<compile_context>
chip_gen: v6e
topology: v6e:2x2x1
jax: 0.10.0
libtpu: 0.0.40
codegen_flags: <defaults>
</compile_context>

<pallas_src>
import functools

import jax
import jax.numpy as jnp
import numpy as np
from jax.experimental import pallas as pl
from jax.experimental.pallas import tpu as pltpu

BN_EPS = 1e-5
LANE = 128        # pad every channel dim to a full lane group
TM_MAX = 256      # row tile (multiple of 8); raise to 1024+ for real sizes

_COMPILER_PARAMS = pltpu.CompilerParams(
    dimension_semantics=("arbitrary", "arbitrary"),
    vmem_limit_bytes=64 * 1024 * 1024,
)


def _rup(x, m):
    return (x + m - 1) // m * m


def _pad_to(a, shape):
    return jnp.pad(a, [(0, t - s) for s, t in zip(a.shape, shape)])


# --------------------- shared two-phase BatchNorm helper -------------------- #
def _bn_two_phase(y, phase, tile, gamma_ref, beta_ref,
                  sum_ref, ssq_ref, scale_ref, shift_ref, count):
    """Phase 0: accumulate per-channel sum / sumsq of y (f32, one pass).
       Phase 1 (first tile): fold into scale = gamma*rsqrt(var+eps) and
       shift = beta - mean*scale."""

    @pl.when(jnp.logical_and(phase == 0, tile == 0))
    def _():
        sum_ref[...] = jnp.zeros_like(sum_ref)
        ssq_ref[...] = jnp.zeros_like(ssq_ref)

    @pl.when(phase == 0)
    def _():
        sum_ref[...] = sum_ref[...] + jnp.sum(y, axis=0, keepdims=True)
        ssq_ref[...] = ssq_ref[...] + jnp.sum(y * y, axis=0, keepdims=True)

    @pl.when(jnp.logical_and(phase == 1, tile == 0))
    def _():
        inv_n = 1.0 / count
        mean = sum_ref[...] * inv_n
        var = jnp.maximum(ssq_ref[...] * inv_n - mean * mean, 0.0)
        sc = gamma_ref[...] * jax.lax.rsqrt(var + BN_EPS)
        scale_ref[...] = sc
        shift_ref[...] = beta_ref[...] - mean * sc


# ------------------------------ Pallas kernels ------------------------------ #
def _mm_bn_relu_kernel(x_ref, w_ref, gamma_ref, beta_ref, o_ref,
                       sum_ref, ssq_ref, scale_ref, shift_ref, *, count):
    # relu(BN(x @ w)) with global batch statistics (two-phase over the grid).
    phase, tile = pl.program_id(0), pl.program_id(1)
    y = jnp.dot(x_ref[...], w_ref[...], preferred_element_type=jnp.float32)
    _bn_two_phase(y, phase, tile, gamma_ref, beta_ref,
                  sum_ref, ssq_ref, scale_ref, shift_ref, count)

    @pl.when(phase == 1)
    def _():
        o_ref[...] = jnp.maximum(
            y * scale_ref[...] + shift_ref[...], 0.0).astype(o_ref.dtype)


def _mm_bn_add_relu_kernel(x_ref, w_ref, gamma_ref, beta_ref, s_ref, o_ref,
                           sum_ref, ssq_ref, scale_ref, shift_ref, *, count):
    # relu(BN(x @ w) + shortcut), identity shortcut: plain add, no eye-matmul.
    phase, tile = pl.program_id(0), pl.program_id(1)
    y = jnp.dot(x_ref[...], w_ref[...], preferred_element_type=jnp.float32)
    _bn_two_phase(y, phase, tile, gamma_ref, beta_ref,
                  sum_ref, ssq_ref, scale_ref, shift_ref, count)

    @pl.when(phase == 1)
    def _():
        short = s_ref[...].astype(jnp.float32)
        o_ref[...] = jnp.maximum(
            y * scale_ref[...] + shift_ref[...] + short, 0.0).astype(o_ref.dtype)


def _mm_bn_proj_relu_kernel(x_ref, w_ref, gamma_ref, beta_ref, s_ref, ws_ref,
                            o_ref, sum_ref, ssq_ref, scale_ref, shift_ref,
                            *, count):
    # relu(BN(x @ w) + s @ ws), 1x1 projection shortcut fused (bf16 matmul).
    phase, tile = pl.program_id(0), pl.program_id(1)
    y = jnp.dot(x_ref[...], w_ref[...], preferred_element_type=jnp.float32)
    _bn_two_phase(y, phase, tile, gamma_ref, beta_ref,
                  sum_ref, ssq_ref, scale_ref, shift_ref, count)

    @pl.when(phase == 1)
    def _():
        short = jnp.dot(s_ref[...], ws_ref[...],
                        preferred_element_type=jnp.float32)
        o_ref[...] = jnp.maximum(
            y * scale_ref[...] + shift_ref[...] + short, 0.0).astype(o_ref.dtype)


def _conv3_bn_relu_kernel(planes_ref, w_ref, gamma_ref, beta_ref, o_ref,
                          acc_ref, sum_ref, ssq_ref, scale_ref, shift_ref,
                          *, stride, ho, wo, hp, count):
    # 3x3 conv (stride handled via parity planes) + two-phase BN + ReLU.
    # The 9 taps are contiguous static slices of the per-image VMEM block;
    # the conv output lives only in the f32 VMEM scratch `acc_ref`.
    phase, tile = pl.program_id(0), pl.program_id(1)
    c = o_ref.shape[-1]
    for i in range(ho):                       # one output-row strip at a time
        row = jnp.zeros((wo, c), jnp.float32)
        for dy in range(3):
            for dx in range(3):
                pidx = (dy % stride) * stride + (dx % stride)
                oy, ox = dy // stride, dx // stride
                lhs = planes_ref[0, pidx * hp + oy + i, ox:ox + wo, :]
                row = row + jnp.dot(lhs, w_ref[dy * 3 + dx],
                                    preferred_element_type=jnp.float32)
        acc_ref[i * wo:(i + 1) * wo, :] = row
    # NOTE: C2's bias is intentionally omitted (cancels under batch-stat BN).
    y = acc_ref[...]
    _bn_two_phase(y, phase, tile, gamma_ref, beta_ref,
                  sum_ref, ssq_ref, scale_ref, shift_ref, count)

    @pl.when(phase == 1)
    def _():
        o_ref[0] = jnp.maximum(
            y * scale_ref[...] + shift_ref[...], 0.0).astype(o_ref.dtype)


# ------------------------------ pallas_call glue ---------------------------- #
def _call_mm_bn_relu(x, w, gamma, beta, *, tm, count, out_dtype):
    mp, kp = x.shape
    cp = w.shape[1]
    return pl.pallas_call(
        functools.partial(_mm_bn_relu_kernel, count=float(count)),
        out_shape=jax.ShapeDtypeStruct((mp, cp), out_dtype),
        grid_spec=pltpu.PrefetchScalarGridSpec(
            num_scalar_prefetch=0,
            grid=(2, mp // tm),
            in_specs=[
                pl.BlockSpec((tm, kp), lambda p, t: (t, 0)),
                pl.BlockSpec((kp, cp), lambda p, t: (0, 0)),
                pl.BlockSpec((1, cp), lambda p, t: (0, 0)),
                pl.BlockSpec((1, cp), lambda p, t: (0, 0)),
            ],
            out_specs=pl.BlockSpec((tm, cp), lambda p, t: (t, 0)),
            scratch_shapes=[pltpu.VMEM((1, cp), jnp.float32) for _ in range(4)],
        ),
        compiler_params=_COMPILER_PARAMS,
    )(x, w, gamma, beta)


def _call_mm_bn_add_relu(x, w, gamma, beta, short, *, tm, count):
    mp, kp = x.shape
    cp = w.shape[1]
    sp = short.shape[1]
    return pl.pallas_call(
        functools.partial(_mm_bn_add_relu_kernel, count=float(count)),
        out_shape=jax.ShapeDtypeStruct((mp, cp), jnp.float32),
        grid_spec=pltpu.PrefetchScalarGridSpec(
            num_scalar_prefetch=0,
            grid=(2, mp // tm),
            in_specs=[
                pl.BlockSpec((tm, kp), lambda p, t: (t, 0)),
                pl.BlockSpec((kp, cp), lambda p, t: (0, 0)),
                pl.BlockSpec((1, cp), lambda p, t: (0, 0)),
                pl.BlockSpec((1, cp), lambda p, t: (0, 0)),
                pl.BlockSpec((tm, sp), lambda p, t: (t, 0)),
            ],
            out_specs=pl.BlockSpec((tm, cp), lambda p, t: (t, 0)),
            scratch_shapes=[pltpu.VMEM((1, cp), jnp.float32) for _ in range(4)],
        ),
        compiler_params=_COMPILER_PARAMS,
    )(x, w, gamma, beta, short)


def _call_mm_bn_proj_relu(x, w, gamma, beta, short, wsc, *, tm, count):
    mp, kp = x.shape
    cp = w.shape[1]
    sp = short.shape[1]
    return pl.pallas_call(
        functools.partial(_mm_bn_proj_relu_kernel, count=float(count)),
        out_shape=jax.ShapeDtypeStruct((mp, cp), jnp.float32),
        grid_spec=pltpu.PrefetchScalarGridSpec(
            num_scalar_prefetch=0,
            grid=(2, mp // tm),
            in_specs=[
                pl.BlockSpec((tm, kp), lambda p, t: (t, 0)),
                pl.BlockSpec((kp, cp), lambda p, t: (0, 0)),
                pl.BlockSpec((1, cp), lambda p, t: (0, 0)),
                pl.BlockSpec((1, cp), lambda p, t: (0, 0)),
                pl.BlockSpec((tm, sp), lambda p, t: (t, 0)),
                pl.BlockSpec((sp, cp), lambda p, t: (0, 0)),
            ],
            out_specs=pl.BlockSpec((tm, cp), lambda p, t: (t, 0)),
            scratch_shapes=[pltpu.VMEM((1, cp), jnp.float32) for _ in range(4)],
        ),
        compiler_params=_COMPILER_PARAMS,
    )(x, w, gamma, beta, short, wsc)


def _call_conv3_bn_relu(planes, w2, gamma, beta, *, stride, ho, wo, hp, count):
    n, php, wp, cp = planes.shape
    return pl.pallas_call(
        functools.partial(_conv3_bn_relu_kernel, stride=stride,
                          ho=ho, wo=wo, hp=hp, count=float(count)),
        out_shape=jax.ShapeDtypeStruct((n, ho * wo, cp), jnp.bfloat16),
        grid_spec=pltpu.PrefetchScalarGridSpec(
            num_scalar_prefetch=0,
            grid=(2, n),
            in_specs=[
                pl.BlockSpec((1, php, wp, cp), lambda p, t: (t, 0, 0, 0)),
                pl.BlockSpec((9, cp, cp), lambda p, t: (0, 0, 0)),
                pl.BlockSpec((1, cp), lambda p, t: (0, 0)),
                pl.BlockSpec((1, cp), lambda p, t: (0, 0)),
            ],
            out_specs=pl.BlockSpec((1, ho * wo, cp), lambda p, t: (t, 0, 0)),
            scratch_shapes=[pltpu.VMEM((ho * wo, cp), jnp.float32)]
                          + [pltpu.VMEM((1, cp), jnp.float32) for _ in range(4)],
        ),
        compiler_params=_COMPILER_PARAMS,
    )(planes, w2, gamma, beta)


# --------------------------------- parameters ------------------------------- #
def init_params(key, indim, outdim):
    cb = outdim // 4
    ks = jax.random.split(key, 5)
    p = {}
    # init_layer: conv weight ~ N(0, sqrt(2 / (kh*kw*out_channels)))
    p["w1"] = jax.random.normal(ks[0], (indim, cb), jnp.float32) * np.sqrt(2.0 / cb)
    p["w2"] = jax.random.normal(ks[1], (3, 3, cb, cb), jnp.float32) * np.sqrt(2.0 / (9 * cb))
    fan_in2 = 9 * cb
    p["bias2"] = jax.random.uniform(ks[2], (cb,), jnp.float32,
                                    -1.0 / np.sqrt(fan_in2), 1.0 / np.sqrt(fan_in2))
    p["w3"] = jax.random.normal(ks[3], (cb, outdim), jnp.float32) * np.sqrt(2.0 / outdim)
    if indim != outdim:
        p["wsc"] = jax.random.normal(ks[4], (indim, outdim), jnp.float32) * np.sqrt(2.0 / outdim)
    for i, c in zip((1, 2, 3), (cb, cb, outdim)):
        p[f"gamma{i}"] = jnp.ones((c,), jnp.float32)   # BN weight = 1
        p[f"beta{i}"] = jnp.zeros((c,), jnp.float32)   # BN bias = 0
    return p


# ----------------------------------- forward -------------------------------- #
def bottleneck_forward(x_nchw, p, half_res):
    x = jnp.transpose(x_nchw, (0, 2, 3, 1)).astype(jnp.float32)      # NHWC
    n, h, w, cin = x.shape
    cb, cout = p["w3"].shape
    s = 2 if half_res else 1
    ho = (h + 2 - 3) // s + 1
    wo = (w + 2 - 3) // s + 1
    m1, m2 = n * h * w, n * ho * wo

    cin_p, cb_p, cout_p = _rup(cin, LANE), _rup(cb, LANE), _rup(cout, LANE)

    # lane-padded bf16 operands (glue); padded gamma lanes are 0 so padded
    # channels stay exactly zero through every stage.
    x_p = _pad_to(x, (n, h, w, cin_p)).astype(jnp.bfloat16)
    w1_p = _pad_to(p["w1"], (cin_p, cb_p)).astype(jnp.bfloat16)
    w2_p = _pad_to(p["w2"].reshape(9, cb, cb), (9, cb_p, cb_p)).astype(jnp.bfloat16)
    w3_p = _pad_to(p["w3"], (cb_p, cout_p)).astype(jnp.bfloat16)
    g1, b1 = _pad_to(p["gamma1"][None, :], (1, cb_p)), _pad_to(p["beta1"][None, :], (1, cb_p))
    g2, b2 = _pad_to(p["gamma2"][None, :], (1, cb_p)), _pad_to(p["beta2"][None, :], (1, cb_p))
    g3, b3 = _pad_to(p["gamma3"][None, :], (1, cout_p)), _pad_to(p["beta3"][None, :], (1, cout_p))

    # ---- stage 1: C1 (1x1, no bias) + BN1 + ReLU ----
    tm1 = min(TM_MAX, _rup(m1, 8))
    m1p = _rup(m1, tm1)
    x_flat = _pad_to(x_p.reshape(m1, cin_p), (m1p, cin_p))
    out1 = _call_mm_bn_relu(x_flat, w1_p, g1, b1, tm=tm1, count=m1,
                            out_dtype=jnp.bfloat16)
    out1 = out1[:m1].reshape(n, h, w, cb_p)

    # ---- stage 2: C2 (3x3, stride s, pad 1) + BN2 + ReLU ----
    # zero-pad spatially; for stride 2 pre-split into 4 parity planes so the
    # in-kernel taps are contiguous (no strided loads, no HBM im2col slab).
    xp = jnp.pad(out1, ((0, 0), (1, 1), (1, 1), (0, 0)))
    if s == 1:
        hp, wp = h + 2, w + 2
        planes = xp
    else:
        hp, wp = ho + 1, wo + 1
        xp = _pad_to(xp, (n, 2 * hp, 2 * wp, cb_p))
        planes = jnp.concatenate(
            [xp[:, a::2, b::2, :] for a in range(2) for b in range(2)], axis=1)
    out2 = _call_conv3_bn_relu(planes, w2_p, g2, b2, stride=s,
                               ho=ho, wo=wo, hp=hp, count=m2)

    # ---- stage 3: C3 (1x1, no bias) + BN3 + shortcut + ReLU ----
    tm3 = min(TM_MAX, _rup(m2, 8))
    m2p = _rup(m2, tm3)
    out2_flat = _pad_to(out2.reshape(m2, cb_p), (m2p, cb_p))
    if cin != cout:           # 1x1 projection shortcut, stride s
        xs = _pad_to(x_p[:, ::s, ::s, :].reshape(m2, cin_p), (m2p, cin_p))
        wsc_p = _pad_to(p["wsc"], (cin_p, cout_p)).astype(jnp.bfloat16)
        out3 = _call_mm_bn_proj_relu(out2_flat, w3_p, g3, b3, xs, wsc_p,
                                     tm=tm3, count=m2)
    else:                     # identity shortcut (module assumes stride 1 here)
        xs = _pad_to(x_p.reshape(m2, cin_p), (m2p, cin_p))
        out3 = _call_mm_bn_add_relu(out2_flat, w3_p, g3, b3, xs,
                                    tm=tm3, count=m2)

    out3 = out3[:m2, :cout].reshape(n, ho, wo, cout)
    return jnp.transpose(out3, (0, 3, 1, 2))                          # NCHW


# ----------------------------- pure-JAX reference --------------------------- #
def ref_forward(x_nchw, p, half_res, mm_dtype=jnp.float32):
    x = jnp.transpose(x_nchw, (0, 2, 3, 1)).astype(jnp.float32)
    s = 2 if half_res else 1
    cin = p["w1"].shape[0]
    cb, cout = p["w3"].shape

    def conv(z, w_hwio, stride, pad):
        return jax.lax.conv_general_dilated(
            z.astype(mm_dtype), w_hwio.astype(mm_dtype), (stride, stride), pad,
            dimension_numbers=("NHWC", "HWIO", "NHWC"),
            preferred_element_type=jnp.float32)

    def bn(y, g, b):
        m = jnp.mean(y, axis=(0, 1, 2), keepdims=True)
        v = jnp.mean((y - m) ** 2, axis=(0, 1, 2), keepdims=True)
        return (y - m) * jax.lax.rsqrt(v + BN_EPS) * g + b

    out = jax.nn.relu(bn(conv(x, p["w1"].reshape(1, 1, cin, cb), 1,
                              [(0, 0), (0, 0)]), p["gamma1"], p["beta1"]))
    out = jax.nn.relu(bn(conv(out, p["w2"], s, [(1, 1), (1, 1)]) + p["bias2"],
                         p["gamma2"], p["beta2"]))
    out = bn(conv(out, p["w3"].reshape(1, 1, cb, cout), 1, [(0, 0), (0, 0)]),
             p["gamma3"], p["beta3"])
    if cin != cout:
        short = conv(x, p["wsc"].reshape(1, 1, cin, cout), s, [(0, 0), (0, 0)])
    else:
        short = x
    return jnp.transpose(jax.nn.relu(out + short), (0, 3, 1, 2))


if __name__ == "__main__":
    key = jax.random.PRNGKey(0)
    k1, k2, k3, k4 = jax.random.split(key, 4)
    fwd = jax.jit(bottleneck_forward, static_argnums=(2,))

    # Case 1: 1x1 projection shortcut, stride 2 (indim != outdim, half_res).
    indim, outdim, half_res = 8, 16, True
    x = jax.random.normal(k1, (2, indim, 16, 16), jnp.float32)         # NCHW
    params = init_params(k2, indim, outdim)
    out = jax.block_until_ready(fwd(x, params, half_res))
    assert out.shape == (2, outdim, 8, 8), out.shape
    ref = jax.block_until_ready(ref_forward(x, params, half_res, jnp.bfloat16))
    np.testing.assert_allclose(np.asarray(out), np.asarray(ref),
                               rtol=3e-2, atol=3e-2)

    # Case 2: identity shortcut, stride 1 (indim == outdim).
    indim2 = outdim2 = 16
    x2 = jax.random.normal(k3, (2, indim2, 8, 8), jnp.float32)
    params2 = init_params(k4, indim2, outdim2)
    out2 = jax.block_until_ready(fwd(x2, params2, False))
    assert out2.shape == (2, outdim2, 8, 8), out2.shape
    ref2 = jax.block_until_ready(ref_forward(x2, params2, False, jnp.bfloat16))
    np.testing.assert_allclose(np.asarray(out2), np.asarray(ref2),
                               rtol=3e-2, atol=3e-2)

    print("KERNEL_OK")
</pallas_src>

<mosaic_0001>
module attributes {stable_mosaic.version = 11 : i64} {
  func.func @_mm_bn_relu_kernel(%arg0: i32, %arg1: i32, %arg2: memref<256x128xbf16, #tpu.memory_space<vmem>>, %arg3: memref<128x128xbf16, #tpu.memory_space<vmem>>, %arg4: memref<1x128xf32, #tpu.memory_space<vmem>>, %arg5: memref<1x128xf32, #tpu.memory_space<vmem>>, %arg6: memref<256x128xbf16, #tpu.memory_space<vmem>>, %arg7: memref<1x128xf32, #tpu.memory_space<vmem>>, %arg8: memref<1x128xf32, #tpu.memory_space<vmem>>, %arg9: memref<1x128xf32, #tpu.memory_space<vmem>>, %arg10: memref<1x128xf32, #tpu.memory_space<vmem>>) attributes {dimension_semantics = [#tpu.dimension_semantics<arbitrary>, #tpu.dimension_semantics<arbitrary>], iteration_bounds = array<i64: 2, 2>, scalar_prefetch = 0 : i64, scratch_operands = 4 : i64, tpu.core_type = #tpu.core_type<tc>, window_params = [{transform_indices = @transform_0, window_bounds = array<i64: 256, 128>}, {pipeline_mode = #tpu.pipeline_mode<synchronous>, transform_indices = @transform_1, window_bounds = array<i64: 128, 128>}, {pipeline_mode = #tpu.pipeline_mode<synchronous>, transform_indices = @transform_2, window_bounds = array<i64: 1, 128>}, {pipeline_mode = #tpu.pipeline_mode<synchronous>, transform_indices = @transform_3, window_bounds = array<i64: 1, 128>}, {transform_indices = @transform_4, window_bounds = array<i64: 256, 128>}]} {
    %c0 = arith.constant 0 : index
    %c0_0 = arith.constant 0 : index
    %0 = vector.load %arg2[%c0, %c0_0] : memref<256x128xbf16, #tpu.memory_space<vmem>>, vector<256x128xbf16>
    %c0_1 = arith.constant 0 : index
    %c0_2 = arith.constant 0 : index
    %1 = vector.load %arg3[%c0_1, %c0_2] : memref<128x128xbf16, #tpu.memory_space<vmem>>, vector<128x128xbf16>
    %cst = arith.constant dense<0.000000e+00> : vector<256x128xf32>
    %2 = tpu.matmul %0, %1, %cst {dimension_numbers = #tpu.dot_dimension_numbers<[1], [0], [0], [1], [0, 0, 1, 1], [], []>} : vector<256x128xbf16>, vector<128x128xbf16>, vector<256x128xf32> -> vector<256x128xf32>
    %c0_i32 = arith.constant 0 : i32
    %3 = arith.cmpi eq, %arg0, %c0_i32 : i32
    %c0_i32_3 = arith.constant 0 : i32
    %4 = arith.cmpi eq, %arg1, %c0_i32_3 : i32
    %5 = arith.andi %3, %4 : i1
    %6 = arith.extui %5 : i1 to i32
    %c0_i32_4 = arith.constant 0 : i32
    %7 = arith.cmpi ne, %6, %c0_i32_4 : i32
    scf.if %7 {
      %cst_11 = arith.constant 0.000000e+00 : f32
      %19 = vector.broadcast %cst_11 : f32 to vector<1x128xf32>
      %c0_12 = arith.constant 0 : index
      %c0_13 = arith.constant 0 : index
      %20 = vector.load %arg7[%c0_12, %c0_13] : memref<1x128xf32, #tpu.memory_space<vmem>>, vector<1x128xf32>
      tpu.vector_store %arg7[%c0_12, %c0_13], %19 {strides = array<i32>} : memref<1x128xf32, #tpu.memory_space<vmem>>, vector<1x128xf32>,
      %cst_14 = arith.constant 0.000000e+00 : f32
      %21 = vector.broadcast %cst_14 : f32 to vector<1x128xf32>
      %c0_15 = arith.constant 0 : index
      %c0_16 = arith.constant 0 : index
      %22 = vector.load %arg8[%c0_15, %c0_16] : memref<1x128xf32, #tpu.memory_space<vmem>>, vector<1x128xf32>
      tpu.vector_store %arg8[%c0_15, %c0_16], %21 {strides = array<i32>} : memref<1x128xf32, #tpu.memory_space<vmem>>, vector<1x128xf32>,
    } else {
    }
    %c0_i32_5 = arith.constant 0 : i32
    %8 = arith.cmpi eq, %arg0, %c0_i32_5 : i32
    %9 = arith.extui %8 : i1 to i32
    %c0_i32_6 = arith.constant 0 : i32
    %10 = arith.cmpi ne, %9, %c0_i32_6 : i32
    scf.if %10 {
      %c0_11 = arith.constant 0 : index
      %c0_12 = arith.constant 0 : index
      %19 = vector.load %arg7[%c0_11, %c0_12] : memref<1x128xf32, #tpu.memory_space<vmem>>, vector<1x128xf32>
      %cst_13 = arith.constant dense<0.000000e+00> : vector<128xf32>
      %20 = vector.multi_reduction <add>, %2, %cst_13 [0] : vector<256x128xf32> to vector<128xf32>
      %21 = vector.shape_cast %20 : vector<128xf32> to vector<1x128xf32>
      %22 = arith.addf %19, %21 : vector<1x128xf32>
      %c0_14 = arith.constant 0 : index
      %c0_15 = arith.constant 0 : index
      %23 = vector.load %arg7[%c0_14, %c0_15] : memref<1x128xf32, #tpu.memory_space<vmem>>, vector<1x128xf32>
      tpu.vector_store %arg7[%c0_14, %c0_15], %22 {strides = array<i32>} : memref<1x128xf32, #tpu.memory_space<vmem>>, vector<1x128xf32>,
      %c0_16 = arith.constant 0 : index
      %c0_17 = arith.constant 0 : index
      %24 = vector.load %arg8[%c0_16, %c0_17] : memref<1x128xf32, #tpu.memory_space<vmem>>, vector<1x128xf32>
      %25 = arith.mulf %2, %2 : vector<256x128xf32>
      %cst_18 = arith.constant dense<0.000000e+00> : vector<128xf32>
      %26 = vector.multi_reduction <add>, %25, %cst_18 [0] : vector<256x128xf32> to vector<128xf32>
      %27 = vector.shape_cast %26 : vector<128xf32> to vector<1x128xf32>
      %28 = arith.addf %24, %27 : vector<1x128xf32>
      %c0_19 = arith.constant 0 : index
      %c0_20 = arith.constant 0 : index
      %29 = vector.load %arg8[%c0_19, %c0_20] : memref<1x128xf32, #tpu.memory_space<vmem>>, vector<1x128xf32>
      tpu.vector_store %arg8[%c0_19, %c0_20], %28 {strides = array<i32>} : memref<1x128xf32, #tpu.memory_space<vmem>>, vector<1x128xf32>,
    } else {
    }
    %c1_i32 = arith.constant 1 : i32
    %11 = arith.cmpi eq, %arg0, %c1_i32 : i32
    %c0_i32_7 = arith.constant 0 : i32
    %12 = arith.cmpi eq, %arg1, %c0_i32_7 : i32
    %13 = arith.andi %11, %12 : i1
    %14 = arith.extui %13 : i1 to i32
    %c0_i32_8 = arith.constant 0 : i32
    %15 = arith.cmpi ne, %14, %c0_i32_8 : i32
    scf.if %15 {
      %c0_11 = arith.constant 0 : index
      %c0_12 = arith.constant 0 : index
      %19 = vector.load %arg7[%c0_11, %c0_12] : memref<1x128xf32, #tpu.memory_space<vmem>>, vector<1x128xf32>
      %cst_13 = arith.constant 0.001953125 : f32
      %20 = vector.broadcast %cst_13 : f32 to vector<1x128xf32>
      %21 = arith.mulf %19, %20 : vector<1x128xf32>
      %c0_14 = arith.constant 0 : index
      %c0_15 = arith.constant 0 : index
      %22 = vector.load %arg8[%c0_14, %c0_15] : memref<1x128xf32, #tpu.memory_space<vmem>>, vector<1x128xf32>
      %cst_16 = arith.constant 0.001953125 : f32
      %23 = vector.broadcast %cst_16 : f32 to vector<1x128xf32>
      %24 = arith.mulf %22, %23 : vector<1x128xf32>
      %25 = arith.mulf %21, %21 : vector<1x128xf32>
      %26 = arith.subf %24, %25 : vector<1x128xf32>
      %cst_17 = arith.constant 0.000000e+00 : f32
      %27 = vector.broadcast %cst_17 : f32 to vector<1x128xf32>
      %28 = arith.maximumf %26, %27 : vector<1x128xf32>
      %c0_18 = arith.constant 0 : index
      %c0_19 = arith.constant 0 : index
      %29 = vector.load %arg4[%c0_18, %c0_19] : memref<1x128xf32, #tpu.memory_space<vmem>>, vector<1x128xf32>
      %cst_20 = arith.constant 9.99999974E-6 : f32
      %30 = vector.broadcast %cst_20 : f32 to vector<1x128xf32>
      %31 = arith.addf %28, %30 : vector<1x128xf32>
      %32 = math.rsqrt %31 : vector<1x128xf32>
      %33 = arith.mulf %29, %32 : vector<1x128xf32>
      %c0_21 = arith.constant 0 : index
      %c0_22 = arith.constant 0 : index
      %34 = vector.load %arg9[%c0_21, %c0_22] : memref<1x128xf32, #tpu.memory_space<vmem>>, vector<1x128xf32>
      tpu.vector_store %arg9[%c0_21, %c0_22], %33 {strides = array<i32>} : memref<1x128xf32, #tpu.memory_space<vmem>>, vector<1x128xf32>,
      %c0_23 = arith.constant 0 : index
      %c0_24 = arith.constant 0 : index
      %35 = vector.load %arg5[%c0_23, %c0_24] : memref<1x128xf32, #tpu.memory_space<vmem>>, vector<1x128xf32>
      %36 = arith.mulf %21, %33 : vector<1x128xf32>
      %37 = arith.subf %35, %36 : vector<1x128xf32>
      %c0_25 = arith.constant 0 : index
      %c0_26 = arith.constant 0 : index
      %38 = vector.load %arg10[%c0_25, %c0_26] : memref<1x128xf32, #tpu.memory_space<vmem>>, vector<1x128xf32>
      tpu.vector_store %arg10[%c0_25, %c0_26], %37 {strides = array<i32>} : memref<1x128xf32, #tpu.memory_space<vmem>>, vector<1x128xf32>,
    } else {
    }
    %c1_i32_9 = arith.constant 1 : i32
    %16 = arith.cmpi eq, %arg0, %c1_i32_9 : i32
    %17 = arith.extui %16 : i1 to i32
    %c0_i32_10 = arith.constant 0 : i32
    %18 = arith.cmpi ne, %17, %c0_i32_10 : i32
    scf.if %18 {
      %c0_11 = arith.constant 0 : index
      %c0_12 = arith.constant 0 : index
      %19 = vector.load %arg9[%c0_11, %c0_12] : memref<1x128xf32, #tpu.memory_space<vmem>>, vector<1x128xf32>
      %20 = vector.broadcast %19 : vector<1x128xf32> to vector<256x128xf32>
      %21 = arith.mulf %2, %20 : vector<256x128xf32>
      %c0_13 = arith.constant 0 : index
      %c0_14 = arith.constant 0 : index
      %22 = vector.load %arg10[%c0_13, %c0_14] : memref<1x128xf32, #tpu.memory_space<vmem>>, vector<1x128xf32>
      %23 = vector.broadcast %22 : vector<1x128xf32> to vector<256x128xf32>
      %24 = arith.addf %21, %23 : vector<256x128xf32>
      %cst_15 = arith.constant 0.000000e+00 : f32
      %25 = vector.broadcast %cst_15 : f32 to vector<256x128xf32>
      %26 = arith.maximumf %24, %25 : vector<256x128xf32>
      %27 = arith.truncf %26 : vector<256x128xf32> to vector<256x128xbf16>
      %c0_16 = arith.constant 0 : index
      %c0_17 = arith.constant 0 : index
      %28 = vector.load %arg6[%c0_16, %c0_17] : memref<256x128xbf16, #tpu.memory_space<vmem>>, vector<256x128xbf16>
      tpu.vector_store %arg6[%c0_16, %c0_17], %27 {strides = array<i32>} : memref<256x128xbf16, #tpu.memory_space<vmem>>, vector<256x128xbf16>,
    } else {
    }
    return
  }
  func.func @transform_0(%arg0: i32, %arg1: i32) -> (i32, i32) {
    %c0_i32 = arith.constant 0 : i32
    %c0_i32_0 = arith.constant 0 : i32
    return %arg1, %c0_i32 : i32, i32
  }
  func.func @transform_1(%arg0: i32, %arg1: i32) -> (i32, i32) {
    %c0_i32 = arith.constant 0 : i32
    %c0_i32_0 = arith.constant 0 : i32
    %c0_i32_1 = arith.constant 0 : i32
    return %c0_i32, %c0_i32_0 : i32, i32
  }
  func.func @transform_2(%arg0: i32, %arg1: i32) -> (i32, i32) {
    %c0_i32 = arith.constant 0 : i32
    %c0_i32_0 = arith.constant 0 : i32
    %c0_i32_1 = arith.constant 0 : i32
    return %c0_i32, %c0_i32_0 : i32, i32
  }
  func.func @transform_3(%arg0: i32, %arg1: i32) -> (i32, i32) {
    %c0_i32 = arith.constant 0 : i32
    %c0_i32_0 = arith.constant 0 : i32
    %c0_i32_1 = arith.constant 0 : i32
    return %c0_i32, %c0_i32_0 : i32, i32
  }
  func.func @transform_4(%arg0: i32, %arg1: i32) -> (i32, i32) {
    %c0_i32 = arith.constant 0 : i32
    %c0_i32_0 = arith.constant 0 : i32
    return %arg1, %c0_i32 : i32, i32
  }
}

module attributes {stable_mosaic.version = 11 : i64} {
  func.func @_conv3_bn_relu_kernel(%arg0: i32, %arg1: i32, %arg2: memref<1x36x9x128xbf16, #tpu.memory_space<vmem>>, %arg3: memref<9x128x128xbf16, #tpu.memory_space<vmem>>, %arg4: memref<1x128xf32, #tpu.memory_space<vmem>>, %arg5: memref<1x128xf32, #tpu.memory_space<vmem>>, %arg6: memref<1x64x128xbf16, #tpu.memory_space<vmem>>, %arg7: memref<64x128xf32, #tpu.memory_space<vmem>>, %arg8: memref<1x128xf32, #tpu.memory_space<vmem>>, %arg9: memref<1x128xf32, #tpu.memory_space<vmem>>, %arg10: memref<1x128xf32, #tpu.memory_space<vmem>>, %arg11: memref<1x128xf32, #tpu.memory_space<vmem>>) attributes {dimension_semantics = [#tpu.dimension_semantics<arbitrary>, #tpu.dimension_semantics<arbitrary>], iteration_bounds = array<i64: 2, 2>, scalar_prefetch = 0 : i64, scratch_operands = 5 : i64, tpu.core_type = #tpu.core_type<tc>, window_params = [{transform_indices = @transform_0, window_bounds = array<i64: 1, 36, 9, 128>}, {pipeline_mode = #tpu.pipeline_mode<synchronous>, transform_indices = @transform_1, window_bounds = array<i64: 9, 128, 128>}, {pipeline_mode = #tpu.pipeline_mode<synchronous>, transform_indices = @transform_2, window_bounds = array<i64: 1, 128>}, {pipeline_mode = #tpu.pipeline_mode<synchronous>, transform_indices = @transform_3, window_bounds = array<i64: 1, 128>}, {transform_indices = @transform_4, window_bounds = array<i64: 1, 64, 128>}]} {
    %cst = arith.constant 0.000000e+00 : f32
    %0 = vector.broadcast %cst : f32 to vector<8x128xf32>
    %c0 = arith.constant 0 : index
    %c0_0 = arith.constant 0 : index
    %c0_1 = arith.constant 0 : index
    %c0_2 = arith.constant 0 : index
    %1 = vector.load %arg2[%c0, %c0_0, %c0_1, %c0_2] : memref<1x36x9x128xbf16, #tpu.memory_space<vmem>>, vector<1x1x8x128xbf16>
    %2 = vector.shape_cast %1 : vector<1x1x8x128xbf16> to vector<8x128xbf16>
    %c0_3 = arith.constant 0 : index
    %c0_4 = arith.constant 0 : index
    %c0_5 = arith.constant 0 : index
    %3 = vector.load %arg3[%c0_3, %c0_4, %c0_5] : memref<9x128x128xbf16, #tpu.memory_space<vmem>>, vector<1x128x128xbf16>
    %4 = vector.shape_cast %3 : vector<1x128x128xbf16> to vector<128x128xbf16>
    %cst_6 = arith.constant dense<0.000000e+00> : vector<8x128xf32>
    %5 = tpu.matmul %2, %4, %cst_6 {dimension_numbers = #tpu.dot_dimension_numbers<[1], [0], [0], [1], [0, 0, 1, 1], [], []>} : vector<8x128xbf16>, vector<128x128xbf16>, vector<8x128xf32> -> vector<8x128xf32>
    %6 = arith.addf %0, %5 : vector<8x128xf32>
    %c0_7 = arith.constant 0 : index
    %c9 = arith.constant 9 : index
    %c0_8 = arith.constant 0 : index
    %c0_9 = arith.constant 0 : index
    %7 = vector.load %arg2[%c0_7, %c9, %c0_8, %c0_9] : memref<1x36x9x128xbf16, #tpu.memory_space<vmem>>, vector<1x1x8x128xbf16>
    %8 = vector.shape_cast %7 : vector<1x1x8x128xbf16> to vector<8x128xbf16>
    %c1 = arith.constant 1 : index
    %c0_10 = arith.constant 0 : index
    %c0_11 = arith.constant 0 : index
    %9 = vector.load %arg3[%c1, %c0_10, %c0_11] : memref<9x128x128xbf16, #tpu.memory_space<vmem>>, vector<1x128x128xbf16>
    %10 = vector.shape_cast %9 : vector<1x128x128xbf16> to vector<128x128xbf16>
    %cst_12 = arith.constant dense<0.000000e+00> : vector<8x128xf32>
    %11 = tpu.matmul %8, %10, %cst_12 {dimension_numbers = #tpu.dot_dimension_numbers<[1], [0], [0], [1], [0, 0, 1, 1], [], []>} : vector<8x128xbf16>, vector<128x128xbf16>, vector<8x128xf32> -> vector<8x128xf32>
    %12 = arith.addf %6, %11 : vector<8x128xf32>
    %c0_13 = arith.constant 0 : index
    %c0_14 = arith.constant 0 : index
    %c1_15 = arith.constant 1 : index
    %c0_16 = arith.constant 0 : index
    %13 = vector.load %arg2[%c0_13, %c0_14, %c1_15, %c0_16] : memref<1x36x9x128xbf16, #tpu.memory_space<vmem>>, vector<1x1x8x128xbf16>
    %14 = vector.shape_cast %13 : vector<1x1x8x128xbf16> to vector<8x128xbf16>
    %c2 = arith.constant 2 : index
    %c0_17 = arith.constant 0 : index
    %c0_18 = arith.constant 0 : index
    %15 = vector.load %arg3[%c2, %c0_17, %c0_18] : memref<9x128x128xbf16, #tpu.memory_space<vmem>>, vector<1x128x128xbf16>
    %16 = vector.shape_cast %15 : vector<1x128x128xbf16> to vector<128x128xbf16>
    %cst_19 = arith.constant dense<0.000000e+00> : vector<8x128xf32>
    %17 = tpu.matmul %14, %16, %cst_19 {dimension_numbers = #tpu.dot_dimension_numbers<[1], [0], [0], [1], [0, 0, 1, 1], [], []>} : vector<8x128xbf16>, vector<128x128xbf16>, vector<8x128xf32> -> vector<8x128xf32>
    %18 = arith.addf %12, %17 : vector<8x128xf32>
    %c0_20 = arith.constant 0 : index
    %c18 = arith.constant 18 : index
    %c0_21 = arith.constant 0 : index
    %c0_22 = arith.constant 0 : index
    %19 = vector.load %arg2[%c0_20, %c18, %c0_21, %c0_22] : memref<1x36x9x128xbf16, #tpu.memory_space<vmem>>, vector<1x1x8x128xbf16>
    %20 = vector.shape_cast %19 : vector<1x1x8x128xbf16> to vector<8x128xbf16>
    %c3 = arith.constant 3 : index
    %c0_23 = arith.constant 0 : index
    %c0_24 = arith.constant 0 : index
    %21 = vector.load %arg3[%c3, %c0_23, %c0_24] : memref<9x128x128xbf16, #tpu.memory_space<vmem>>, vector<1x128x128xbf16>
    %22 = vector.shape_cast %21 : vector<1x128x128xbf16> to vector<128x128xbf16>
    %cst_25 = arith.constant dense<0.000000e+00> : vector<8x128xf32>
    %23 = tpu.matmul %20, %22, %cst_25 {dimension_numbers = #tpu.dot_dimension_numbers<[1], [0], [0], [1], [0, 0, 1, 1], [], []>} : vector<8x128xbf16>, vector<128x128xbf16>, vector<8x128xf32> -> vector<8x128xf32>
    %24 = arith.addf %18, %23 : vector<8x128xf32>
    %c0_26 = arith.constant 0 : index
    %c27 = arith.constant 27 : index
    %c0_27 = arith.constant 0 : index
    %c0_28 = arith.constant 0 : index
    %25 = vector.load %arg2[%c0_26, %c27, %c0_27, %c0_28] : memref<1x36x9x128xbf16, #tpu.memory_space<vmem>>, vector<1x1x8x128xbf16>
    %26 = vector.shape_cast %25 : vector<1x1x8x128xbf16> to vector<8x128xbf16>
    %c4 = arith.constant 4 : index
    %c0_29 = arith.constant 0 : index
    %c0_30 = arith.constant 0 : index
    %27 = vector.load %arg3[%c4, %c0_29, %c0_30] : memref<9x128x128xbf16, #tpu.memory_space<vmem>>, vector<1x128x128xbf16>
    %28 = vector.shape_cast %27 : vector<1x128x128xbf16> to vector<128x128xbf16>
    %cst_31 = arith.constant dense<0.000000e+00> : vector<8x128xf32>
    %29 = tpu.matmul %26, %28, %cst_31 {dimension_numbers = #tpu.dot_dimension_numbers<[1], [0], [0], [1], [0, 0, 1, 1], [], []>} : vector<8x128xbf16>, vector<128x128xbf16>, vector<8x128xf32> -> vector<8x128xf32>
    %30 = arith.addf %24, %29 : vector<8x128xf32>
    %c0_32 = arith.constant 0 : index
    %c18_33 = arith.constant 18 : index
    %c1_34 = arith.constant 1 : index
    %c0_35 = arith.constant 0 : index
    %31 = vector.load %arg2[%c0_32, %c18_33, %c1_34, %c0_35] : memref<1x36x9x128xbf16, #tpu.memory_space<vmem>>, vector<1x1x8x128xbf16>
    %32 = vector.shape_cast %31 : vector<1x1x8x128xbf16> to vector<8x128xbf16>
    %c5 = arith.constant 5 : index
    %c0_36 = arith.constant 0 : index
    %c0_37 = arith.constant 0 : index
    %33 = vector.load %arg3[%c5, %c0_36, %c0_37] : memref<9x128x128xbf16, #tpu.memory_space<vmem>>, vector<1x128x128xbf16>
    %34 = vector.shape_cast %33 : vector<1x128x128xbf16> to vector<128x128xbf16>
    %cst_38 = arith.constant dense<0.000000e+00> : vector<8x128xf32>
    %35 = tpu.matmul %32, %34, %cst_38 {dimension_numbers = #tpu.dot_dimension_numbers<[1], [0], [0], [1], [0, 0, 1, 1], [], []>} : vector<8x128xbf16>, vector<128x128xbf16>, vector<8x128xf32> -> vector<8x128xf32>
    %36 = arith.addf %30, %35 : vector<8x128xf32>
    %c0_39 = arith.constant 0 : index
    %c1_40 = arith.constant 1 : index
    %c0_41 = arith.constant 0 : index
    %c0_42 = arith.constant 0 : index
    %37 = vector.load %arg2[%c0_39, %c1_40, %c0_41, %c0_42] : memref<1x36x9x128xbf16, #tpu.memory_space<vmem>>, vector<1x1x8x128xbf16>
    %38 = vector.shape_cast %37 : vector<1x1x8x128xbf16> to vector<8x128xbf16>
    %c6 = arith.constant 6 : index
    %c0_43 = arith.constant 0 : index
    %c0_44 = arith.constant 0 : index
    %39 = vector.load %arg3[%c6, %c0_43, %c0_44] : memref<9x128x128xbf16, #tpu.memory_space<vmem>>, vector<1x128x128xbf16>
    %40 = vector.shape_cast %39 : vector<1x128x128xbf16> to vector<128x128xbf16>
    %cst_45 = arith.constant dense<0.000000e+00> : vector<8x128xf32>
    %41 = tpu.matmul %38, %40, %cst_45 {dimension_numbers = #tpu.dot_dimension_numbers<[1], [0], [0], [1], [0, 0, 1, 1], [], []>} : vector<8x128xbf16>, vector<128x128xbf16>, vector<8x128xf32> -> vector<8x128xf32>
    %42 = arith.addf %36, %41 : vector<8x128xf32>
    %c0_46 = arith.constant 0 : index
    %c10 = arith.constant 10 : index
    %c0_47 = arith.constant 0 : index
    %c0_48 = arith.constant 0 : index
    %43 = vector.load %arg2[%c0_46, %c10, %c0_47, %c0_48] : memref<1x36x9x128xbf16, #tpu.memory_space<vmem>>, vector<1x1x8x128xbf16>
    %44 = vector.shape_cast %43 : vector<1x1x8x128xbf16> to vector<8x128xbf16>
    %c7 = arith.constant 7 : index
    %c0_49 = arith.constant 0 : index
    %c0_50 = arith.constant 0 : index
    %45 = vector.load %arg3[%c7, %c0_49, %c0_50] : memref<9x128x128xbf16, #tpu.memory_space<vmem>>, vector<1x128x128xbf16>
    %46 = vector.shape_cast %45 : vector<1x128x128xbf16> to vector<128x128xbf16>
    %cst_51 = arith.constant dense<0.000000e+00> : vector<8x128xf32>
    %47 = tpu.matmul %44, %46, %cst_51 {dimension_numbers = #tpu.dot_dimension_numbers<[1], [0], [0], [1], [0, 0, 1, 1], [], []>} : vector<8x128xbf16>, vector<128x128xbf16>, vector<8x128xf32> -> vector<8x128xf32>
    %48 = arith.addf %42, %47 : vector<8x128xf32>
    %c0_52 = arith.constant 0 : index
    %c1_53 = arith.constant 1 : index
    %c1_54 = arith.constant 1 : index
    %c0_55 = arith.constant 0 : index
    %49 = vector.load %arg2[%c0_52, %c1_53, %c1_54, %c0_55] : memref<1x36x9x128xbf16, #tpu.memory_space<vmem>>, vector<1x1x8x128xbf16>
    %50 = vector.shape_cast %49 : vector<1x1x8x128xbf16> to vector<8x128xbf16>
    %c8 = arith.constant 8 : index
    %c0_56 = arith.constant 0 : index
    %c0_57 = arith.constant 0 : index
    %51 = vector.load %arg3[%c8, %c0_56, %c0_57] : memref<9x128x128xbf16, #tpu.memory_space<vmem>>, vector<1x128x128xbf16>
    %52 = vector.shape_cast %51 : vector<1x128x128xbf16> to vector<128x128xbf16>
    %cst_58 = arith.constant dense<0.000000e+00> : vector<8x128xf32>
    %53 = tpu.matmul %50, %52, %cst_58 {dimension_numbers = #tpu.dot_dimension_numbers<[1], [0], [0], [1], [0, 0, 1, 1], [], []>} : vector<8x128xbf16>, vector<128x128xbf16>, vector<8x128xf32> -> vector<8x128xf32>
    %54 = arith.addf %48, %53 : vector<8x128xf32>
    %c0_59 = arith.constant 0 : index
    %c0_60 = arith.constant 0 : index
    %55 = vector.load %arg7[%c0_59, %c0_60] : memref<64x128xf32, #tpu.memory_space<vmem>>, vector<8x128xf32>
    tpu.vector_store %arg7[%c0_59, %c0_60], %54 {strides = array<i32>} : memref<64x128xf32, #tpu.memory_space<vmem>>, vector<8x128xf32>,
    %cst_61 = arith.constant 0.000000e+00 : f32
    %56 = vector.broadcast %cst_61 : f32 to vector<8x128xf32>
    %c0_62 = arith.constant 0 : index
    %c1_63 = arith.constant 1 : index
    %c0_64 = arith.constant 0 : index
    %c0_65 = arith.constant 0 : index
    %57 = vector.load %arg2[%c0_62, %c1_63, %c0_64, %c0_65] : memref<1x36x9x128xbf16, #tpu.memory_space<vmem>>, vector<1x1x8x128xbf16>
    %58 = vector.shape_cast %57 : vector<1x1x8x128xbf16> to vector<8x128xbf16>
    %c0_66 = arith.constant 0 : index
    %c0_67 = arith.constant 0 : index
    %c0_68 = arith.constant 0 : index
    %59 = vector.load %arg3[%c0_66, %c0_67, %c0_68] : memref<9x128x128xbf16, #tpu.memory_space<vmem>>, vector<1x128x128xbf16>
    %60 = vector.shape_cast %59 : vector<1x128x128xbf16> to vector<128x128xbf16>
    %cst_69 = arith.constant dense<0.000000e+00> : vector<8x128xf32>
    %61 = tpu.matmul %58, %60, %cst_69 {dimension_numbers = #tpu.dot_dimension_numbers<[1], [0], [0], [1], [0, 0, 1, 1], [], []>} : vector<8x128xbf16>, vector<128x128xbf16>, vector<8x128xf32> -> vector<8x128xf32>
    %62 = arith.addf %56, %61 : vector<8x128xf32>
    %c0_70 = arith.constant 0 : index
    %c10_71 = arith.constant 10 : index
    %c0_72 = arith.constant 0 : index
    %c0_73 = arith.constant 0 : index
    %63 = vector.load %arg2[%c0_70, %c10_71, %c0_72, %c0_73] : memref<1x36x9x128xbf16, #tpu.memory_space<vmem>>, vector<1x1x8x128xbf16>
    %64 = vector.shape_cast %63 : vector<1x1x8x128xbf16> to vector<8x128xbf16>
    %c1_74 = arith.constant 1 : index
    %c0_75 = arith.constant 0 : index
    %c0_76 = arith.constant 0 : index
    %65 = vector.load %arg3[%c1_74, %c0_75, %c0_76] : memref<9x128x128xbf16, #tpu.memory_space<vmem>>, vector<1x128x128xbf16>
    %66 = vector.shape_cast %65 : vector<1x128x128xbf16> to vector<128x128xbf16>
    %cst_77 = arith.constant dense<0.000000e+00> : vector<8x128xf32>
    %67 = tpu.matmul %64, %66, %cst_77 {dimension_numbers = #tpu.dot_dimension_numbers<[1], [0], [0], [1], [0, 0, 1, 1], [], []>} : vector<8x128xbf16>, vector<128x128xbf16>, vector<8x128xf32> -> vector<8x128xf32>
    %68 = arith.addf %62, %67 : vector<8x128xf32>
    %c0_78 = arith.constant 0 : index
    %c1_79 = arith.constant 1 : index
    %c1_80 = arith.constant 1 : index
    %c0_81 = arith.constant 0 : index
    %69 = vector.load %arg2[%c0_78, %c1_79, %c1_80, %c0_81] : memref<1x36x9x128xbf16, #tpu.memory_space<vmem>>, vector<1x1x8x128xbf16>
    %70 = vector.shape_cast %69 : vector<1x1x8x128xbf16> to vector<8x128xbf16>
    %c2_82 = arith.constant 2 : index
    %c0_83 = arith.constant 0 : index
    %c0_84 = arith.constant 0 : index
    %71 = vector.load %arg3[%c2_82, %c0_83, %c0_84] : memref<9x128x128xbf16, #tpu.memory_space<vmem>>, vector<1x128x128xbf16>
    %72 = vector.shape_cast %71 : vector<1x128x128xbf16> to vector<128x128xbf16>
    %cst_85 = arith.constant dense<0.000000e+00> : vector<8x128xf32>
    %73 = tpu.matmul %70, %72, %cst_85 {dimension_numbers = #tpu.dot_dimension_numbers<[1], [0], [0], [1], [0, 0, 1, 1], [], []>} : vector<8x128xbf16>, vector<128x128xbf16>, vector<8x128xf32> -> vector<8x128xf32>
    %74 = arith.addf %68, %73 : vector<8x128xf32>
    %c0_86 = arith.constant 0 : index
    %c19 = arith.constant 19 : index
    %c0_87 = arith.constant 0 : index
    %c0_88 = arith.constant 0 : index
    %75 = vector.load %arg2[%c0_86, %c19, %c0_87, %c0_88] : memref<1x36x9x128xbf16, #tpu.memory_space<vmem>>, vector<1x1x8x128xbf16>
    %76 = vector.shape_cast %75 : vector<1x1x8x128xbf16> to vector<8x128xbf16>
    %c3_89 = arith.constant 3 : index
    %c0_90 = arith.constant 0 : index
    %c0_91 = arith.constant 0 : index
    %77 = vector.load %arg3[%c3_89, %c0_90, %c0_91] : memref<9x128x128xbf16, #tpu.memory_space<vmem>>, vector<1x128x128xbf16>
    %78 = vector.shape_cast %77 : vector<1x128x128xbf16> to vector<128x128xbf16>
    %cst_92 = arith.constant dense<0.000000e+00> : vector<8x128xf32>
    %79 = tpu.matmul %76, %78, %cst_92 {dimension_numbers = #tpu.dot_dimension_numbers<[1], [0], [0], [1], [0, 0, 1, 1], [], []>} : vector<8x128xbf16>, vector<128x128xbf16>, vector<8x128xf32> -> vector<8x128xf32>
    %80 = arith.addf %74, %79 : vector<8x128xf32>
    %c0_93 = arith.constant 0 : index
    %c28 = arith.constant 28 : index
    %c0_94 = arith.constant 0 : index
    %c0_95 = arith.constant 0 : index
    %81 = vector.load %arg2[%c0_93, %c28, %c0_94, %c0_95] : memref<1x36x9x128xbf16, #tpu.memory_space<vmem>>, vector<1x1x8x128xbf16>
    %82 = vector.shape_cast %81 : vector<1x1x8x128xbf16> to vector<8x128xbf16>
    %c4_96 = arith.constant 4 : index
    %c0_97 = arith.constant 0 : index
    %c0_98 = arith.constant 0 : index
    %83 = vector.load %arg3[%c4_96, %c0_97, %c0_98] : memref<9x128x128xbf16, #tpu.memory_space<vmem>>, vector<1x128x128xbf16>
    %84 = vector.shape_cast %83 : vector<1x128x128xbf16> to vector<128x128xbf16>
    %cst_99 = arith.constant dense<0.000000e+00> : vector<8x128xf32>
    %85 = tpu.matmul %82, %84, %cst_99 {dimension_numbers = #tpu.dot_dimension_numbers<[1], [0], [0], [1], [0, 0, 1, 1], [], []>} : vector<8x128xbf16>, vector<128x128xbf16>, vector<8x128xf32> -> vector<8x128xf32>
    %86 = arith.addf %80, %85 : vector<8x128xf32>
    %c0_100 = arith.constant 0 : index
    %c19_101 = arith.constant 19 : index
    %c1_102 = arith.constant 1 : index
    %c0_103 = arith.constant 0 : index
    %87 = vector.load %arg2[%c0_100, %c19_101, %c1_102, %c0_103] : memref<1x36x9x128xbf16, #tpu.memory_space<vmem>>, vector<1x1x8x128xbf16>
    %88 = vector.shape_cast %87 : vector<1x1x8x128xbf16> to vector<8x128xbf16>
    %c5_104 = arith.constant 5 : index
    %c0_105 = arith.constant 0 : index
    %c0_106 = arith.constant 0 : index
    %89 = vector.load %arg3[%c5_104, %c0_105, %c0_106] : memref<9x128x128xbf16, #tpu.memory_space<vmem>>, vector<1x128x128xbf16>
    %90 = vector.shape_cast %89 : vector<1x128x128xbf16> to vector<128x128xbf16>
    %cst_107 = arith.constant dense<0.000000e+00> : vector<8x128xf32>
    %91 = tpu.matmul %88, %90, %cst_107 {dimension_numbers = #tpu.dot_dimension_numbers<[1], [0], [0], [1], [0, 0, 1, 1], [], []>} : vector<8x128xbf16>, vector<128x128xbf16>, vector<8x128xf32> -> vector<8x128xf32>
    %92 = arith.addf %86, %91 : vector<8x128xf32>
    %c0_108 = arith.constant 0 : index
    %c2_109 = arith.constant 2 : index
    %c0_110 = arith.constant 0 : index
    %c0_111 = arith.constant 0 : index
    %93 = vector.load %arg2[%c0_108, %c2_109, %c0_110, %c0_111] : memref<1x36x9x128xbf16, #tpu.memory_space<vmem>>, vector<1x1x8x128xbf16>
    %94 = vector.shape_cast %93 : vector<1x1x8x128xbf16> to vector<8x128xbf16>
    %c6_112 = arith.constant 6 : index
    %c0_113 = arith.constant 0 : index
    %c0_114 = arith.constant 0 : index
    %95 = vector.load %arg3[%c6_112, %c0_113, %c0_114] : memref<9x128x128xbf16, #tpu.memory_space<vmem>>, vector<1x128x128xbf16>
    %96 = vector.shape_cast %95 : vector<1x128x128xbf16> to vector<128x128xbf16>
    %cst_115 = arith.constant dense<0.000000e+00> : vector<8x128xf32>
    %97 = tpu.matmul %94, %96, %cst_115 {dimension_numbers = #tpu.dot_dimension_numbers<[1], [0], [0], [1], [0, 0, 1, 1], [], []>} : vector<8x128xbf16>, vector<128x128xbf16>, vector<8x128xf32> -> vector<8x128xf32>
    %98 = arith.addf %92, %97 : vector<8x128xf32>
    %c0_116 = arith.constant 0 : index
    %c11 = arith.constant 11 : index
    %c0_117 = arith.constant 0 : index
    %c0_118 = arith.constant 0 : index
    %99 = vector.load %arg2[%c0_116, %c11, %c0_117, %c0_118] : memref<1x36x9x128xbf16, #tpu.memory_space<vmem>>, vector<1x1x8x128xbf16>
    %100 = vector.shape_cast %99 : vector<1x1x8x128xbf16> to vector<8x128xbf16>
    %c7_119 = arith.constant 7 : index
    %c0_120 = arith.constant 0 : index
    %c0_121 = arith.constant 0 : index
    %101 = vector.load %arg3[%c7_119, %c0_120, %c0_121] : memref<9x128x128xbf16, #tpu.memory_space<vmem>>, vector<1x128x128xbf16>
    %102 = vector.shape_cast %101 : vector<1x128x128xbf16> to vector<128x128xbf16>
    %cst_122 = arith.constant dense<0.000000e+00> : vector<8x128xf32>
    %103 = tpu.matmul %100, %102, %cst_122 {dimension_numbers = #tpu.dot_dimension_numbers<[1], [0], [0], [1], [0, 0, 1, 1], [], []>} : vector<8x128xbf16>, vector<128x128xbf16>, vector<8x128xf32> -> vector<8x128xf32>
    %104 = arith.addf %98, %103 : vector<8x128xf32>
    %c0_123 = arith.constant 0 : index
    %c2_124 = arith.constant 2 : index
    %c1_125 = arith.constant 1 : index
    %c0_126 = arith.constant 0 : index
    %105 = vector.load %arg2[%c0_123, %c2_124, %c1_125, %c0_126] : memref<1x36x9x128xbf16, #tpu.memory_space<vmem>>, vector<1x1x8x128xbf16>
    %106 = vector.shape_cast %105 : vector<1x1x8x128xbf16> to vector<8x128xbf16>
    %c8_127 = arith.constant 8 : index
    %c0_128 = arith.constant 0 : index
    %c0_129 = arith.constant 0 : index
    %107 = vector.load %arg3[%c8_127, %c0_128, %c0_129] : memref<9x128x128xbf16, #tpu.memory_space<vmem>>, vector<1x128x128xbf16>
    %108 = vector.shape_cast %107 : vector<1x128x128xbf16> to vector<128x128xbf16>
    %cst_130 = arith.constant dense<0.000000e+00> : vector<8x128xf32>
    %109 = tpu.matmul %106, %108, %cst_130 {dimension_numbers = #tpu.dot_dimension_numbers<[1], [0], [0], [1], [0, 0, 1, 1], [], []>} : vector<8x128xbf16>, vector<128x128xbf16>, vector<8x128xf32> -> vector<8x128xf32>
    %110 = arith.addf %104, %109 : vector<8x128xf32>
    %c8_131 = arith.constant 8 : index
    %c0_132 = arith.constant 0 : index
    %111 = vector.load %arg7[%c8_131, %c0_132] : memref<64x128xf32, #tpu.memory_space<vmem>>, vector<8x128xf32>
    tpu.vector_store %arg7[%c8_131, %c0_132], %110 {strides = array<i32>} : memref<64x128xf32, #tpu.memory_space<vmem>>, vector<8x128xf32>,
    %cst_133 = arith.constant 0.000000e+00 : f32
    %112 = vector.broadcast %cst_133 : f32 to vector<8x128xf32>
    %c0_134 = arith.constant 0 : index
    %c2_135 = arith.constant 2 : index
    %c0_136 = arith.constant 0 : index
    %c0_137 = arith.constant 0 : index
    %113 = vector.load %arg2[%c0_134, %c2_135, %c0_136, %c0_137] : memref<1x36x9x128xbf16, #tpu.memory_space<vmem>>, vector<1x1x8x128xbf16>
    %114 = vector.shape_cast %113 : vector<1x1x8x128xbf16> to vector<8x128xbf16>
    %c0_138 = arith.constant 0 : index
    %c0_139 = arith.constant 0 : index
    %c0_140 = arith.constant 0 : index
    %115 = vector.load %arg3[%c0_138, %c0_139, %c0_140] : memref<9x128x128xbf16, #tpu.memory_space<vmem>>, vector<1x128x128xbf16>
    %116 = vector.shape_cast %115 : vector<1x128x128xbf16> to vector<128x128xbf16>
    %cst_141 = arith.constant dense<0.000000e+00> : vector<8x128xf32>
    %117 = tpu.matmul %114, %116, %cst_141 {dimension_numbers = #tpu.dot_dimension_numbers<[1], [0], [0], [1], [0, 0, 1, 1], [], []>} : vector<8x128xbf16>, vector<128x128xbf16>, vector<8x128xf32> -> vector<8x128xf32>
    %118 = arith.addf %112, %117 : vector<8x128xf32>
    %c0_142 = arith.constant 0 : index
    %c11_143 = arith.constant 11 : index
    %c0_144 = arith.constant 0 : index
    %c0_145 = arith.constant 0 : index
    %119 = vector.load %arg2[%c0_142, %c11_143, %c0_144, %c0_145] : memref<1x36x9x128xbf16, #tpu.memory_space<vmem>>, vector<1x1x8x128xbf16>
    %120 = vector.shape_cast %119 : vector<1x1x8x128xbf16> to vector<8x128xbf16>
    %c1_146 = arith.constant 1 : index
    %c0_147 = arith.constant 0 : index
    %c0_148 = arith.constant 0 : index
    %121 = vector.load %arg3[%c1_146, %c0_147, %c0_148] : memref<9x128x128xbf16, #tpu.memory_space<vmem>>, vector<1x128x128xbf16>
    %122 = vector.shape_cast %121 : vector<1x128x128xbf16> to vector<128x128xbf16>
    %cst_149 = arith.constant dense<0.000000e+00> : vector<8x128xf32>
    %123 = tpu.matmul %120, %122, %cst_149 {dimension_numbers = #tpu.dot_dimension_numbers<[1], [0], [0], [1], [0, 0, 1, 1], [], []>} : vector<8x128xbf16>, vector<128x128xbf16>, vector<8x128xf32> -> vector<8x128xf32>
    %124 = arith.addf %118, %123 : vector<8x128xf32>
    %c0_150 = arith.constant 0 : index
    %c2_151 = arith.constant 2 : index
    %c1_152 = arith.constant 1 : index
    %c0_153 = arith.constant 0 : index
    %125 = vector.load %arg2[%c0_150, %c2_151, %c1_152, %c0_153] : memref<1x36x9x128xbf16, #tpu.memory_space<vmem>>, vector<1x1x8x128xbf16>
    %126 = vector.shape_cast %125 : vector<1x1x8x128xbf16> to vector<8x128xbf16>
    %c2_154 = arith.constant 2 : index
    %c0_155 = arith.constant 0 : index
    %c0_156 = arith.constant 0 : index
    %127 = vector.load %arg3[%c2_154, %c0_155, %c0_156] : memref<9x128x128xbf16, #tpu.memory_space<vmem>>, vector<1x128x128xbf16>
    %128 = vector.shape_cast %127 : vector<1x128x128xbf16> to vector<128x128xbf16>
    %cst_157 = arith.constant dense<0.000000e+00> : vector<8x128xf32>
    %129 = tpu.matmul %126, %128, %cst_157 {dimension_numbers = #tpu.dot_dimension_numbers<[1], [0], [0], [1], [0, 0, 1, 1], [], []>} : vector<8x128xbf16>, vector<128x128xbf16>, vector<8x128xf32> -> vector<8x128xf32>
    %130 = arith.addf %124, %129 : vector<8x128xf32>
    %c0_158 = arith.constant 0 : index
    %c20 = arith.constant 20 : index
    %c0_159 = arith.constant 0 : index
    %c0_160 = arith.constant 0 : index
    %131 = vector.load %arg2[%c0_158, %c20, %c0_159, %c0_160] : memref<1x36x9x128xbf16, #tpu.memory_space<vmem>>, vector<1x1x8x128xbf16>
    %132 = vector.shape_cast %131 : vector<1x1x8x128xbf16> to vector<8x128xbf16>
    %c3_161 = arith.constant 3 : index
    %c0_162 = arith.constant 0 : index
    %c0_163 = arith.constant 0 : index
    %133 = vector.load %arg3[%c3_161, %c0_162, %c0_163] : memref<9x128x128xbf16, #tpu.memory_space<vmem>>, vector<1x128x128xbf16>
    %134 = vector.shape_cast %133 : vector<1x128x128xbf16> to vector<128x128xbf16>
    %cst_164 = arith.constant dense<0.000000e+00> : vector<8x128xf32>
    %135 = tpu.matmul %132, %134, %cst_164 {dimension_numbers = #tpu.dot_dimension_numbers<[1], [0], [0], [1], [0, 0, 1, 1], [], []>} : vector<8x128xbf16>, vector<128x128xbf16>, vector<8x128xf32> -> vector<8x128xf32>
    %136 = arith.addf %130, %135 : vector<8x128xf32>
    %c0_165 = arith.constant 0 : index
    %c29 = arith.constant 29 : index
    %c0_166 = arith.constant 0 : index
    %c0_167 = arith.constant 0 : index
    %137 = vector.load %arg2[%c0_165, %c29, %c0_166, %c0_167] : memref<1x36x9x128xbf16, #tpu.memory_space<vmem>>, vector<1x1x8x128xbf16>
    %138 = vector.shape_cast %137 : vector<1x1x8x128xbf16> to vector<8x128xbf16>
    %c4_168 = arith.constant 4 : index
    %c0_169 = arith.constant 0 : index
    %c0_170 = arith.constant 0 : index
    %139 = vector.load %arg3[%c4_168, %c0_169, %c0_170] : memref<9x128x128xbf16, #tpu.memory_space<vmem>>, vector<1x128x128xbf16>
    %140 = vector.shape_cast %139 : vector<1x128x128xbf16> to vector<128x128xbf16>
    %cst_171 = arith.constant dense<0.000000e+00> : vector<8x128xf32>
    %141 = tpu.matmul %138, %140, %cst_171 {dimension_numbers = #tpu.dot_dimension_numbers<[1], [0], [0], [1], [0, 0, 1, 1], [], []>} : vector<8x128xbf16>, vector<128x128xbf16>, vector<8x128xf32> -> vector<8x128xf32>
    %142 = arith.addf %136, %141 : vector<8x128xf32>
    %c0_172 = arith.constant 0 : index
    %c20_173 = arith.constant 20 : index
    %c1_174 = arith.constant 1 : index
    %c0_175 = arith.constant 0 : index
    %143 = vector.load %arg2[%c0_172, %c20_173, %c1_174, %c0_175] : memref<1x36x9x128xbf16, #tpu.memory_space<vmem>>, vector<1x1x8x128xbf16>
    %144 = vector.shape_cast %143 : vector<1x1x8x128xbf16> to vector<8x128xbf16>
    %c5_176 = arith.constant 5 : index
    %c0_177 = arith.constant 0 : index
    %c0_178 = arith.constant 0 : index
    %145 = vector.load %arg3[%c5_176, %c0_177, %c0_178] : memref<9x128x128xbf16, #tpu.memory_space<vmem>>, vector<1x128x128xbf16>
    %146 = vector.shape_cast %145 : vector<1x128x128xbf16> to vector<128x128xbf16>
    %cst_179 = arith.constant dense<0.000000e+00> : vector<8x128xf32>
    %147 = tpu.matmul %144, %146, %cst_179 {dimension_numbers = #tpu.dot_dimension_numbers<[1], [0], [0], [1], [0, 0, 1, 1], [], []>} : vector<8x128xbf16>, vector<128x128xbf16>, vector<8x128xf32> -> vector<8x128xf32>
    %148 = arith.addf %142, %147 : vector<8x128xf32>
    %c0_180 = arith.constant 0 : index
    %c3_181 = arith.constant 3 : index
    %c0_182 = arith.constant 0 : index
    %c0_183 = arith.constant 0 : index
    %149 = vector.load %arg2[%c0_180, %c3_181, %c0_182, %c0_183] : memref<1x36x9x128xbf16, #tpu.memory_space<vmem>>, vector<1x1x8x128xbf16>
    %150 = vector.shape_cast %149 : vector<1x1x8x128xbf16> to vector<8x128xbf16>
    %c6_184 = arith.constant 6 : index
    %c0_185 = arith.constant 0 : index
    %c0_186 = arith.constant 0 : index
    %151 = vector.load %arg3[%c6_184, %c0_185, %c0_186] : memref<9x128x128xbf16, #tpu.memory_space<vmem>>, vector<1x128x128xbf16>
    %152 = vector.shape_cast %151 : vector<1x128x128xbf16> to vector<128x128xbf16>
    %cst_187 = arith.constant dense<0.000000e+00> : vector<8x128xf32>
    %153 = tpu.matmul %150, %152, %cst_187 {dimension_numbers = #tpu.dot_dimension_numbers<[1], [0], [0], [1], [0, 0, 1, 1], [], []>} : vector<8x128xbf16>, vector<128x128xbf16>, vector<8x128xf32> -> vector<8x128xf32>
    %154 = arith.addf %148, %153 : vector<8x128xf32>
    %c0_188 = arith.constant 0 : index
    %c12 = arith.constant 12 : index
    %c0_189 = arith.constant 0 : index
    %c0_190 = arith.constant 0 : index
    %155 = vector.load %arg2[%c0_188, %c12, %c0_189, %c0_190] : memref<1x36x9x128xbf16, #tpu.memory_space<vmem>>, vector<1x1x8x128xbf16>
    %156 = vector.shape_cast %155 : vector<1x1x8x128xbf16> to vector<8x128xbf16>
    %c7_191 = arith.constant 7 : index
    %c0_192 = arith.constant 0 : index
    %c0_193 = arith.constant 0 : index
    %157 = vector.load %arg3[%c7_191, %c0_192, %c0_193] : memref<9x128x128xbf16, #tpu.memory_space<vmem>>, vector<1x128x128xbf16>
    %158 = vector.shape_cast %157 : vector<1x128x128xbf16> to vector<128x128xbf16>
    %cst_194 = arith.constant dense<0.000000e+00> : vector<8x128xf32>
    %159 = tpu.matmul %156, %158, %cst_194 {dimension_numbers = #tpu.dot_dimension_numbers<[1], [0], [0], [1], [0, 0, 1, 1], [], []>} : vector<8x128xbf16>, vector<128x128xbf16>, vector<8x128xf32> -> vector<8x128xf32>
    %160 = arith.addf %154, %159 : vector<8x128xf32>
    %c0_195 = arith.constant 0 : index
    %c3_196 = arith.constant 3 : index
    %c1_197 = arith.constant 1 : index
    %c0_198 = arith.constant 0 : index
    %161 = vector.load %arg2[%c0_195, %c3_196, %c1_197, %c0_198] : memref<1x36x9x128xbf16, #tpu.memory_space<vmem>>, vector<1x1x8x128xbf16>
    %162 = vector.shape_cast %161 : vector<1x1x8x128xbf16> to vector<8x128xbf16>
    %c8_199 = arith.constant 8 : index
    %c0_200 = arith.constant 0 : index
    %c0_201 = arith.constant 0 : index
    %163 = vector.load %arg3[%c8_199, %c0_200, %c0_201] : memref<9x128x128xbf16, #tpu.memory_space<vmem>>, vector<1x128x128xbf16>
    %164 = vector.shape_cast %163 : vector<1x128x128xbf16> to vector<128x128xbf16>
    %cst_202 = arith.constant dense<0.000000e+00> : vector<8x128xf32>
    %165 = tpu.matmul %162, %164, %cst_202 {dimension_numbers = #tpu.dot_dimension_numbers<[1], [0], [0], [1], [0, 0, 1, 1], [], []>} : vector<8x128xbf16>, vector<128x128xbf16>, vector<8x128xf32> -> vector<8x128xf32>
    %166 = arith.addf %160, %165 : vector<8x128xf32>
    %c16 = arith.constant 16 : index
    %c0_203 = arith.constant 0 : index
    %167 = vector.load %arg7[%c16, %c0_203] : memref<64x128xf32, #tpu.memory_space<vmem>>, vector<8x128xf32>
    tpu.vector_store %arg7[%c16, %c0_203], %166 {strides = array<i32>} : memref<64x128xf32, #tpu.memory_space<vmem>>, vector<8x128xf32>,
    %cst_204 = arith.constant 0.000000e+00 : f32
    %168 = vector.broadcast %cst_204 : f32 to vector<8x128xf32>
    %c0_205 = arith.constant 0 : index
    %c3_206 = arith.constant 3 : index
    %c0_207 = arith.constant 0 : index
    %c0_208 = arith.constant 0 : index
    %169 = vector.load %arg2[%c0_205, %c3_206, %c0_207, %c0_208] : memref<1x36x9x128xbf16, #tpu.memory_space<vmem>>, vector<1x1x8x128xbf16>
    %170 = vector.shape_cast %169 : vector<1x1x8x128xbf16> to vector<8x128xbf16>
    %c0_209 = arith.constant 0 : index
    %c0_210 = arith.constant 0 : index
    %c0_211 = arith.constant 0 : index
    %171 = vector.load %arg3[%c0_209, %c0_210, %c0_211] : memref<9x128x128xbf16, #tpu.memory_space<vmem>>, vector<1x128x128xbf16>
    %172 = vector.shape_cast %171 : vector<1x128x128xbf16> to vector<128x128xbf16>
    %cst_212 = arith.constant dense<0.000000e+00> : vector<8x128xf32>
    %173 = tpu.matmul %170, %172, %cst_212 {dimension_numbers = #tpu.dot_dimension_numbers<[1], [0], [0], [1], [0, 0, 1, 1], [], []>} : vector<8x128xbf16>, vector<128x128xbf16>, vector<8x128xf32> -> vector<8x128xf32>
    %174 = arith.addf %168, %173 : vector<8x128xf32>
    %c0_213 = arith.constant 0 : index
    %c12_214 = arith.constant 12 : index
    %c0_215 = arith.constant 0 : index
    %c0_216 = arith.constant 0 : index
    %175 = vector.load %arg2[%c0_213, %c12_214, %c0_215, %c0_216] : memref<1x36x9x128xbf16, #tpu.memory_space<vmem>>, vector<1x1x8x128xbf16>
    %176 = vector.shape_cast %175 : vector<1x1x8x128xbf16> to vector<8x128xbf16>
    %c1_217 = arith.constant 1 : index
    %c0_218 = arith.constant 0 : index
    %c0_219 = arith.constant 0 : index
    %177 = vector.load %arg3[%c1_217, %c0_218, %c0_219] : memref<9x128x128xbf16, #tpu.memory_space<vmem>>, vector<1x128x128xbf16>
    %178 = vector.shape_cast %177 : vector<1x128x128xbf16> to vector<128x128xbf16>
    %cst_220 = arith.constant dense<0.000000e+00> : vector<8x128xf32>
    %179 = tpu.matmul %176, %178, %cst_220 {dimension_numbers = #tpu.dot_dimension_numbers<[1], [0], [0], [1], [0, 0, 1, 1], [], []>} : vector<8x128xbf16>, vector<128x128xbf16>, vector<8x128xf32> -> vector<8x128xf32>
    %180 = arith.addf %174, %179 : vector<8x128xf32>
    %c0_221 = arith.constant 0 : index
    %c3_222 = arith.constant 3 : index
    %c1_223 = arith.constant 1 : index
    %c0_224 = arith.constant 0 : index
    %181 = vector.load %arg2[%c0_221, %c3_222, %c1_223, %c0_224] : memref<1x36x9x128xbf16, #tpu.memory_space<vmem>>, vector<1x1x8x128xbf16>
    %182 = vector.shape_cast %181 : vector<1x1x8x128xbf16> to vector<8x128xbf16>
    %c2_225 = arith.constant 2 : index
    %c0_226 = arith.constant 0 : index
    %c0_227 = arith.constant 0 : index
    %183 = vector.load %arg3[%c2_225, %c0_226, %c0_227] : memref<9x128x128xbf16, #tpu.memory_space<vmem>>, vector<1x128x128xbf16>
    %184 = vector.shape_cast %183 : vector<1x128x128xbf16> to vector<128x128xbf16>
    %cst_228 = arith.constant dense<0.000000e+00> : vector<8x128xf32>
    %185 = tpu.matmul %182, %184, %cst_228 {dimension_numbers = #tpu.dot_dimension_numbers<[1], [0], [0], [1], [0, 0, 1, 1], [], []>} : vector<8x128xbf16>, vector<128x128xbf16>, vector<8x128xf32> -> vector<8x128xf32>
    %186 = arith.addf %180, %185 : vector<8x128xf32>
    %c0_229 = arith.constant 0 : index
    %c21 = arith.constant 21 : index
    %c0_230 = arith.constant 0 : index
    %c0_231 = arith.constant 0 : index
    %187 = vector.load %arg2[%c0_229, %c21, %c0_230, %c0_231] : memref<1x36x9x128xbf16, #tpu.memory_space<vmem>>, vector<1x1x8x128xbf16>
    %188 = vector.shape_cast %187 : vector<1x1x8x128xbf16> to vector<8x128xbf16>
    %c3_232 = arith.constant 3 : index
    %c0_233 = arith.constant 0 : index
    %c0_234 = arith.constant 0 : index
    %189 = vector.load %arg3[%c3_232, %c0_233, %c0_234] : memref<9x128x128xbf16, #tpu.memory_space<vmem>>, vector<1x128x128xbf16>
    %190 = vector.shape_cast %189 : vector<1x128x128xbf16> to vector<128x128xbf16>
    %cst_235 = arith.constant dense<0.000000e+00> : vector<8x128xf32>
    %191 = tpu.matmul %188, %190, %cst_235 {dimension_numbers = #tpu.dot_dimension_numbers<[1], [0], [0], [1], [0, 0, 1, 1], [], []>} : vector<8x128xbf16>, vector<128x128xbf16>, vector<8x128xf32> -> vector<8x128xf32>
    %192 = arith.addf %186, %191 : vector<8x128xf32>
    %c0_236 = arith.constant 0 : index
    %c30 = arith.constant 30 : index
    %c0_237 = arith.constant 0 : index
    %c0_238 = arith.constant 0 : index
    %193 = vector.load %arg2[%c0_236, %c30, %c0_237, %c0_238] : memref<1x36x9x128xbf16, #tpu.memory_space<vmem>>, vector<1x1x8x128xbf16>
    %194 = vector.shape_cast %193 : vector<1x1x8x128xbf16> to vector<8x128xbf16>
    %c4_239 = arith.constant 4 : index
    %c0_240 = arith.constant 0 : index
    %c0_241 = arith.constant 0 : index
    %195 = vector.load %arg3[%c4_239, %c0_240, %c0_241] : memref<9x128x128xbf16, #tpu.memory_space<vmem>>, vector<1x128x128xbf16>
    %196 = vector.shape_cast %195 : vector<1x128x128xbf16> to vector<128x128xbf16>
    %cst_242 = arith.constant dense<0.000000e+00> : vector<8x128xf32>
    %197 = tpu.matmul %194, %196, %cst_242 {dimension_numbers = #tpu.dot_dimension_numbers<[1], [0], [0], [1], [0, 0, 1, 1], [], []>} : vector<8x128xbf16>, vector<128x128xbf16>, vector<8x128xf32> -> vector<8x128xf32>
    %198 = arith.addf %192, %197 : vector<8x128xf32>
    %c0_243 = arith.constant 0 : index
    %c21_244 = arith.constant 21 : index
    %c1_245 = arith.constant 1 : index
    %c0_246 = arith.constant 0 : index
    %199 = vector.load %arg2[%c0_243, %c21_244, %c1_245, %c0_246] : memref<1x36x9x128xbf16, #tpu.memory_space<vmem>>, vector<1x1x8x128xbf16>
    %200 = vector.shape_cast %199 : vector<1x1x8x128xbf16> to vector<8x128xbf16>
    %c5_247 = arith.constant 5 : index
    %c0_248 = arith.constant 0 : index
    %c0_249 = arith.constant 0 : index
    %201 = vector.load %arg3[%c5_247, %c0_248, %c0_249] : memref<9x128x128xbf16, #tpu.memory_space<vmem>>, vector<1x128x128xbf16>
    %202 = vector.shape_cast %201 : vector<1x128x128xbf16> to vector<128x128xbf16>
    %cst_250 = arith.constant dense<0.000000e+00> : vector<8x128xf32>
    %203 = tpu.matmul %200, %202, %cst_250 {dimension_numbers = #tpu.dot_dimension_numbers<[1], [0], [0], [1], [0, 0, 1, 1], [], []>} : vector<8x128xbf16>, vector<128x128xbf16>, vector<8x128xf32> -> vector<8x128xf32>
    %204 = arith.addf %198, %203 : vector<8x128xf32>
    %c0_251 = arith.constant 0 : index
    %c4_252 = arith.constant 4 : index
    %c0_253 = arith.constant 0 : index
    %c0_254 = arith.constant 0 : index
    %205 = vector.load %arg2[%c0_251, %c4_252, %c0_253, %c0_254] : memref<1x36x9x128xbf16, #tpu.memory_space<vmem>>, vector<1x1x8x128xbf16>
    %206 = vector.shape_cast %205 : vector<1x1x8x128xbf16> to vector<8x128xbf16>
    %c6_255 = arith.constant 6 : index
    %c0_256 = arith.constant 0 : index
    %c0_257 = arith.constant 0 : index
    %207 = vector.load %arg3[%c6_255, %c0_256, %c0_257] : memref<9x128x128xbf16, #tpu.memory_space<vmem>>, vector<1x128x128xbf16>
    %208 = vector.shape_cast %207 : vector<1x128x128xbf16> to vector<128x128xbf16>
    %cst_258 = arith.constant dense<0.000000e+00> : vector<8x128xf32>
    %209 = tpu.matmul %206, %208, %cst_258 {dimension_numbers = #tpu.dot_dimension_numbers<[1], [0], [0], [1], [0, 0, 1, 1], [], []>} : vector<8x128xbf16>, vector<128x128xbf16>, vector<8x128xf32> -> vector<8x128xf32>
    %210 = arith.addf %204, %209 : vector<8x128xf32>
    %c0_259 = arith.constant 0 : index
    %c13 = arith.constant 13 : index
    %c0_260 = arith.constant 0 : index
    %c0_261 = arith.constant 0 : index
    %211 = vector.load %arg2[%c0_259, %c13, %c0_260, %c0_261] : memref<1x36x9x128xbf16, #tpu.memory_space<vmem>>, vector<1x1x8x128xbf16>
    %212 = vector.shape_cast %211 : vector<1x1x8x128xbf16> to vector<8x128xbf16>
    %c7_262 = arith.constant 7 : index
    %c0_263 = arith.constant 0 : index
    %c0_264 = arith.constant 0 : index
    %213 = vector.load %arg3[%c7_262, %c0_263, %c0_264] : memref<9x128x128xbf16, #tpu.memory_space<vmem>>, vector<1x128x128xbf16>
    %214 = vector.shape_cast %213 : vector<1x128x128xbf16> to vector<128x128xbf16>
    %cst_265 = arith.constant dense<0.000000e+00> : vector<8x128xf32>
    %215 = tpu.matmul %212, %214, %cst_265 {dimension_numbers = #tpu.dot_dimension_numbers<[1], [0], [0], [1], [0, 0, 1, 1], [], []>} : vector<8x128xbf16>, vector<128x128xbf16>, vector<8x128xf32> -> vector<8x128xf32>
    %216 = arith.addf %210, %215 : vector<8x128xf32>
    %c0_266 = arith.constant 0 : index
    %c4_267 = arith.constant 4 : index
    %c1_268 = arith.constant 1 : index
    %c0_269 = arith.constant 0 : index
    %217 = vector.load %arg2[%c0_266, %c4_267, %c1_268, %c0_269] : memref<1x36x9x128xbf16, #tpu.memory_space<vmem>>, vector<1x1x8x128xbf16>
    %218 = vector.shape_cast %217 : vector<1x1x8x128xbf16> to vector<8x128xbf16>
    %c8_270 = arith.constant 8 : index
    %c0_271 = arith.constant 0 : index
    %c0_272 = arith.constant 0 : index
    %219 = vector.load %arg3[%c8_270, %c0_271, %c0_272] : memref<9x128x128xbf16, #tpu.memory_space<vmem>>, vector<1x128x128xbf16>
    %220 = vector.shape_cast %219 : vector<1x128x128xbf16> to vector<128x128xbf16>
    %cst_273 = arith.constant dense<0.000000e+00> : vector<8x128xf32>
    %221 = tpu.matmul %218, %220, %cst_273 {dimension_numbers = #tpu.dot_dimension_numbers<[1], [0], [0], [1], [0, 0, 1, 1], [], []>} : vector<8x128xbf16>, vector<128x128xbf16>, vector<8x128xf32> -> vector<8x128xf32>
    %222 = arith.addf %216, %221 : vector<8x128xf32>
    %c24 = arith.constant 24 : index
    %c0_274 = arith.constant 0 : index
    %223 = vector.load %arg7[%c24, %c0_274] : memref<64x128xf32, #tpu.memory_space<vmem>>, vector<8x128xf32>
    tpu.vector_store %arg7[%c24, %c0_274], %222 {strides = array<i32>} : memref<64x128xf32, #tpu.memory_space<vmem>>, vector<8x128xf32>,
    %cst_275 = arith.constant 0.000000e+00 : f32
    %224 = vector.broadcast %cst_275 : f32 to vector<8x128xf32>
    %c0_276 = arith.constant 0 : index
    %c4_277 = arith.constant 4 : index
    %c0_278 = arith.constant 0 : index
    %c0_279 = arith.constant 0 : index
    %225 = vector.load %arg2[%c0_276, %c4_277, %c0_278, %c0_279] : memref<1x36x9x128xbf16, #tpu.memory_space<vmem>>, vector<1x1x8x128xbf16>
    %226 = vector.shape_cast %225 : vector<1x1x8x128xbf16> to vector<8x128xbf16>
    %c0_280 = arith.constant 0 : index
    %c0_281 = arith.constant 0 : index
    %c0_282 = arith.constant 0 : index
    %227 = vector.load %arg3[%c0_280, %c0_281, %c0_282] : memref<9x128x128xbf16, #tpu.memory_space<vmem>>, vector<1x128x128xbf16>
    %228 = vector.shape_cast %227 : vector<1x128x128xbf16> to vector<128x128xbf16>
    %cst_283 = arith.constant dense<0.000000e+00> : vector<8x128xf32>
    %229 = tpu.matmul %226, %228, %cst_283 {dimension_numbers = #tpu.dot_dimension_numbers<[1], [0], [0], [1], [0, 0, 1, 1], [], []>} : vector<8x128xbf16>, vector<128x128xbf16>, vector<8x128xf32> -> vector<8x128xf32>
    %230 = arith.addf %224, %229 : vector<8x128xf32>
    %c0_284 = arith.constant 0 : index
    %c13_285 = arith.constant 13 : index
    %c0_286 = arith.constant 0 : index
    %c0_287 = arith.constant 0 : index
    %231 = vector.load %arg2[%c0_284, %c13_285, %c0_286, %c0_287] : memref<1x36x9x128xbf16, #tpu.memory_space<vmem>>, vector<1x1x8x128xbf16>
    %232 = vector.shape_cast %231 : vector<1x1x8x128xbf16> to vector<8x128xbf16>
    %c1_288 = arith.constant 1 : index
    %c0_289 = arith.constant 0 : index
    %c0_290 = arith.constant 0 : index
    %233 = vector.load %arg3[%c1_288, %c0_289, %c0_290] : memref<9x128x128xbf16, #tpu.memory_space<vmem>>, vector<1x128x128xbf16>
    %234 = vector.shape_cast %233 : vector<1x128x128xbf16> to vector<128x128xbf16>
    %cst_291 = arith.constant dense<0.000000e+00> : vector<8x128xf32>
    %235 = tpu.matmul %232, %234, %cst_291 {dimension_numbers = #tpu.dot_dimension_numbers<[1], [0], [0], [1], [0, 0, 1, 1], [], []>} : vector<8x128xbf16>, vector<128x128xbf16>, vector<8x128xf32> -> vector<8x128xf32>
    %236 = arith.addf %230, %235 : vector<8x128xf32>
    %c0_292 = arith.constant 0 : index
    %c4_293 = arith.constant 4 : index
    %c1_294 = arith.constant 1 : index
    %c0_295 = arith.constant 0 : index
    %237 = vector.load %arg2[%c0_292, %c4_293, %c1_294, %c0_295] : memref<1x36x9x128xbf16, #tpu.memory_space<vmem>>, vector<1x1x8x128xbf16>
    %238 = vector.shape_cast %237 : vector<1x1x8x128xbf16> to vector<8x128xbf16>
    %c2_296 = arith.constant 2 : index
    %c0_297 = arith.constant 0 : index
    %c0_298 = arith.constant 0 : index
    %239 = vector.load %arg3[%c2_296, %c0_297, %c0_298] : memref<9x128x128xbf16, #tpu.memory_space<vmem>>, vector<1x128x128xbf16>
    %240 = vector.shape_cast %239 : vector<1x128x128xbf16> to vector<128x128xbf16>
    %cst_299 = arith.constant dense<0.000000e+00> : vector<8x128xf32>
    %241 = tpu.matmul %238, %240, %cst_299 {dimension_numbers = #tpu.dot_dimension_numbers<[1], [0], [0], [1], [0, 0, 1, 1], [], []>} : vector<8x128xbf16>, vector<128x128xbf16>, vector<8x128xf32> -> vector<8x128xf32>
    %242 = arith.addf %236, %241 : vector<8x128xf32>
    %c0_300 = arith.constant 0 : index
    %c22 = arith.constant 22 : index
    %c0_301 = arith.constant 0 : index
    %c0_302 = arith.constant 0 : index
    %243 = vector.load %arg2[%c0_300, %c22, %c0_301, %c0_302] : memref<1x36x9x128xbf16, #tpu.memory_space<vmem>>, vector<1x1x8x128xbf16>
    %244 = vector.shape_cast %243 : vector<1x1x8x128xbf16> to vector<8x128xbf16>
    %c3_303 = arith.constant 3 : index
    %c0_304 = arith.constant 0 : index
    %c0_305 = arith.constant 0 : index
    %245 = vector.load %arg3[%c3_303, %c0_304, %c0_305] : memref<9x128x128xbf16, #tpu.memory_space<vmem>>, vector<1x128x128xbf16>
    %246 = vector.shape_cast %245 : vector<1x128x128xbf16> to vector<128x128xbf16>
    %cst_306 = arith.constant dense<0.000000e+00> : vector<8x128xf32>
    %247 = tpu.matmul %244, %246, %cst_306 {dimension_numbers = #tpu.dot_dimension_numbers<[1], [0], [0], [1], [0, 0, 1, 1], [], []>} : vector<8x128xbf16>, vector<128x128xbf16>, vector<8x128xf32> -> vector<8x128xf32>
    %248 = arith.addf %242, %247 : vector<8x128xf32>
    %c0_307 = arith.constant 0 : index
    %c31 = arith.constant 31 : index
    %c0_308 = arith.constant 0 : index
    %c0_309 = arith.constant 0 : index
    %249 = vector.load %arg2[%c0_307, %c31, %c0_308, %c0_309] : memref<1x36x9x128xbf16, #tpu.memory_space<vmem>>, vector<1x1x8x128xbf16>
    %250 = vector.shape_cast %249 : vector<1x1x8x128xbf16> to vector<8x128xbf16>
    %c4_310 = arith.constant 4 : index
    %c0_311 = arith.constant 0 : index
    %c0_312 = arith.constant 0 : index
    %251 = vector.load %arg3[%c4_310, %c0_311, %c0_312] : memref<9x128x128xbf16, #tpu.memory_space<vmem>>, vector<1x128x128xbf16>
    %252 = vector.shape_cast %251 : vector<1x128x128xbf16> to vector<128x128xbf16>
    %cst_313 = arith.constant dense<0.000000e+00> : vector<8x128xf32>
    %253 = tpu.matmul %250, %252, %cst_313 {dimension_numbers = #tpu.dot_dimension_numbers<[1], [0], [0], [1], [0, 0, 1, 1], [], []>} : vector<8x128xbf16>, vector<128x128xbf16>, vector<8x128xf32> -> vector<8x128xf32>
    %254 = arith.addf %248, %253 : vector<8x128xf32>
    %c0_314 = arith.constant 0 : index
    %c22_315 = arith.constant 22 : index
    %c1_316 = arith.constant 1 : index
    %c0_317 = arith.constant 0 : index
    %255 = vector.load %arg2[%c0_314, %c22_315, %c1_316, %c0_317] : memref<1x36x9x128xbf16, #tpu.memory_space<vmem>>, vector<1x1x8x128xbf16>
    %256 = vector.shape_cast %255 : vector<1x1x8x128xbf16> to vector<8x128xbf16>
    %c5_318 = arith.constant 5 : index
    %c0_319 = arith.constant 0 : index
    %c0_320 = arith.constant 0 : index
    %257 = vector.load %arg3[%c5_318, %c0_319, %c0_320] : memref<9x128x128xbf16, #tpu.memory_space<vmem>>, vector<1x128x128xbf16>
    %258 = vector.shape_cast %257 : vector<1x128x128xbf16> to vector<128x128xbf16>
    %cst_321 = arith.constant dense<0.000000e+00> : vector<8x128xf32>
    %259 = tpu.matmul %256, %258, %cst_321 {dimension_numbers = #tpu.dot_dimension_numbers<[1], [0], [0], [1], [0, 0, 1, 1], [], []>} : vector<8x128xbf16>, vector<128x128xbf16>, vector<8x128xf32> -> vector<8x128xf32>
    %260 = arith.addf %254, %259 : vector<8x128xf32>
    %c0_322 = arith.constant 0 : index
    %c5_323 = arith.constant 5 : index
    %c0_324 = arith.constant 0 : index
    %c0_325 = arith.constant 0 : index
    %261 = vector.load %arg2[%c0_322, %c5_323, %c0_324, %c0_325] : memref<1x36x9x128xbf16, #tpu.memory_space<vmem>>, vector<1x1x8x128xbf16>
    %262 = vector.shape_cast %261 : vector<1x1x8x128xbf16> to vector<8x128xbf16>
    %c6_326 = arith.constant 6 : index
    %c0_327 = arith.constant 0 : index
    %c0_328 = arith.constant 0 : index
    %263 = vector.load %arg3[%c6_326, %c0_327, %c0_328] : memref<9x128x128xbf16, #tpu.memory_space<vmem>>, vector<1x128x128xbf16>
    %264 = vector.shape_cast %263 : vector<1x128x128xbf16> to vector<128x128xbf16>
    %cst_329 = arith.constant dense<0.000000e+00> : vector<8x128xf32>
    %265 = tpu.matmul %262, %264, %cst_329 {dimension_numbers = #tpu.dot_dimension_numbers<[1], [0], [0], [1], [0, 0, 1, 1], [], []>} : vector<8x128xbf16>, vector<128x128xbf16>, vector<8x128xf32> -> vector<8x128xf32>
    %266 = arith.addf %260, %265 : vector<8x128xf32>
    %c0_330 = arith.constant 0 : index
    %c14 = arith.constant 14 : index
    %c0_331 = arith.constant 0 : index
    %c0_332 = arith.constant 0 : index
    %267 = vector.load %arg2[%c0_330, %c14, %c0_331, %c0_332] : memref<1x36x9x128xbf16, #tpu.memory_space<vmem>>, vector<1x1x8x128xbf16>
    %268 = vector.shape_cast %267 : vector<1x1x8x128xbf16> to vector<8x128xbf16>
    %c7_333 = arith.constant 7 : index
    %c0_334 = arith.constant 0 : index
    %c0_335 = arith.constant 0 : index
    %269 = vector.load %arg3[%c7_333, %c0_334, %c0_335] : memref<9x128x128xbf16, #tpu.memory_space<vmem>>, vector<1x128x128xbf16>
    %270 = vector.shape_cast %269 : vector<1x128x128xbf16> to vector<128x128xbf16>
    %cst_336 = arith.constant dense<0.000000e+00> : vector<8x128xf32>
    %271 = tpu.matmul %268, %270, %cst_336 {dimension_numbers = #tpu.dot_dimension_numbers<[1], [0], [0], [1], [0, 0, 1, 1], [], []>} : vector<8x128xbf16>, vector<128x128xbf16>, vector<8x128xf32> -> vector<8x128xf32>
    %272 = arith.addf %266, %271 : vector<8x128xf32>
    %c0_337 = arith.constant 0 : index
    %c5_338 = arith.constant 5 : index
    %c1_339 = arith.constant 1 : index
    %c0_340 = arith.constant 0 : index
    %273 = vector.load %arg2[%c0_337, %c5_338, %c1_339, %c0_340] : memref<1x36x9x128xbf16, #tpu.memory_space<vmem>>, vector<1x1x8x128xbf16>
    %274 = vector.shape_cast %273 : vector<1x1x8x128xbf16> to vector<8x128xbf16>
    %c8_341 = arith.constant 8 : index
    %c0_342 = arith.constant 0 : index
    %c0_343 = arith.constant 0 : index
    %275 = vector.load %arg3[%c8_341, %c0_342, %c0_343] : memref<9x128x128xbf16, #tpu.memory_space<vmem>>, vector<1x128x128xbf16>
    %276 = vector.shape_cast %275 : vector<1x128x128xbf16> to vector<128x128xbf16>
    %cst_344 = arith.constant dense<0.000000e+00> : vector<8x128xf32>
    %277 = tpu.matmul %274, %276, %cst_344 {dimension_numbers = #tpu.dot_dimension_numbers<[1], [0], [0], [1], [0, 0, 1, 1], [], []>} : vector<8x128xbf16>, vector<128x128xbf16>, vector<8x128xf32> -> vector<8x128xf32>
    %278 = arith.addf %272, %277 : vector<8x128xf32>
    %c32 = arith.constant 32 : index
    %c0_345 = arith.constant 0 : index
    %279 = vector.load %arg7[%c32, %c0_345] : memref<64x128xf32, #tpu.memory_space<vmem>>, vector<8x128xf32>
    tpu.vector_store %arg7[%c32, %c0_345], %278 {strides = array<i32>} : memref<64x128xf32, #tpu.memory_space<vmem>>, vector<8x128xf32>,
    %cst_346 = arith.constant 0.000000e+00 : f32
    %280 = vector.broadcast %cst_346 : f32 to vector<8x128xf32>
    %c0_347 = arith.constant 0 : index
    %c5_348 = arith.constant 5 : index
    %c0_349 = arith.constant 0 : index
    %c0_350 = arith.constant 0 : index
    %281 = vector.load %arg2[%c0_347, %c5_348, %c0_349, %c0_350] : memref<1x36x9x128xbf16, #tpu.memory_space<vmem>>, vector<1x1x8x128xbf16>
    %282 = vector.shape_cast %281 : vector<1x1x8x128xbf16> to vector<8x128xbf16>
    %c0_351 = arith.constant 0 : index
    %c0_352 = arith.constant 0 : index
    %c0_353 = arith.constant 0 : index
    %283 = vector.load %arg3[%c0_351, %c0_352, %c0_353] : memref<9x128x128xbf16, #tpu.memory_space<vmem>>, vector<1x128x128xbf16>
    %284 = vector.shape_cast %283 : vector<1x128x128xbf16> to vector<128x128xbf16>
    %cst_354 = arith.constant dense<0.000000e+00> : vector<8x128xf32>
    %285 = tpu.matmul %282, %284, %cst_354 {dimension_numbers = #tpu.dot_dimension_numbers<[1], [0], [0], [1], [0, 0, 1, 1], [], []>} : vector<8x128xbf16>, vector<128x128xbf16>, vector<8x128xf32> -> vector<8x128xf32>
    %286 = arith.addf %280, %285 : vector<8x128xf32>
    %c0_355 = arith.constant 0 : index
    %c14_356 = arith.constant 14 : index
    %c0_357 = arith.constant 0 : index
    %c0_358 = arith.constant 0 : index
    %287 = vector.load %arg2[%c0_355, %c14_356, %c0_357, %c0_358] : memref<1x36x9x128xbf16, #tpu.memory_space<vmem>>, vector<1x1x8x128xbf16>
    %288 = vector.shape_cast %287 : vector<1x1x8x128xbf16> to vector<8x128xbf16>
    %c1_359 = arith.constant 1 : index
    %c0_360 = arith.constant 0 : index
    %c0_361 = arith.constant 0 : index
    %289 = vector.load %arg3[%c1_359, %c0_360, %c0_361] : memref<9x128x128xbf16, #tpu.memory_space<vmem>>, vector<1x128x128xbf16>
    %290 = vector.shape_cast %289 : vector<1x128x128xbf16> to vector<128x128xbf16>
    %cst_362 = arith.constant dense<0.000000e+00> : vector<8x128xf32>
    %291 = tpu.matmul %288, %290, %cst_362 {dimension_numbers = #tpu.dot_dimension_numbers<[1], [0], [0], [1], [0, 0, 1, 1], [], []>} : vector<8x128xbf16>, vector<128x128xbf16>, vector<8x128xf32> -> vector<8x128xf32>
    %292 = arith.addf %286, %291 : vector<8x128xf32>
    %c0_363 = arith.constant 0 : index
    %c5_364 = arith.constant 5 : index
    %c1_365 = arith.constant 1 : index
    %c0_366 = arith.constant 0 : index
    %293 = vector.load %arg2[%c0_363, %c5_364, %c1_365, %c0_366] : memref<1x36x9x128xbf16, #tpu.memory_space<vmem>>, vector<1x1x8x128xbf16>
    %294 = vector.shape_cast %293 : vector<1x1x8x128xbf16> to vector<8x128xbf16>
    %c2_367 = arith.constant 2 : index
    %c0_368 = arith.constant 0 : index
    %c0_369 = arith.constant 0 : index
    %295 = vector.load %arg3[%c2_367, %c0_368, %c0_369] : memref<9x128x128xbf16, #tpu.memory_space<vmem>>, vector<1x128x128xbf16>
    %296 = vector.shape_cast %295 : vector<1x128x128xbf16> to vector<128x128xbf16>
    %cst_370 = arith.constant dense<0.000000e+00> : vector<8x128xf32>
    %297 = tpu.matmul %294, %296, %cst_370 {dimension_numbers = #tpu.dot_dimension_numbers<[1], [0], [0], [1], [0, 0, 1, 1], [], []>} : vector<8x128xbf16>, vector<128x128xbf16>, vector<8x128xf32> -> vector<8x128xf32>
    %298 = arith.addf %292, %297 : vector<8x128xf32>
    %c0_371 = arith.constant 0 : index
    %c23 = arith.constant 23 : index
    %c0_372 = arith.constant 0 : index
    %c0_373 = arith.constant 0 : index
    %299 = vector.load %arg2[%c0_371, %c23, %c0_372, %c0_373] : memref<1x36x9x128xbf16, #tpu.memory_space<vmem>>, vector<1x1x8x128xbf16>
    %300 = vector.shape_cast %299 : vector<1x1x8x128xbf16> to vector<8x128xbf16>
    %c3_374 = arith.constant 3 : index
    %c0_375 = arith.constant 0 : index
    %c0_376 = arith.constant 0 : index
    %301 = vector.load %arg3[%c3_374, %c0_375, %c0_376] : memref<9x128x128xbf16, #tpu.memory_space<vmem>>, vector<1x128x128xbf16>
    %302 = vector.shape_cast %301 : vector<1x128x128xbf16> to vector<128x128xbf16>
    %cst_377 = arith.constant dense<0.000000e+00> : vector<8x128xf32>
    %303 = tpu.matmul %300, %302, %cst_377 {dimension_numbers = #tpu.dot_dimension_numbers<[1], [0], [0], [1], [0, 0, 1, 1], [], []>} : vector<8x128xbf16>, vector<128x128xbf16>, vector<8x128xf32> -> vector<8x128xf32>
    %304 = arith.addf %298, %303 : vector<8x128xf32>
    %c0_378 = arith.constant 0 : index
    %c32_379 = arith.constant 32 : index
    %c0_380 = arith.constant 0 : index
    %c0_381 = arith.constant 0 : index
    %305 = vector.load %arg2[%c0_378, %c32_379, %c0_380, %c0_381] : memref<1x36x9x128xbf16, #tpu.memory_space<vmem>>, vector<1x1x8x128xbf16>
    %306 = vector.shape_cast %305 : vector<1x1x8x128xbf16> to vector<8x128xbf16>
    %c4_382 = arith.constant 4 : index
    %c0_383 = arith.constant 0 : index
    %c0_384 = arith.constant 0 : index
    %307 = vector.load %arg3[%c4_382, %c0_383, %c0_384] : memref<9x128x128xbf16, #tpu.memory_space<vmem>>, vector<1x128x128xbf16>
    %308 = vector.shape_cast %307 : vector<1x128x128xbf16> to vector<128x128xbf16>
    %cst_385 = arith.constant dense<0.000000e+00> : vector<8x128xf32>
    %309 = tpu.matmul %306, %308, %cst_385 {dimension_numbers = #tpu.dot_dimension_numbers<[1], [0], [0], [1], [0, 0, 1, 1], [], []>} : vector<8x128xbf16>, vector<128x128xbf16>, vector<8x128xf32> -> vector<8x128xf32>
    %310 = arith.addf %304, %309 : vector<8x128xf32>
    %c0_386 = arith.constant 0 : index
    %c23_387 = arith.constant 23 : index
    %c1_388 = arith.constant 1 : index
    %c0_389 = arith.constant 0 : index
    %311 = vector.load %arg2[%c0_386, %c23_387, %c1_388, %c0_389] : memref<1x36x9x128xbf16, #tpu.memory_space<vmem>>, vector<1x1x8x128xbf16>
    %312 = vector.shape_cast %311 : vector<1x1x8x128xbf16> to vector<8x128xbf16>
    %c5_390 = arith.constant 5 : index
    %c0_391 = arith.constant 0 : index
    %c0_392 = arith.constant 0 : index
    %313 = vector.load %arg3[%c5_390, %c0_391, %c0_392] : memref<9x128x128xbf16, #tpu.memory_space<vmem>>, vector<1x128x128xbf16>
    %314 = vector.shape_cast %313 : vector<1x128x128xbf16> to vector<128x128xbf16>
    %cst_393 = arith.constant dense<0.000000e+00> : vector<8x128xf32>
    %315 = tpu.matmul %312, %314, %cst_393 {dimension_numbers = #tpu.dot_dimension_numbers<[1], [0], [0], [1], [0, 0, 1, 1], [], []>} : vector<8x128xbf16>, vector<128x128xbf16>, vector<8x128xf32> -> vector<8x128xf32>
    %316 = arith.addf %310, %315 : vector<8x128xf32>
    %c0_394 = arith.constant 0 : index
    %c6_395 = arith.constant 6 : index
    %c0_396 = arith.constant 0 : index
    %c0_397 = arith.constant 0 : index
    %317 = vector.load %arg2[%c0_394, %c6_395, %c0_396, %c0_397] : memref<1x36x9x128xbf16, #tpu.memory_space<vmem>>, vector<1x1x8x128xbf16>
    %318 = vector.shape_cast %317 : vector<1x1x8x128xbf16> to vector<8x128xbf16>
    %c6_398 = arith.constant 6 : index
    %c0_399 = arith.constant 0 : index
    %c0_400 = arith.constant 0 : index
    %319 = vector.load %arg3[%c6_398, %c0_399, %c0_400] : memref<9x128x128xbf16, #tpu.memory_space<vmem>>, vector<1x128x128xbf16>
    %320 = vector.shape_cast %319 : vector<1x128x128xbf16> to vector<128x128xbf16>
    %cst_401 = arith.constant dense<0.000000e+00> : vector<8x128xf32>
    %321 = tpu.matmul %318, %320, %cst_401 {dimension_numbers = #tpu.dot_dimension_numbers<[1], [0], [0], [1], [0, 0, 1, 1], [], []>} : vector<8x128xbf16>, vector<128x128xbf16>, vector<8x128xf32> -> vector<8x128xf32>
    %322 = arith.addf %316, %321 : vector<8x128xf32>
    %c0_402 = arith.constant 0 : index
    %c15 = arith.constant 15 : index
    %c0_403 = arith.constant 0 : index
    %c0_404 = arith.constant 0 : index
    %323 = vector.load %arg2[%c0_402, %c15, %c0_403, %c0_404] : memref<1x36x9x128xbf16, #tpu.memory_space<vmem>>, vector<1x1x8x128xbf16>
    %324 = vector.shape_cast %323 : vector<1x1x8x128xbf16> to vector<8x128xbf16>
    %c7_405 = arith.constant 7 : index
    %c0_406 = arith.constant 0 : index
    %c0_407 = arith.constant 0 : index
    %325 = vector.load %arg3[%c7_405, %c0_406, %c0_407] : memref<9x128x128xbf16, #tpu.memory_space<vmem>>, vector<1x128x128xbf16>
    %326 = vector.shape_cast %325 : vector<1x128x128xbf16> to vector<128x128xbf16>
    %cst_408 = arith.constant dense<0.000000e+00> : vector<8x128xf32>
    %327 = tpu.matmul %324, %326, %cst_408 {dimension_numbers = #tpu.dot_dimension_numbers<[1], [0], [0], [1], [0, 0, 1, 1], [], []>} : vector<8x128xbf16>, vector<128x128xbf16>, vector<8x128xf32> -> vector<8x128xf32>
    %328 = arith.addf %322, %327 : vector<8x128xf32>
    %c0_409 = arith.constant 0 : index
    %c6_410 = arith.constant 6 : index
    %c1_411 = arith.constant 1 : index
    %c0_412 = arith.constant 0 : index
    %329 = vector.load %arg2[%c0_409, %c6_410, %c1_411, %c0_412] : memref<1x36x9x128xbf16, #tpu.memory_space<vmem>>, vector<1x1x8x128xbf16>
    %330 = vector.shape_cast %329 : vector<1x1x8x128xbf16> to vector<8x128xbf16>
    %c8_413 = arith.constant 8 : index
    %c0_414 = arith.constant 0 : index
    %c0_415 = arith.constant 0 : index
    %331 = vector.load %arg3[%c8_413, %c0_414, %c0_415] : memref<9x128x128xbf16, #tpu.memory_space<vmem>>, vector<1x128x128xbf16>
    %332 = vector.shape_cast %331 : vector<1x128x128xbf16> to vector<128x128xbf16>
    %cst_416 = arith.constant dense<0.000000e+00> : vector<8x128xf32>
    %333 = tpu.matmul %330, %332, %cst_416 {dimension_numbers = #tpu.dot_dimension_numbers<[1], [0], [0], [1], [0, 0, 1, 1], [], []>} : vector<8x128xbf16>, vector<128x128xbf16>, vector<8x128xf32> -> vector<8x128xf32>
    %334 = arith.addf %328, %333 : vector<8x128xf32>
    %c40 = arith.constant 40 : index
    %c0_417 = arith.constant 0 : index
    %335 = vector.load %arg7[%c40, %c0_417] : memref<64x128xf32, #tpu.memory_space<vmem>>, vector<8x128xf32>
    tpu.vector_store %arg7[%c40, %c0_417], %334 {strides = array<i32>} : memref<64x128xf32, #tpu.memory_space<vmem>>, vector<8x128xf32>,
    %cst_418 = arith.constant 0.000000e+00 : f32
    %336 = vector.broadcast %cst_418 : f32 to vector<8x128xf32>
    %c0_419 = arith.constant 0 : index
    %c6_420 = arith.constant 6 : index
    %c0_421 = arith.constant 0 : index
    %c0_422 = arith.constant 0 : index
    %337 = vector.load %arg2[%c0_419, %c6_420, %c0_421, %c0_422] : memref<1x36x9x128xbf16, #tpu.memory_space<vmem>>, vector<1x1x8x128xbf16>
    %338 = vector.shape_cast %337 : vector<1x1x8x128xbf16> to vector<8x128xbf16>
    %c0_423 = arith.constant 0 : index
    %c0_424 = arith.constant 0 : index
    %c0_425 = arith.constant 0 : index
    %339 = vector.load %arg3[%c0_423, %c0_424, %c0_425] : memref<9x128x128xbf16, #tpu.memory_space<vmem>>, vector<1x128x128xbf16>
    %340 = vector.shape_cast %339 : vector<1x128x128xbf16> to vector<128x128xbf16>
    %cst_426 = arith.constant dense<0.000000e+00> : vector<8x128xf32>
    %341 = tpu.matmul %338, %340, %cst_426 {dimension_numbers = #tpu.dot_dimension_numbers<[1], [0], [0], [1], [0, 0, 1, 1], [], []>} : vector<8x128xbf16>, vector<128x128xbf16>, vector<8x128xf32> -> vector<8x128xf32>
    %342 = arith.addf %336, %341 : vector<8x128xf32>
    %c0_427 = arith.constant 0 : index
    %c15_428 = arith.constant 15 : index
    %c0_429 = arith.constant 0 : index
    %c0_430 = arith.constant 0 : index
    %343 = vector.load %arg2[%c0_427, %c15_428, %c0_429, %c0_430] : memref<1x36x9x128xbf16, #tpu.memory_space<vmem>>, vector<1x1x8x128xbf16>
    %344 = vector.shape_cast %343 : vector<1x1x8x128xbf16> to vector<8x128xbf16>
    %c1_431 = arith.constant 1 : index
    %c0_432 = arith.constant 0 : index
    %c0_433 = arith.constant 0 : index
    %345 = vector.load %arg3[%c1_431, %c0_432, %c0_433] : memref<9x128x128xbf16, #tpu.memory_space<vmem>>, vector<1x128x128xbf16>
    %346 = vector.shape_cast %345 : vector<1x128x128xbf16> to vector<128x128xbf16>
    %cst_434 = arith.constant dense<0.000000e+00> : vector<8x128xf32>
    %347 = tpu.matmul %344, %346, %cst_434 {dimension_numbers = #tpu.dot_dimension_numbers<[1], [0], [0], [1], [0, 0, 1, 1], [], []>} : vector<8x128xbf16>, vector<128x128xbf16>, vector<8x128xf32> -> vector<8x128xf32>
    %348 = arith.addf %342, %347 : vector<8x128xf32>
    %c0_435 = arith.constant 0 : index
    %c6_436 = arith.constant 6 : index
    %c1_437 = arith.constant 1 : index
    %c0_438 = arith.constant 0 : index
    %349 = vector.load %arg2[%c0_435, %c6_436, %c1_437, %c0_438] : memref<1x36x9x128xbf16, #tpu.memory_space<vmem>>, vector<1x1x8x128xbf16>
    %350 = vector.shape_cast %349 : vector<1x1x8x128xbf16> to vector<8x128xbf16>
    %c2_439 = arith.constant 2 : index
    %c0_440 = arith.constant 0 : index
    %c0_441 = arith.constant 0 : index
    %351 = vector.load %arg3[%c2_439, %c0_440, %c0_441] : memref<9x128x128xbf16, #tpu.memory_space<vmem>>, vector<1x128x128xbf16>
    %352 = vector.shape_cast %351 : vector<1x128x128xbf16> to vector<128x128xbf16>
    %cst_442 = arith.constant dense<0.000000e+00> : vector<8x128xf32>
    %353 = tpu.matmul %350, %352, %cst_442 {dimension_numbers = #tpu.dot_dimension_numbers<[1], [0], [0], [1], [0, 0, 1, 1], [], []>} : vector<8x128xbf16>, vector<128x128xbf16>, vector<8x128xf32> -> vector<8x128xf32>
    %354 = arith.addf %348, %353 : vector<8x128xf32>
    %c0_443 = arith.constant 0 : index
    %c24_444 = arith.constant 24 : index
    %c0_445 = arith.constant 0 : index
    %c0_446 = arith.constant 0 : index
    %355 = vector.load %arg2[%c0_443, %c24_444, %c0_445, %c0_446] : memref<1x36x9x128xbf16, #tpu.memory_space<vmem>>, vector<1x1x8x128xbf16>
    %356 = vector.shape_cast %355 : vector<1x1x8x128xbf16> to vector<8x128xbf16>
    %c3_447 = arith.constant 3 : index
    %c0_448 = arith.constant 0 : index
    %c0_449 = arith.constant 0 : index
    %357 = vector.load %arg3[%c3_447, %c0_448, %c0_449] : memref<9x128x128xbf16, #tpu.memory_space<vmem>>, vector<1x128x128xbf16>
    %358 = vector.shape_cast %357 : vector<1x128x128xbf16> to vector<128x128xbf16>
    %cst_450 = arith.constant dense<0.000000e+00> : vector<8x128xf32>
    %359 = tpu.matmul %356, %358, %cst_450 {dimension_numbers = #tpu.dot_dimension_numbers<[1], [0], [0], [1], [0, 0, 1, 1], [], []>} : vector<8x128xbf16>, vector<128x128xbf16>, vector<8x128xf32> -> vector<8x128xf32>
    %360 = arith.addf %354, %359 : vector<8x128xf32>
    %c0_451 = arith.constant 0 : index
    %c33 = arith.constant 33 : index
    %c0_452 = arith.constant 0 : index
    %c0_453 = arith.constant 0 : index
    %361 = vector.load %arg2[%c0_451, %c33, %c0_452, %c0_453] : memref<1x36x9x128xbf16, #tpu.memory_space<vmem>>, vector<1x1x8x128xbf16>
    %362 = vector.shape_cast %361 : vector<1x1x8x128xbf16> to vector<8x128xbf16>
    %c4_454 = arith.constant 4 : index
    %c0_455 = arith.constant 0 : index
    %c0_456 = arith.constant 0 : index
    %363 = vector.load %arg3[%c4_454, %c0_455, %c0_456] : memref<9x128x128xbf16, #tpu.memory_space<vmem>>, vector<1x128x128xbf16>
    %364 = vector.shape_cast %363 : vector<1x128x128xbf16> to vector<128x128xbf16>
    %cst_457 = arith.constant dense<0.000000e+00> : vector<8x128xf32>
    %365 = tpu.matmul %362, %364, %cst_457 {dimension_numbers = #tpu.dot_dimension_numbers<[1], [0], [0], [1], [0, 0, 1, 1], [], []>} : vector<8x128xbf16>, vector<128x128xbf16>, vector<8x128xf32> -> vector<8x128xf32>
    %366 = arith.addf %360, %365 : vector<8x128xf32>
    %c0_458 = arith.constant 0 : index
    %c24_459 = arith.constant 24 : index
    %c1_460 = arith.constant 1 : index
    %c0_461 = arith.constant 0 : index
    %367 = vector.load %arg2[%c0_458, %c24_459, %c1_460, %c0_461] : memref<1x36x9x128xbf16, #tpu.memory_space<vmem>>, vector<1x1x8x128xbf16>
    %368 = vector.shape_cast %367 : vector<1x1x8x128xbf16> to vector<8x128xbf16>
    %c5_462 = arith.constant 5 : index
    %c0_463 = arith.constant 0 : index
    %c0_464 = arith.constant 0 : index
    %369 = vector.load %arg3[%c5_462, %c0_463, %c0_464] : memref<9x128x128xbf16, #tpu.memory_space<vmem>>, vector<1x128x128xbf16>
    %370 = vector.shape_cast %369 : vector<1x128x128xbf16> to vector<128x128xbf16>
    %cst_465 = arith.constant dense<0.000000e+00> : vector<8x128xf32>
    %371 = tpu.matmul %368, %370, %cst_465 {dimension_numbers = #tpu.dot_dimension_numbers<[1], [0], [0], [1], [0, 0, 1, 1], [], []>} : vector<8x128xbf16>, vector<128x128xbf16>, vector<8x128xf32> -> vector<8x128xf32>
    %372 = arith.addf %366, %371 : vector<8x128xf32>
    %c0_466 = arith.constant 0 : index
    %c7_467 = arith.constant 7 : index
    %c0_468 = arith.constant 0 : index
    %c0_469 = arith.constant 0 : index
    %373 = vector.load %arg2[%c0_466, %c7_467, %c0_468, %c0_469] : memref<1x36x9x128xbf16, #tpu.memory_space<vmem>>, vector<1x1x8x128xbf16>
    %374 = vector.shape_cast %373 : vector<1x1x8x128xbf16> to vector<8x128xbf16>
    %c6_470 = arith.constant 6 : index
    %c0_471 = arith.constant 0 : index
    %c0_472 = arith.constant 0 : index
    %375 = vector.load %arg3[%c6_470, %c0_471, %c0_472] : memref<9x128x128xbf16, #tpu.memory_space<vmem>>, vector<1x128x128xbf16>
    %376 = vector.shape_cast %375 : vector<1x128x128xbf16> to vector<128x128xbf16>
    %cst_473 = arith.constant dense<0.000000e+00> : vector<8x128xf32>
    %377 = tpu.matmul %374, %376, %cst_473 {dimension_numbers = #tpu.dot_dimension_numbers<[1], [0], [0], [1], [0, 0, 1, 1], [], []>} : vector<8x128xbf16>, vector<128x128xbf16>, vector<8x128xf32> -> vector<8x128xf32>
    %378 = arith.addf %372, %377 : vector<8x128xf32>
    %c0_474 = arith.constant 0 : index
    %c16_475 = arith.constant 16 : index
    %c0_476 = arith.constant 0 : index
    %c0_477 = arith.constant 0 : index
    %379 = vector.load %arg2[%c0_474, %c16_475, %c0_476, %c0_477] : memref<1x36x9x128xbf16, #tpu.memory_space<vmem>>, vector<1x1x8x128xbf16>
    %380 = vector.shape_cast %379 : vector<1x1x8x128xbf16> to vector<8x128xbf16>
    %c7_478 = arith.constant 7 : index
    %c0_479 = arith.constant 0 : index
    %c0_480 = arith.constant 0 : index
    %381 = vector.load %arg3[%c7_478, %c0_479, %c0_480] : memref<9x128x128xbf16, #tpu.memory_space<vmem>>, vector<1x128x128xbf16>
    %382 = vector.shape_cast %381 : vector<1x128x128xbf16> to vector<128x128xbf16>
    %cst_481 = arith.constant dense<0.000000e+00> : vector<8x128xf32>
    %383 = tpu.matmul %380, %382, %cst_481 {dimension_numbers = #tpu.dot_dimension_numbers<[1], [0], [0], [1], [0, 0, 1, 1], [], []>} : vector<8x128xbf16>, vector<128x128xbf16>, vector<8x128xf32> -> vector<8x128xf32>
    %384 = arith.addf %378, %383 : vector<8x128xf32>
    %c0_482 = arith.constant 0 : index
    %c7_483 = arith.constant 7 : index
    %c1_484 = arith.constant 1 : index
    %c0_485 = arith.constant 0 : index
    %385 = vector.load %arg2[%c0_482, %c7_483, %c1_484, %c0_485] : memref<1x36x9x128xbf16, #tpu.memory_space<vmem>>, vector<1x1x8x128xbf16>
    %386 = vector.shape_cast %385 : vector<1x1x8x128xbf16> to vector<8x128xbf16>
    %c8_486 = arith.constant 8 : index
    %c0_487 = arith.constant 0 : index
    %c0_488 = arith.constant 0 : index
    %387 = vector.load %arg3[%c8_486, %c0_487, %c0_488] : memref<9x128x128xbf16, #tpu.memory_space<vmem>>, vector<1x128x128xbf16>
    %388 = vector.shape_cast %387 : vector<1x128x128xbf16> to vector<128x128xbf16>
    %cst_489 = arith.constant dense<0.000000e+00> : vector<8x128xf32>
    %389 = tpu.matmul %386, %388, %cst_489 {dimension_numbers = #tpu.dot_dimension_numbers<[1], [0], [0], [1], [0, 0, 1, 1], [], []>} : vector<8x128xbf16>, vector<128x128xbf16>, vector<8x128xf32> -> vector<8x128xf32>
    %390 = arith.addf %384, %389 : vector<8x128xf32>
    %c48 = arith.constant 48 : index
    %c0_490 = arith.constant 0 : index
    %391 = vector.load %arg7[%c48, %c0_490] : memref<64x128xf32, #tpu.memory_space<vmem>>, vector<8x128xf32>
    tpu.vector_store %arg7[%c48, %c0_490], %390 {strides = array<i32>} : memref<64x128xf32, #tpu.memory_space<vmem>>, vector<8x128xf32>,
    %cst_491 = arith.constant 0.000000e+00 : f32
    %392 = vector.broadcast %cst_491 : f32 to vector<8x128xf32>
    %c0_492 = arith.constant 0 : index
    %c7_493 = arith.constant 7 : index
    %c0_494 = arith.constant 0 : index
    %c0_495 = arith.constant 0 : index
    %393 = vector.load %arg2[%c0_492, %c7_493, %c0_494, %c0_495] : memref<1x36x9x128xbf16, #tpu.memory_space<vmem>>, vector<1x1x8x128xbf16>
    %394 = vector.shape_cast %393 : vector<1x1x8x128xbf16> to vector<8x128xbf16>
    %c0_496 = arith.constant 0 : index
    %c0_497 = arith.constant 0 : index
    %c0_498 = arith.constant 0 : index
    %395 = vector.load %arg3[%c0_496, %c0_497, %c0_498] : memref<9x128x128xbf16, #tpu.memory_space<vmem>>, vector<1x128x128xbf16>
    %396 = vector.shape_cast %395 : vector<1x128x128xbf16> to vector<128x128xbf16>
    %cst_499 = arith.constant dense<0.000000e+00> : vector<8x128xf32>
    %397 = tpu.matmul %394, %396, %cst_499 {dimension_numbers = #tpu.dot_dimension_numbers<[1], [0], [0], [1], [0, 0, 1, 1], [], []>} : vector<8x128xbf16>, vector<128x128xbf16>, vector<8x128xf32> -> vector<8x128xf32>
    %398 = arith.addf %392, %397 : vector<8x128xf32>
    %c0_500 = arith.constant 0 : index
    %c16_501 = arith.constant 16 : index
    %c0_502 = arith.constant 0 : index
    %c0_503 = arith.constant 0 : index
    %399 = vector.load %arg2[%c0_500, %c16_501, %c0_502, %c0_503] : memref<1x36x9x128xbf16, #tpu.memory_space<vmem>>, vector<1x1x8x128xbf16>
    %400 = vector.shape_cast %399 : vector<1x1x8x128xbf16> to vector<8x128xbf16>
    %c1_504 = arith.constant 1 : index
    %c0_505 = arith.constant 0 : index
    %c0_506 = arith.constant 0 : index
    %401 = vector.load %arg3[%c1_504, %c0_505, %c0_506] : memref<9x128x128xbf16, #tpu.memory_space<vmem>>, vector<1x128x128xbf16>
    %402 = vector.shape_cast %401 : vector<1x128x128xbf16> to vector<128x128xbf16>
    %cst_507 = arith.constant dense<0.000000e+00> : vector<8x128xf32>
    %403 = tpu.matmul %400, %402, %cst_507 {dimension_numbers = #tpu.dot_dimension_numbers<[1], [0], [0], [1], [0, 0, 1, 1], [], []>} : vector<8x128xbf16>, vector<128x128xbf16>, vector<8x128xf32> -> vector<8x128xf32>
    %404 = arith.addf %398, %403 : vector<8x128xf32>
    %c0_508 = arith.constant 0 : index
    %c7_509 = arith.constant 7 : index
    %c1_510 = arith.constant 1 : index
    %c0_511 = arith.constant 0 : index
    %405 = vector.load %arg2[%c0_508, %c7_509, %c1_510, %c0_511] : memref<1x36x9x128xbf16, #tpu.memory_space<vmem>>, vector<1x1x8x128xbf16>
    %406 = vector.shape_cast %405 : vector<1x1x8x128xbf16> to vector<8x128xbf16>
    %c2_512 = arith.constant 2 : index
    %c0_513 = arith.constant 0 : index
    %c0_514 = arith.constant 0 : index
    %407 = vector.load %arg3[%c2_512, %c0_513, %c0_514] : memref<9x128x128xbf16, #tpu.memory_space<vmem>>, vector<1x128x128xbf16>
    %408 = vector.shape_cast %407 : vector<1x128x128xbf16> to vector<128x128xbf16>
    %cst_515 = arith.constant dense<0.000000e+00> : vector<8x128xf32>
    %409 = tpu.matmul %406, %408, %cst_515 {dimension_numbers = #tpu.dot_dimension_numbers<[1], [0], [0], [1], [0, 0, 1, 1], [], []>} : vector<8x128xbf16>, vector<128x128xbf16>, vector<8x128xf32> -> vector<8x128xf32>
    %410 = arith.addf %404, %409 : vector<8x128xf32>
    %c0_516 = arith.constant 0 : index
    %c25 = arith.constant 25 : index
    %c0_517 = arith.constant 0 : index
    %c0_518 = arith.constant 0 : index
    %411 = vector.load %arg2[%c0_516, %c25, %c0_517, %c0_518] : memref<1x36x9x128xbf16, #tpu.memory_space<vmem>>, vector<1x1x8x128xbf16>
    %412 = vector.shape_cast %411 : vector<1x1x8x128xbf16> to vector<8x128xbf16>
    %c3_519 = arith.constant 3 : index
    %c0_520 = arith.constant 0 : index
    %c0_521 = arith.constant 0 : index
    %413 = vector.load %arg3[%c3_519, %c0_520, %c0_521] : memref<9x128x128xbf16, #tpu.memory_space<vmem>>, vector<1x128x128xbf16>
    %414 = vector.shape_cast %413 : vector<1x128x128xbf16> to vector<128x128xbf16>
    %cst_522 = arith.constant dense<0.000000e+00> : vector<8x128xf32>
    %415 = tpu.matmul %412, %414, %cst_522 {dimension_numbers = #tpu.dot_dimension_numbers<[1], [0], [0], [1], [0, 0, 1, 1], [], []>} : vector<8x128xbf16>, vector<128x128xbf16>, vector<8x128xf32> -> vector<8x128xf32>
    %416 = arith.addf %410, %415 : vector<8x128xf32>
    %c0_523 = arith.constant 0 : index
    %c34 = arith.constant 34 : index
    %c0_524 = arith.constant 0 : index
    %c0_525 = arith.constant 0 : index
    %417 = vector.load %arg2[%c0_523, %c34, %c0_524, %c0_525] : memref<1x36x9x128xbf16, #tpu.memory_space<vmem>>, vector<1x1x8x128xbf16>
    %418 = vector.shape_cast %417 : vector<1x1x8x128xbf16> to vector<8x128xbf16>
    %c4_526 = arith.constant 4 : index
    %c0_527 = arith.constant 0 : index
    %c0_528 = arith.constant 0 : index
    %419 = vector.load %arg3[%c4_526, %c0_527, %c0_528] : memref<9x128x128xbf16, #tpu.memory_space<vmem>>, vector<1x128x128xbf16>
    %420 = vector.shape_cast %419 : vector<1x128x128xbf16> to vector<128x128xbf16>
    %cst_529 = arith.constant dense<0.000000e+00> : vector<8x128xf32>
    %421 = tpu.matmul %418, %420, %cst_529 {dimension_numbers = #tpu.dot_dimension_numbers<[1], [0], [0], [1], [0, 0, 1, 1], [], []>} : vector<8x128xbf16>, vector<128x128xbf16>, vector<8x128xf32> -> vector<8x128xf32>
    %422 = arith.addf %416, %421 : vector<8x128xf32>
    %c0_530 = arith.constant 0 : index
    %c25_531 = arith.constant 25 : index
    %c1_532 = arith.constant 1 : index
    %c0_533 = arith.constant 0 : index
    %423 = vector.load %arg2[%c0_530, %c25_531, %c1_532, %c0_533] : memref<1x36x9x128xbf16, #tpu.memory_space<vmem>>, vector<1x1x8x128xbf16>
    %424 = vector.shape_cast %423 : vector<1x1x8x128xbf16> to vector<8x128xbf16>
    %c5_534 = arith.constant 5 : index
    %c0_535 = arith.constant 0 : index
    %c0_536 = arith.constant 0 : index
    %425 = vector.load %arg3[%c5_534, %c0_535, %c0_536] : memref<9x128x128xbf16, #tpu.memory_space<vmem>>, vector<1x128x128xbf16>
    %426 = vector.shape_cast %425 : vector<1x128x128xbf16> to vector<128x128xbf16>
    %cst_537 = arith.constant dense<0.000000e+00> : vector<8x128xf32>
    %427 = tpu.matmul %424, %426, %cst_537 {dimension_numbers = #tpu.dot_dimension_numbers<[1], [0], [0], [1], [0, 0, 1, 1], [], []>} : vector<8x128xbf16>, vector<128x128xbf16>, vector<8x128xf32> -> vector<8x128xf32>
    %428 = arith.addf %422, %427 : vector<8x128xf32>
    %c0_538 = arith.constant 0 : index
    %c8_539 = arith.constant 8 : index
    %c0_540 = arith.constant 0 : index
    %c0_541 = arith.constant 0 : index
    %429 = vector.load %arg2[%c0_538, %c8_539, %c0_540, %c0_541] : memref<1x36x9x128xbf16, #tpu.memory_space<vmem>>, vector<1x1x8x128xbf16>
    %430 = vector.shape_cast %429 : vector<1x1x8x128xbf16> to vector<8x128xbf16>
    %c6_542 = arith.constant 6 : index
    %c0_543 = arith.constant 0 : index
    %c0_544 = arith.constant 0 : index
    %431 = vector.load %arg3[%c6_542, %c0_543, %c0_544] : memref<9x128x128xbf16, #tpu.memory_space<vmem>>, vector<1x128x128xbf16>
    %432 = vector.shape_cast %431 : vector<1x128x128xbf16> to vector<128x128xbf16>
    %cst_545 = arith.constant dense<0.000000e+00> : vector<8x128xf32>
    %433 = tpu.matmul %430, %432, %cst_545 {dimension_numbers = #tpu.dot_dimension_numbers<[1], [0], [0], [1], [0, 0, 1, 1], [], []>} : vector<8x128xbf16>, vector<128x128xbf16>, vector<8x128xf32> -> vector<8x128xf32>
    %434 = arith.addf %428, %433 : vector<8x128xf32>
    %c0_546 = arith.constant 0 : index
    %c17 = arith.constant 17 : index
    %c0_547 = arith.constant 0 : index
    %c0_548 = arith.constant 0 : index
    %435 = vector.load %arg2[%c0_546, %c17, %c0_547, %c0_548] : memref<1x36x9x128xbf16, #tpu.memory_space<vmem>>, vector<1x1x8x128xbf16>
    %436 = vector.shape_cast %435 : vector<1x1x8x128xbf16> to vector<8x128xbf16>
    %c7_549 = arith.constant 7 : index
    %c0_550 = arith.constant 0 : index
    %c0_551 = arith.constant 0 : index
    %437 = vector.load %arg3[%c7_549, %c0_550, %c0_551] : memref<9x128x128xbf16, #tpu.memory_space<vmem>>, vector<1x128x128xbf16>
    %438 = vector.shape_cast %437 : vector<1x128x128xbf16> to vector<128x128xbf16>
    %cst_552 = arith.constant dense<0.000000e+00> : vector<8x128xf32>
    %439 = tpu.matmul %436, %438, %cst_552 {dimension_numbers = #tpu.dot_dimension_numbers<[1], [0], [0], [1], [0, 0, 1, 1], [], []>} : vector<8x128xbf16>, vector<128x128xbf16>, vector<8x128xf32> -> vector<8x128xf32>
    %440 = arith.addf %434, %439 : vector<8x128xf32>
    %c0_553 = arith.constant 0 : index
    %c8_554 = arith.constant 8 : index
    %c1_555 = arith.constant 1 : index
    %c0_556 = arith.constant 0 : index
    %441 = vector.load %arg2[%c0_553, %c8_554, %c1_555, %c0_556] : memref<1x36x9x128xbf16, #tpu.memory_space<vmem>>, vector<1x1x8x128xbf16>
    %442 = vector.shape_cast %441 : vector<1x1x8x128xbf16> to vector<8x128xbf16>
    %c8_557 = arith.constant 8 : index
    %c0_558 = arith.constant 0 : index
    %c0_559 = arith.constant 0 : index
    %443 = vector.load %arg3[%c8_557, %c0_558, %c0_559] : memref<9x128x128xbf16, #tpu.memory_space<vmem>>, vector<1x128x128xbf16>
    %444 = vector.shape_cast %443 : vector<1x128x128xbf16> to vector<128x128xbf16>
    %cst_560 = arith.constant dense<0.000000e+00> : vector<8x128xf32>
    %445 = tpu.matmul %442, %444, %cst_560 {dimension_numbers = #tpu.dot_dimension_numbers<[1], [0], [0], [1], [0, 0, 1, 1], [], []>} : vector<8x128xbf16>, vector<128x128xbf16>, vector<8x128xf32> -> vector<8x128xf32>
    %446 = arith.addf %440, %445 : vector<8x128xf32>
    %c56 = arith.constant 56 : index
    %c0_561 = arith.constant 0 : index
    %447 = vector.load %arg7[%c56, %c0_561] : memref<64x128xf32, #tpu.memory_space<vmem>>, vector<8x128xf32>
    tpu.vector_store %arg7[%c56, %c0_561], %446 {strides = array<i32>} : memref<64x128xf32, #tpu.memory_space<vmem>>, vector<8x128xf32>,
    %c0_562 = arith.constant 0 : index
    %c0_563 = arith.constant 0 : index
    %448 = vector.load %arg7[%c0_562, %c0_563] : memref<64x128xf32, #tpu.memory_space<vmem>>, vector<64x128xf32>
    %c0_i32 = arith.constant 0 : i32
    %449 = arith.cmpi eq, %arg0, %c0_i32 : i32
    %c0_i32_564 = arith.constant 0 : i32
    %450 = arith.cmpi eq, %arg1, %c0_i32_564 : i32
    %451 = arith.andi %449, %450 : i1
    %452 = arith.extui %451 : i1 to i32
    %c0_i32_565 = arith.constant 0 : i32
    %453 = arith.cmpi ne, %452, %c0_i32_565 : i32
    scf.if %453 {
      %cst_572 = arith.constant 0.000000e+00 : f32
      %465 = vector.broadcast %cst_572 : f32 to vector<1x128xf32>
      %c0_573 = arith.constant 0 : index
      %c0_574 = arith.constant 0 : index
      %466 = vector.load %arg8[%c0_573, %c0_574] : memref<1x128xf32, #tpu.memory_space<vmem>>, vector<1x128xf32>
      tpu.vector_store %arg8[%c0_573, %c0_574], %465 {strides = array<i32>} : memref<1x128xf32, #tpu.memory_space<vmem>>, vector<1x128xf32>,
      %cst_575 = arith.constant 0.000000e+00 : f32
      %467 = vector.broadcast %cst_575 : f32 to vector<1x128xf32>
      %c0_576 = arith.constant 0 : index
      %c0_577 = arith.constant 0 : index
      %468 = vector.load %arg9[%c0_576, %c0_577] : memref<1x128xf32, #tpu.memory_space<vmem>>, vector<1x128xf32>
      tpu.vector_store %arg9[%c0_576, %c0_577], %467 {strides = array<i32>} : memref<1x128xf32, #tpu.memory_space<vmem>>, vector<1x128xf32>,
    } else {
    }
    %c0_i32_566 = arith.constant 0 : i32
    %454 = arith.cmpi eq, %arg0, %c0_i32_566 : i32
    %455 = arith.extui %454 : i1 to i32
    %c0_i32_567 = arith.constant 0 : i32
    %456 = arith.cmpi ne, %455, %c0_i32_567 : i32
    scf.if %456 {
      %c0_572 = arith.constant 0 : index
      %c0_573 = arith.constant 0 : index
      %465 = vector.load %arg8[%c0_572, %c0_573] : memref<1x128xf32, #tpu.memory_space<vmem>>, vector<1x128xf32>
      %cst_574 = arith.constant dense<0.000000e+00> : vector<128xf32>
      %466 = vector.multi_reduction <add>, %448, %cst_574 [0] : vector<64x128xf32> to vector<128xf32>
      %467 = vector.shape_cast %466 : vector<128xf32> to vector<1x128xf32>
      %468 = arith.addf %465, %467 : vector<1x128xf32>
      %c0_575 = arith.constant 0 : index
      %c0_576 = arith.constant 0 : index
      %469 = vector.load %arg8[%c0_575, %c0_576] : memref<1x128xf32, #tpu.memory_space<vmem>>, vector<1x128xf32>
      tpu.vector_store %arg8[%c0_575, %c0_576], %468 {strides = array<i32>} : memref<1x128xf32, #tpu.memory_space<vmem>>, vector<1x128xf32>,
      %c0_577 = arith.constant 0 : index
      %c0_578 = arith.constant 0 : index
      %470 = vector.load %arg9[%c0_577, %c0_578] : memref<1x128xf32, #tpu.memory_space<vmem>>, vector<1x128xf32>
      %471 = arith.mulf %448, %448 : vector<64x128xf32>
      %cst_579 = arith.constant dense<0.000000e+00> : vector<128xf32>
      %472 = vector.multi_reduction <add>, %471, %cst_579 [0] : vector<64x128xf32> to vector<128xf32>
      %473 = vector.shape_cast %472 : vector<128xf32> to vector<1x128xf32>
      %474 = arith.addf %470, %473 : vector<1x128xf32>
      %c0_580 = arith.constant 0 : index
      %c0_581 = arith.constant 0 : index
      %475 = vector.load %arg9[%c0_580, %c0_581] : memref<1x128xf32, #tpu.memory_space<vmem>>, vector<1x128xf32>
      tpu.vector_store %arg9[%c0_580, %c0_581], %474 {strides = array<i32>} : memref<1x128xf32, #tpu.memory_space<vmem>>, vector<1x128xf32>,
    } else {
    }
    %c1_i32 = arith.constant 1 : i32
    %457 = arith.cmpi eq, %arg0, %c1_i32 : i32
    %c0_i32_568 = arith.constant 0 : i32
    %458 = arith.cmpi eq, %arg1, %c0_i32_568 : i32
    %459 = arith.andi %457, %458 : i1
    %460 = arith.extui %459 : i1 to i32
    %c0_i32_569 = arith.constant 0 : i32
    %461 = arith.cmpi ne, %460, %c0_i32_569 : i32
    scf.if %461 {
      %c0_572 = arith.constant 0 : index
      %c0_573 = arith.constant 0 : index
      %465 = vector.load %arg8[%c0_572, %c0_573] : memref<1x128xf32, #tpu.memory_space<vmem>>, vector<1x128xf32>
      %cst_574 = arith.constant 7.812500e-03 : f32
      %466 = vector.broadcast %cst_574 : f32 to vector<1x128xf32>
      %467 = arith.mulf %465, %466 : vector<1x128xf32>
      %c0_575 = arith.constant 0 : index
      %c0_576 = arith.constant 0 : index
      %468 = vector.load %arg9[%c0_575, %c0_576] : memref<1x128xf32, #tpu.memory_space<vmem>>, vector<1x128xf32>
      %cst_577 = arith.constant 7.812500e-03 : f32
      %469 = vector.broadcast %cst_577 : f32 to vector<1x128xf32>
      %470 = arith.mulf %468, %469 : vector<1x128xf32>
      %471 = arith.mulf %467, %467 : vector<1x128xf32>
      %472 = arith.subf %470, %471 : vector<1x128xf32>
      %cst_578 = arith.constant 0.000000e+00 : f32
      %473 = vector.broadcast %cst_578 : f32 to vector<1x128xf32>
      %474 = arith.maximumf %472, %473 : vector<1x128xf32>
      %c0_579 = arith.constant 0 : index
      %c0_580 = arith.constant 0 : index
      %475 = vector.load %arg4[%c0_579, %c0_580] : memref<1x128xf32, #tpu.memory_space<vmem>>, vector<1x128xf32>
      %cst_581 = arith.constant 9.99999974E-6 : f32
      %476 = vector.broadcast %cst_581 : f32 to vector<1x128xf32>
      %477 = arith.addf %474, %476 : vector<1x128xf32>
      %478 = math.rsqrt %477 : vector<1x128xf32>
      %479 = arith.mulf %475, %478 : vector<1x128xf32>
      %c0_582 = arith.constant 0 : index
      %c0_583 = arith.constant 0 : index
      %480 = vector.load %arg10[%c0_582, %c0_583] : memref<1x128xf32, #tpu.memory_space<vmem>>, vector<1x128xf32>
      tpu.vector_store %arg10[%c0_582, %c0_583], %479 {strides = array<i32>} : memref<1x128xf32, #tpu.memory_space<vmem>>, vector<1x128xf32>,
      %c0_584 = arith.constant 0 : index
      %c0_585 = arith.constant 0 : index
      %481 = vector.load %arg5[%c0_584, %c0_585] : memref<1x128xf32, #tpu.memory_space<vmem>>, vector<1x128xf32>
      %482 = arith.mulf %467, %479 : vector<1x128xf32>
      %483 = arith.subf %481, %482 : vector<1x128xf32>
      %c0_586 = arith.constant 0 : index
      %c0_587 = arith.constant 0 : index
      %484 = vector.load %arg11[%c0_586, %c0_587] : memref<1x128xf32, #tpu.memory_space<vmem>>, vector<1x128xf32>
      tpu.vector_store %arg11[%c0_586, %c0_587], %483 {strides = array<i32>} : memref<1x128xf32, #tpu.memory_space<vmem>>, vector<1x128xf32>,
    } else {
    }
    %c1_i32_570 = arith.constant 1 : i32
    %462 = arith.cmpi eq, %arg0, %c1_i32_570 : i32
    %463 = arith.extui %462 : i1 to i32
    %c0_i32_571 = arith.constant 0 : i32
    %464 = arith.cmpi ne, %463, %c0_i32_571 : i32
    scf.if %464 {
      %c0_572 = arith.constant 0 : index
      %c0_573 = arith.constant 0 : index
      %465 = vector.load %arg10[%c0_572, %c0_573] : memref<1x128xf32, #tpu.memory_space<vmem>>, vector<1x128xf32>
      %466 = vector.broadcast %465 : vector<1x128xf32> to vector<64x128xf32>
      %467 = arith.mulf %448, %466 : vector<64x128xf32>
      %c0_574 = arith.constant 0 : index
      %c0_575 = arith.constant 0 : index
      %468 = vector.load %arg11[%c0_574, %c0_575] : memref<1x128xf32, #tpu.memory_space<vmem>>, vector<1x128xf32>
      %469 = vector.broadcast %468 : vector<1x128xf32> to vector<64x128xf32>
      %470 = arith.addf %467, %469 : vector<64x128xf32>
      %cst_576 = arith.constant 0.000000e+00 : f32
      %471 = vector.broadcast %cst_576 : f32 to vector<64x128xf32>
      %472 = arith.maximumf %470, %471 : vector<64x128xf32>
      %473 = arith.truncf %472 : vector<64x128xf32> to vector<64x128xbf16>
      %c0_577 = arith.constant 0 : index
      %c0_578 = arith.constant 0 : index
      %c0_579 = arith.constant 0 : index
      %474 = vector.load %arg6[%c0_577, %c0_578, %c0_579] : memref<1x64x128xbf16, #tpu.memory_space<vmem>>, vector<1x64x128xbf16>
      %475 = vector.shape_cast %474 : vector<1x64x128xbf16> to vector<64x128xbf16>
      %476 = vector.shape_cast %473 : vector<64x128xbf16> to vector<1x64x128xbf16>
      tpu.vector_store %arg6[%c0_577, %c0_578, %c0_579], %476 {strides = array<i32>} : memref<1x64x128xbf16, #tpu.memory_space<vmem>>, vector<1x64x128xbf16>,
    } else {
    }
    return
  }
  func.func @transform_0(%arg0: i32, %arg1: i32) -> (i32, i32, i32, i32) {
    %c0_i32 = arith.constant 0 : i32
    %c0_i32_0 = arith.constant 0 : i32
    %c0_i32_1 = arith.constant 0 : i32
    %c0_i32_2 = arith.constant 0 : i32
    return %arg1, %c0_i32, %c0_i32_0, %c0_i32_1 : i32, i32, i32, i32
  }
  func.func @transform_1(%arg0: i32, %arg1: i32) -> (i32, i32, i32) {
    %c0_i32 = arith.constant 0 : i32
    %c0_i32_0 = arith.constant 0 : i32
    %c0_i32_1 = arith.constant 0 : i32
    %c0_i32_2 = arith.constant 0 : i32
    return %c0_i32, %c0_i32_0, %c0_i32_1 : i32, i32, i32
  }
  func.func @transform_2(%arg0: i32, %arg1: i32) -> (i32, i32) {
    %c0_i32 = arith.constant 0 : i32
    %c0_i32_0 = arith.constant 0 : i32
    %c0_i32_1 = arith.constant 0 : i32
    return %c0_i32, %c0_i32_0 : i32, i32
  }
  func.func @transform_3(%arg0: i32, %arg1: i32) -> (i32, i32) {
    %c0_i32 = arith.constant 0 : i32
    %c0_i32_0 = arith.constant 0 : i32
    %c0_i32_1 = arith.constant 0 : i32
    return %c0_i32, %c0_i32_0 : i32, i32
  }
  func.func @transform_4(%arg0: i32, %arg1: i32) -> (i32, i32, i32) {
    %c0_i32 = arith.constant 0 : i32
    %c0_i32_0 = arith.constant 0 : i32
    %c0_i32_1 = arith.constant 0 : i32
    return %arg1, %c0_i32, %c0_i32_0 : i32, i32, i32
  }
}

module attributes {stable_mosaic.version = 11 : i64} {
  func.func @_mm_bn_proj_relu_kernel(%arg0: i32, %arg1: i32, %arg2: memref<128x128xbf16, #tpu.memory_space<vmem>>, %arg3: memref<128x128xbf16, #tpu.memory_space<vmem>>, %arg4: memref<1x128xf32, #tpu.memory_space<vmem>>, %arg5: memref<1x128xf32, #tpu.memory_space<vmem>>, %arg6: memref<128x128xbf16, #tpu.memory_space<vmem>>, %arg7: memref<128x128xbf16, #tpu.memory_space<vmem>>, %arg8: memref<128x128xf32, #tpu.memory_space<vmem>>, %arg9: memref<1x128xf32, #tpu.memory_space<vmem>>, %arg10: memref<1x128xf32, #tpu.memory_space<vmem>>, %arg11: memref<1x128xf32, #tpu.memory_space<vmem>>, %arg12: memref<1x128xf32, #tpu.memory_space<vmem>>) attributes {dimension_semantics = [#tpu.dimension_semantics<arbitrary>, #tpu.dimension_semantics<arbitrary>], iteration_bounds = array<i64: 2, 1>, scalar_prefetch = 0 : i64, scratch_operands = 4 : i64, tpu.core_type = #tpu.core_type<tc>, window_params = [{transform_indices = @transform_0, window_bounds = array<i64: 128, 128>}, {pipeline_mode = #tpu.pipeline_mode<synchronous>, transform_indices = @transform_1, window_bounds = array<i64: 128, 128>}, {pipeline_mode = #tpu.pipeline_mode<synchronous>, transform_indices = @transform_2, window_bounds = array<i64: 1, 128>}, {pipeline_mode = #tpu.pipeline_mode<synchronous>, transform_indices = @transform_3, window_bounds = array<i64: 1, 128>}, {transform_indices = @transform_4, window_bounds = array<i64: 128, 128>}, {pipeline_mode = #tpu.pipeline_mode<synchronous>, transform_indices = @transform_5, window_bounds = array<i64: 128, 128>}, {transform_indices = @transform_6, window_bounds = array<i64: 128, 128>}]} {
    %c0 = arith.constant 0 : index
    %c0_0 = arith.constant 0 : index
    %0 = vector.load %arg2[%c0, %c0_0] : memref<128x128xbf16, #tpu.memory_space<vmem>>, vector<128x128xbf16>
    %c0_1 = arith.constant 0 : index
    %c0_2 = arith.constant 0 : index
    %1 = vector.load %arg3[%c0_1, %c0_2] : memref<128x128xbf16, #tpu.memory_space<vmem>>, vector<128x128xbf16>
    %cst = arith.constant dense<0.000000e+00> : vector<128x128xf32>
    %2 = tpu.matmul %0, %1, %cst {dimension_numbers = #tpu.dot_dimension_numbers<[1], [0], [0], [1], [0, 0, 1, 1], [], []>} : vector<128x128xbf16>, vector<128x128xbf16>, vector<128x128xf32> -> vector<128x128xf32>
    %c0_i32 = arith.constant 0 : i32
    %3 = arith.cmpi eq, %arg0, %c0_i32 : i32
    %c0_i32_3 = arith.constant 0 : i32
    %4 = arith.cmpi eq, %arg1, %c0_i32_3 : i32
    %5 = arith.andi %3, %4 : i1
    %6 = arith.extui %5 : i1 to i32
    %c0_i32_4 = arith.constant 0 : i32
    %7 = arith.cmpi ne, %6, %c0_i32_4 : i32
    scf.if %7 {
      %cst_11 = arith.constant 0.000000e+00 : f32
      %19 = vector.broadcast %cst_11 : f32 to vector<1x128xf32>
      %c0_12 = arith.constant 0 : index
      %c0_13 = arith.constant 0 : index
      %20 = vector.load %arg9[%c0_12, %c0_13] : memref<1x128xf32, #tpu.memory_space<vmem>>, vector<1x128xf32>
      tpu.vector_store %arg9[%c0_12, %c0_13], %19 {strides = array<i32>} : memref<1x128xf32, #tpu.memory_space<vmem>>, vector<1x128xf32>,
      %cst_14 = arith.constant 0.000000e+00 : f32
      %21 = vector.broadcast %cst_14 : f32 to vector<1x128xf32>
      %c0_15 = arith.constant 0 : index
      %c0_16 = arith.constant 0 : index
      %22 = vector.load %arg10[%c0_15, %c0_16] : memref<1x128xf32, #tpu.memory_space<vmem>>, vector<1x128xf32>
      tpu.vector_store %arg10[%c0_15, %c0_16], %21 {strides = array<i32>} : memref<1x128xf32, #tpu.memory_space<vmem>>, vector<1x128xf32>,
    } else {
    }
    %c0_i32_5 = arith.constant 0 : i32
    %8 = arith.cmpi eq, %arg0, %c0_i32_5 : i32
    %9 = arith.extui %8 : i1 to i32
    %c0_i32_6 = arith.constant 0 : i32
    %10 = arith.cmpi ne, %9, %c0_i32_6 : i32
    scf.if %10 {
      %c0_11 = arith.constant 0 : index
      %c0_12 = arith.constant 0 : index
      %19 = vector.load %arg9[%c0_11, %c0_12] : memref<1x128xf32, #tpu.memory_space<vmem>>, vector<1x128xf32>
      %cst_13 = arith.constant dense<0.000000e+00> : vector<128xf32>
      %20 = vector.multi_reduction <add>, %2, %cst_13 [0] : vector<128x128xf32> to vector<128xf32>
      %21 = vector.shape_cast %20 : vector<128xf32> to vector<1x128xf32>
      %22 = arith.addf %19, %21 : vector<1x128xf32>
      %c0_14 = arith.constant 0 : index
      %c0_15 = arith.constant 0 : index
      %23 = vector.load %arg9[%c0_14, %c0_15] : memref<1x128xf32, #tpu.memory_space<vmem>>, vector<1x128xf32>
      tpu.vector_store %arg9[%c0_14, %c0_15], %22 {strides = array<i32>} : memref<1x128xf32, #tpu.memory_space<vmem>>, vector<1x128xf32>,
      %c0_16 = arith.constant 0 : index
      %c0_17 = arith.constant 0 : index
      %24 = vector.load %arg10[%c0_16, %c0_17] : memref<1x128xf32, #tpu.memory_space<vmem>>, vector<1x128xf32>
      %25 = arith.mulf %2, %2 : vector<128x128xf32>
      %cst_18 = arith.constant dense<0.000000e+00> : vector<128xf32>
      %26 = vector.multi_reduction <add>, %25, %cst_18 [0] : vector<128x128xf32> to vector<128xf32>
      %27 = vector.shape_cast %26 : vector<128xf32> to vector<1x128xf32>
      %28 = arith.addf %24, %27 : vector<1x128xf32>
      %c0_19 = arith.constant 0 : index
      %c0_20 = arith.constant 0 : index
      %29 = vector.load %arg10[%c0_19, %c0_20] : memref<1x128xf32, #tpu.memory_space<vmem>>, vector<1x128xf32>
      tpu.vector_store %arg10[%c0_19, %c0_20], %28 {strides = array<i32>} : memref<1x128xf32, #tpu.memory_space<vmem>>, vector<1x128xf32>,
    } else {
    }
    %c1_i32 = arith.constant 1 : i32
    %11 = arith.cmpi eq, %arg0, %c1_i32 : i32
    %c0_i32_7 = arith.constant 0 : i32
    %12 = arith.cmpi eq, %arg1, %c0_i32_7 : i32
    %13 = arith.andi %11, %12 : i1
    %14 = arith.extui %13 : i1 to i32
    %c0_i32_8 = arith.constant 0 : i32
    %15 = arith.cmpi ne, %14, %c0_i32_8 : i32
    scf.if %15 {
      %c0_11 = arith.constant 0 : index
      %c0_12 = arith.constant 0 : index
      %19 = vector.load %arg9[%c0_11, %c0_12] : memref<1x128xf32, #tpu.memory_space<vmem>>, vector<1x128xf32>
      %cst_13 = arith.constant 7.812500e-03 : f32
      %20 = vector.broadcast %cst_13 : f32 to vector<1x128xf32>
      %21 = arith.mulf %19, %20 : vector<1x128xf32>
      %c0_14 = arith.constant 0 : index
      %c0_15 = arith.constant 0 : index
      %22 = vector.load %arg10[%c0_14, %c0_15] : memref<1x128xf32, #tpu.memory_space<vmem>>, vector<1x128xf32>
      %cst_16 = arith.constant 7.812500e-03 : f32
      %23 = vector.broadcast %cst_16 : f32 to vector<1x128xf32>
      %24 = arith.mulf %22, %23 : vector<1x128xf32>
      %25 = arith.mulf %21, %21 : vector<1x128xf32>
      %26 = arith.subf %24, %25 : vector<1x128xf32>
      %cst_17 = arith.constant 0.000000e+00 : f32
      %27 = vector.broadcast %cst_17 : f32 to vector<1x128xf32>
      %28 = arith.maximumf %26, %27 : vector<1x128xf32>
      %c0_18 = arith.constant 0 : index
      %c0_19 = arith.constant 0 : index
      %29 = vector.load %arg4[%c0_18, %c0_19] : memref<1x128xf32, #tpu.memory_space<vmem>>, vector<1x128xf32>
      %cst_20 = arith.constant 9.99999974E-6 : f32
      %30 = vector.broadcast %cst_20 : f32 to vector<1x128xf32>
      %31 = arith.addf %28, %30 : vector<1x128xf32>
      %32 = math.rsqrt %31 : vector<1x128xf32>
      %33 = arith.mulf %29, %32 : vector<1x128xf32>
      %c0_21 = arith.constant 0 : index
      %c0_22 = arith.constant 0 : index
      %34 = vector.load %arg11[%c0_21, %c0_22] : memref<1x128xf32, #tpu.memory_space<vmem>>, vector<1x128xf32>
      tpu.vector_store %arg11[%c0_21, %c0_22], %33 {strides = array<i32>} : memref<1x128xf32, #tpu.memory_space<vmem>>, vector<1x128xf32>,
      %c0_23 = arith.constant 0 : index
      %c0_24 = arith.constant 0 : index
      %35 = vector.load %arg5[%c0_23, %c0_24] : memref<1x128xf32, #tpu.memory_space<vmem>>, vector<1x128xf32>
      %36 = arith.mulf %21, %33 : vector<1x128xf32>
      %37 = arith.subf %35, %36 : vector<1x128xf32>
      %c0_25 = arith.constant 0 : index
      %c0_26 = arith.constant 0 : index
      %38 = vector.load %arg12[%c0_25, %c0_26] : memref<1x128xf32, #tpu.memory_space<vmem>>, vector<1x128xf32>
      tpu.vector_store %arg12[%c0_25, %c0_26], %37 {strides = array<i32>} : memref<1x128xf32, #tpu.memory_space<vmem>>, vector<1x128xf32>,
    } else {
    }
    %c1_i32_9 = arith.constant 1 : i32
    %16 = arith.cmpi eq, %arg0, %c1_i32_9 : i32
    %17 = arith.extui %16 : i1 to i32
    %c0_i32_10 = arith.constant 0 : i32
    %18 = arith.cmpi ne, %17, %c0_i32_10 : i32
    scf.if %18 {
      %c0_11 = arith.constant 0 : index
      %c0_12 = arith.constant 0 : index
      %19 = vector.load %arg6[%c0_11, %c0_12] : memref<128x128xbf16, #tpu.memory_space<vmem>>, vector<128x128xbf16>
      %c0_13 = arith.constant 0 : index
      %c0_14 = arith.constant 0 : index
      %20 = vector.load %arg7[%c0_13, %c0_14] : memref<128x128xbf16, #tpu.memory_space<vmem>>, vector<128x128xbf16>
      %cst_15 = arith.constant dense<0.000000e+00> : vector<128x128xf32>
      %21 = tpu.matmul %19, %20, %cst_15 {dimension_numbers = #tpu.dot_dimension_numbers<[1], [0], [0], [1], [0, 0, 1, 1], [], []>} : vector<128x128xbf16>, vector<128x128xbf16>, vector<128x128xf32> -> vector<128x128xf32>
      %c0_16 = arith.constant 0 : index
      %c0_17 = arith.constant 0 : index
      %22 = vector.load %arg11[%c0_16, %c0_17] : memref<1x128xf32, #tpu.memory_space<vmem>>, vector<1x128xf32>
      %23 = vector.broadcast %22 : vector<1x128xf32> to vector<128x128xf32>
      %24 = arith.mulf %2, %23 : vector<128x128xf32>
      %c0_18 = arith.constant 0 : index
      %c0_19 = arith.constant 0 : index
      %25 = vector.load %arg12[%c0_18, %c0_19] : memref<1x128xf32, #tpu.memory_space<vmem>>, vector<1x128xf32>
      %26 = vector.broadcast %25 : vector<1x128xf32> to vector<128x128xf32>
      %27 = arith.addf %24, %26 : vector<128x128xf32>
      %28 = arith.addf %27, %21 : vector<128x128xf32>
      %cst_20 = arith.constant 0.000000e+00 : f32
      %29 = vector.broadcast %cst_20 : f32 to vector<128x128xf32>
      %30 = arith.maximumf %28, %29 : vector<128x128xf32>
      %c0_21 = arith.constant 0 : index
      %c0_22 = arith.constant 0 : index
      %31 = vector.load %arg8[%c0_21, %c0_22] : memref<128x128xf32, #tpu.memory_space<vmem>>, vector<128x128xf32>
      tpu.vector_store %arg8[%c0_21, %c0_22], %30 {strides = array<i32>} : memref<128x128xf32, #tpu.memory_space<vmem>>, vector<128x128xf32>,
    } else {
    }
    return
  }
  func.func @transform_0(%arg0: i32, %arg1: i32) -> (i32, i32) {
    %c0_i32 = arith.constant 0 : i32
    %c0_i32_0 = arith.constant 0 : i32
    return %arg1, %c0_i32 : i32, i32
  }
  func.func @transform_1(%arg0: i32, %arg1: i32) -> (i32, i32) {
    %c0_i32 = arith.constant 0 : i32
    %c0_i32_0 = arith.constant 0 : i32
    %c0_i32_1 = arith.constant 0 : i32
    return %c0_i32, %c0_i32_0 : i32, i32
  }
  func.func @transform_2(%arg0: i32, %arg1: i32) -> (i32, i32) {
    %c0_i32 = arith.constant 0 : i32
    %c0_i32_0 = arith.constant 0 : i32
    %c0_i32_1 = arith.constant 0 : i32
    return %c0_i32, %c0_i32_0 : i32, i32
  }
  func.func @transform_3(%arg0: i32, %arg1: i32) -> (i32, i32) {
    %c0_i32 = arith.constant 0 : i32
    %c0_i32_0 = arith.constant 0 : i32
    %c0_i32_1 = arith.constant 0 : i32
    return %c0_i32, %c0_i32_0 : i32, i32
  }
  func.func @transform_4(%arg0: i32, %arg1: i32) -> (i32, i32) {
    %c0_i32 = arith.constant 0 : i32
    %c0_i32_0 = arith.constant 0 : i32
    return %arg1, %c0_i32 : i32, i32
  }
  func.func @transform_5(%arg0: i32, %arg1: i32) -> (i32, i32) {
    %c0_i32 = arith.constant 0 : i32
    %c0_i32_0 = arith.constant 0 : i32
    %c0_i32_1 = arith.constant 0 : i32
    return %c0_i32, %c0_i32_0 : i32, i32
  }
  func.func @transform_6(%arg0: i32, %arg1: i32) -> (i32, i32) {
    %c0_i32 = arith.constant 0 : i32
    %c0_i32_0 = arith.constant 0 : i32
    return %arg1, %c0_i32 : i32, i32
  }
}

</mosaic_0001>

<llo_original>
// kernel: bottleneck_forward.3
$region0: #{bottleneck_forward.3}
  #allocation0 [shape = 'u32[]', space=smem, size = 0x4, offset = 0x4, fixed_abs, tag = 'smem constant byte address 0x4 - core index']
  #allocation1 [shape = 'u32[144,128]{1,0:T(1,128)}', space=vmem, size = 0x12000, scoped, tag = 'internal scratch']
  #allocation2 [shape = 'f32[1,128]{1,0:T(1,128)}', space=vmem, size = 0x200, scoped, tag = 'scratch operand']
  #allocation3 [shape = 'f32[1,128]{1,0:T(1,128)}', space=vmem, size = 0x200, scoped, tag = 'scratch operand']
  #allocation4 [shape = 'f32[1,128]{1,0:T(1,128)}', space=vmem, size = 0x200, scoped, tag = 'scratch operand']
  #allocation5 [shape = 'f32[1,128]{1,0:T(1,128)}', space=vmem, size = 0x200, scoped, tag = 'scratch operand']
  %s0 = inlined_call_operand.vmem [shape: bf16[512,128], index: 0, kind: input, shape index: {}]
  %s1 = inlined_call_operand.vmem [shape: bf16[128,128], index: 1, kind: input, shape index: {}]
  %s2 = inlined_call_operand.vmem [shape: f32[1,128], index: 2, kind: input, shape index: {}]
  %s3 = inlined_call_operand.vmem [shape: f32[1,128], index: 3, kind: input, shape index: {}]
  %s4 = inlined_call_operand.vmem [shape: bf16[512,128], index: 4, kind: output, shape index: {}]
  %s5 = sld [smem:[#allocation0]]
  $region65: #{bottleneck_forward.3} parent=0
    _
  %s7 = ssub.s32 1, %s5
  %s8 = scalar_select 0, %s7, %s5
  loop: start=0, step=1, limit=6
  $region2: #{bottleneck_forward.3} parent=0 // loop_pre_header
    _
  $region3: #{bottleneck_forward.3} parent=0 // loop_header
    %s10 = sphi 0, %s14
    %p11 = scmp.ge.s32.totalorder %s10, 6
    %s17 = sphi 0, %s29
    %s18 = sphi 0, %s25
    %s19 = sphi 0, %s17
    %s20 = sphi 0, %s18
    %s21 = sphi 0, %s19
    %s22 = sphi 0, %s20
    %s32 = sphi 0, %s34
    %s35 = sphi 0, %s32
    %s36 = sphi 0, %s35
    %s52 = sphi 0, %s36
    %s56 = sphi 0, %s56
    %s58 = sphi 0, %s56
    %s59 = sphi 0, %s58
    %s73 = sphi 0, %s59
    %s77 = sphi 0, %s77
    %s79 = sphi 0, %s77
    %s80 = sphi 0, %s79
    %s94 = sphi 0, %s80
    %s98 = sphi 0, %s98
    %s100 = sphi 0, %s98
    %s101 = sphi 0, %s100
    %s115 = sphi 0, %s101
    %s121 = sphi 0, %s123
    %s124 = sphi 0, %s121
    %s125 = sphi 0, %s124
    %s141 = sphi 0, %s125
  $region4: #{bottleneck_forward.3} parent=0 // loop_header_branch
    %13 = sbr.rel (%p11) target = $region8
  $region5: #{bottleneck_forward.3} parent=0 // loop_body
    %s15 = ssub.s32 %s10, 1
    %s16 = ssub.s32 %s10, 2
    %s23 = sadd.s32 1, %s18
    %p24 = scmp.ge.s32.totalorder %s23, 2
    %s25 = scalar_select %p24, 0, %s23
    %s26 = sadd.s32 1, %s17
    %s27 = scalar_select %p24, %s26, %s17
    %p28 = scmp.ge.s32.totalorder %s27, 2
    %s29 = scalar_select %p28, 0, %s27
    %s30 = ssub.s32 %s18, %s25
    %p31 = scmp.eq.s32.totalorder %s30, 0
    %s33 = sadd.s32 %s32, 1
    %s34 = scalar_select %p31, %s32, %s33
    %p37 = pneg %p31
    %p38 = scmp.eq.s32.totalorder %s10, 3
    %p39 = por %p37, %p38
    %p40 = scmp.ne.s32.totalorder %s32, %s35
    %p41 = scmp.eq.s32.totalorder %s10, 0
    %p42 = por %p40, %p41
    %p43 = scmp.ne.s32.totalorder %s32, %s35
    %p44 = scmp.eq.s32.totalorder %s15, 3
    %p45 = por %p43, %p44
    %p46 = scmp.ne.s32.totalorder %s35, %s36
    %p47 = scmp.eq.s32.totalorder %s15, 0
    %p48 = por %p46, %p47
    %p49 = scmp.ne.s32.totalorder %s35, %s36
    %p50 = scmp.eq.s32.totalorder %s16, 3
    %p51 = por %p49, %p50
    %p53 = scmp.ne.s32.totalorder %s36, %s52
    %p54 = scmp.eq.s32.totalorder %s16, 0
    %p55 = por %p53, %p54
    %s57 = sadd.s32 %s56, 1
    %p60 = scmp.eq.s32.totalorder %s10, 3
    %p61 = scmp.ne.s32.totalorder %s56, %s58
    %p62 = scmp.eq.s32.totalorder %s10, 0
    %p63 = por %p61, %p62
    %p64 = scmp.ne.s32.totalorder %s56, %s58
    %p65 = scmp.eq.s32.totalorder %s15, 3
    %p66 = por %p64, %p65
    %p67 = scmp.ne.s32.totalorder %s58, %s59
    %p68 = scmp.eq.s32.totalorder %s15, 0
    %p69 = por %p67, %p68
    %p70 = scmp.ne.s32.totalorder %s58, %s59
    %p71 = scmp.eq.s32.totalorder %s16, 3
    %p72 = por %p70, %p71
    %p74 = scmp.ne.s32.totalorder %s59, %s73
    %p75 = scmp.eq.s32.totalorder %s16, 0
    %p76 = por %p74, %p75
    %s78 = sadd.s32 %s77, 1
    %p81 = scmp.eq.s32.totalorder %s10, 3
    %p82 = scmp.ne.s32.totalorder %s77, %s79
    %p83 = scmp.eq.s32.totalorder %s10, 0
    %p84 = por %p82, %p83
    %p85 = scmp.ne.s32.totalorder %s77, %s79
    %p86 = scmp.eq.s32.totalorder %s15, 3
    %p87 = por %p85, %p86
    %p88 = scmp.ne.s32.totalorder %s79, %s80
    %p89 = scmp.eq.s32.totalorder %s15, 0
    %p90 = por %p88, %p89
    %p91 = scmp.ne.s32.totalorder %s79, %s80
    %p92 = scmp.eq.s32.totalorder %s16, 3
    %p93 = por %p91, %p92
    %p95 = scmp.ne.s32.totalorder %s80, %s94
    %p96 = scmp.eq.s32.totalorder %s16, 0
    %p97 = por %p95, %p96
    %s99 = sadd.s32 %s98, 1
    %p102 = scmp.eq.s32.totalorder %s10, 3
    %p103 = scmp.ne.s32.totalorder %s98, %s100
    %p104 = scmp.eq.s32.totalorder %s10, 0
    %p105 = por %p103, %p104
    %p106 = scmp.ne.s32.totalorder %s98, %s100
    %p107 = scmp.eq.s32.totalorder %s15, 3
    %p108 = por %p106, %p107
    %p109 = scmp.ne.s32.totalorder %s100, %s101
    %p110 = scmp.eq.s32.totalorder %s15, 0
    %p111 = por %p109, %p110
    %p112 = scmp.ne.s32.totalorder %s100, %s101
    %p113 = scmp.eq.s32.totalorder %s16, 3
    %p114 = por %p112, %p113
    %p116 = scmp.ne.s32.totalorder %s101, %s115
    %p117 = scmp.eq.s32.totalorder %s16, 0
    %p118 = por %p116, %p117
    %s119 = ssub.s32 %s18, %s25
    %p120 = scmp.eq.s32.totalorder %s119, 0
    %s122 = sadd.s32 %s121, 1
    %s123 = scalar_select %p120, %s121, %s122
    %p126 = pneg %p120
    %p127 = scmp.eq.s32.totalorder %s10, 3
    %p128 = por %p126, %p127
    %p129 = scmp.ne.s32.totalorder %s121, %s124
    %p130 = scmp.eq.s32.totalorder %s10, 0
    %p131 = por %p129, %p130
    %p132 = scmp.ne.s32.totalorder %s121, %s124
    %p133 = scmp.eq.s32.totalorder %s15, 3
    %p134 = por %p132, %p133
    %p135 = scmp.ne.s32.totalorder %s124, %s125
    %p136 = scmp.eq.s32.totalorder %s15, 0
    %p137 = por %p135, %p136
    %p138 = scmp.ne.s32.totalorder %s124, %s125
    %p139 = scmp.eq.s32.totalorder %s16, 3
    %p140 = por %p138, %p139
    %p142 = scmp.ne.s32.totalorder %s125, %s141
    %p143 = scmp.eq.s32.totalorder %s16, 0
    %p144 = por %p142, %p143
    %p145 = scmp.le.s32.totalorder 1, %s10
    %p146 = scmp.lt.s32.totalorder %s10, 5
    %p147 = pnand %p145, %p146
    %p148 = pneg %p147
    // Predicated region
    $region9: #{bottleneck_forward.3} parent=5 // pred_check
      _
    $region10: #{bottleneck_forward.3} parent=5 // pred_check_branch
      %150 = sbr.rel (%p147) target = $region12
    $region11: #{bottleneck_forward.3} parent=5 // pred_region
      %s151 = ssub.s32 %s10, 1
      // Predicated region
      $region13: #{bottleneck_forward.3} parent=11 // pred_check
        %p152 = pneg %p69
      $region14: #{bottleneck_forward.3} parent=11 // pred_check_branch
        %154 = sbr.rel (%p152) target = $region16
      $region15: #{bottleneck_forward.3} parent=11 // pred_region
        _
      $region16: #{bottleneck_forward.3} parent=11 // pred_fallthru
        _
      // Predicated region
      $region17: #{bottleneck_forward.3} parent=11 // pred_check
        %p155 = pneg %p90
      $region18: #{bottleneck_forward.3} parent=11 // pred_check_branch
        %157 = sbr.rel (%p155) target = $region20
      $region19: #{bottleneck_forward.3} parent=11 // pred_region
        _
      $region20: #{bottleneck_forward.3} parent=11 // pred_fallthru
        _
      // Predicated region
      $region21: #{bottleneck_forward.3} parent=11 // pred_check
        %p158 = pneg %p111
      $region22: #{bottleneck_forward.3} parent=11 // pred_check_branch
        %160 = sbr.rel (%p158) target = $region24
      $region23: #{bottleneck_forward.3} parent=11 // pred_region
        _
      $region24: #{bottleneck_forward.3} parent=11 // pred_fallthru
        _
    $region12: #{bottleneck_forward.3} parent=5 // pred_fallthru
      _
    %p161 = scmp.lt.s32.totalorder %s10, 4
    // Predicated region
    $region25: #{bottleneck_forward.3} parent=5 // pred_check
      %p162 = pneg %p161
    $region26: #{bottleneck_forward.3} parent=5 // pred_check_branch
      %164 = sbr.rel (%p162) target = $region28
    $region27: #{bottleneck_forward.3} parent=5 // pred_region
      // Predicated region
      $region29: #{bottleneck_forward.3} parent=27 // pred_check
        %p165 = pneg %p42
      $region30: #{bottleneck_forward.3} parent=27 // pred_check_branch
        %167 = sbr.rel (%p165) target = $region32
      $region31: #{bottleneck_forward.3} parent=27 // pred_region
        %s168 = smul.u32 32, %s18
        %p169 = scmp.lt.s32.totalorder %s168, 63
        %s170 = scalar_select %p169, %s168, 63
        %s171 = smul.addr %s170, 4
        %s172 = scalar_lea.vmem %s0, %s171
        %s173 = smul.u32 32, %s18
      $region32: #{bottleneck_forward.3} parent=27 // pred_fallthru
        _
    $region28: #{bottleneck_forward.3} parent=5 // pred_fallthru
      _
    %p174 = scmp.le.s32.totalorder 1, %s10
    %p175 = scmp.lt.s32.totalorder %s10, 5
    %p176 = pnand %p174, %p175
    %p177 = pneg %p176
    // Predicated region
    $region33: #{bottleneck_forward.3} parent=5 // pred_check
      _
    $region34: #{bottleneck_forward.3} parent=5 // pred_check_branch
      %179 = sbr.rel (%p176) target = $region36
    $region35: #{bottleneck_forward.3} parent=5 // pred_region
      %s180 = ssub.s32 %s10, 1
      %s181 = smul.u32 32, %s20
      %p182 = scmp.lt.s32.totalorder %s181, 63
      %s183 = scalar_select %p182, %s181, 63
      %s184 = smul.addr %s183, 4
      %s185 = scalar_lea.vmem %s0, %s184
      %p186 = pneg %p48
      %p187 = pneg %p45
      %p188 = pneg %p69
      %p189 = pneg %p66
      %p190 = pneg %p90
      %p191 = pneg %p87
      %p192 = pneg %p111
      %p193 = pneg %p108
      %p194 = pneg %p137
      %p195 = pneg %p134
      %s196 = smul.u32 32, %s20
      %p197 = scmp.lt.s32.totalorder %s196, 63
      %s198 = scalar_select %p197, %s196, 63
      %s199 = smul.addr %s198, 4
      %s200 = scalar_lea.vmem %s4, %s199
      %s201 = smul.u32 32, %s20
      %p202 = scmp.lt.s32.totalorder %s201, 63
      %s203 = scalar_select %p202, %s201, 63
      %s204 = smul.addr %s203, 4
      %s205 = scalar_lea.vmem %s0, %s204
      %s206 = smul.u32 32, %s20
      %s207 = smul.u32 32, %s20
      %p208 = scmp.lt.s32.totalorder %s207, 63
      %s209 = scalar_select %p208, %s207, 63
      %s210 = smul.addr %s209, 4
      %s211 = scalar_lea.vmem %s4, %s210
      %s212 = smul.u32 32, %s20
      %v214 = vld [vmem:[%s205] sm:$0xf]
      %v215 = vld [vmem:[%s205 + $0x4] sm:$0xf]
      %v216 = vld [vmem:[%s205 + $0x8] sm:$0xf]
      %v217 = vld [vmem:[%s205 + $0xc] sm:$0xf]
      %v218 = vld [vmem:[%s205 + $0x10] sm:$0xf]
      %v219 = vld [vmem:[%s205 + $0x14] sm:$0xf]
      %v220 = vld [vmem:[%s205 + $0x18] sm:$0xf]
      %v221 = vld [vmem:[%s205 + $0x1c] sm:$0xf]
      %v222 = vld [vmem:[%s205 + $0x20] sm:$0xf]
      %v223 = vld [vmem:[%s205 + $0x24] sm:$0xf]
      %v224 = vld [vmem:[%s205 + $0x28] sm:$0xf]
      %v225 = vld [vmem:[%s205 + $0x2c] sm:$0xf]
      %v226 = vld [vmem:[%s205 + $0x30] sm:$0xf]
      %v227 = vld [vmem:[%s205 + $0x34] sm:$0xf]
      %v228 = vld [vmem:[%s205 + $0x38] sm:$0xf]
      %v229 = vld [vmem:[%s205 + $0x3c] sm:$0xf]
      %v230 = vld [vmem:[%s205 + $0x40] sm:$0xf]
      %v231 = vld [vmem:[%s205 + $0x44] sm:$0xf]
      %v232 = vld [vmem:[%s205 + $0x48] sm:$0xf]
      %v233 = vld [vmem:[%s205 + $0x4c] sm:$0xf]
      %v234 = vld [vmem:[%s205 + $0x50] sm:$0xf]
      %v235 = vld [vmem:[%s205 + $0x54] sm:$0xf]
      %v236 = vld [vmem:[%s205 + $0x58] sm:$0xf]
      %v237 = vld [vmem:[%s205 + $0x5c] sm:$0xf]
      %v238 = vld [vmem:[%s205 + $0x60] sm:$0xf]
      %v239 = vld [vmem:[%s205 + $0x64] sm:$0xf]
      %v240 = vld [vmem:[%s205 + $0x68] sm:$0xf]
      %v241 = vld [vmem:[%s205 + $0x6c] sm:$0xf]
      %v242 = vld [vmem:[%s205 + $0x70] sm:$0xf]
      %v243 = vld [vmem:[%s205 + $0x74] sm:$0xf]
      %v244 = vld [vmem:[%s205 + $0x78] sm:$0xf]
      %v245 = vld [vmem:[%s205 + $0x7c] sm:$0xf]
      %v246 = vld [vmem:[%s1] sm:$0xf]
      %v247 = vld [vmem:[%s1 + $0x4] sm:$0xf]
      %v248 = vld [vmem:[%s1 + $0x8] sm:$0xf]
      %v249 = vld [vmem:[%s1 + $0xc] sm:$0xf]
      %v250 = vld [vmem:[%s1 + $0x10] sm:$0xf]
      %v251 = vld [vmem:[%s1 + $0x14] sm:$0xf]
      %v252 = vld [vmem:[%s1 + $0x18] sm:$0xf]
      %v253 = vld [vmem:[%s1 + $0x1c] sm:$0xf]
      %v254 = vld [vmem:[%s1 + $0x20] sm:$0xf]
      %v255 = vld [vmem:[%s1 + $0x24] sm:$0xf]
      %v256 = vld [vmem:[%s1 + $0x28] sm:$0xf]
      %v257 = vld [vmem:[%s1 + $0x2c] sm:$0xf]
      %v258 = vld [vmem:[%s1 + $0x30] sm:$0xf]
      %v259 = vld [vmem:[%s1 + $0x34] sm:$0xf]
      %v260 = vld [vmem:[%s1 + $0x38] sm:$0xf]
      %v261 = vld [vmem:[%s1 + $0x3c] sm:$0xf]
      %v294 = vunpack.c.l.b16 %v214
      %v295 = vunpack.c.l.b16 %v215
      %v296 = vunpack.c.l.b16 %v216
      %v297 = vunpack.c.l.b16 %v217
      %v298 = vunpack.c.l.b16 %v218
      %v299 = vunpack.c.l.b16 %v219
      %v300 = vunpack.c.l.b16 %v220
      %v301 = vunpack.c.l.b16 %v221
      %v302 = vunpack.c.l.b16 %v222
      %v303 = vunpack.c.l.b16 %v223
      %v304 = vunpack.c.l.b16 %v224
      %v305 = vunpack.c.l.b16 %v225
      %v306 = vunpack.c.l.b16 %v226
      %v307 = vunpack.c.l.b16 %v227
      %v308 = vunpack.c.l.b16 %v228
      %v309 = vunpack.c.l.b16 %v229
      %v310 = vunpack.c.l.b16 %v230
      %v311 = vunpack.c.l.b16 %v231
      %v312 = vunpack.c.l.b16 %v232
      %v313 = vunpack.c.l.b16 %v233
      %v314 = vunpack.c.l.b16 %v234
      %v315 = vunpack.c.l.b16 %v235
      %v316 = vunpack.c.l.b16 %v236
      %v317 = vunpack.c.l.b16 %v237
      %v318 = vunpack.c.l.b16 %v238
      %v319 = vunpack.c.l.b16 %v239
      %v320 = vunpack.c.l.b16 %v240
      %v321 = vunpack.c.l.b16 %v241
      %v322 = vunpack.c.l.b16 %v242
      %v323 = vunpack.c.l.b16 %v243
      %v324 = vunpack.c.l.b16 %v244
      %v325 = vunpack.c.l.b16 %v245
      %v326 = vpack.c.b16 %v295, %v294
      %v327 = vpack.c.b16 %v297, %v296
      %v328 = vpack.c.b16 %v299, %v298
      %v329 = vpack.c.b16 %v301, %v300
      %v330 = vpack.c.b16 %v303, %v302
      %v331 = vpack.c.b16 %v305, %v304
      %v332 = vpack.c.b16 %v307, %v306
      %v333 = vpack.c.b16 %v309, %v308
      %v334 = vpack.c.b16 %v311, %v310
      %v335 = vpack.c.b16 %v313, %v312
      %v336 = vpack.c.b16 %v315, %v314
      %v337 = vpack.c.b16 %v317, %v316
      %v338 = vpack.c.b16 %v319, %v318
      %v339 = vpack.c.b16 %v321, %v320
      %v340 = vpack.c.b16 %v323, %v322
      %v341 = vpack.c.b16 %v325, %v324
      %v374 = vunpack.c.l.b16 %v246
      %v375 = vunpack.c.l.b16 %v247
      %v376 = vunpack.c.l.b16 %v248
      %v377 = vunpack.c.l.b16 %v249
      %v378 = vunpack.c.l.b16 %v250
      %v379 = vunpack.c.l.b16 %v251
      %v380 = vunpack.c.l.b16 %v252
      %v381 = vunpack.c.l.b16 %v253
      %v382 = vunpack.c.l.b16 %v254
      %v383 = vunpack.c.l.b16 %v255
      %v384 = vunpack.c.l.b16 %v256
      %v385 = vunpack.c.l.b16 %v257
      %v386 = vunpack.c.l.b16 %v258
      %v387 = vunpack.c.l.b16 %v259
      %v388 = vunpack.c.l.b16 %v260
      %v389 = vunpack.c.l.b16 %v261
      %v390 = vpack.c.b16 %v375, %v374
      %v391 = vpack.c.b16 %v377, %v376
      %v392 = vpack.c.b16 %v379, %v378
      %v393 = vpack.c.b16 %v381, %v380
      %v394 = vpack.c.b16 %v383, %v382
      %v395 = vpack.c.b16 %v385, %v384
      %v396 = vpack.c.b16 %v387, %v386
      %v397 = vpack.c.b16 %v389, %v388
      %406 = vmatprep.subr.bf16.mxu0 0
      %407 = vmatpush1.bf16.msra.mxu0 %v397
      %408 = vmatprep.subr.bf16.mxu0 0
      %409 = vmatpush1.bf16.msra.mxu0 %v396
      %410 = vmatprep.subr.bf16.mxu0 0
      %411 = vmatpush1.bf16.msra.mxu0 %v395
      %412 = vmatprep.subr.bf16.mxu0 0
      %413 = vmatpush1.bf16.msra.mxu0 %v394
      %414 = vmatprep.subr.bf16.mxu0 0
      %415 = vmatpush1.bf16.msra.mxu0 %v393
      %416 = vmatprep.subr.bf16.mxu0 0
      %417 = vmatpush1.bf16.msra.mxu0 %v392
      %418 = vmatprep.subr.bf16.mxu0 0
      %419 = vmatpush1.bf16.msra.mxu0 %v391
      %420 = vmatprep.subr.bf16.mxu0 0
      %421 = vmatpush1.bf16.msra.mxu0 %v390
      %422 = vmatprep.subr.bf16.mxu0 0
      %423 = vmatpush2.bf16.msra.mxu0 0
      %424 = vmatprep.subr.bf16.mxu0 0
      %425 = vmatpush2.bf16.msra.mxu0 0
      %426 = vmatprep.subr.bf16.mxu0 0
      %427 = vmatpush2.bf16.msra.mxu0 0
      %428 = vmatprep.subr.bf16.mxu0 0
      %429 = vmatpush2.bf16.msra.mxu0 0
      %430 = vmatprep.subr.bf16.mxu0 0
      %431 = vmatpush2.bf16.msra.mxu0 0
      %432 = vmatprep.subr.bf16.mxu0 0
      %433 = vmatpush2.bf16.msra.mxu0 0
      %434 = vmatprep.subr.bf16.mxu0 0
      %435 = vmatpush2.bf16.msra.mxu0 0
      %436 = vmatprep.subr.bf16.mxu0 0
      %437 = vmatpush2.bf16.msra.mxu0 0
      %438 = vmatprep.mubr.bf16.mxu0 0
      %439 = vmatmul.mubr.bf16.gmra.mxu0 %v326
      %v440 = vpop.f32.mrf.mxu0
      %v441 = vadd.f32 0.0, %v440
      %v442 = vpop.f32.mrf.mxu0
      %v443 = vpop.f32.mrf.mxu0
      %v444 = vadd.f32 0.0, %v443
      %v445 = vpop.f32.mrf.mxu0
      %446 = vmatprep.mubr.bf16.mxu0 0
      %447 = vmatmul.mubr.bf16.gmra.mxu0 %v327
      %v448 = vpop.f32.mrf.mxu0
      %v449 = vadd.f32 0.0, %v448
      %v450 = vpop.f32.mrf.mxu0
      %v451 = vpop.f32.mrf.mxu0
      %v452 = vadd.f32 0.0, %v451
      %v453 = vpop.f32.mrf.mxu0
      %454 = vmatprep.mubr.bf16.mxu0 0
      %455 = vmatmul.mubr.bf16.gmra.mxu0 %v328
      %v456 = vpop.f32.mrf.mxu0
      %v457 = vadd.f32 0.0, %v456
      %v458 = vpop.f32.mrf.mxu0
      %v459 = vpop.f32.mrf.mxu0
      %v460 = vadd.f32 0.0, %v459
      %v461 = vpop.f32.mrf.mxu0
      %462 = vmatprep.mubr.bf16.mxu0 0
      %463 = vmatmul.mubr.bf16.gmra.mxu0 %v329
      %v464 = vpop.f32.mrf.mxu0
      %v465 = vadd.f32 0.0, %v464
      %v466 = vpop.f32.mrf.mxu0
      %v467 = vpop.f32.mrf.mxu0
      %v468 = vadd.f32 0.0, %v467
      %v469 = vpop.f32.mrf.mxu0
      %470 = vmatprep.mubr.bf16.mxu0 0
      %471 = vmatmul.mubr.bf16.gmra.mxu0 %v330
      %v472 = vpop.f32.mrf.mxu0
      %v473 = vadd.f32 0.0, %v472
      %v474 = vpop.f32.mrf.mxu0
      %v475 = vpop.f32.mrf.mxu0
      %v476 = vadd.f32 0.0, %v475
      %v477 = vpop.f32.mrf.mxu0
      %478 = vmatprep.mubr.bf16.mxu0 0
      %479 = vmatmul.mubr.bf16.gmra.mxu0 %v331
      %v480 = vpop.f32.mrf.mxu0
      %v481 = vadd.f32 0.0, %v480
      %v482 = vpop.f32.mrf.mxu0
      %v483 = vpop.f32.mrf.mxu0
      %v484 = vadd.f32 0.0, %v483
      %v485 = vpop.f32.mrf.mxu0
      %486 = vmatprep.mubr.bf16.mxu0 0
      %487 = vmatmul.mubr.bf16.gmra.mxu0 %v332
      %v488 = vpop.f32.mrf.mxu0
      %v489 = vadd.f32 0.0, %v488
      %v490 = vpop.f32.mrf.mxu0
      %v491 = vpop.f32.mrf.mxu0
      %v492 = vadd.f32 0.0, %v491
      %v493 = vpop.f32.mrf.mxu0
      %494 = vmatprep.mubr.bf16.mxu0 0
      %495 = vmatmul.mubr.bf16.gmra.mxu0 %v333
      %v496 = vpop.f32.mrf.mxu0
      %v497 = vadd.f32 0.0, %v496
      %v498 = vpop.f32.mrf.mxu0
      %v499 = vpop.f32.mrf.mxu0
      %v500 = vadd.f32 0.0, %v499
      %v501 = vpop.f32.mrf.mxu0
      %502 = vmatprep.mubr.bf16.mxu0 0
      %503 = vmatmul.mubr.bf16.gmra.mxu0 %v334
      %v504 = vpop.f32.mrf.mxu0
      %v505 = vadd.f32 0.0, %v504
      %v506 = vpop.f32.mrf.mxu0
      %v507 = vpop.f32.mrf.mxu0
      %v508 = vadd.f32 0.0, %v507
      %v509 = vpop.f32.mrf.mxu0
      %510 = vmatprep.mubr.bf16.mxu0 0
      %511 = vmatmul.mubr.bf16.gmra.mxu0 %v335
      %v512 = vpop.f32.mrf.mxu0
      %v513 = vadd.f32 0.0, %v512
      %v514 = vpop.f32.mrf.mxu0
      %v515 = vpop.f32.mrf.mxu0
      %v516 = vadd.f32 0.0, %v515
      %v517 = vpop.f32.mrf.mxu0
      %518 = vmatprep.mubr.bf16.mxu0 0
      %519 = vmatmul.mubr.bf16.gmra.mxu0 %v336
      %v520 = vpop.f32.mrf.mxu0
      %v521 = vadd.f32 0.0, %v520
      %v522 = vpop.f32.mrf.mxu0
      %v523 = vpop.f32.mrf.mxu0
      %v524 = vadd.f32 0.0, %v523
      %v525 = vpop.f32.mrf.mxu0
      %526 = vmatprep.mubr.bf16.mxu0 0
      %527 = vmatmul.mubr.bf16.gmra.mxu0 %v337
      %v528 = vpop.f32.mrf.mxu0
      %v529 = vadd.f32 0.0, %v528
      %v530 = vpop.f32.mrf.mxu0
      %v531 = vpop.f32.mrf.mxu0
      %v532 = vadd.f32 0.0, %v531
      %v533 = vpop.f32.mrf.mxu0
      %534 = vmatprep.mubr.bf16.mxu0 0
      %535 = vmatmul.mubr.bf16.gmra.mxu0 %v338
      %v536 = vpop.f32.mrf.mxu0
      %v537 = vadd.f32 0.0, %v536
      %v538 = vpop.f32.mrf.mxu0
      %v539 = vpop.f32.mrf.mxu0
      %v540 = vadd.f32 0.0, %v539
      %v541 = vpop.f32.mrf.mxu0
      %542 = vmatprep.mubr.bf16.mxu0 0
      %543 = vmatmul.mubr.bf16.gmra.mxu0 %v339
      %v544 = vpop.f32.mrf.mxu0
      %v545 = vadd.f32 0.0, %v544
      %v546 = vpop.f32.mrf.mxu0
      %v547 = vpop.f32.mrf.mxu0
      %v548 = vadd.f32 0.0, %v547
      %v549 = vpop.f32.mrf.mxu0
      %550 = vmatprep.mubr.bf16.mxu0 0
      %551 = vmatmul.mubr.bf16.gmra.mxu0 %v340
      %v552 = vpop.f32.mrf.mxu0
      %v553 = vadd.f32 0.0, %v552
      %v554 = vpop.f32.mrf.mxu0
      %v555 = vpop.f32.mrf.mxu0
      %v556 = vadd.f32 0.0, %v555
      %v557 = vpop.f32.mrf.mxu0
      %558 = vmatprep.mubr.bf16.mxu0 0
      %559 = vmatmul.mubr.bf16.gmra.mxu0 %v341
      %v560 = vpop.f32.mrf.mxu0
      %v561 = vadd.f32 0.0, %v560
      %v562 = vpop.f32.mrf.mxu0
      %v563 = vpop.f32.mrf.mxu0
      %v564 = vadd.f32 0.0, %v563
      %v565 = vpop.f32.mrf.mxu0
      %566 = vdwg.mxu0
      %p567 = scmp.eq.s32.totalorder %s19, 0
      %p568 = scmp.eq.s32.totalorder %s20, 0
      %p569 = pnand %p567, %p568
      %p570 = pneg %p569
      // Predicated region
      $region37: #{bottleneck_forward.3} parent=35 // pred_check
        _
      $region38: #{bottleneck_forward.3} parent=35 // pred_check_branch
        %572 = sbr.rel (%p569) target = $region40
      $region39: #{bottleneck_forward.3} parent=35 // pred_region
        %573 = vst [vmem:[#allocation2] sm:$0x1] 0.0
        %574 = vst [vmem:[#allocation3] sm:$0x1] 0.0
      $region40: #{bottleneck_forward.3} parent=35 // pred_fallthru
        _
      // Predicated region
      $region41: #{bottleneck_forward.3} parent=35 // pred_check
        %p575 = pneg %p567
      $region42: #{bottleneck_forward.3} parent=35 // pred_check_branch
        %577 = sbr.rel (%p575) target = $region44
      $region43: #{bottleneck_forward.3} parent=35 // pred_region
        %v578 = vld [vmem:[#allocation2] sm:$0x1]
        %v579 = vadd.f32 %v441, %v444
        %v580 = vadd.f32 %v579, %v449
        %v581 = vadd.f32 %v580, %v452
        %v582 = vadd.f32 %v581, %v457
        %v583 = vadd.f32 %v582, %v460
        %v584 = vadd.f32 %v583, %v465
        %v585 = vadd.f32 %v584, %v468
        %v586 = vadd.f32 %v585, %v473
        %v587 = vadd.f32 %v586, %v476
        %v588 = vadd.f32 %v587, %v481
        %v589 = vadd.f32 %v588, %v484
        %v590 = vadd.f32 %v589, %v489
        %v591 = vadd.f32 %v590, %v492
        %v592 = vadd.f32 %v591, %v497
        %v593 = vadd.f32 %v592, %v500
        %v594 = vadd.f32 %v593, %v505
        %v595 = vadd.f32 %v594, %v508
        %v596 = vadd.f32 %v595, %v513
        %v597 = vadd.f32 %v596, %v516
        %v598 = vadd.f32 %v597, %v521
        %v599 = vadd.f32 %v598, %v524
        %v600 = vadd.f32 %v599, %v529
        %v601 = vadd.f32 %v600, %v532
        %v602 = vadd.f32 %v601, %v537
        %v603 = vadd.f32 %v602, %v540
        %v604 = vadd.f32 %v603, %v545
        %v605 = vadd.f32 %v604, %v548
        %v606 = vadd.f32 %v605, %v553
        %v607 = vadd.f32 %v606, %v556
        %v608 = vadd.f32 %v607, %v561
        %v609 = vadd.f32 %v608, %v564
        %v610 = vrot.slane %v609, 4
        %v611 = vadd.f32 %v609, %v610
        %v612 = vrot.slane %v611, 2
        %v613 = vadd.f32 %v611, %v612
        %v614 = vrot.slane %v613, 1
        %v615 = vadd.f32 %v613, %v614
        %v616 = vadd.f32 %v578, %v615
        %617 = vst [vmem:[#allocation2] sm:$0x1] %v616
        %v618 = vld [vmem:[#allocation3] sm:$0x1]
        %v619 = vmul.f32 %v441, %v441
        %v620 = vmul.f32 %v444, %v444
        %v621 = vmul.f32 %v449, %v449
        %v622 = vmul.f32 %v452, %v452
        %v623 = vmul.f32 %v457, %v457
        %v624 = vmul.f32 %v460, %v460
        %v625 = vmul.f32 %v465, %v465
        %v626 = vmul.f32 %v468, %v468
        %v627 = vmul.f32 %v473, %v473
        %v628 = vmul.f32 %v476, %v476
        %v629 = vmul.f32 %v481, %v481
        %v630 = vmul.f32 %v484, %v484
        %v631 = vmul.f32 %v489, %v489
        %v632 = vmul.f32 %v492, %v492
        %v633 = vmul.f32 %v497, %v497
        %v634 = vmul.f32 %v500, %v500
        %v635 = vmul.f32 %v505, %v505
        %v636 = vmul.f32 %v508, %v508
        %v637 = vmul.f32 %v513, %v513
        %v638 = vmul.f32 %v516, %v516
        %v639 = vmul.f32 %v521, %v521
        %v640 = vmul.f32 %v524, %v524
        %v641 = vmul.f32 %v529, %v529
        %v642 = vmul.f32 %v532, %v532
        %v643 = vmul.f32 %v537, %v537
        %v644 = vmul.f32 %v540, %v540
        %v645 = vmul.f32 %v545, %v545
        %v646 = vmul.f32 %v548, %v548
        %v647 = vmul.f32 %v553, %v553
        %v648 = vmul.f32 %v556, %v556
        %v649 = vmul.f32 %v561, %v561
        %v650 = vmul.f32 %v564, %v564
        %v651 = vadd.f32 %v619, %v620
        %v652 = vadd.f32 %v651, %v621
        %v653 = vadd.f32 %v652, %v622
        %v654 = vadd.f32 %v653, %v623
        %v655 = vadd.f32 %v654, %v624
        %v656 = vadd.f32 %v655, %v625
        %v657 = vadd.f32 %v656, %v626
        %v658 = vadd.f32 %v657, %v627
        %v659 = vadd.f32 %v658, %v628
        %v660 = vadd.f32 %v659, %v629
        %v661 = vadd.f32 %v660, %v630
        %v662 = vadd.f32 %v661, %v631
        %v663 = vadd.f32 %v662, %v632
        %v664 = vadd.f32 %v663, %v633
        %v665 = vadd.f32 %v664, %v634
        %v666 = vadd.f32 %v665, %v635
        %v667 = vadd.f32 %v666, %v636
        %v668 = vadd.f32 %v667, %v637
        %v669 = vadd.f32 %v668, %v638
        %v670 = vadd.f32 %v669, %v639
        %v671 = vadd.f32 %v670, %v640
        %v672 = vadd.f32 %v671, %v641
        %v673 = vadd.f32 %v672, %v642
        %v674 = vadd.f32 %v673, %v643
        %v675 = vadd.f32 %v674, %v644
        %v676 = vadd.f32 %v675, %v645
        %v677 = vadd.f32 %v676, %v646
        %v678 = vadd.f32 %v677, %v647
        %v679 = vadd.f32 %v678, %v648
        %v680 = vadd.f32 %v679, %v649
        %v681 = vadd.f32 %v680, %v650
        %v682 = vrot.slane %v681, 4
        %v683 = vadd.f32 %v681, %v682
        %v684 = vrot.slane %v683, 2
        %v685 = vadd.f32 %v683, %v684
        %v686 = vrot.slane %v685, 1
        %v687 = vadd.f32 %v685, %v686
        %v688 = vadd.f32 %v618, %v687
        %689 = vst [vmem:[#allocation3] sm:$0x1] %v688
      $region44: #{bottleneck_forward.3} parent=35 // pred_fallthru
        _
      %p690 = scmp.eq.s32.totalorder %s19, 1
      %p691 = pnand %p690, %p568
      %p692 = pneg %p691
      // Predicated region
      $region45: #{bottleneck_forward.3} parent=35 // pred_check
        _
      $region46: #{bottleneck_forward.3} parent=35 // pred_check_branch
        %694 = sbr.rel (%p691) target = $region48
      $region47: #{bottleneck_forward.3} parent=35 // pred_region
        %v695 = vld [vmem:[#allocation2] sm:$0x1]
        %v696 = vmul.f32 %v695, 0.001953125
        %v697 = vld [vmem:[#allocation3] sm:$0x1]
        %v698 = vmul.f32 %v697, 0.001953125
        %v699 = vmul.f32 %v696, %v696
        %v700 = vsub.f32 %v698, %v699
        %v701 = vmax.f32 %v700, 0.0
        %v702 = vld [vmem:[%s2] sm:$0x1]
        %v703 = vadd.f32 %v701, 1e-05
        %v704 = vrsqrt.pop %v703
        %v705 = vmul.f32 %v702, %v704
        %706 = vst [vmem:[#allocation4] sm:$0x1] %v705
        %v707 = vld [vmem:[%s3] sm:$0x1]
        %v708 = vmul.f32 %v696, %v705
        %v709 = vsub.f32 %v707, %v708
        %710 = vst [vmem:[#allocation5] sm:$0x1] %v709
      $region48: #{bottleneck_forward.3} parent=35 // pred_fallthru
        _
      // Predicated region
      $region49: #{bottleneck_forward.3} parent=35 // pred_check
        %p711 = pneg %p690
      $region50: #{bottleneck_forward.3} parent=35 // pred_check_branch
        %713 = sbr.rel (%p711) target = $region52
      $region51: #{bottleneck_forward.3} parent=35 // pred_region
        %v714 = vld [vmem:[#allocation4] sm:$0x1]
        %v716 = vlaneseq
        %v717 = vshrl.u32 %v716, 7
        %v718 = vsub.s32 0, %v717
        %v719 = vrot.slane %v714, %v718
        %v721 = vmul.f32 %v441, %v719
        %v722 = vmul.f32 %v444, %v719
        %v723 = vmul.f32 %v449, %v719
        %v724 = vmul.f32 %v452, %v719
        %v725 = vmul.f32 %v457, %v719
        %v726 = vmul.f32 %v460, %v719
        %v727 = vmul.f32 %v465, %v719
        %v728 = vmul.f32 %v468, %v719
        %v729 = vmul.f32 %v473, %v719
        %v730 = vmul.f32 %v476, %v719
        %v731 = vmul.f32 %v481, %v719
        %v732 = vmul.f32 %v484, %v719
        %v733 = vmul.f32 %v489, %v719
        %v734 = vmul.f32 %v492, %v719
        %v735 = vmul.f32 %v497, %v719
        %v736 = vmul.f32 %v500, %v719
        %v737 = vmul.f32 %v505, %v719
        %v738 = vmul.f32 %v508, %v719
        %v739 = vmul.f32 %v513, %v719
        %v740 = vmul.f32 %v516, %v719
        %v741 = vmul.f32 %v521, %v719
        %v742 = vmul.f32 %v524, %v719
        %v743 = vmul.f32 %v529, %v719
        %v744 = vmul.f32 %v532, %v719
        %v745 = vmul.f32 %v537, %v719
        %v746 = vmul.f32 %v540, %v719
        %v747 = vmul.f32 %v545, %v719
        %v748 = vmul.f32 %v548, %v719
        %v749 = vmul.f32 %v553, %v719
        %v750 = vmul.f32 %v556, %v719
        %v751 = vmul.f32 %v561, %v719
        %v752 = vmul.f32 %v564, %v719
        %v753 = vld [vmem:[#allocation5] sm:$0x1]
        %v755 = vlaneseq
        %v756 = vshrl.u32 %v755, 7
        %v757 = vsub.s32 0, %v756
        %v758 = vrot.slane %v753, %v757
        %v760 = vadd.f32 %v721, %v758
        %v761 = vadd.f32 %v722, %v758
        %v762 = vadd.f32 %v723, %v758
        %v763 = vadd.f32 %v724, %v758
        %v764 = vadd.f32 %v725, %v758
        %v765 = vadd.f32 %v726, %v758
        %v766 = vadd.f32 %v727, %v758
        %v767 = vadd.f32 %v728, %v758
        %v768 = vadd.f32 %v729, %v758
        %v769 = vadd.f32 %v730, %v758
        %v770 = vadd.f32 %v731, %v758
        %v771 = vadd.f32 %v732, %v758
        %v772 = vadd.f32 %v733, %v758
        %v773 = vadd.f32 %v734, %v758
        %v774 = vadd.f32 %v735, %v758
        %v775 = vadd.f32 %v736, %v758
        %v776 = vadd.f32 %v737, %v758
        %v777 = vadd.f32 %v738, %v758
        %v778 = vadd.f32 %v739, %v758
        %v779 = vadd.f32 %v740, %v758
        %v780 = vadd.f32 %v741, %v758
        %v781 = vadd.f32 %v742, %v758
        %v782 = vadd.f32 %v743, %v758
        %v783 = vadd.f32 %v744, %v758
        %v784 = vadd.f32 %v745, %v758
        %v785 = vadd.f32 %v746, %v758
        %v786 = vadd.f32 %v747, %v758
        %v787 = vadd.f32 %v748, %v758
        %v788 = vadd.f32 %v749, %v758
        %v789 = vadd.f32 %v750, %v758
        %v790 = vadd.f32 %v751, %v758
        %v791 = vadd.f32 %v752, %v758
        %v792 = vmax.f32 %v760, 0.0
        %v793 = vmax.f32 %v761, 0.0
        %v794 = vmax.f32 %v762, 0.0
        %v795 = vmax.f32 %v763, 0.0
        %v796 = vmax.f32 %v764, 0.0
        %v797 = vmax.f32 %v765, 0.0
        %v798 = vmax.f32 %v766, 0.0
        %v799 = vmax.f32 %v767, 0.0
        %v800 = vmax.f32 %v768, 0.0
        %v801 = vmax.f32 %v769, 0.0
        %v802 = vmax.f32 %v770, 0.0
        %v803 = vmax.f32 %v771, 0.0
        %v804 = vmax.f32 %v772, 0.0
        %v805 = vmax.f32 %v773, 0.0
        %v806 = vmax.f32 %v774, 0.0
        %v807 = vmax.f32 %v775, 0.0
        %v808 = vmax.f32 %v776, 0.0
        %v809 = vmax.f32 %v777, 0.0
        %v810 = vmax.f32 %v778, 0.0
        %v811 = vmax.f32 %v779, 0.0
        %v812 = vmax.f32 %v780, 0.0
        %v813 = vmax.f32 %v781, 0.0
        %v814 = vmax.f32 %v782, 0.0
        %v815 = vmax.f32 %v783, 0.0
        %v816 = vmax.f32 %v784, 0.0
        %v817 = vmax.f32 %v785, 0.0
        %v818 = vmax.f32 %v786, 0.0
        %v819 = vmax.f32 %v787, 0.0
        %v820 = vmax.f32 %v788, 0.0
        %v821 = vmax.f32 %v789, 0.0
        %v822 = vmax.f32 %v790, 0.0
        %v823 = vmax.f32 %v791, 0.0
        %v824 = vpack.c.bf16 %v793, %v792
        %v825 = vpack.c.bf16 %v795, %v794
        %v826 = vpack.c.bf16 %v797, %v796
        %v827 = vpack.c.bf16 %v799, %v798
        %v828 = vpack.c.bf16 %v801, %v800
        %v829 = vpack.c.bf16 %v803, %v802
        %v830 = vpack.c.bf16 %v805, %v804
        %v831 = vpack.c.bf16 %v807, %v806
        %v832 = vpack.c.bf16 %v809, %v808
        %v833 = vpack.c.bf16 %v811, %v810
        %v834 = vpack.c.bf16 %v813, %v812
        %v835 = vpack.c.bf16 %v815, %v814
        %v836 = vpack.c.bf16 %v817, %v816
        %v837 = vpack.c.bf16 %v819, %v818
        %v838 = vpack.c.bf16 %v821, %v820
        %v839 = vpack.c.bf16 %v823, %v822
        %v856 = vunpack.c.l.b16 %v824
        %v857 = vunpack.c.h.b16 %v824
        %v858 = vunpack.c.l.b16 %v825
        %v859 = vunpack.c.h.b16 %v825
        %v860 = vunpack.c.l.b16 %v826
        %v861 = vunpack.c.h.b16 %v826
        %v862 = vunpack.c.l.b16 %v827
        %v863 = vunpack.c.h.b16 %v827
        %v864 = vunpack.c.l.b16 %v828
        %v865 = vunpack.c.h.b16 %v828
        %v866 = vunpack.c.l.b16 %v829
        %v867 = vunpack.c.h.b16 %v829
        %v868 = vunpack.c.l.b16 %v830
        %v869 = vunpack.c.h.b16 %v830
        %v870 = vunpack.c.l.b16 %v831
        %v871 = vunpack.c.h.b16 %v831
        %v872 = vunpack.c.l.b16 %v832
        %v873 = vunpack.c.h.b16 %v832
        %v874 = vunpack.c.l.b16 %v833
        %v875 = vunpack.c.h.b16 %v833
        %v876 = vunpack.c.l.b16 %v834
        %v877 = vunpack.c.h.b16 %v834
        %v878 = vunpack.c.l.b16 %v835
        %v879 = vunpack.c.h.b16 %v835
        %v880 = vunpack.c.l.b16 %v836
        %v881 = vunpack.c.h.b16 %v836
        %v882 = vunpack.c.l.b16 %v837
        %v883 = vunpack.c.h.b16 %v837
        %v884 = vunpack.c.l.b16 %v838
        %v885 = vunpack.c.h.b16 %v838
        %v886 = vunpack.c.l.b16 %v839
        %v887 = vunpack.c.h.b16 %v839
        %v888 = vpack.c.b16 %v856, %v856
        %v889 = vpack.c.b16 %v857, %v857
        %v890 = vpack.c.b16 %v858, %v858
        %v891 = vpack.c.b16 %v859, %v859
        %v892 = vpack.c.b16 %v860, %v860
        %v893 = vpack.c.b16 %v861, %v861
        %v894 = vpack.c.b16 %v862, %v862
        %v895 = vpack.c.b16 %v863, %v863
        %v896 = vpack.c.b16 %v864, %v864
        %v897 = vpack.c.b16 %v865, %v865
        %v898 = vpack.c.b16 %v866, %v866
        %v899 = vpack.c.b16 %v867, %v867
        %v900 = vpack.c.b16 %v868, %v868
        %v901 = vpack.c.b16 %v869, %v869
        %v902 = vpack.c.b16 %v870, %v870
        %v903 = vpack.c.b16 %v871, %v871
        %v904 = vpack.c.b16 %v872, %v872
        %v905 = vpack.c.b16 %v873, %v873
        %v906 = vpack.c.b16 %v874, %v874
        %v907 = vpack.c.b16 %v875, %v875
        %v908 = vpack.c.b16 %v876, %v876
        %v909 = vpack.c.b16 %v877, %v877
        %v910 = vpack.c.b16 %v878, %v878
        %v911 = vpack.c.b16 %v879, %v879
        %v912 = vpack.c.b16 %v880, %v880
        %v913 = vpack.c.b16 %v881, %v881
        %v914 = vpack.c.b16 %v882, %v882
        %v915 = vpack.c.b16 %v883, %v883
        %v916 = vpack.c.b16 %v884, %v884
        %v917 = vpack.c.b16 %v885, %v885
        %v918 = vpack.c.b16 %v886, %v886
        %v919 = vpack.c.b16 %v887, %v887
        %952 = vst [vmem:[%s211] sm:$0xf] %v888
        %953 = vst [vmem:[%s211 + $0x4] sm:$0xf] %v889
        %954 = vst [vmem:[%s211 + $0x8] sm:$0xf] %v890
        %955 = vst [vmem:[%s211 + $0xc] sm:$0xf] %v891
        %956 = vst [vmem:[%s211 + $0x10] sm:$0xf] %v892
        %957 = vst [vmem:[%s211 + $0x14] sm:$0xf] %v893
        %958 = vst [vmem:[%s211 + $0x18] sm:$0xf] %v894
        %959 = vst [vmem:[%s211 + $0x1c] sm:$0xf] %v895
        %960 = vst [vmem:[%s211 + $0x20] sm:$0xf] %v896
        %961 = vst [vmem:[%s211 + $0x24] sm:$0xf] %v897
        %962 = vst [vmem:[%s211 + $0x28] sm:$0xf] %v898
        %963 = vst [vmem:[%s211 + $0x2c] sm:$0xf] %v899
        %964 = vst [vmem:[%s211 + $0x30] sm:$0xf] %v900
        %965 = vst [vmem:[%s211 + $0x34] sm:$0xf] %v901
        %966 = vst [vmem:[%s211 + $0x38] sm:$0xf] %v902
        %967 = vst [vmem:[%s211 + $0x3c] sm:$0xf] %v903
        %968 = vst [vmem:[%s211 + $0x40] sm:$0xf] %v904
        %969 = vst [vmem:[%s211 + $0x44] sm:$0xf] %v905
        %970 = vst [vmem:[%s211 + $0x48] sm:$0xf] %v906
        %971 = vst [vmem:[%s211 + $0x4c] sm:$0xf] %v907
        %972 = vst [vmem:[%s211 + $0x50] sm:$0xf] %v908
        %973 = vst [vmem:[%s211 + $0x54] sm:$0xf] %v909
        %974 = vst [vmem:[%s211 + $0x58] sm:$0xf] %v910
        %975 = vst [vmem:[%s211 + $0x5c] sm:$0xf] %v911
        %976 = vst [vmem:[%s211 + $0x60] sm:$0xf] %v912
        %977 = vst [vmem:[%s211 + $0x64] sm:$0xf] %v913
        %978 = vst [vmem:[%s211 + $0x68] sm:$0xf] %v914
        %979 = vst [vmem:[%s211 + $0x6c] sm:$0xf] %v915
        %980 = vst [vmem:[%s211 + $0x70] sm:$0xf] %v916
        %981 = vst [vmem:[%s211 + $0x74] sm:$0xf] %v917
        %982 = vst [vmem:[%s211 + $0x78] sm:$0xf] %v918
        %983 = vst [vmem:[%s211 + $0x7c] sm:$0xf] %v919
      $region52: #{bottleneck_forward.3} parent=35 // pred_fallthru
        _
      %s984 = smul.u32 32, %s20
      %p985 = scmp.lt.s32.totalorder %s984, 63
      %s986 = scalar_select %p985, %s984, 63
      %s987 = smul.addr %s986, 4
      %s988 = scalar_lea.vmem %s4, %s987
      // Predicated region
      $region53: #{bottleneck_forward.3} parent=35 // pred_check
        %p989 = pneg %p134
      $region54: #{bottleneck_forward.3} parent=35 // pred_check_branch
        %991 = sbr.rel (%p989) target = $region56
      $region55: #{bottleneck_forward.3} parent=35 // pred_region
        %s992 = smul.u32 32, %s20
      $region56: #{bottleneck_forward.3} parent=35 // pred_fallthru
        _
    $region36: #{bottleneck_forward.3} parent=5 // pred_fallthru
      _
    %p993 = scmp.le.s32.totalorder 2, %s10
    // Predicated region
    $region57: #{bottleneck_forward.3} parent=5 // pred_check
      %p994 = pneg %p993
    $region58: #{bottleneck_forward.3} parent=5 // pred_check_branch
      %996 = sbr.rel (%p994) target = $region60
    $region59: #{bottleneck_forward.3} parent=5 // pred_region
      %s997 = ssub.s32 %s10, 2
      // Predicated region
      $region61: #{bottleneck_forward.3} parent=59 // pred_check
        %p998 = pneg %p140
      $region62: #{bottleneck_forward.3} parent=59 // pred_check_branch
        %1000 = sbr.rel (%p998) target = $region64
      $region63: #{bottleneck_forward.3} parent=59 // pred_region
        %s1001 = smul.u32 32, %s22
        %p1002 = scmp.lt.s32.totalorder %s1001, 63
        %s1003 = scalar_select %p1002, %s1001, 63
        %s1004 = smul.addr %s1003, 4
        %s1005 = scalar_lea.vmem %s4, %s1004
      $region64: #{bottleneck_forward.3} parent=59 // pred_fallthru
        _
    $region60: #{bottleneck_forward.3} parent=5 // pred_fallthru
      _
  $region6: #{bottleneck_forward.3} parent=0 // loop_footer
    %s14 = sadd.s32 1, %s10
  $region7: #{bottleneck_forward.3} parent=0 // loop_footer_branch
    %9 = sbr.rel target = $region3
  $region8: #{bottleneck_forward.3} parent=0 // loop_exit
    _

// kernel: bottleneck_forward.5
$region0: #{bottleneck_forward.5}
  #allocation0 [shape = 'u32[]', space=smem, size = 0x4, offset = 0x4, fixed_abs, tag = 'smem constant byte address 0x4 - core index']
  #allocation1 [shape = 'u32[144,128]{1,0:T(1,128)}', space=vmem, size = 0x12000, scoped, tag = 'internal scratch']
  #allocation2 [shape = 'f32[1,128]{1,0:T(1,128)}', space=vmem, size = 0x200, scoped, tag = 'scratch operand']
  #allocation3 [shape = 'f32[1,128]{1,0:T(1,128)}', space=vmem, size = 0x200, scoped, tag = 'scratch operand']
  #allocation4 [shape = 'f32[1,128]{1,0:T(1,128)}', space=vmem, size = 0x200, scoped, tag = 'scratch operand']
  #allocation5 [shape = 'f32[1,128]{1,0:T(1,128)}', space=vmem, size = 0x200, scoped, tag = 'scratch operand']
  %s0 = inlined_call_operand.vmem [shape: bf16[128,128], index: 0, kind: input, shape index: {}]
  %s1 = inlined_call_operand.vmem [shape: bf16[128,128], index: 1, kind: input, shape index: {}]
  %s2 = inlined_call_operand.vmem [shape: f32[1,128], index: 2, kind: input, shape index: {}]
  %s3 = inlined_call_operand.vmem [shape: f32[1,128], index: 3, kind: input, shape index: {}]
  %s4 = inlined_call_operand.vmem [shape: bf16[128,128], index: 4, kind: input, shape index: {}]
  %s5 = inlined_call_operand.vmem [shape: bf16[128,128], index: 5, kind: input, shape index: {}]
  %s6 = inlined_call_operand.hbm [shape: f32[128,128], index: 6, kind: output, shape index: {}]
  %s7 = sld [smem:[#allocation0]]
  $region73: #{bottleneck_forward.5} parent=0
    _
  %s9 = ssub.s32 1, %s7
  %s10 = scalar_select 0, %s9, %s7
  $region1: #{bottleneck_forward.5} parent=0
    #allocation6 [shape = 'u8[65536]{0}', space=vmem, size = 0x10000, scoped, tag = 'output window, operand 0, single buffered']
    #allocation7 [shape = 's32[2]{0}', space=sflag, size = 0x8, scoped, tag = 'scoped memory for bottleneck_forward.5']
    %11 = vsyncpa [#allocation7], 0
    loop: start=0, step=1, limit=4
    $region2: #{bottleneck_forward.5} parent=1 // loop_pre_header
      _
    $region3: #{bottleneck_forward.5} parent=1 // loop_header
      %s13 = sphi 0, %s17
      %p14 = scmp.ge.s32.totalorder %s13, 4
      %s20 = sphi 0, %s32
      %s21 = sphi 0, %s28
      %s22 = sphi 0, %s20
      %s23 = sphi 0, %s21
      %s24 = sphi 0, %s22
      %s25 = sphi 0, %s23
      %s35 = sphi 0, %s37
      %s38 = sphi 0, %s35
      %s39 = sphi 0, %s38
      %s55 = sphi 0, %s39
      %s59 = sphi 0, %s59
      %s61 = sphi 0, %s59
      %s62 = sphi 0, %s61
      %s76 = sphi 0, %s62
      %s80 = sphi 0, %s80
      %s82 = sphi 0, %s80
      %s83 = sphi 0, %s82
      %s97 = sphi 0, %s83
      %s101 = sphi 0, %s101
      %s103 = sphi 0, %s101
      %s104 = sphi 0, %s103
      %s118 = sphi 0, %s104
      %s124 = sphi 0, %s126
      %s127 = sphi 0, %s124
      %s128 = sphi 0, %s127
      %s144 = sphi 0, %s128
      %s148 = sphi 0, %s148
      %s150 = sphi 0, %s148
      %s151 = sphi 0, %s150
      %s165 = sphi 0, %s151
      %s171 = sphi 0, %s173
      %s174 = sphi 0, %s171
      %s175 = sphi 0, %s174
      %s191 = sphi 0, %s175
    $region4: #{bottleneck_forward.5} parent=1 // loop_header_branch
      %16 = sbr.rel (%p14) target = $region8
    $region5: #{bottleneck_forward.5} parent=1 // loop_body
      %s18 = ssub.s32 %s13, 1
      %s19 = ssub.s32 %s13, 2
      %s26 = sadd.s32 1, %s21
      %p27 = scmp.ge.s32.totalorder %s26, 1
      %s28 = scalar_select %p27, 0, %s26
      %s29 = sadd.s32 1, %s20
      %s30 = scalar_select %p27, %s29, %s20
      %p31 = scmp.ge.s32.totalorder %s30, 2
      %s32 = scalar_select %p31, 0, %s30
      %s33 = ssub.s32 %s21, %s28
      %p34 = scmp.eq.s32.totalorder %s33, 0
      %s36 = sadd.s32 %s35, 1
      %s37 = scalar_select %p34, %s35, %s36
      %p40 = pneg %p34
      %p41 = scmp.eq.s32.totalorder %s13, 1
      %p42 = por %p40, %p41
      %p43 = scmp.ne.s32.totalorder %s35, %s38
      %p44 = scmp.eq.s32.totalorder %s13, 0
      %p45 = por %p43, %p44
      %p46 = scmp.ne.s32.totalorder %s35, %s38
      %p47 = scmp.eq.s32.totalorder %s18, 1
      %p48 = por %p46, %p47
      %p49 = scmp.ne.s32.totalorder %s38, %s39
      %p50 = scmp.eq.s32.totalorder %s18, 0
      %p51 = por %p49, %p50
      %p52 = scmp.ne.s32.totalorder %s38, %s39
      %p53 = scmp.eq.s32.totalorder %s19, 1
      %p54 = por %p52, %p53
      %p56 = scmp.ne.s32.totalorder %s39, %s55
      %p57 = scmp.eq.s32.totalorder %s19, 0
      %p58 = por %p56, %p57
      %s60 = sadd.s32 %s59, 1
      %p63 = scmp.eq.s32.totalorder %s13, 1
      %p64 = scmp.ne.s32.totalorder %s59, %s61
      %p65 = scmp.eq.s32.totalorder %s13, 0
      %p66 = por %p64, %p65
      %p67 = scmp.ne.s32.totalorder %s59, %s61
      %p68 = scmp.eq.s32.totalorder %s18, 1
      %p69 = por %p67, %p68
      %p70 = scmp.ne.s32.totalorder %s61, %s62
      %p71 = scmp.eq.s32.totalorder %s18, 0
      %p72 = por %p70, %p71
      %p73 = scmp.ne.s32.totalorder %s61, %s62
      %p74 = scmp.eq.s32.totalorder %s19, 1
      %p75 = por %p73, %p74
      %p77 = scmp.ne.s32.totalorder %s62, %s76
      %p78 = scmp.eq.s32.totalorder %s19, 0
      %p79 = por %p77, %p78
      %s81 = sadd.s32 %s80, 1
      %p84 = scmp.eq.s32.totalorder %s13, 1
      %p85 = scmp.ne.s32.totalorder %s80, %s82
      %p86 = scmp.eq.s32.totalorder %s13, 0
      %p87 = por %p85, %p86
      %p88 = scmp.ne.s32.totalorder %s80, %s82
      %p89 = scmp.eq.s32.totalorder %s18, 1
      %p90 = por %p88, %p89
      %p91 = scmp.ne.s32.totalorder %s82, %s83
      %p92 = scmp.eq.s32.totalorder %s18, 0
      %p93 = por %p91, %p92
      %p94 = scmp.ne.s32.totalorder %s82, %s83
      %p95 = scmp.eq.s32.totalorder %s19, 1
      %p96 = por %p94, %p95
      %p98 = scmp.ne.s32.totalorder %s83, %s97
      %p99 = scmp.eq.s32.totalorder %s19, 0
      %p100 = por %p98, %p99
      %s102 = sadd.s32 %s101, 1
      %p105 = scmp.eq.s32.totalorder %s13, 1
      %p106 = scmp.ne.s32.totalorder %s101, %s103
      %p107 = scmp.eq.s32.totalorder %s13, 0
      %p108 = por %p106, %p107
      %p109 = scmp.ne.s32.totalorder %s101, %s103
      %p110 = scmp.eq.s32.totalorder %s18, 1
      %p111 = por %p109, %p110
      %p112 = scmp.ne.s32.totalorder %s103, %s104
      %p113 = scmp.eq.s32.totalorder %s18, 0
      %p114 = por %p112, %p113
      %p115 = scmp.ne.s32.totalorder %s103, %s104
      %p116 = scmp.eq.s32.totalorder %s19, 1
      %p117 = por %p115, %p116
      %p119 = scmp.ne.s32.totalorder %s104, %s118
      %p120 = scmp.eq.s32.totalorder %s19, 0
      %p121 = por %p119, %p120
      %s122 = ssub.s32 %s21, %s28
      %p123 = scmp.eq.s32.totalorder %s122, 0
      %s125 = sadd.s32 %s124, 1
      %s126 = scalar_select %p123, %s124, %s125
      %p129 = pneg %p123
      %p130 = scmp.eq.s32.totalorder %s13, 1
      %p131 = por %p129, %p130
      %p132 = scmp.ne.s32.totalorder %s124, %s127
      %p133 = scmp.eq.s32.totalorder %s13, 0
      %p134 = por %p132, %p133
      %p135 = scmp.ne.s32.totalorder %s124, %s127
      %p136 = scmp.eq.s32.totalorder %s18, 1
      %p137 = por %p135, %p136
      %p138 = scmp.ne.s32.totalorder %s127, %s128
      %p139 = scmp.eq.s32.totalorder %s18, 0
      %p140 = por %p138, %p139
      %p141 = scmp.ne.s32.totalorder %s127, %s128
      %p142 = scmp.eq.s32.totalorder %s19, 1
      %p143 = por %p141, %p142
      %p145 = scmp.ne.s32.totalorder %s128, %s144
      %p146 = scmp.eq.s32.totalorder %s19, 0
      %p147 = por %p145, %p146
      %s149 = sadd.s32 %s148, 1
      %p152 = scmp.eq.s32.totalorder %s13, 1
      %p153 = scmp.ne.s32.totalorder %s148, %s150
      %p154 = scmp.eq.s32.totalorder %s13, 0
      %p155 = por %p153, %p154
      %p156 = scmp.ne.s32.totalorder %s148, %s150
      %p157 = scmp.eq.s32.totalorder %s18, 1
      %p158 = por %p156, %p157
      %p159 = scmp.ne.s32.totalorder %s150, %s151
      %p160 = scmp.eq.s32.totalorder %s18, 0
      %p161 = por %p159, %p160
      %p162 = scmp.ne.s32.totalorder %s150, %s151
      %p163 = scmp.eq.s32.totalorder %s19, 1
      %p164 = por %p162, %p163
      %p166 = scmp.ne.s32.totalorder %s151, %s165
      %p167 = scmp.eq.s32.totalorder %s19, 0
      %p168 = por %p166, %p167
      %s169 = ssub.s32 %s21, %s28
      %p170 = scmp.eq.s32.totalorder %s169, 0
      %s172 = sadd.s32 %s171, 1
      %s173 = scalar_select %p170, %s171, %s172
      %p176 = pneg %p170
      %p177 = scmp.eq.s32.totalorder %s13, 1
      %p178 = por %p176, %p177
      %p179 = scmp.ne.s32.totalorder %s171, %s174
      %p180 = scmp.eq.s32.totalorder %s13, 0
      %p181 = por %p179, %p180
      %p182 = scmp.ne.s32.totalorder %s171, %s174
      %p183 = scmp.eq.s32.totalorder %s18, 1
      %p184 = por %p182, %p183
      %p185 = scmp.ne.s32.totalorder %s174, %s175
      %p186 = scmp.eq.s32.totalorder %s18, 0
      %p187 = por %p185, %p186
      %p188 = scmp.ne.s32.totalorder %s174, %s175
      %p189 = scmp.eq.s32.totalorder %s19, 1
      %p190 = por %p188, %p189
      %p192 = scmp.ne.s32.totalorder %s175, %s191
      %p193 = scmp.eq.s32.totalorder %s19, 0
      %p194 = por %p192, %p193
      %p195 = scmp.le.s32.totalorder 1, %s13
      %p196 = scmp.lt.s32.totalorder %s13, 3
      %p197 = pnand %p195, %p196
      %p198 = pneg %p197
      // Predicated region
      $region9: #{bottleneck_forward.5} parent=5 // pred_check
        _
      $region10: #{bottleneck_forward.5} parent=5 // pred_check_branch
        %200 = sbr.rel (%p197) target = $region12
      $region11: #{bottleneck_forward.5} parent=5 // pred_region
        %s201 = ssub.s32 %s13, 1
        // Predicated region
        $region13: #{bottleneck_forward.5} parent=11 // pred_check
          %p202 = pneg %p51
        $region14: #{bottleneck_forward.5} parent=11 // pred_check_branch
          %204 = sbr.rel (%p202) target = $region16
        $region15: #{bottleneck_forward.5} parent=11 // pred_region
          %s205 = smul.u32 16, %s23
          %p206 = scmp.lt.s32.totalorder %s205, 15
          %s207 = scalar_select %p206, %s205, 15
          %s208 = smul.addr %s207, 4
          %s209 = scalar_lea.vmem %s0, %s208
          %s210 = smul.u32 16, %s23
        $region16: #{bottleneck_forward.5} parent=11 // pred_fallthru
          _
        // Predicated region
        $region17: #{bottleneck_forward.5} parent=11 // pred_check
          %p211 = pneg %p72
        $region18: #{bottleneck_forward.5} parent=11 // pred_check_branch
          %213 = sbr.rel (%p211) target = $region20
        $region19: #{bottleneck_forward.5} parent=11 // pred_region
          _
        $region20: #{bottleneck_forward.5} parent=11 // pred_fallthru
          _
        // Predicated region
        $region21: #{bottleneck_forward.5} parent=11 // pred_check
          %p214 = pneg %p93
        $region22: #{bottleneck_forward.5} parent=11 // pred_check_branch
          %216 = sbr.rel (%p214) target = $region24
        $region23: #{bottleneck_forward.5} parent=11 // pred_region
          _
        $region24: #{bottleneck_forward.5} parent=11 // pred_fallthru
          _
        // Predicated region
        $region25: #{bottleneck_forward.5} parent=11 // pred_check
          %p217 = pneg %p114
        $region26: #{bottleneck_forward.5} parent=11 // pred_check_branch
          %219 = sbr.rel (%p217) target = $region28
        $region27: #{bottleneck_forward.5} parent=11 // pred_region
          _
        $region28: #{bottleneck_forward.5} parent=11 // pred_fallthru
          _
        // Predicated region
        $region29: #{bottleneck_forward.5} parent=11 // pred_check
          %p220 = pneg %p140
        $region30: #{bottleneck_forward.5} parent=11 // pred_check_branch
          %222 = sbr.rel (%p220) target = $region32
        $region31: #{bottleneck_forward.5} parent=11 // pred_region
          %s223 = smul.u32 16, %s23
          %p224 = scmp.lt.s32.totalorder %s223, 15
          %s225 = scalar_select %p224, %s223, 15
          %s226 = smul.addr %s225, 4
          %s227 = scalar_lea.vmem %s4, %s226
          %s228 = smul.u32 16, %s23
        $region32: #{bottleneck_forward.5} parent=11 // pred_fallthru
          _
        // Predicated region
        $region33: #{bottleneck_forward.5} parent=11 // pred_check
          %p229 = pneg %p161
        $region34: #{bottleneck_forward.5} parent=11 // pred_check_branch
          %231 = sbr.rel (%p229) target = $region36
        $region35: #{bottleneck_forward.5} parent=11 // pred_region
          _
        $region36: #{bottleneck_forward.5} parent=11 // pred_fallthru
          _
      $region12: #{bottleneck_forward.5} parent=5 // pred_fallthru
        _
      %p232 = scmp.lt.s32.totalorder %s13, 2
      // Predicated region
      $region37: #{bottleneck_forward.5} parent=5 // pred_check
        %p233 = pneg %p232
      $region38: #{bottleneck_forward.5} parent=5 // pred_check_branch
        %235 = sbr.rel (%p233) target = $region40
      $region39: #{bottleneck_forward.5} parent=5 // pred_region
        _
      $region40: #{bottleneck_forward.5} parent=5 // pred_fallthru
        _
      %p236 = scmp.le.s32.totalorder 1, %s13
      %p237 = scmp.lt.s32.totalorder %s13, 3
      %p238 = pnand %p236, %p237
      %p239 = pneg %p238
      // Predicated region
      $region41: #{bottleneck_forward.5} parent=5 // pred_check
        _
      $region42: #{bottleneck_forward.5} parent=5 // pred_check_branch
        %241 = sbr.rel (%p238) target = $region44
      $region43: #{bottleneck_forward.5} parent=5 // pred_region
        %s242 = ssub.s32 %s13, 1
        %s243 = smul.u32 16, %s23
        %p244 = scmp.lt.s32.totalorder %s243, 15
        %s245 = scalar_select %p244, %s243, 15
        %s246 = smul.addr %s245, 4
        %s247 = scalar_lea.vmem %s0, %s246
        %p248 = pneg %p51
        %p249 = pneg %p48
        %p250 = pneg %p72
        %p251 = pneg %p69
        %p252 = pneg %p93
        %p253 = pneg %p90
        %p254 = pneg %p114
        %p255 = pneg %p111
        %s256 = smul.u32 16, %s23
        %p257 = scmp.lt.s32.totalorder %s256, 15
        %s258 = scalar_select %p257, %s256, 15
        %s259 = smul.addr %s258, 4
        %s260 = scalar_lea.vmem %s4, %s259
        %p261 = pneg %p140
        %p262 = pneg %p137
        %p263 = pneg %p161
        %p264 = pneg %p158
        %p265 = pneg %p187
        %p266 = pneg %p184
        %s267 = smul.u32 16, %s23
        %p268 = scmp.lt.s32.totalorder %s267, 15
        %s269 = scalar_select %p268, %s267, 15
        %s270 = smul.addr %s269, 4
        %s271 = scalar_lea.vmem %s0, %s270
        %s272 = smul.u32 16, %s23
        %s273 = smul.u32 16, %s23
        %p274 = scmp.lt.s32.totalorder %s273, 15
        %s275 = scalar_select %p274, %s273, 15
        %s276 = smul.addr %s275, 4
        %s277 = scalar_lea.vmem %s4, %s276
        %s278 = smul.u32 16, %s23
        %s279 = smul.u32 16, %s23
        %v281 = vld [vmem:[%s271] sm:$0xf]
        %v282 = vld [vmem:[%s271 + $0x4] sm:$0xf]
        %v283 = vld [vmem:[%s271 + $0x8] sm:$0xf]
        %v284 = vld [vmem:[%s271 + $0xc] sm:$0xf]
        %v285 = vld [vmem:[%s271 + $0x10] sm:$0xf]
        %v286 = vld [vmem:[%s271 + $0x14] sm:$0xf]
        %v287 = vld [vmem:[%s271 + $0x18] sm:$0xf]
        %v288 = vld [vmem:[%s271 + $0x1c] sm:$0xf]
        %v289 = vld [vmem:[%s271 + $0x20] sm:$0xf]
        %v290 = vld [vmem:[%s271 + $0x24] sm:$0xf]
        %v291 = vld [vmem:[%s271 + $0x28] sm:$0xf]
        %v292 = vld [vmem:[%s271 + $0x2c] sm:$0xf]
        %v293 = vld [vmem:[%s271 + $0x30] sm:$0xf]
        %v294 = vld [vmem:[%s271 + $0x34] sm:$0xf]
        %v295 = vld [vmem:[%s271 + $0x38] sm:$0xf]
        %v296 = vld [vmem:[%s271 + $0x3c] sm:$0xf]
        %v297 = vld [vmem:[%s1] sm:$0xf]
        %v298 = vld [vmem:[%s1 + $0x4] sm:$0xf]
        %v299 = vld [vmem:[%s1 + $0x8] sm:$0xf]
        %v300 = vld [vmem:[%s1 + $0xc] sm:$0xf]
        %v301 = vld [vmem:[%s1 + $0x10] sm:$0xf]
        %v302 = vld [vmem:[%s1 + $0x14] sm:$0xf]
        %v303 = vld [vmem:[%s1 + $0x18] sm:$0xf]
        %v304 = vld [vmem:[%s1 + $0x1c] sm:$0xf]
        %v305 = vld [vmem:[%s1 + $0x20] sm:$0xf]
        %v306 = vld [vmem:[%s1 + $0x24] sm:$0xf]
        %v307 = vld [vmem:[%s1 + $0x28] sm:$0xf]
        %v308 = vld [vmem:[%s1 + $0x2c] sm:$0xf]
        %v309 = vld [vmem:[%s1 + $0x30] sm:$0xf]
        %v310 = vld [vmem:[%s1 + $0x34] sm:$0xf]
        %v311 = vld [vmem:[%s1 + $0x38] sm:$0xf]
        %v312 = vld [vmem:[%s1 + $0x3c] sm:$0xf]
        %v329 = vunpack.c.l.b16 %v281
        %v330 = vunpack.c.l.b16 %v282
        %v331 = vunpack.c.l.b16 %v283
        %v332 = vunpack.c.l.b16 %v284
        %v333 = vunpack.c.l.b16 %v285
        %v334 = vunpack.c.l.b16 %v286
        %v335 = vunpack.c.l.b16 %v287
        %v336 = vunpack.c.l.b16 %v288
        %v337 = vunpack.c.l.b16 %v289
        %v338 = vunpack.c.l.b16 %v290
        %v339 = vunpack.c.l.b16 %v291
        %v340 = vunpack.c.l.b16 %v292
        %v341 = vunpack.c.l.b16 %v293
        %v342 = vunpack.c.l.b16 %v294
        %v343 = vunpack.c.l.b16 %v295
        %v344 = vunpack.c.l.b16 %v296
        %v345 = vpack.c.b16 %v330, %v329
        %v346 = vpack.c.b16 %v332, %v331
        %v347 = vpack.c.b16 %v334, %v333
        %v348 = vpack.c.b16 %v336, %v335
        %v349 = vpack.c.b16 %v338, %v337
        %v350 = vpack.c.b16 %v340, %v339
        %v351 = vpack.c.b16 %v342, %v341
        %v352 = vpack.c.b16 %v344, %v343
        %v377 = vunpack.c.l.b16 %v297
        %v378 = vunpack.c.l.b16 %v298
        %v379 = vunpack.c.l.b16 %v299
        %v380 = vunpack.c.l.b16 %v300
        %v381 = vunpack.c.l.b16 %v301
        %v382 = vunpack.c.l.b16 %v302
        %v383 = vunpack.c.l.b16 %v303
        %v384 = vunpack.c.l.b16 %v304
        %v385 = vunpack.c.l.b16 %v305
        %v386 = vunpack.c.l.b16 %v306
        %v387 = vunpack.c.l.b16 %v307
        %v388 = vunpack.c.l.b16 %v308
        %v389 = vunpack.c.l.b16 %v309
        %v390 = vunpack.c.l.b16 %v310
        %v391 = vunpack.c.l.b16 %v311
        %v392 = vunpack.c.l.b16 %v312
        %v393 = vpack.c.b16 %v378, %v377
        %v394 = vpack.c.b16 %v380, %v379
        %v395 = vpack.c.b16 %v382, %v381
        %v396 = vpack.c.b16 %v384, %v383
        %v397 = vpack.c.b16 %v386, %v385
        %v398 = vpack.c.b16 %v388, %v387
        %v399 = vpack.c.b16 %v390, %v389
        %v400 = vpack.c.b16 %v392, %v391
        %409 = vmatprep.subr.bf16.mxu0 0
        %410 = vmatpush1.bf16.msra.mxu0 %v400
        %411 = vmatprep.subr.bf16.mxu0 0
        %412 = vmatpush1.bf16.msra.mxu0 %v399
        %413 = vmatprep.subr.bf16.mxu0 0
        %414 = vmatpush1.bf16.msra.mxu0 %v398
        %415 = vmatprep.subr.bf16.mxu0 0
        %416 = vmatpush1.bf16.msra.mxu0 %v397
        %417 = vmatprep.subr.bf16.mxu0 0
        %418 = vmatpush1.bf16.msra.mxu0 %v396
        %419 = vmatprep.subr.bf16.mxu0 0
        %420 = vmatpush1.bf16.msra.mxu0 %v395
        %421 = vmatprep.subr.bf16.mxu0 0
        %422 = vmatpush1.bf16.msra.mxu0 %v394
        %423 = vmatprep.subr.bf16.mxu0 0
        %424 = vmatpush1.bf16.msra.mxu0 %v393
        %425 = vmatprep.subr.bf16.mxu0 0
        %426 = vmatpush2.bf16.msra.mxu0 0
        %427 = vmatprep.subr.bf16.mxu0 0
        %428 = vmatpush2.bf16.msra.mxu0 0
        %429 = vmatprep.subr.bf16.mxu0 0
        %430 = vmatpush2.bf16.msra.mxu0 0
        %431 = vmatprep.subr.bf16.mxu0 0
        %432 = vmatpush2.bf16.msra.mxu0 0
        %433 = vmatprep.subr.bf16.mxu0 0
        %434 = vmatpush2.bf16.msra.mxu0 0
        %435 = vmatprep.subr.bf16.mxu0 0
        %436 = vmatpush2.bf16.msra.mxu0 0
        %437 = vmatprep.subr.bf16.mxu0 0
        %438 = vmatpush2.bf16.msra.mxu0 0
        %439 = vmatprep.subr.bf16.mxu0 0
        %440 = vmatpush2.bf16.msra.mxu0 0
        %441 = vmatprep.mubr.bf16.mxu0 0
        %442 = vmatmul.mubr.bf16.gmra.mxu0 %v345
        %v443 = vpop.f32.mrf.mxu0
        %v444 = vadd.f32 0.0, %v443
        %v445 = vpop.f32.mrf.mxu0
        %v446 = vpop.f32.mrf.mxu0
        %v447 = vadd.f32 0.0, %v446
        %v448 = vpop.f32.mrf.mxu0
        %449 = vmatprep.mubr.bf16.mxu0 0
        %450 = vmatmul.mubr.bf16.gmra.mxu0 %v346
        %v451 = vpop.f32.mrf.mxu0
        %v452 = vadd.f32 0.0, %v451
        %v453 = vpop.f32.mrf.mxu0
        %v454 = vpop.f32.mrf.mxu0
        %v455 = vadd.f32 0.0, %v454
        %v456 = vpop.f32.mrf.mxu0
        %457 = vmatprep.mubr.bf16.mxu0 0
        %458 = vmatmul.mubr.bf16.gmra.mxu0 %v347
        %v459 = vpop.f32.mrf.mxu0
        %v460 = vadd.f32 0.0, %v459
        %v461 = vpop.f32.mrf.mxu0
        %v462 = vpop.f32.mrf.mxu0
        %v463 = vadd.f32 0.0, %v462
        %v464 = vpop.f32.mrf.mxu0
        %465 = vmatprep.mubr.bf16.mxu0 0
        %466 = vmatmul.mubr.bf16.gmra.mxu0 %v348
        %v467 = vpop.f32.mrf.mxu0
        %v468 = vadd.f32 0.0, %v467
        %v469 = vpop.f32.mrf.mxu0
        %v470 = vpop.f32.mrf.mxu0
        %v471 = vadd.f32 0.0, %v470
        %v472 = vpop.f32.mrf.mxu0
        %473 = vmatprep.mubr.bf16.mxu0 0
        %474 = vmatmul.mubr.bf16.gmra.mxu0 %v349
        %v475 = vpop.f32.mrf.mxu0
        %v476 = vadd.f32 0.0, %v475
        %v477 = vpop.f32.mrf.mxu0
        %v478 = vpop.f32.mrf.mxu0
        %v479 = vadd.f32 0.0, %v478
        %v480 = vpop.f32.mrf.mxu0
        %481 = vmatprep.mubr.bf16.mxu0 0
        %482 = vmatmul.mubr.bf16.gmra.mxu0 %v350
        %v483 = vpop.f32.mrf.mxu0
        %v484 = vadd.f32 0.0, %v483
        %v485 = vpop.f32.mrf.mxu0
        %v486 = vpop.f32.mrf.mxu0
        %v487 = vadd.f32 0.0, %v486
        %v488 = vpop.f32.mrf.mxu0
        %489 = vmatprep.mubr.bf16.mxu0 0
        %490 = vmatmul.mubr.bf16.gmra.mxu0 %v351
        %v491 = vpop.f32.mrf.mxu0
        %v492 = vadd.f32 0.0, %v491
        %v493 = vpop.f32.mrf.mxu0
        %v494 = vpop.f32.mrf.mxu0
        %v495 = vadd.f32 0.0, %v494
        %v496 = vpop.f32.mrf.mxu0
        %497 = vmatprep.mubr.bf16.mxu0 0
        %498 = vmatmul.mubr.bf16.gmra.mxu0 %v352
        %v499 = vpop.f32.mrf.mxu0
        %v500 = vadd.f32 0.0, %v499
        %v501 = vpop.f32.mrf.mxu0
        %v502 = vpop.f32.mrf.mxu0
        %v503 = vadd.f32 0.0, %v502
        %v504 = vpop.f32.mrf.mxu0
        %505 = vdwg.mxu0
        %p506 = scmp.eq.s32.totalorder %s22, 0
        %p507 = scmp.eq.s32.totalorder %s23, 0
        %p508 = pnand %p506, %p507
        %p509 = pneg %p508
        // Predicated region
        $region45: #{bottleneck_forward.5} parent=43 // pred_check
          _
        $region46: #{bottleneck_forward.5} parent=43 // pred_check_branch
          %511 = sbr.rel (%p508) target = $region48
        $region47: #{bottleneck_forward.5} parent=43 // pred_region
          %512 = vst [vmem:[#allocation2] sm:$0x1] 0.0
          %513 = vst [vmem:[#allocation3] sm:$0x1] 0.0
        $region48: #{bottleneck_forward.5} parent=43 // pred_fallthru
          _
        // Predicated region
        $region49: #{bottleneck_forward.5} parent=43 // pred_check
          %p514 = pneg %p506
        $region50: #{bottleneck_forward.5} parent=43 // pred_check_branch
          %516 = sbr.rel (%p514) target = $region52
        $region51: #{bottleneck_forward.5} parent=43 // pred_region
          %v517 = vld [vmem:[#allocation2] sm:$0x1]
          %v518 = vadd.f32 %v444, %v447
          %v519 = vadd.f32 %v518, %v452
          %v520 = vadd.f32 %v519, %v455
          %v521 = vadd.f32 %v520, %v460
          %v522 = vadd.f32 %v521, %v463
          %v523 = vadd.f32 %v522, %v468
          %v524 = vadd.f32 %v523, %v471
          %v525 = vadd.f32 %v524, %v476
          %v526 = vadd.f32 %v525, %v479
          %v527 = vadd.f32 %v526, %v484
          %v528 = vadd.f32 %v527, %v487
          %v529 = vadd.f32 %v528, %v492
          %v530 = vadd.f32 %v529, %v495
          %v531 = vadd.f32 %v530, %v500
          %v532 = vadd.f32 %v531, %v503
          %v533 = vrot.slane %v532, 4
          %v534 = vadd.f32 %v532, %v533
          %v535 = vrot.slane %v534, 2
          %v536 = vadd.f32 %v534, %v535
          %v537 = vrot.slane %v536, 1
          %v538 = vadd.f32 %v536, %v537
          %v539 = vadd.f32 %v517, %v538
          %540 = vst [vmem:[#allocation2] sm:$0x1] %v539
          %v541 = vld [vmem:[#allocation3] sm:$0x1]
          %v542 = vmul.f32 %v444, %v444
          %v543 = vmul.f32 %v447, %v447
          %v544 = vmul.f32 %v452, %v452
          %v545 = vmul.f32 %v455, %v455
          %v546 = vmul.f32 %v460, %v460
          %v547 = vmul.f32 %v463, %v463
          %v548 = vmul.f32 %v468, %v468
          %v549 = vmul.f32 %v471, %v471
          %v550 = vmul.f32 %v476, %v476
          %v551 = vmul.f32 %v479, %v479
          %v552 = vmul.f32 %v484, %v484
          %v553 = vmul.f32 %v487, %v487
          %v554 = vmul.f32 %v492, %v492
          %v555 = vmul.f32 %v495, %v495
          %v556 = vmul.f32 %v500, %v500
          %v557 = vmul.f32 %v503, %v503
          %v558 = vadd.f32 %v542, %v543
          %v559 = vadd.f32 %v558, %v544
          %v560 = vadd.f32 %v559, %v545
          %v561 = vadd.f32 %v560, %v546
          %v562 = vadd.f32 %v561, %v547
          %v563 = vadd.f32 %v562, %v548
          %v564 = vadd.f32 %v563, %v549
          %v565 = vadd.f32 %v564, %v550
          %v566 = vadd.f32 %v565, %v551
          %v567 = vadd.f32 %v566, %v552
          %v568 = vadd.f32 %v567, %v553
          %v569 = vadd.f32 %v568, %v554
          %v570 = vadd.f32 %v569, %v555
          %v571 = vadd.f32 %v570, %v556
          %v572 = vadd.f32 %v571, %v557
          %v573 = vrot.slane %v572, 4
          %v574 = vadd.f32 %v572, %v573
          %v575 = vrot.slane %v574, 2
          %v576 = vadd.f32 %v574, %v575
          %v577 = vrot.slane %v576, 1
          %v578 = vadd.f32 %v576, %v577
          %v579 = vadd.f32 %v541, %v578
          %580 = vst [vmem:[#allocation3] sm:$0x1] %v579
        $region52: #{bottleneck_forward.5} parent=43 // pred_fallthru
          _
        %p581 = scmp.eq.s32.totalorder %s22, 1
        %p582 = pnand %p581, %p507
        %p583 = pneg %p582
        // Predicated region
        $region53: #{bottleneck_forward.5} parent=43 // pred_check
          _
        $region54: #{bottleneck_forward.5} parent=43 // pred_check_branch
          %585 = sbr.rel (%p582) target = $region56
        $region55: #{bottleneck_forward.5} parent=43 // pred_region
          %v586 = vld [vmem:[#allocation2] sm:$0x1]
          %v587 = vmul.f32 %v586, 0.0078125
          %v588 = vld [vmem:[#allocation3] sm:$0x1]
          %v589 = vmul.f32 %v588, 0.0078125
          %v590 = vmul.f32 %v587, %v587
          %v591 = vsub.f32 %v589, %v590
          %v592 = vmax.f32 %v591, 0.0
          %v593 = vld [vmem:[%s2] sm:$0x1]
          %v594 = vadd.f32 %v592, 1e-05
          %v595 = vrsqrt.pop %v594
          %v596 = vmul.f32 %v593, %v595
          %597 = vst [vmem:[#allocation4] sm:$0x1] %v596
          %v598 = vld [vmem:[%s3] sm:$0x1]
          %v599 = vmul.f32 %v587, %v596
          %v600 = vsub.f32 %v598, %v599
          %601 = vst [vmem:[#allocation5] sm:$0x1] %v600
        $region56: #{bottleneck_forward.5} parent=43 // pred_fallthru
          _
        // Predicated region
        $region57: #{bottleneck_forward.5} parent=43 // pred_check
          %p602 = pneg %p581
        $region58: #{bottleneck_forward.5} parent=43 // pred_check_branch
          %604 = sbr.rel (%p602) target = $region60
        $region59: #{bottleneck_forward.5} parent=43 // pred_region
          %v605 = vld [vmem:[%s277] sm:$0xf]
          %v606 = vld [vmem:[%s277 + $0x4] sm:$0xf]
          %v607 = vld [vmem:[%s277 + $0x8] sm:$0xf]
          %v608 = vld [vmem:[%s277 + $0xc] sm:$0xf]
          %v609 = vld [vmem:[%s277 + $0x10] sm:$0xf]
          %v610 = vld [vmem:[%s277 + $0x14] sm:$0xf]
          %v611 = vld [vmem:[%s277 + $0x18] sm:$0xf]
          %v612 = vld [vmem:[%s277 + $0x1c] sm:$0xf]
          %v613 = vld [vmem:[%s277 + $0x20] sm:$0xf]
          %v614 = vld [vmem:[%s277 + $0x24] sm:$0xf]
          %v615 = vld [vmem:[%s277 + $0x28] sm:$0xf]
          %v616 = vld [vmem:[%s277 + $0x2c] sm:$0xf]
          %v617 = vld [vmem:[%s277 + $0x30] sm:$0xf]
          %v618 = vld [vmem:[%s277 + $0x34] sm:$0xf]
          %v619 = vld [vmem:[%s277 + $0x38] sm:$0xf]
          %v620 = vld [vmem:[%s277 + $0x3c] sm:$0xf]
          %v621 = vld [vmem:[%s5] sm:$0xf]
          %v622 = vld [vmem:[%s5 + $0x4] sm:$0xf]
          %v623 = vld [vmem:[%s5 + $0x8] sm:$0xf]
          %v624 = vld [vmem:[%s5 + $0xc] sm:$0xf]
          %v625 = vld [vmem:[%s5 + $0x10] sm:$0xf]
          %v626 = vld [vmem:[%s5 + $0x14] sm:$0xf]
          %v627 = vld [vmem:[%s5 + $0x18] sm:$0xf]
          %v628 = vld [vmem:[%s5 + $0x1c] sm:$0xf]
          %v629 = vld [vmem:[%s5 + $0x20] sm:$0xf]
          %v630 = vld [vmem:[%s5 + $0x24] sm:$0xf]
          %v631 = vld [vmem:[%s5 + $0x28] sm:$0xf]
          %v632 = vld [vmem:[%s5 + $0x2c] sm:$0xf]
          %v633 = vld [vmem:[%s5 + $0x30] sm:$0xf]
          %v634 = vld [vmem:[%s5 + $0x34] sm:$0xf]
          %v635 = vld [vmem:[%s5 + $0x38] sm:$0xf]
          %v636 = vld [vmem:[%s5 + $0x3c] sm:$0xf]
          %v653 = vunpack.c.l.b16 %v605
          %v654 = vunpack.c.l.b16 %v606
          %v655 = vunpack.c.l.b16 %v607
          %v656 = vunpack.c.l.b16 %v608
          %v657 = vunpack.c.l.b16 %v609
          %v658 = vunpack.c.l.b16 %v610
          %v659 = vunpack.c.l.b16 %v611
          %v660 = vunpack.c.l.b16 %v612
          %v661 = vunpack.c.l.b16 %v613
          %v662 = vunpack.c.l.b16 %v614
          %v663 = vunpack.c.l.b16 %v615
          %v664 = vunpack.c.l.b16 %v616
          %v665 = vunpack.c.l.b16 %v617
          %v666 = vunpack.c.l.b16 %v618
          %v667 = vunpack.c.l.b16 %v619
          %v668 = vunpack.c.l.b16 %v620
          %v669 = vpack.c.b16 %v654, %v653
          %v670 = vpack.c.b16 %v656, %v655
          %v671 = vpack.c.b16 %v658, %v657
          %v672 = vpack.c.b16 %v660, %v659
          %v673 = vpack.c.b16 %v662, %v661
          %v674 = vpack.c.b16 %v664, %v663
          %v675 = vpack.c.b16 %v666, %v665
          %v676 = vpack.c.b16 %v668, %v667
          %v701 = vunpack.c.l.b16 %v621
          %v702 = vunpack.c.l.b16 %v622
          %v703 = vunpack.c.l.b16 %v623
          %v704 = vunpack.c.l.b16 %v624
          %v705 = vunpack.c.l.b16 %v625
          %v706 = vunpack.c.l.b16 %v626
          %v707 = vunpack.c.l.b16 %v627
          %v708 = vunpack.c.l.b16 %v628
          %v709 = vunpack.c.l.b16 %v629
          %v710 = vunpack.c.l.b16 %v630
          %v711 = vunpack.c.l.b16 %v631
          %v712 = vunpack.c.l.b16 %v632
          %v713 = vunpack.c.l.b16 %v633
          %v714 = vunpack.c.l.b16 %v634
          %v715 = vunpack.c.l.b16 %v635
          %v716 = vunpack.c.l.b16 %v636
          %v717 = vpack.c.b16 %v702, %v701
          %v718 = vpack.c.b16 %v704, %v703
          %v719 = vpack.c.b16 %v706, %v705
          %v720 = vpack.c.b16 %v708, %v707
          %v721 = vpack.c.b16 %v710, %v709
          %v722 = vpack.c.b16 %v712, %v711
          %v723 = vpack.c.b16 %v714, %v713
          %v724 = vpack.c.b16 %v716, %v715
          %733 = vmatprep.subr.bf16.mxu0 0
          %734 = vmatpush1.bf16.msra.mxu0 %v724
          %735 = vmatprep.subr.bf16.mxu0 0
          %736 = vmatpush1.bf16.msra.mxu0 %v723
          %737 = vmatprep.subr.bf16.mxu0 0
          %738 = vmatpush1.bf16.msra.mxu0 %v722
          %739 = vmatprep.subr.bf16.mxu0 0
          %740 = vmatpush1.bf16.msra.mxu0 %v721
          %741 = vmatprep.subr.bf16.mxu0 0
          %742 = vmatpush1.bf16.msra.mxu0 %v720
          %743 = vmatprep.subr.bf16.mxu0 0
          %744 = vmatpush1.bf16.msra.mxu0 %v719
          %745 = vmatprep.subr.bf16.mxu0 0
          %746 = vmatpush1.bf16.msra.mxu0 %v718
          %747 = vmatprep.subr.bf16.mxu0 0
          %748 = vmatpush1.bf16.msra.mxu0 %v717
          %749 = vmatprep.subr.bf16.mxu0 0
          %750 = vmatpush2.bf16.msra.mxu0 0
          %751 = vmatprep.subr.bf16.mxu0 0
          %752 = vmatpush2.bf16.msra.mxu0 0
          %753 = vmatprep.subr.bf16.mxu0 0
          %754 = vmatpush2.bf16.msra.mxu0 0
          %755 = vmatprep.subr.bf16.mxu0 0
          %756 = vmatpush2.bf16.msra.mxu0 0
          %757 = vmatprep.subr.bf16.mxu0 0
          %758 = vmatpush2.bf16.msra.mxu0 0
          %759 = vmatprep.subr.bf16.mxu0 0
          %760 = vmatpush2.bf16.msra.mxu0 0
          %761 = vmatprep.subr.bf16.mxu0 0
          %762 = vmatpush2.bf16.msra.mxu0 0
          %763 = vmatprep.subr.bf16.mxu0 0
          %764 = vmatpush2.bf16.msra.mxu0 0
          %765 = vmatprep.mubr.bf16.mxu0 0
          %766 = vmatmul.mubr.bf16.gmra.mxu0 %v669
          %v767 = vpop.f32.mrf.mxu0
          %v768 = vadd.f32 0.0, %v767
          %v769 = vpop.f32.mrf.mxu0
          %v770 = vpop.f32.mrf.mxu0
          %v771 = vadd.f32 0.0, %v770
          %v772 = vpop.f32.mrf.mxu0
          %773 = vmatprep.mubr.bf16.mxu0 0
          %774 = vmatmul.mubr.bf16.gmra.mxu0 %v670
          %v775 = vpop.f32.mrf.mxu0
          %v776 = vadd.f32 0.0, %v775
          %v777 = vpop.f32.mrf.mxu0
          %v778 = vpop.f32.mrf.mxu0
          %v779 = vadd.f32 0.0, %v778
          %v780 = vpop.f32.mrf.mxu0
          %781 = vmatprep.mubr.bf16.mxu0 0
          %782 = vmatmul.mubr.bf16.gmra.mxu0 %v671
          %v783 = vpop.f32.mrf.mxu0
          %v784 = vadd.f32 0.0, %v783
          %v785 = vpop.f32.mrf.mxu0
          %v786 = vpop.f32.mrf.mxu0
          %v787 = vadd.f32 0.0, %v786
          %v788 = vpop.f32.mrf.mxu0
          %789 = vmatprep.mubr.bf16.mxu0 0
          %790 = vmatmul.mubr.bf16.gmra.mxu0 %v672
          %v791 = vpop.f32.mrf.mxu0
          %v792 = vadd.f32 0.0, %v791
          %v793 = vpop.f32.mrf.mxu0
          %v794 = vpop.f32.mrf.mxu0
          %v795 = vadd.f32 0.0, %v794
          %v796 = vpop.f32.mrf.mxu0
          %797 = vmatprep.mubr.bf16.mxu0 0
          %798 = vmatmul.mubr.bf16.gmra.mxu0 %v673
          %v799 = vpop.f32.mrf.mxu0
          %v800 = vadd.f32 0.0, %v799
          %v801 = vpop.f32.mrf.mxu0
          %v802 = vpop.f32.mrf.mxu0
          %v803 = vadd.f32 0.0, %v802
          %v804 = vpop.f32.mrf.mxu0
          %805 = vmatprep.mubr.bf16.mxu0 0
          %806 = vmatmul.mubr.bf16.gmra.mxu0 %v674
          %v807 = vpop.f32.mrf.mxu0
          %v808 = vadd.f32 0.0, %v807
          %v809 = vpop.f32.mrf.mxu0
          %v810 = vpop.f32.mrf.mxu0
          %v811 = vadd.f32 0.0, %v810
          %v812 = vpop.f32.mrf.mxu0
          %813 = vmatprep.mubr.bf16.mxu0 0
          %814 = vmatmul.mubr.bf16.gmra.mxu0 %v675
          %v815 = vpop.f32.mrf.mxu0
          %v816 = vadd.f32 0.0, %v815
          %v817 = vpop.f32.mrf.mxu0
          %v818 = vpop.f32.mrf.mxu0
          %v819 = vadd.f32 0.0, %v818
          %v820 = vpop.f32.mrf.mxu0
          %821 = vmatprep.mubr.bf16.mxu0 0
          %822 = vmatmul.mubr.bf16.gmra.mxu0 %v676
          %v823 = vpop.f32.mrf.mxu0
          %v824 = vadd.f32 0.0, %v823
          %v825 = vpop.f32.mrf.mxu0
          %v826 = vpop.f32.mrf.mxu0
          %v827 = vadd.f32 0.0, %v826
          %v828 = vpop.f32.mrf.mxu0
          %829 = vdwg.mxu0
          %v830 = vld [vmem:[#allocation4] sm:$0x1]
          %v832 = vlaneseq
          %v833 = vshrl.u32 %v832, 7
          %v834 = vsub.s32 0, %v833
          %v835 = vrot.slane %v830, %v834
          %v837 = vmul.f32 %v444, %v835
          %v838 = vmul.f32 %v447, %v835
          %v839 = vmul.f32 %v452, %v835
          %v840 = vmul.f32 %v455, %v835
          %v841 = vmul.f32 %v460, %v835
          %v842 = vmul.f32 %v463, %v835
          %v843 = vmul.f32 %v468, %v835
          %v844 = vmul.f32 %v471, %v835
          %v845 = vmul.f32 %v476, %v835
          %v846 = vmul.f32 %v479, %v835
          %v847 = vmul.f32 %v484, %v835
          %v848 = vmul.f32 %v487, %v835
          %v849 = vmul.f32 %v492, %v835
          %v850 = vmul.f32 %v495, %v835
          %v851 = vmul.f32 %v500, %v835
          %v852 = vmul.f32 %v503, %v835
          %v853 = vld [vmem:[#allocation5] sm:$0x1]
          %v855 = vlaneseq
          %v856 = vshrl.u32 %v855, 7
          %v857 = vsub.s32 0, %v856
          %v858 = vrot.slane %v853, %v857
          %v860 = vadd.f32 %v837, %v858
          %v861 = vadd.f32 %v838, %v858
          %v862 = vadd.f32 %v839, %v858
          %v863 = vadd.f32 %v840, %v858
          %v864 = vadd.f32 %v841, %v858
          %v865 = vadd.f32 %v842, %v858
          %v866 = vadd.f32 %v843, %v858
          %v867 = vadd.f32 %v844, %v858
          %v868 = vadd.f32 %v845, %v858
          %v869 = vadd.f32 %v846, %v858
          %v870 = vadd.f32 %v847, %v858
          %v871 = vadd.f32 %v848, %v858
          %v872 = vadd.f32 %v849, %v858
          %v873 = vadd.f32 %v850, %v858
          %v874 = vadd.f32 %v851, %v858
          %v875 = vadd.f32 %v852, %v858
          %v876 = vadd.f32 %v860, %v768
          %v877 = vadd.f32 %v861, %v771
          %v878 = vadd.f32 %v862, %v776
          %v879 = vadd.f32 %v863, %v779
          %v880 = vadd.f32 %v864, %v784
          %v881 = vadd.f32 %v865, %v787
          %v882 = vadd.f32 %v866, %v792
          %v883 = vadd.f32 %v867, %v795
          %v884 = vadd.f32 %v868, %v800
          %v885 = vadd.f32 %v869, %v803
          %v886 = vadd.f32 %v870, %v808
          %v887 = vadd.f32 %v871, %v811
          %v888 = vadd.f32 %v872, %v816
          %v889 = vadd.f32 %v873, %v819
          %v890 = vadd.f32 %v874, %v824
          %v891 = vadd.f32 %v875, %v827
          %v892 = vmax.f32 %v876, 0.0
          %v893 = vmax.f32 %v877, 0.0
          %v894 = vmax.f32 %v878, 0.0
          %v895 = vmax.f32 %v879, 0.0
          %v896 = vmax.f32 %v880, 0.0
          %v897 = vmax.f32 %v881, 0.0
          %v898 = vmax.f32 %v882, 0.0
          %v899 = vmax.f32 %v883, 0.0
          %v900 = vmax.f32 %v884, 0.0
          %v901 = vmax.f32 %v885, 0.0
          %v902 = vmax.f32 %v886, 0.0
          %v903 = vmax.f32 %v887, 0.0
          %v904 = vmax.f32 %v888, 0.0
          %v905 = vmax.f32 %v889, 0.0
          %v906 = vmax.f32 %v890, 0.0
          %v907 = vmax.f32 %v891, 0.0
          %908 = vst [vmem:[#allocation6] sm:$0xff] %v892
          %909 = vst [vmem:[#allocation6 + $0x8] sm:$0xff] %v893
          %910 = vst [vmem:[#allocation6 + $0x10] sm:$0xff] %v894
          %911 = vst [vmem:[#allocation6 + $0x18] sm:$0xff] %v895
          %912 = vst [vmem:[#allocation6 + $0x20] sm:$0xff] %v896
          %913 = vst [vmem:[#allocation6 + $0x28] sm:$0xff] %v897
          %914 = vst [vmem:[#allocation6 + $0x30] sm:$0xff] %v898
          %915 = vst [vmem:[#allocation6 + $0x38] sm:$0xff] %v899
          %916 = vst [vmem:[#allocation6 + $0x40] sm:$0xff] %v900
          %917 = vst [vmem:[#allocation6 + $0x48] sm:$0xff] %v901
          %918 = vst [vmem:[#allocation6 + $0x50] sm:$0xff] %v902
          %919 = vst [vmem:[#allocation6 + $0x58] sm:$0xff] %v903
          %920 = vst [vmem:[#allocation6 + $0x60] sm:$0xff] %v904
          %921 = vst [vmem:[#allocation6 + $0x68] sm:$0xff] %v905
          %922 = vst [vmem:[#allocation6 + $0x70] sm:$0xff] %v906
          %923 = vst [vmem:[#allocation6 + $0x78] sm:$0xff] %v907
        $region60: #{bottleneck_forward.5} parent=43 // pred_fallthru
          _
        // Predicated region
        $region61: #{bottleneck_forward.5} parent=43 // pred_check
          %p924 = pneg %p184
        $region62: #{bottleneck_forward.5} parent=43 // pred_check_branch
          %926 = sbr.rel (%p924) target = $region64
        $region63: #{bottleneck_forward.5} parent=43 // pred_region
          %s927 = smul.u32 16, %s23
          %s929 = ssub.s32 2048, 2048
          %930 = vsyncadd [#allocation7], %s929
          %s931 = smul.addr %s927, 128
          %s932 = scalar_lea.hbm %s6, %s931
          %s933 = sshll.u32 [#allocation6], 4
          %s934 = int_to_ptr.vmem [resolvable:$true] %s933
          %939 = dma.vmem_to_hbm [thread:$0]  %s934, 2048, %s932, [#allocation7], 128, 128, 8
        $region64: #{bottleneck_forward.5} parent=43 // pred_fallthru
          _
        // Predicated region
        $region65: #{bottleneck_forward.5} parent=43 // pred_check
          %p940 = pneg %p184
        $region66: #{bottleneck_forward.5} parent=43 // pred_check_branch
          %942 = sbr.rel (%p940) target = $region68
        $region67: #{bottleneck_forward.5} parent=43 // pred_region
          %943 = dma.done [#allocation7], 2048
        $region68: #{bottleneck_forward.5} parent=43 // pred_fallthru
          _
      $region44: #{bottleneck_forward.5} parent=5 // pred_fallthru
        _
      %p944 = scmp.le.s32.totalorder 2, %s13
      // Predicated region
      $region69: #{bottleneck_forward.5} parent=5 // pred_check
        %p945 = pneg %p944
      $region70: #{bottleneck_forward.5} parent=5 // pred_check_branch
        %947 = sbr.rel (%p945) target = $region72
      $region71: #{bottleneck_forward.5} parent=5 // pred_region
        %s948 = ssub.s32 %s13, 2
      $region72: #{bottleneck_forward.5} parent=5 // pred_fallthru
        _
    $region6: #{bottleneck_forward.5} parent=1 // loop_footer
      %s17 = sadd.s32 1, %s13
    $region7: #{bottleneck_forward.5} parent=1 // loop_footer_branch
      %12 = sbr.rel target = $region3
    $region8: #{bottleneck_forward.5} parent=1 // loop_exit
      _
    %949 = vsyncpa [#allocation7], 1
    %s950 = scalar_lea.sflag [#allocation7], 1
    %951 = vsyncpa %s950, 1

// kernel: bottleneck_forward.4
$region0: #{bottleneck_forward.4}
  #allocation0 [shape = 'u32[]', space=smem, size = 0x4, offset = 0x4, fixed_abs, tag = 'smem constant byte address 0x4 - core index']
  #allocation1 [shape = 'u32[144,128]{1,0:T(1,128)}', space=vmem, size = 0x12000, scoped, tag = 'internal scratch']
  #allocation2 [shape = 'f32[64,128]{1,0:T(8,128)}', space=vmem, size = 0x8000, scoped, tag = 'scratch operand']
  #allocation3 [shape = 'f32[1,128]{1,0:T(1,128)}', space=vmem, size = 0x200, scoped, tag = 'scratch operand']
  #allocation4 [shape = 'f32[1,128]{1,0:T(1,128)}', space=vmem, size = 0x200, scoped, tag = 'scratch operand']
  #allocation5 [shape = 'f32[1,128]{1,0:T(1,128)}', space=vmem, size = 0x200, scoped, tag = 'scratch operand']
  #allocation6 [shape = 'f32[1,128]{1,0:T(1,128)}', space=vmem, size = 0x200, scoped, tag = 'scratch operand']
  %s0 = inlined_call_operand.vmem [shape: bf16[2,36,9,128], index: 0, kind: input, shape index: {}]
  %s1 = inlined_call_operand.vmem [shape: bf16[9,128,128], index: 1, kind: input, shape index: {}]
  %s2 = inlined_call_operand.vmem [shape: f32[1,128], index: 2, kind: input, shape index: {}]
  %s3 = inlined_call_operand.vmem [shape: f32[1,128], index: 3, kind: input, shape index: {}]
  %s4 = inlined_call_operand.vmem [shape: bf16[2,64,128], index: 4, kind: output, shape index: {}]
  %s5 = sld [smem:[#allocation0]]
  $region65: #{bottleneck_forward.4} parent=0
    _
  %s7 = ssub.s32 1, %s5
  %s8 = scalar_select 0, %s7, %s5
  loop: start=0, step=1, limit=6
  $region2: #{bottleneck_forward.4} parent=0 // loop_pre_header
    _
  $region3: #{bottleneck_forward.4} parent=0 // loop_header
    %s10 = sphi 0, %s14
    %p11 = scmp.ge.s32.totalorder %s10, 6
    %s17 = sphi 0, %s29
    %s18 = sphi 0, %s25
    %s19 = sphi 0, %s17
    %s20 = sphi 0, %s18
    %s21 = sphi 0, %s19
    %s22 = sphi 0, %s20
    %s32 = sphi 0, %s34
    %s35 = sphi 0, %s32
    %s36 = sphi 0, %s35
    %s52 = sphi 0, %s36
    %s56 = sphi 0, %s56
    %s58 = sphi 0, %s56
    %s59 = sphi 0, %s58
    %s73 = sphi 0, %s59
    %s77 = sphi 0, %s77
    %s79 = sphi 0, %s77
    %s80 = sphi 0, %s79
    %s94 = sphi 0, %s80
    %s98 = sphi 0, %s98
    %s100 = sphi 0, %s98
    %s101 = sphi 0, %s100
    %s115 = sphi 0, %s101
    %s121 = sphi 0, %s123
    %s124 = sphi 0, %s121
    %s125 = sphi 0, %s124
    %s141 = sphi 0, %s125
  $region4: #{bottleneck_forward.4} parent=0 // loop_header_branch
    %13 = sbr.rel (%p11) target = $region8
  $region5: #{bottleneck_forward.4} parent=0 // loop_body
    %s15 = ssub.s32 %s10, 1
    %s16 = ssub.s32 %s10, 2
    %s23 = sadd.s32 1, %s18
    %p24 = scmp.ge.s32.totalorder %s23, 2
    %s25 = scalar_select %p24, 0, %s23
    %s26 = sadd.s32 1, %s17
    %s27 = scalar_select %p24, %s26, %s17
    %p28 = scmp.ge.s32.totalorder %s27, 2
    %s29 = scalar_select %p28, 0, %s27
    %s30 = ssub.s32 %s18, %s25
    %p31 = scmp.eq.s32.totalorder %s30, 0
    %s33 = sadd.s32 %s32, 1
    %s34 = scalar_select %p31, %s32, %s33
    %p37 = pneg %p31
    %p38 = scmp.eq.s32.totalorder %s10, 3
    %p39 = por %p37, %p38
    %p40 = scmp.ne.s32.totalorder %s32, %s35
    %p41 = scmp.eq.s32.totalorder %s10, 0
    %p42 = por %p40, %p41
    %p43 = scmp.ne.s32.totalorder %s32, %s35
    %p44 = scmp.eq.s32.totalorder %s15, 3
    %p45 = por %p43, %p44
    %p46 = scmp.ne.s32.totalorder %s35, %s36
    %p47 = scmp.eq.s32.totalorder %s15, 0
    %p48 = por %p46, %p47
    %p49 = scmp.ne.s32.totalorder %s35, %s36
    %p50 = scmp.eq.s32.totalorder %s16, 3
    %p51 = por %p49, %p50
    %p53 = scmp.ne.s32.totalorder %s36, %s52
    %p54 = scmp.eq.s32.totalorder %s16, 0
    %p55 = por %p53, %p54
    %s57 = sadd.s32 %s56, 1
    %p60 = scmp.eq.s32.totalorder %s10, 3
    %p61 = scmp.ne.s32.totalorder %s56, %s58
    %p62 = scmp.eq.s32.totalorder %s10, 0
    %p63 = por %p61, %p62
    %p64 = scmp.ne.s32.totalorder %s56, %s58
    %p65 = scmp.eq.s32.totalorder %s15, 3
    %p66 = por %p64, %p65
    %p67 = scmp.ne.s32.totalorder %s58, %s59
    %p68 = scmp.eq.s32.totalorder %s15, 0
    %p69 = por %p67, %p68
    %p70 = scmp.ne.s32.totalorder %s58, %s59
    %p71 = scmp.eq.s32.totalorder %s16, 3
    %p72 = por %p70, %p71
    %p74 = scmp.ne.s32.totalorder %s59, %s73
    %p75 = scmp.eq.s32.totalorder %s16, 0
    %p76 = por %p74, %p75
    %s78 = sadd.s32 %s77, 1
    %p81 = scmp.eq.s32.totalorder %s10, 3
    %p82 = scmp.ne.s32.totalorder %s77, %s79
    %p83 = scmp.eq.s32.totalorder %s10, 0
    %p84 = por %p82, %p83
    %p85 = scmp.ne.s32.totalorder %s77, %s79
    %p86 = scmp.eq.s32.totalorder %s15, 3
    %p87 = por %p85, %p86
    %p88 = scmp.ne.s32.totalorder %s79, %s80
    %p89 = scmp.eq.s32.totalorder %s15, 0
    %p90 = por %p88, %p89
    %p91 = scmp.ne.s32.totalorder %s79, %s80
    %p92 = scmp.eq.s32.totalorder %s16, 3
    %p93 = por %p91, %p92
    %p95 = scmp.ne.s32.totalorder %s80, %s94
    %p96 = scmp.eq.s32.totalorder %s16, 0
    %p97 = por %p95, %p96
    %s99 = sadd.s32 %s98, 1
    %p102 = scmp.eq.s32.totalorder %s10, 3
    %p103 = scmp.ne.s32.totalorder %s98, %s100
    %p104 = scmp.eq.s32.totalorder %s10, 0
    %p105 = por %p103, %p104
    %p106 = scmp.ne.s32.totalorder %s98, %s100
    %p107 = scmp.eq.s32.totalorder %s15, 3
    %p108 = por %p106, %p107
    %p109 = scmp.ne.s32.totalorder %s100, %s101
    %p110 = scmp.eq.s32.totalorder %s15, 0
    %p111 = por %p109, %p110
    %p112 = scmp.ne.s32.totalorder %s100, %s101
    %p113 = scmp.eq.s32.totalorder %s16, 3
    %p114 = por %p112, %p113
    %p116 = scmp.ne.s32.totalorder %s101, %s115
    %p117 = scmp.eq.s32.totalorder %s16, 0
    %p118 = por %p116, %p117
    %s119 = ssub.s32 %s18, %s25
    %p120 = scmp.eq.s32.totalorder %s119, 0
    %s122 = sadd.s32 %s121, 1
    %s123 = scalar_select %p120, %s121, %s122
    %p126 = pneg %p120
    %p127 = scmp.eq.s32.totalorder %s10, 3
    %p128 = por %p126, %p127
    %p129 = scmp.ne.s32.totalorder %s121, %s124
    %p130 = scmp.eq.s32.totalorder %s10, 0
    %p131 = por %p129, %p130
    %p132 = scmp.ne.s32.totalorder %s121, %s124
    %p133 = scmp.eq.s32.totalorder %s15, 3
    %p134 = por %p132, %p133
    %p135 = scmp.ne.s32.totalorder %s124, %s125
    %p136 = scmp.eq.s32.totalorder %s15, 0
    %p137 = por %p135, %p136
    %p138 = scmp.ne.s32.totalorder %s124, %s125
    %p139 = scmp.eq.s32.totalorder %s16, 3
    %p140 = por %p138, %p139
    %p142 = scmp.ne.s32.totalorder %s125, %s141
    %p143 = scmp.eq.s32.totalorder %s16, 0
    %p144 = por %p142, %p143
    %p145 = scmp.le.s32.totalorder 1, %s10
    %p146 = scmp.lt.s32.totalorder %s10, 5
    %p147 = pnand %p145, %p146
    %p148 = pneg %p147
    // Predicated region
    $region9: #{bottleneck_forward.4} parent=5 // pred_check
      _
    $region10: #{bottleneck_forward.4} parent=5 // pred_check_branch
      %150 = sbr.rel (%p147) target = $region12
    $region11: #{bottleneck_forward.4} parent=5 // pred_region
      %s151 = ssub.s32 %s10, 1
      // Predicated region
      $region13: #{bottleneck_forward.4} parent=11 // pred_check
        %p152 = pneg %p69
      $region14: #{bottleneck_forward.4} parent=11 // pred_check_branch
        %154 = sbr.rel (%p152) target = $region16
      $region15: #{bottleneck_forward.4} parent=11 // pred_region
        _
      $region16: #{bottleneck_forward.4} parent=11 // pred_fallthru
        _
      // Predicated region
      $region17: #{bottleneck_forward.4} parent=11 // pred_check
        %p155 = pneg %p90
      $region18: #{bottleneck_forward.4} parent=11 // pred_check_branch
        %157 = sbr.rel (%p155) target = $region20
      $region19: #{bottleneck_forward.4} parent=11 // pred_region
        _
      $region20: #{bottleneck_forward.4} parent=11 // pred_fallthru
        _
      // Predicated region
      $region21: #{bottleneck_forward.4} parent=11 // pred_check
        %p158 = pneg %p111
      $region22: #{bottleneck_forward.4} parent=11 // pred_check_branch
        %160 = sbr.rel (%p158) target = $region24
      $region23: #{bottleneck_forward.4} parent=11 // pred_region
        _
      $region24: #{bottleneck_forward.4} parent=11 // pred_fallthru
        _
    $region12: #{bottleneck_forward.4} parent=5 // pred_fallthru
      _
    %p161 = scmp.lt.s32.totalorder %s10, 4
    // Predicated region
    $region25: #{bottleneck_forward.4} parent=5 // pred_check
      %p162 = pneg %p161
    $region26: #{bottleneck_forward.4} parent=5 // pred_check_branch
      %164 = sbr.rel (%p162) target = $region28
    $region27: #{bottleneck_forward.4} parent=5 // pred_region
      // Predicated region
      $region29: #{bottleneck_forward.4} parent=27 // pred_check
        %p165 = pneg %p42
      $region30: #{bottleneck_forward.4} parent=27 // pred_check_branch
        %167 = sbr.rel (%p165) target = $region32
      $region31: #{bottleneck_forward.4} parent=27 // pred_region
        %p168 = scmp.lt.s32.totalorder %s18, 1
        %s169 = scalar_select %p168, %s18, 1
        %s170 = smul.addr %s169, 72
        %s171 = smul.addr %s170, 4
        %s172 = scalar_lea.vmem %s0, %s171
      $region32: #{bottleneck_forward.4} parent=27 // pred_fallthru
        _
    $region28: #{bottleneck_forward.4} parent=5 // pred_fallthru
      _
    %p173 = scmp.le.s32.totalorder 1, %s10
    %p174 = scmp.lt.s32.totalorder %s10, 5
    %p175 = pnand %p173, %p174
    %p176 = pneg %p175
    // Predicated region
    $region33: #{bottleneck_forward.4} parent=5 // pred_check
      _
    $region34: #{bottleneck_forward.4} parent=5 // pred_check_branch
      %178 = sbr.rel (%p175) target = $region36
    $region35: #{bottleneck_forward.4} parent=5 // pred_region
      %s179 = ssub.s32 %s10, 1
      %p180 = scmp.lt.s32.totalorder %s20, 1
      %s181 = scalar_select %p180, %s20, 1
      %s182 = smul.addr %s181, 72
      %s183 = smul.addr %s182, 4
      %s184 = scalar_lea.vmem %s0, %s183
      %p185 = pneg %p48
      %p186 = pneg %p45
      %p187 = pneg %p69
      %p188 = pneg %p66
      %p189 = pneg %p90
      %p190 = pneg %p87
      %p191 = pneg %p111
      %p192 = pneg %p108
      %p193 = pneg %p137
      %p194 = pneg %p134
      %p195 = scmp.lt.s32.totalorder %s20, 1
      %s196 = scalar_select %p195, %s20, 1
      %s197 = smul.addr %s196, 8
      %s198 = smul.addr %s197, 4
      %s199 = scalar_lea.vmem %s4, %s198
      %p200 = scmp.lt.s32.totalorder %s20, 1
      %s201 = scalar_select %p200, %s20, 1
      %s202 = smul.addr %s201, 72
      %s203 = smul.addr %s202, 4
      %s204 = scalar_lea.vmem %s0, %s203
      %p205 = scmp.lt.s32.totalorder %s20, 1
      %s206 = scalar_select %p205, %s20, 1
      %s207 = smul.addr %s206, 8
      %s208 = smul.addr %s207, 4
      %s209 = scalar_lea.vmem %s4, %s208
      %v211 = vld [vmem:[%s204] sm:$0xf]
      %v212 = vld [vmem:[%s1] sm:$0xf]
      %v213 = vld [vmem:[%s1 + $0x4] sm:$0xf]
      %v214 = vld [vmem:[%s1 + $0x8] sm:$0xf]
      %v215 = vld [vmem:[%s1 + $0xc] sm:$0xf]
      %v216 = vld [vmem:[%s1 + $0x10] sm:$0xf]
      %v217 = vld [vmem:[%s1 + $0x14] sm:$0xf]
      %v218 = vld [vmem:[%s1 + $0x18] sm:$0xf]
      %v219 = vld [vmem:[%s1 + $0x1c] sm:$0xf]
      %v220 = vld [vmem:[%s1 + $0x20] sm:$0xf]
      %v221 = vld [vmem:[%s1 + $0x24] sm:$0xf]
      %v222 = vld [vmem:[%s1 + $0x28] sm:$0xf]
      %v223 = vld [vmem:[%s1 + $0x2c] sm:$0xf]
      %v224 = vld [vmem:[%s1 + $0x30] sm:$0xf]
      %v225 = vld [vmem:[%s1 + $0x34] sm:$0xf]
      %v226 = vld [vmem:[%s1 + $0x38] sm:$0xf]
      %v227 = vld [vmem:[%s1 + $0x3c] sm:$0xf]
      %s228 = scalar_lea.vmem %s204, 72
      %v229 = vld [vmem:[%s228] sm:$0xf]
      %s230 = scalar_lea.vmem %s1, 64
      %v231 = vld [vmem:[%s230] sm:$0xf]
      %v232 = vld [vmem:[%s230 + $0x4] sm:$0xf]
      %v233 = vld [vmem:[%s230 + $0x8] sm:$0xf]
      %v234 = vld [vmem:[%s230 + $0xc] sm:$0xf]
      %v235 = vld [vmem:[%s230 + $0x10] sm:$0xf]
      %v236 = vld [vmem:[%s230 + $0x14] sm:$0xf]
      %v237 = vld [vmem:[%s230 + $0x18] sm:$0xf]
      %v238 = vld [vmem:[%s230 + $0x1c] sm:$0xf]
      %v239 = vld [vmem:[%s230 + $0x20] sm:$0xf]
      %v240 = vld [vmem:[%s230 + $0x24] sm:$0xf]
      %v241 = vld [vmem:[%s230 + $0x28] sm:$0xf]
      %v242 = vld [vmem:[%s230 + $0x2c] sm:$0xf]
      %v243 = vld [vmem:[%s230 + $0x30] sm:$0xf]
      %v244 = vld [vmem:[%s230 + $0x34] sm:$0xf]
      %v245 = vld [vmem:[%s230 + $0x38] sm:$0xf]
      %v246 = vld [vmem:[%s230 + $0x3c] sm:$0xf]
      %v263 = vunpack.c.l.b16 %v231
      %v264 = vunpack.c.l.b16 %v232
      %v265 = vunpack.c.l.b16 %v233
      %v266 = vunpack.c.l.b16 %v234
      %v267 = vunpack.c.l.b16 %v235
      %v268 = vunpack.c.l.b16 %v236
      %v269 = vunpack.c.l.b16 %v237
      %v270 = vunpack.c.l.b16 %v238
      %v271 = vunpack.c.l.b16 %v239
      %v272 = vunpack.c.l.b16 %v240
      %v273 = vunpack.c.l.b16 %v241
      %v274 = vunpack.c.l.b16 %v242
      %v275 = vunpack.c.l.b16 %v243
      %v276 = vunpack.c.l.b16 %v244
      %v277 = vunpack.c.l.b16 %v245
      %v278 = vunpack.c.l.b16 %v246
      %v279 = vpack.c.b16 %v264, %v263
      %v280 = vpack.c.b16 %v266, %v265
      %v281 = vpack.c.b16 %v268, %v267
      %v282 = vpack.c.b16 %v270, %v269
      %v283 = vpack.c.b16 %v272, %v271
      %v284 = vpack.c.b16 %v274, %v273
      %v285 = vpack.c.b16 %v276, %v275
      %v286 = vpack.c.b16 %v278, %v277
      %295 = vmatprep.subr.bf16.mxu0 0
      %296 = vmatpush1.bf16.msra.mxu0 %v286
      %297 = vmatprep.subr.bf16.mxu0 0
      %298 = vmatpush1.bf16.msra.mxu0 %v285
      %299 = vmatprep.subr.bf16.mxu0 0
      %300 = vmatpush1.bf16.msra.mxu0 %v284
      %301 = vmatprep.subr.bf16.mxu0 0
      %302 = vmatpush1.bf16.msra.mxu0 %v283
      %303 = vmatprep.subr.bf16.mxu0 0
      %304 = vmatpush1.bf16.msra.mxu0 %v282
      %305 = vmatprep.subr.bf16.mxu0 0
      %306 = vmatpush1.bf16.msra.mxu0 %v281
      %307 = vmatprep.subr.bf16.mxu0 0
      %308 = vmatpush1.bf16.msra.mxu0 %v280
      %309 = vmatprep.subr.bf16.mxu0 0
      %310 = vmatpush1.bf16.msra.mxu0 %v279
      %311 = vmatprep.subr.bf16.mxu0 0
      %312 = vmatpush2.bf16.msra.mxu0 0
      %313 = vmatprep.subr.bf16.mxu0 0
      %314 = vmatpush2.bf16.msra.mxu0 0
      %315 = vmatprep.subr.bf16.mxu0 0
      %316 = vmatpush2.bf16.msra.mxu0 0
      %317 = vmatprep.subr.bf16.mxu0 0
      %318 = vmatpush2.bf16.msra.mxu0 0
      %319 = vmatprep.subr.bf16.mxu0 0
      %320 = vmatpush2.bf16.msra.mxu0 0
      %321 = vmatprep.subr.bf16.mxu0 0
      %322 = vmatpush2.bf16.msra.mxu0 0
      %323 = vmatprep.subr.bf16.mxu0 0
      %324 = vmatpush2.bf16.msra.mxu0 0
      %325 = vmatprep.subr.bf16.mxu0 0
      %326 = vmatpush2.bf16.msra.mxu0 0
      %327 = vmatprep.mubr.bf16.mxu0 0
      %328 = vmatmul.mubr.bf16.gmra.mxu0 %v229
      %v329 = vpop.f32.mrf.mxu0
      %v330 = vadd.f32 0.0, %v329
      %v331 = vpop.f32.mrf.mxu0
      %v332 = vpop.f32.mrf.mxu0
      %v333 = vpop.f32.mrf.mxu0
      %334 = vdwg.mxu0
      %v351 = vunpack.c.l.b16 %v212
      %v352 = vunpack.c.l.b16 %v213
      %v353 = vunpack.c.l.b16 %v214
      %v354 = vunpack.c.l.b16 %v215
      %v355 = vunpack.c.l.b16 %v216
      %v356 = vunpack.c.l.b16 %v217
      %v357 = vunpack.c.l.b16 %v218
      %v358 = vunpack.c.l.b16 %v219
      %v359 = vunpack.c.l.b16 %v220
      %v360 = vunpack.c.l.b16 %v221
      %v361 = vunpack.c.l.b16 %v222
      %v362 = vunpack.c.l.b16 %v223
      %v363 = vunpack.c.l.b16 %v224
      %v364 = vunpack.c.l.b16 %v225
      %v365 = vunpack.c.l.b16 %v226
      %v366 = vunpack.c.l.b16 %v227
      %v367 = vpack.c.b16 %v352, %v351
      %v368 = vpack.c.b16 %v354, %v353
      %v369 = vpack.c.b16 %v356, %v355
      %v370 = vpack.c.b16 %v358, %v357
      %v371 = vpack.c.b16 %v360, %v359
      %v372 = vpack.c.b16 %v362, %v361
      %v373 = vpack.c.b16 %v364, %v363
      %v374 = vpack.c.b16 %v366, %v365
      %383 = vmatprep.subr.bf16.mxu0 0
      %384 = vmatpush1.bf16.msra.mxu0 %v374
      %385 = vmatprep.subr.bf16.mxu0 0
      %386 = vmatpush1.bf16.msra.mxu0 %v373
      %387 = vmatprep.subr.bf16.mxu0 0
      %388 = vmatpush1.bf16.msra.mxu0 %v372
      %389 = vmatprep.subr.bf16.mxu0 0
      %390 = vmatpush1.bf16.msra.mxu0 %v371
      %391 = vmatprep.subr.bf16.mxu0 0
      %392 = vmatpush1.bf16.msra.mxu0 %v370
      %393 = vmatprep.subr.bf16.mxu0 0
      %394 = vmatpush1.bf16.msra.mxu0 %v369
      %395 = vmatprep.subr.bf16.mxu0 0
      %396 = vmatpush1.bf16.msra.mxu0 %v368
      %397 = vmatprep.subr.bf16.mxu0 0
      %398 = vmatpush1.bf16.msra.mxu0 %v367
      %399 = vmatprep.subr.bf16.mxu0 0
      %400 = vmatpush2.bf16.msra.mxu0 0
      %401 = vmatprep.subr.bf16.mxu0 0
      %402 = vmatpush2.bf16.msra.mxu0 0
      %403 = vmatprep.subr.bf16.mxu0 0
      %404 = vmatpush2.bf16.msra.mxu0 0
      %405 = vmatprep.subr.bf16.mxu0 0
      %406 = vmatpush2.bf16.msra.mxu0 0
      %407 = vmatprep.subr.bf16.mxu0 0
      %408 = vmatpush2.bf16.msra.mxu0 0
      %409 = vmatprep.subr.bf16.mxu0 0
      %410 = vmatpush2.bf16.msra.mxu0 0
      %411 = vmatprep.subr.bf16.mxu0 0
      %412 = vmatpush2.bf16.msra.mxu0 0
      %413 = vmatprep.subr.bf16.mxu0 0
      %414 = vmatpush2.bf16.msra.mxu0 0
      %415 = vmatprep.mubr.bf16.mxu0 0
      %416 = vmatmul.mubr.bf16.gmra.mxu0 %v211
      %v417 = vpop.f32.mrf.mxu0
      %v418 = vadd.f32 %v330, %v417
      %v419 = vpop.f32.mrf.mxu0
      %v420 = vpop.f32.mrf.mxu0
      %v421 = vpop.f32.mrf.mxu0
      %422 = vdwg.mxu0
      %v423 = vld [vmem:[%s204] sm:$0xf]
      %v424 = vld [vmem:[%s204 + $0x4] sm:$0x1]
      %s425 = scalar_lea.vmem %s1, 128
      %v426 = vld [vmem:[%s425] sm:$0xf]
      %v427 = vld [vmem:[%s425 + $0x4] sm:$0xf]
      %v428 = vld [vmem:[%s425 + $0x8] sm:$0xf]
      %v429 = vld [vmem:[%s425 + $0xc] sm:$0xf]
      %v430 = vld [vmem:[%s425 + $0x10] sm:$0xf]
      %v431 = vld [vmem:[%s425 + $0x14] sm:$0xf]
      %v432 = vld [vmem:[%s425 + $0x18] sm:$0xf]
      %v433 = vld [vmem:[%s425 + $0x1c] sm:$0xf]
      %v434 = vld [vmem:[%s425 + $0x20] sm:$0xf]
      %v435 = vld [vmem:[%s425 + $0x24] sm:$0xf]
      %v436 = vld [vmem:[%s425 + $0x28] sm:$0xf]
      %v437 = vld [vmem:[%s425 + $0x2c] sm:$0xf]
      %v438 = vld [vmem:[%s425 + $0x30] sm:$0xf]
      %v439 = vld [vmem:[%s425 + $0x34] sm:$0xf]
      %v440 = vld [vmem:[%s425 + $0x38] sm:$0xf]
      %v441 = vld [vmem:[%s425 + $0x3c] sm:$0xf]
      %v444 = vunpack.c.l.b16 %v423
      %v445 = vunpack.c.l.b16 %v424
      %v446 = vpack.c.b16 %v445, %v444
      %v448 = vshrl.u32 %v446, 16
      %v450 = vshll.u32 %v446, 16
      %v452 = vrot.slane %v450, 1
      %v453 = vor.u32 %v448, %v452
      %v471 = vunpack.c.l.b16 %v426
      %v472 = vunpack.c.l.b16 %v427
      %v473 = vunpack.c.l.b16 %v428
      %v474 = vunpack.c.l.b16 %v429
      %v475 = vunpack.c.l.b16 %v430
      %v476 = vunpack.c.l.b16 %v431
      %v477 = vunpack.c.l.b16 %v432
      %v478 = vunpack.c.l.b16 %v433
      %v479 = vunpack.c.l.b16 %v434
      %v480 = vunpack.c.l.b16 %v435
      %v481 = vunpack.c.l.b16 %v436
      %v482 = vunpack.c.l.b16 %v437
      %v483 = vunpack.c.l.b16 %v438
      %v484 = vunpack.c.l.b16 %v439
      %v485 = vunpack.c.l.b16 %v440
      %v486 = vunpack.c.l.b16 %v441
      %v487 = vpack.c.b16 %v472, %v471
      %v488 = vpack.c.b16 %v474, %v473
      %v489 = vpack.c.b16 %v476, %v475
      %v490 = vpack.c.b16 %v478, %v477
      %v491 = vpack.c.b16 %v480, %v479
      %v492 = vpack.c.b16 %v482, %v481
      %v493 = vpack.c.b16 %v484, %v483
      %v494 = vpack.c.b16 %v486, %v485
      %503 = vmatprep.subr.bf16.mxu0 0
      %504 = vmatpush1.bf16.msra.mxu0 %v494
      %505 = vmatprep.subr.bf16.mxu0 0
      %506 = vmatpush1.bf16.msra.mxu0 %v493
      %507 = vmatprep.subr.bf16.mxu0 0
      %508 = vmatpush1.bf16.msra.mxu0 %v492
      %509 = vmatprep.subr.bf16.mxu0 0
      %510 = vmatpush1.bf16.msra.mxu0 %v491
      %511 = vmatprep.subr.bf16.mxu0 0
      %512 = vmatpush1.bf16.msra.mxu0 %v490
      %513 = vmatprep.subr.bf16.mxu0 0
      %514 = vmatpush1.bf16.msra.mxu0 %v489
      %515 = vmatprep.subr.bf16.mxu0 0
      %516 = vmatpush1.bf16.msra.mxu0 %v488
      %517 = vmatprep.subr.bf16.mxu0 0
      %518 = vmatpush1.bf16.msra.mxu0 %v487
      %519 = vmatprep.subr.bf16.mxu0 0
      %520 = vmatpush2.bf16.msra.mxu0 0
      %521 = vmatprep.subr.bf16.mxu0 0
      %522 = vmatpush2.bf16.msra.mxu0 0
      %523 = vmatprep.subr.bf16.mxu0 0
      %524 = vmatpush2.bf16.msra.mxu0 0
      %525 = vmatprep.subr.bf16.mxu0 0
      %526 = vmatpush2.bf16.msra.mxu0 0
      %527 = vmatprep.subr.bf16.mxu0 0
      %528 = vmatpush2.bf16.msra.mxu0 0
      %529 = vmatprep.subr.bf16.mxu0 0
      %530 = vmatpush2.bf16.msra.mxu0 0
      %531 = vmatprep.subr.bf16.mxu0 0
      %532 = vmatpush2.bf16.msra.mxu0 0
      %533 = vmatprep.subr.bf16.mxu0 0
      %534 = vmatpush2.bf16.msra.mxu0 0
      %535 = vmatprep.mubr.bf16.mxu0 0
      %536 = vmatmul.mubr.bf16.gmra.mxu0 %v453
      %v537 = vpop.f32.mrf.mxu0
      %v538 = vadd.f32 0.0, %v537
      %v539 = vpop.f32.mrf.mxu0
      %v540 = vpop.f32.mrf.mxu0
      %v541 = vpop.f32.mrf.mxu0
      %542 = vdwg.mxu0
      %v543 = vadd.f32 %v418, %v538
      %s544 = scalar_lea.vmem %s204, 144
      %v545 = vld [vmem:[%s544] sm:$0xf]
      %s546 = scalar_lea.vmem %s1, 192
      %v547 = vld [vmem:[%s546] sm:$0xf]
      %v548 = vld [vmem:[%s546 + $0x4] sm:$0xf]
      %v549 = vld [vmem:[%s546 + $0x8] sm:$0xf]
      %v550 = vld [vmem:[%s546 + $0xc] sm:$0xf]
      %v551 = vld [vmem:[%s546 + $0x10] sm:$0xf]
      %v552 = vld [vmem:[%s546 + $0x14] sm:$0xf]
      %v553 = vld [vmem:[%s546 + $0x18] sm:$0xf]
      %v554 = vld [vmem:[%s546 + $0x1c] sm:$0xf]
      %v555 = vld [vmem:[%s546 + $0x20] sm:$0xf]
      %v556 = vld [vmem:[%s546 + $0x24] sm:$0xf]
      %v557 = vld [vmem:[%s546 + $0x28] sm:$0xf]
      %v558 = vld [vmem:[%s546 + $0x2c] sm:$0xf]
      %v559 = vld [vmem:[%s546 + $0x30] sm:$0xf]
      %v560 = vld [vmem:[%s546 + $0x34] sm:$0xf]
      %v561 = vld [vmem:[%s546 + $0x38] sm:$0xf]
      %v562 = vld [vmem:[%s546 + $0x3c] sm:$0xf]
      %v579 = vunpack.c.l.b16 %v547
      %v580 = vunpack.c.l.b16 %v548
      %v581 = vunpack.c.l.b16 %v549
      %v582 = vunpack.c.l.b16 %v550
      %v583 = vunpack.c.l.b16 %v551
      %v584 = vunpack.c.l.b16 %v552
      %v585 = vunpack.c.l.b16 %v553
      %v586 = vunpack.c.l.b16 %v554
      %v587 = vunpack.c.l.b16 %v555
      %v588 = vunpack.c.l.b16 %v556
      %v589 = vunpack.c.l.b16 %v557
      %v590 = vunpack.c.l.b16 %v558
      %v591 = vunpack.c.l.b16 %v559
      %v592 = vunpack.c.l.b16 %v560
      %v593 = vunpack.c.l.b16 %v561
      %v594 = vunpack.c.l.b16 %v562
      %v595 = vpack.c.b16 %v580, %v579
      %v596 = vpack.c.b16 %v582, %v581
      %v597 = vpack.c.b16 %v584, %v583
      %v598 = vpack.c.b16 %v586, %v585
      %v599 = vpack.c.b16 %v588, %v587
      %v600 = vpack.c.b16 %v590, %v589
      %v601 = vpack.c.b16 %v592, %v591
      %v602 = vpack.c.b16 %v594, %v593
      %611 = vmatprep.subr.bf16.mxu0 0
      %612 = vmatpush1.bf16.msra.mxu0 %v602
      %613 = vmatprep.subr.bf16.mxu0 0
      %614 = vmatpush1.bf16.msra.mxu0 %v601
      %615 = vmatprep.subr.bf16.mxu0 0
      %616 = vmatpush1.bf16.msra.mxu0 %v600
      %617 = vmatprep.subr.bf16.mxu0 0
      %618 = vmatpush1.bf16.msra.mxu0 %v599
      %619 = vmatprep.subr.bf16.mxu0 0
      %620 = vmatpush1.bf16.msra.mxu0 %v598
      %621 = vmatprep.subr.bf16.mxu0 0
      %622 = vmatpush1.bf16.msra.mxu0 %v597
      %623 = vmatprep.subr.bf16.mxu0 0
      %624 = vmatpush1.bf16.msra.mxu0 %v596
      %625 = vmatprep.subr.bf16.mxu0 0
      %626 = vmatpush1.bf16.msra.mxu0 %v595
      %627 = vmatprep.subr.bf16.mxu0 0
      %628 = vmatpush2.bf16.msra.mxu0 0
      %629 = vmatprep.subr.bf16.mxu0 0
      %630 = vmatpush2.bf16.msra.mxu0 0
      %631 = vmatprep.subr.bf16.mxu0 0
      %632 = vmatpush2.bf16.msra.mxu0 0
      %633 = vmatprep.subr.bf16.mxu0 0
      %634 = vmatpush2.bf16.msra.mxu0 0
      %635 = vmatprep.subr.bf16.mxu0 0
      %636 = vmatpush2.bf16.msra.mxu0 0
      %637 = vmatprep.subr.bf16.mxu0 0
      %638 = vmatpush2.bf16.msra.mxu0 0
      %639 = vmatprep.subr.bf16.mxu0 0
      %640 = vmatpush2.bf16.msra.mxu0 0
      %641 = vmatprep.subr.bf16.mxu0 0
      %642 = vmatpush2.bf16.msra.mxu0 0
      %643 = vmatprep.mubr.bf16.mxu0 0
      %644 = vmatmul.mubr.bf16.gmra.mxu0 %v545
      %v645 = vpop.f32.mrf.mxu0
      %v646 = vadd.f32 0.0, %v645
      %v647 = vpop.f32.mrf.mxu0
      %v648 = vpop.f32.mrf.mxu0
      %v649 = vpop.f32.mrf.mxu0
      %650 = vdwg.mxu0
      %v651 = vadd.f32 %v543, %v646
      %s652 = scalar_lea.vmem %s204, 216
      %v653 = vld [vmem:[%s652] sm:$0xf]
      %s654 = scalar_lea.vmem %s1, 256
      %v655 = vld [vmem:[%s654] sm:$0xf]
      %v656 = vld [vmem:[%s654 + $0x4] sm:$0xf]
      %v657 = vld [vmem:[%s654 + $0x8] sm:$0xf]
      %v658 = vld [vmem:[%s654 + $0xc] sm:$0xf]
      %v659 = vld [vmem:[%s654 + $0x10] sm:$0xf]
      %v660 = vld [vmem:[%s654 + $0x14] sm:$0xf]
      %v661 = vld [vmem:[%s654 + $0x18] sm:$0xf]
      %v662 = vld [vmem:[%s654 + $0x1c] sm:$0xf]
      %v663 = vld [vmem:[%s654 + $0x20] sm:$0xf]
      %v664 = vld [vmem:[%s654 + $0x24] sm:$0xf]
      %v665 = vld [vmem:[%s654 + $0x28] sm:$0xf]
      %v666 = vld [vmem:[%s654 + $0x2c] sm:$0xf]
      %v667 = vld [vmem:[%s654 + $0x30] sm:$0xf]
      %v668 = vld [vmem:[%s654 + $0x34] sm:$0xf]
      %v669 = vld [vmem:[%s654 + $0x38] sm:$0xf]
      %v670 = vld [vmem:[%s654 + $0x3c] sm:$0xf]
      %v687 = vunpack.c.l.b16 %v655
      %v688 = vunpack.c.l.b16 %v656
      %v689 = vunpack.c.l.b16 %v657
      %v690 = vunpack.c.l.b16 %v658
      %v691 = vunpack.c.l.b16 %v659
      %v692 = vunpack.c.l.b16 %v660
      %v693 = vunpack.c.l.b16 %v661
      %v694 = vunpack.c.l.b16 %v662
      %v695 = vunpack.c.l.b16 %v663
      %v696 = vunpack.c.l.b16 %v664
      %v697 = vunpack.c.l.b16 %v665
      %v698 = vunpack.c.l.b16 %v666
      %v699 = vunpack.c.l.b16 %v667
      %v700 = vunpack.c.l.b16 %v668
      %v701 = vunpack.c.l.b16 %v669
      %v702 = vunpack.c.l.b16 %v670
      %v703 = vpack.c.b16 %v688, %v687
      %v704 = vpack.c.b16 %v690, %v689
      %v705 = vpack.c.b16 %v692, %v691
      %v706 = vpack.c.b16 %v694, %v693
      %v707 = vpack.c.b16 %v696, %v695
      %v708 = vpack.c.b16 %v698, %v697
      %v709 = vpack.c.b16 %v700, %v699
      %v710 = vpack.c.b16 %v702, %v701
      %719 = vmatprep.subr.bf16.mxu0 0
      %720 = vmatpush1.bf16.msra.mxu0 %v710
      %721 = vmatprep.subr.bf16.mxu0 0
      %722 = vmatpush1.bf16.msra.mxu0 %v709
      %723 = vmatprep.subr.bf16.mxu0 0
      %724 = vmatpush1.bf16.msra.mxu0 %v708
      %725 = vmatprep.subr.bf16.mxu0 0
      %726 = vmatpush1.bf16.msra.mxu0 %v707
      %727 = vmatprep.subr.bf16.mxu0 0
      %728 = vmatpush1.bf16.msra.mxu0 %v706
      %729 = vmatprep.subr.bf16.mxu0 0
      %730 = vmatpush1.bf16.msra.mxu0 %v705
      %731 = vmatprep.subr.bf16.mxu0 0
      %732 = vmatpush1.bf16.msra.mxu0 %v704
      %733 = vmatprep.subr.bf16.mxu0 0
      %734 = vmatpush1.bf16.msra.mxu0 %v703
      %735 = vmatprep.subr.bf16.mxu0 0
      %736 = vmatpush2.bf16.msra.mxu0 0
      %737 = vmatprep.subr.bf16.mxu0 0
      %738 = vmatpush2.bf16.msra.mxu0 0
      %739 = vmatprep.subr.bf16.mxu0 0
      %740 = vmatpush2.bf16.msra.mxu0 0
      %741 = vmatprep.subr.bf16.mxu0 0
      %742 = vmatpush2.bf16.msra.mxu0 0
      %743 = vmatprep.subr.bf16.mxu0 0
      %744 = vmatpush2.bf16.msra.mxu0 0
      %745 = vmatprep.subr.bf16.mxu0 0
      %746 = vmatpush2.bf16.msra.mxu0 0
      %747 = vmatprep.subr.bf16.mxu0 0
      %748 = vmatpush2.bf16.msra.mxu0 0
      %749 = vmatprep.subr.bf16.mxu0 0
      %750 = vmatpush2.bf16.msra.mxu0 0
      %751 = vmatprep.mubr.bf16.mxu0 0
      %752 = vmatmul.mubr.bf16.gmra.mxu0 %v653
      %v753 = vpop.f32.mrf.mxu0
      %v754 = vadd.f32 0.0, %v753
      %v755 = vpop.f32.mrf.mxu0
      %v756 = vpop.f32.mrf.mxu0
      %v757 = vpop.f32.mrf.mxu0
      %758 = vdwg.mxu0
      %v759 = vadd.f32 %v651, %v754
      %v760 = vld [vmem:[%s544] sm:$0xf]
      %v761 = vld [vmem:[%s544 + $0x4] sm:$0x1]
      %s762 = scalar_lea.vmem %s1, 320
      %v763 = vld [vmem:[%s762] sm:$0xf]
      %v764 = vld [vmem:[%s762 + $0x4] sm:$0xf]
      %v765 = vld [vmem:[%s762 + $0x8] sm:$0xf]
      %v766 = vld [vmem:[%s762 + $0xc] sm:$0xf]
      %v767 = vld [vmem:[%s762 + $0x10] sm:$0xf]
      %v768 = vld [vmem:[%s762 + $0x14] sm:$0xf]
      %v769 = vld [vmem:[%s762 + $0x18] sm:$0xf]
      %v770 = vld [vmem:[%s762 + $0x1c] sm:$0xf]
      %v771 = vld [vmem:[%s762 + $0x20] sm:$0xf]
      %v772 = vld [vmem:[%s762 + $0x24] sm:$0xf]
      %v773 = vld [vmem:[%s762 + $0x28] sm:$0xf]
      %v774 = vld [vmem:[%s762 + $0x2c] sm:$0xf]
      %v775 = vld [vmem:[%s762 + $0x30] sm:$0xf]
      %v776 = vld [vmem:[%s762 + $0x34] sm:$0xf]
      %v777 = vld [vmem:[%s762 + $0x38] sm:$0xf]
      %v778 = vld [vmem:[%s762 + $0x3c] sm:$0xf]
      %v781 = vunpack.c.l.b16 %v760
      %v782 = vunpack.c.l.b16 %v761
      %v783 = vpack.c.b16 %v782, %v781
      %v785 = vshrl.u32 %v783, 16
      %v787 = vshll.u32 %v783, 16
      %v789 = vrot.slane %v787, 1
      %v790 = vor.u32 %v785, %v789
      %v808 = vunpack.c.l.b16 %v763
      %v809 = vunpack.c.l.b16 %v764
      %v810 = vunpack.c.l.b16 %v765
      %v811 = vunpack.c.l.b16 %v766
      %v812 = vunpack.c.l.b16 %v767
      %v813 = vunpack.c.l.b16 %v768
      %v814 = vunpack.c.l.b16 %v769
      %v815 = vunpack.c.l.b16 %v770
      %v816 = vunpack.c.l.b16 %v771
      %v817 = vunpack.c.l.b16 %v772
      %v818 = vunpack.c.l.b16 %v773
      %v819 = vunpack.c.l.b16 %v774
      %v820 = vunpack.c.l.b16 %v775
      %v821 = vunpack.c.l.b16 %v776
      %v822 = vunpack.c.l.b16 %v777
      %v823 = vunpack.c.l.b16 %v778
      %v824 = vpack.c.b16 %v809, %v808
      %v825 = vpack.c.b16 %v811, %v810
      %v826 = vpack.c.b16 %v813, %v812
      %v827 = vpack.c.b16 %v815, %v814
      %v828 = vpack.c.b16 %v817, %v816
      %v829 = vpack.c.b16 %v819, %v818
      %v830 = vpack.c.b16 %v821, %v820
      %v831 = vpack.c.b16 %v823, %v822
      %840 = vmatprep.subr.bf16.mxu0 0
      %841 = vmatpush1.bf16.msra.mxu0 %v831
      %842 = vmatprep.subr.bf16.mxu0 0
      %843 = vmatpush1.bf16.msra.mxu0 %v830
      %844 = vmatprep.subr.bf16.mxu0 0
      %845 = vmatpush1.bf16.msra.mxu0 %v829
      %846 = vmatprep.subr.bf16.mxu0 0
      %847 = vmatpush1.bf16.msra.mxu0 %v828
      %848 = vmatprep.subr.bf16.mxu0 0
      %849 = vmatpush1.bf16.msra.mxu0 %v827
      %850 = vmatprep.subr.bf16.mxu0 0
      %851 = vmatpush1.bf16.msra.mxu0 %v826
      %852 = vmatprep.subr.bf16.mxu0 0
      %853 = vmatpush1.bf16.msra.mxu0 %v825
      %854 = vmatprep.subr.bf16.mxu0 0
      %855 = vmatpush1.bf16.msra.mxu0 %v824
      %856 = vmatprep.subr.bf16.mxu0 0
      %857 = vmatpush2.bf16.msra.mxu0 0
      %858 = vmatprep.subr.bf16.mxu0 0
      %859 = vmatpush2.bf16.msra.mxu0 0
      %860 = vmatprep.subr.bf16.mxu0 0
      %861 = vmatpush2.bf16.msra.mxu0 0
      %862 = vmatprep.subr.bf16.mxu0 0
      %863 = vmatpush2.bf16.msra.mxu0 0
      %864 = vmatprep.subr.bf16.mxu0 0
      %865 = vmatpush2.bf16.msra.mxu0 0
      %866 = vmatprep.subr.bf16.mxu0 0
      %867 = vmatpush2.bf16.msra.mxu0 0
      %868 = vmatprep.subr.bf16.mxu0 0
      %869 = vmatpush2.bf16.msra.mxu0 0
      %870 = vmatprep.subr.bf16.mxu0 0
      %871 = vmatpush2.bf16.msra.mxu0 0
      %872 = vmatprep.mubr.bf16.mxu0 0
      %873 = vmatmul.mubr.bf16.gmra.mxu0 %v790
      %v874 = vpop.f32.mrf.mxu0
      %v875 = vadd.f32 0.0, %v874
      %v876 = vpop.f32.mrf.mxu0
      %v877 = vpop.f32.mrf.mxu0
      %v878 = vpop.f32.mrf.mxu0
      %879 = vdwg.mxu0
      %v880 = vadd.f32 %v759, %v875
      %s881 = scalar_lea.vmem %s204, 8
      %v882 = vld [vmem:[%s881] sm:$0xf]
      %s883 = scalar_lea.vmem %s1, 384
      %v884 = vld [vmem:[%s883] sm:$0xf]
      %v885 = vld [vmem:[%s883 + $0x4] sm:$0xf]
      %v886 = vld [vmem:[%s883 + $0x8] sm:$0xf]
      %v887 = vld [vmem:[%s883 + $0xc] sm:$0xf]
      %v888 = vld [vmem:[%s883 + $0x10] sm:$0xf]
      %v889 = vld [vmem:[%s883 + $0x14] sm:$0xf]
      %v890 = vld [vmem:[%s883 + $0x18] sm:$0xf]
      %v891 = vld [vmem:[%s883 + $0x1c] sm:$0xf]
      %v892 = vld [vmem:[%s883 + $0x20] sm:$0xf]
      %v893 = vld [vmem:[%s883 + $0x24] sm:$0xf]
      %v894 = vld [vmem:[%s883 + $0x28] sm:$0xf]
      %v895 = vld [vmem:[%s883 + $0x2c] sm:$0xf]
      %v896 = vld [vmem:[%s883 + $0x30] sm:$0xf]
      %v897 = vld [vmem:[%s883 + $0x34] sm:$0xf]
      %v898 = vld [vmem:[%s883 + $0x38] sm:$0xf]
      %v899 = vld [vmem:[%s883 + $0x3c] sm:$0xf]
      %v916 = vunpack.c.l.b16 %v884
      %v917 = vunpack.c.l.b16 %v885
      %v918 = vunpack.c.l.b16 %v886
      %v919 = vunpack.c.l.b16 %v887
      %v920 = vunpack.c.l.b16 %v888
      %v921 = vunpack.c.l.b16 %v889
      %v922 = vunpack.c.l.b16 %v890
      %v923 = vunpack.c.l.b16 %v891
      %v924 = vunpack.c.l.b16 %v892
      %v925 = vunpack.c.l.b16 %v893
      %v926 = vunpack.c.l.b16 %v894
      %v927 = vunpack.c.l.b16 %v895
      %v928 = vunpack.c.l.b16 %v896
      %v929 = vunpack.c.l.b16 %v897
      %v930 = vunpack.c.l.b16 %v898
      %v931 = vunpack.c.l.b16 %v899
      %v932 = vpack.c.b16 %v917, %v916
      %v933 = vpack.c.b16 %v919, %v918
      %v934 = vpack.c.b16 %v921, %v920
      %v935 = vpack.c.b16 %v923, %v922
      %v936 = vpack.c.b16 %v925, %v924
      %v937 = vpack.c.b16 %v927, %v926
      %v938 = vpack.c.b16 %v929, %v928
      %v939 = vpack.c.b16 %v931, %v930
      %948 = vmatprep.subr.bf16.mxu0 0
      %949 = vmatpush1.bf16.msra.mxu0 %v939
      %950 = vmatprep.subr.bf16.mxu0 0
      %951 = vmatpush1.bf16.msra.mxu0 %v938
      %952 = vmatprep.subr.bf16.mxu0 0
      %953 = vmatpush1.bf16.msra.mxu0 %v937
      %954 = vmatprep.subr.bf16.mxu0 0
      %955 = vmatpush1.bf16.msra.mxu0 %v936
      %956 = vmatprep.subr.bf16.mxu0 0
      %957 = vmatpush1.bf16.msra.mxu0 %v935
      %958 = vmatprep.subr.bf16.mxu0 0
      %959 = vmatpush1.bf16.msra.mxu0 %v934
      %960 = vmatprep.subr.bf16.mxu0 0
      %961 = vmatpush1.bf16.msra.mxu0 %v933
      %962 = vmatprep.subr.bf16.mxu0 0
      %963 = vmatpush1.bf16.msra.mxu0 %v932
      %964 = vmatprep.subr.bf16.mxu0 0
      %965 = vmatpush2.bf16.msra.mxu0 0
      %966 = vmatprep.subr.bf16.mxu0 0
      %967 = vmatpush2.bf16.msra.mxu0 0
      %968 = vmatprep.subr.bf16.mxu0 0
      %969 = vmatpush2.bf16.msra.mxu0 0
      %970 = vmatprep.subr.bf16.mxu0 0
      %971 = vmatpush2.bf16.msra.mxu0 0
      %972 = vmatprep.subr.bf16.mxu0 0
      %973 = vmatpush2.bf16.msra.mxu0 0
      %974 = vmatprep.subr.bf16.mxu0 0
      %975 = vmatpush2.bf16.msra.mxu0 0
      %976 = vmatprep.subr.bf16.mxu0 0
      %977 = vmatpush2.bf16.msra.mxu0 0
      %978 = vmatprep.subr.bf16.mxu0 0
      %979 = vmatpush2.bf16.msra.mxu0 0
      %980 = vmatprep.mubr.bf16.mxu0 0
      %981 = vmatmul.mubr.bf16.gmra.mxu0 %v882
      %v982 = vpop.f32.mrf.mxu0
      %v983 = vadd.f32 0.0, %v982
      %v984 = vpop.f32.mrf.mxu0
      %v985 = vpop.f32.mrf.mxu0
      %v986 = vpop.f32.mrf.mxu0
      %987 = vdwg.mxu0
      %v988 = vadd.f32 %v880, %v983
      %s989 = scalar_lea.vmem %s204, 80
      %v990 = vld [vmem:[%s989] sm:$0xf]
      %s991 = scalar_lea.vmem %s1, 448
      %v992 = vld [vmem:[%s991] sm:$0xf]
      %v993 = vld [vmem:[%s991 + $0x4] sm:$0xf]
      %v994 = vld [vmem:[%s991 + $0x8] sm:$0xf]
      %v995 = vld [vmem:[%s991 + $0xc] sm:$0xf]
      %v996 = vld [vmem:[%s991 + $0x10] sm:$0xf]
      %v997 = vld [vmem:[%s991 + $0x14] sm:$0xf]
      %v998 = vld [vmem:[%s991 + $0x18] sm:$0xf]
      %v999 = vld [vmem:[%s991 + $0x1c] sm:$0xf]
      %v1000 = vld [vmem:[%s991 + $0x20] sm:$0xf]
      %v1001 = vld [vmem:[%s991 + $0x24] sm:$0xf]
      %v1002 = vld [vmem:[%s991 + $0x28] sm:$0xf]
      %v1003 = vld [vmem:[%s991 + $0x2c] sm:$0xf]
      %v1004 = vld [vmem:[%s991 + $0x30] sm:$0xf]
      %v1005 = vld [vmem:[%s991 + $0x34] sm:$0xf]
      %v1006 = vld [vmem:[%s991 + $0x38] sm:$0xf]
      %v1007 = vld [vmem:[%s991 + $0x3c] sm:$0xf]
      %v1024 = vunpack.c.l.b16 %v992
      %v1025 = vunpack.c.l.b16 %v993
      %v1026 = vunpack.c.l.b16 %v994
      %v1027 = vunpack.c.l.b16 %v995
      %v1028 = vunpack.c.l.b16 %v996
      %v1029 = vunpack.c.l.b16 %v997
      %v1030 = vunpack.c.l.b16 %v998
      %v1031 = vunpack.c.l.b16 %v999
      %v1032 = vunpack.c.l.b16 %v1000
      %v1033 = vunpack.c.l.b16 %v1001
      %v1034 = vunpack.c.l.b16 %v1002
      %v1035 = vunpack.c.l.b16 %v1003
      %v1036 = vunpack.c.l.b16 %v1004
      %v1037 = vunpack.c.l.b16 %v1005
      %v1038 = vunpack.c.l.b16 %v1006
      %v1039 = vunpack.c.l.b16 %v1007
      %v1040 = vpack.c.b16 %v1025, %v1024
      %v1041 = vpack.c.b16 %v1027, %v1026
      %v1042 = vpack.c.b16 %v1029, %v1028
      %v1043 = vpack.c.b16 %v1031, %v1030
      %v1044 = vpack.c.b16 %v1033, %v1032
      %v1045 = vpack.c.b16 %v1035, %v1034
      %v1046 = vpack.c.b16 %v1037, %v1036
      %v1047 = vpack.c.b16 %v1039, %v1038
      %1056 = vmatprep.subr.bf16.mxu0 0
      %1057 = vmatpush1.bf16.msra.mxu0 %v1047
      %1058 = vmatprep.subr.bf16.mxu0 0
      %1059 = vmatpush1.bf16.msra.mxu0 %v1046
      %1060 = vmatprep.subr.bf16.mxu0 0
      %1061 = vmatpush1.bf16.msra.mxu0 %v1045
      %1062 = vmatprep.subr.bf16.mxu0 0
      %1063 = vmatpush1.bf16.msra.mxu0 %v1044
      %1064 = vmatprep.subr.bf16.mxu0 0
      %1065 = vmatpush1.bf16.msra.mxu0 %v1043
      %1066 = vmatprep.subr.bf16.mxu0 0
      %1067 = vmatpush1.bf16.msra.mxu0 %v1042
      %1068 = vmatprep.subr.bf16.mxu0 0
      %1069 = vmatpush1.bf16.msra.mxu0 %v1041
      %1070 = vmatprep.subr.bf16.mxu0 0
      %1071 = vmatpush1.bf16.msra.mxu0 %v1040
      %1072 = vmatprep.subr.bf16.mxu0 0
      %1073 = vmatpush2.bf16.msra.mxu0 0
      %1074 = vmatprep.subr.bf16.mxu0 0
      %1075 = vmatpush2.bf16.msra.mxu0 0
      %1076 = vmatprep.subr.bf16.mxu0 0
      %1077 = vmatpush2.bf16.msra.mxu0 0
      %1078 = vmatprep.subr.bf16.mxu0 0
      %1079 = vmatpush2.bf16.msra.mxu0 0
      %1080 = vmatprep.subr.bf16.mxu0 0
      %1081 = vmatpush2.bf16.msra.mxu0 0
      %1082 = vmatprep.subr.bf16.mxu0 0
      %1083 = vmatpush2.bf16.msra.mxu0 0
      %1084 = vmatprep.subr.bf16.mxu0 0
      %1085 = vmatpush2.bf16.msra.mxu0 0
      %1086 = vmatprep.subr.bf16.mxu0 0
      %1087 = vmatpush2.bf16.msra.mxu0 0
      %1088 = vmatprep.mubr.bf16.mxu0 0
      %1089 = vmatmul.mubr.bf16.gmra.mxu0 %v990
      %v1090 = vpop.f32.mrf.mxu0
      %v1091 = vadd.f32 0.0, %v1090
      %v1092 = vpop.f32.mrf.mxu0
      %v1093 = vpop.f32.mrf.mxu0
      %v1094 = vpop.f32.mrf.mxu0
      %1095 = vdwg.mxu0
      %v1096 = vadd.f32 %v988, %v1091
      %v1097 = vld [vmem:[%s881] sm:$0xf]
      %v1098 = vld [vmem:[%s881 + $0x4] sm:$0x1]
      %s1099 = scalar_lea.vmem %s1, 512
      %v1100 = vld [vmem:[%s1099] sm:$0xf]
      %v1101 = vld [vmem:[%s1099 + $0x4] sm:$0xf]
      %v1102 = vld [vmem:[%s1099 + $0x8] sm:$0xf]
      %v1103 = vld [vmem:[%s1099 + $0xc] sm:$0xf]
      %v1104 = vld [vmem:[%s1099 + $0x10] sm:$0xf]
      %v1105 = vld [vmem:[%s1099 + $0x14] sm:$0xf]
      %v1106 = vld [vmem:[%s1099 + $0x18] sm:$0xf]
      %v1107 = vld [vmem:[%s1099 + $0x1c] sm:$0xf]
      %v1108 = vld [vmem:[%s1099 + $0x20] sm:$0xf]
      %v1109 = vld [vmem:[%s1099 + $0x24] sm:$0xf]
      %v1110 = vld [vmem:[%s1099 + $0x28] sm:$0xf]
      %v1111 = vld [vmem:[%s1099 + $0x2c] sm:$0xf]
      %v1112 = vld [vmem:[%s1099 + $0x30] sm:$0xf]
      %v1113 = vld [vmem:[%s1099 + $0x34] sm:$0xf]
      %v1114 = vld [vmem:[%s1099 + $0x38] sm:$0xf]
      %v1115 = vld [vmem:[%s1099 + $0x3c] sm:$0xf]
      %v1118 = vunpack.c.l.b16 %v1097
      %v1119 = vunpack.c.l.b16 %v1098
      %v1120 = vpack.c.b16 %v1119, %v1118
      %v1122 = vshrl.u32 %v1120, 16
      %v1124 = vshll.u32 %v1120, 16
      %v1126 = vrot.slane %v1124, 1
      %v1127 = vor.u32 %v1122, %v1126
      %v1145 = vunpack.c.l.b16 %v1100
      %v1146 = vunpack.c.l.b16 %v1101
      %v1147 = vunpack.c.l.b16 %v1102
      %v1148 = vunpack.c.l.b16 %v1103
      %v1149 = vunpack.c.l.b16 %v1104
      %v1150 = vunpack.c.l.b16 %v1105
      %v1151 = vunpack.c.l.b16 %v1106
      %v1152 = vunpack.c.l.b16 %v1107
      %v1153 = vunpack.c.l.b16 %v1108
      %v1154 = vunpack.c.l.b16 %v1109
      %v1155 = vunpack.c.l.b16 %v1110
      %v1156 = vunpack.c.l.b16 %v1111
      %v1157 = vunpack.c.l.b16 %v1112
      %v1158 = vunpack.c.l.b16 %v1113
      %v1159 = vunpack.c.l.b16 %v1114
      %v1160 = vunpack.c.l.b16 %v1115
      %v1161 = vpack.c.b16 %v1146, %v1145
      %v1162 = vpack.c.b16 %v1148, %v1147
      %v1163 = vpack.c.b16 %v1150, %v1149
      %v1164 = vpack.c.b16 %v1152, %v1151
      %v1165 = vpack.c.b16 %v1154, %v1153
      %v1166 = vpack.c.b16 %v1156, %v1155
      %v1167 = vpack.c.b16 %v1158, %v1157
      %v1168 = vpack.c.b16 %v1160, %v1159
      %1177 = vmatprep.subr.bf16.mxu0 0
      %1178 = vmatpush1.bf16.msra.mxu0 %v1168
      %1179 = vmatprep.subr.bf16.mxu0 0
      %1180 = vmatpush1.bf16.msra.mxu0 %v1167
      %1181 = vmatprep.subr.bf16.mxu0 0
      %1182 = vmatpush1.bf16.msra.mxu0 %v1166
      %1183 = vmatprep.subr.bf16.mxu0 0
      %1184 = vmatpush1.bf16.msra.mxu0 %v1165
      %1185 = vmatprep.subr.bf16.mxu0 0
      %1186 = vmatpush1.bf16.msra.mxu0 %v1164
      %1187 = vmatprep.subr.bf16.mxu0 0
      %1188 = vmatpush1.bf16.msra.mxu0 %v1163
      %1189 = vmatprep.subr.bf16.mxu0 0
      %1190 = vmatpush1.bf16.msra.mxu0 %v1162
      %1191 = vmatprep.subr.bf16.mxu0 0
      %1192 = vmatpush1.bf16.msra.mxu0 %v1161
      %1193 = vmatprep.subr.bf16.mxu0 0
      %1194 = vmatpush2.bf16.msra.mxu0 0
      %1195 = vmatprep.subr.bf16.mxu0 0
      %1196 = vmatpush2.bf16.msra.mxu0 0
      %1197 = vmatprep.subr.bf16.mxu0 0
      %1198 = vmatpush2.bf16.msra.mxu0 0
      %1199 = vmatprep.subr.bf16.mxu0 0
      %1200 = vmatpush2.bf16.msra.mxu0 0
      %1201 = vmatprep.subr.bf16.mxu0 0
      %1202 = vmatpush2.bf16.msra.mxu0 0
      %1203 = vmatprep.subr.bf16.mxu0 0
      %1204 = vmatpush2.bf16.msra.mxu0 0
      %1205 = vmatprep.subr.bf16.mxu0 0
      %1206 = vmatpush2.bf16.msra.mxu0 0
      %1207 = vmatprep.subr.bf16.mxu0 0
      %1208 = vmatpush2.bf16.msra.mxu0 0
      %1209 = vmatprep.mubr.bf16.mxu0 0
      %1210 = vmatmul.mubr.bf16.gmra.mxu0 %v1127
      %v1211 = vpop.f32.mrf.mxu0
      %v1212 = vadd.f32 0.0, %v1211
      %v1213 = vpop.f32.mrf.mxu0
      %v1214 = vpop.f32.mrf.mxu0
      %v1215 = vpop.f32.mrf.mxu0
      %1216 = vdwg.mxu0
      %v1217 = vadd.f32 %v1096, %v1212
      %1218 = vst [vmem:[#allocation2] sm:$0xff] %v1217
      %v1219 = vld [vmem:[%s881] sm:$0xf]
      %v1220 = vld [vmem:[%s1] sm:$0xf]
      %v1221 = vld [vmem:[%s1 + $0x4] sm:$0xf]
      %v1222 = vld [vmem:[%s1 + $0x8] sm:$0xf]
      %v1223 = vld [vmem:[%s1 + $0xc] sm:$0xf]
      %v1224 = vld [vmem:[%s1 + $0x10] sm:$0xf]
      %v1225 = vld [vmem:[%s1 + $0x14] sm:$0xf]
      %v1226 = vld [vmem:[%s1 + $0x18] sm:$0xf]
      %v1227 = vld [vmem:[%s1 + $0x1c] sm:$0xf]
      %v1228 = vld [vmem:[%s1 + $0x20] sm:$0xf]
      %v1229 = vld [vmem:[%s1 + $0x24] sm:$0xf]
      %v1230 = vld [vmem:[%s1 + $0x28] sm:$0xf]
      %v1231 = vld [vmem:[%s1 + $0x2c] sm:$0xf]
      %v1232 = vld [vmem:[%s1 + $0x30] sm:$0xf]
      %v1233 = vld [vmem:[%s1 + $0x34] sm:$0xf]
      %v1234 = vld [vmem:[%s1 + $0x38] sm:$0xf]
      %v1235 = vld [vmem:[%s1 + $0x3c] sm:$0xf]
      %v1236 = vld [vmem:[%s989] sm:$0xf]
      %v1237 = vld [vmem:[%s230] sm:$0xf]
      %v1238 = vld [vmem:[%s230 + $0x4] sm:$0xf]
      %v1239 = vld [vmem:[%s230 + $0x8] sm:$0xf]
      %v1240 = vld [vmem:[%s230 + $0xc] sm:$0xf]
      %v1241 = vld [vmem:[%s230 + $0x10] sm:$0xf]
      %v1242 = vld [vmem:[%s230 + $0x14] sm:$0xf]
      %v1243 = vld [vmem:[%s230 + $0x18] sm:$0xf]
      %v1244 = vld [vmem:[%s230 + $0x1c] sm:$0xf]
      %v1245 = vld [vmem:[%s230 + $0x20] sm:$0xf]
      %v1246 = vld [vmem:[%s230 + $0x24] sm:$0xf]
      %v1247 = vld [vmem:[%s230 + $0x28] sm:$0xf]
      %v1248 = vld [vmem:[%s230 + $0x2c] sm:$0xf]
      %v1249 = vld [vmem:[%s230 + $0x30] sm:$0xf]
      %v1250 = vld [vmem:[%s230 + $0x34] sm:$0xf]
      %v1251 = vld [vmem:[%s230 + $0x38] sm:$0xf]
      %v1252 = vld [vmem:[%s230 + $0x3c] sm:$0xf]
      %v1269 = vunpack.c.l.b16 %v1237
      %v1270 = vunpack.c.l.b16 %v1238
      %v1271 = vunpack.c.l.b16 %v1239
      %v1272 = vunpack.c.l.b16 %v1240
      %v1273 = vunpack.c.l.b16 %v1241
      %v1274 = vunpack.c.l.b16 %v1242
      %v1275 = vunpack.c.l.b16 %v1243
      %v1276 = vunpack.c.l.b16 %v1244
      %v1277 = vunpack.c.l.b16 %v1245
      %v1278 = vunpack.c.l.b16 %v1246
      %v1279 = vunpack.c.l.b16 %v1247
      %v1280 = vunpack.c.l.b16 %v1248
      %v1281 = vunpack.c.l.b16 %v1249
      %v1282 = vunpack.c.l.b16 %v1250
      %v1283 = vunpack.c.l.b16 %v1251
      %v1284 = vunpack.c.l.b16 %v1252
      %v1285 = vpack.c.b16 %v1270, %v1269
      %v1286 = vpack.c.b16 %v1272, %v1271
      %v1287 = vpack.c.b16 %v1274, %v1273
      %v1288 = vpack.c.b16 %v1276, %v1275
      %v1289 = vpack.c.b16 %v1278, %v1277
      %v1290 = vpack.c.b16 %v1280, %v1279
      %v1291 = vpack.c.b16 %v1282, %v1281
      %v1292 = vpack.c.b16 %v1284, %v1283
      %1301 = vmatprep.subr.bf16.mxu0 0
      %1302 = vmatpush1.bf16.msra.mxu0 %v1292
      %1303 = vmatprep.subr.bf16.mxu0 0
      %1304 = vmatpush1.bf16.msra.mxu0 %v1291
      %1305 = vmatprep.subr.bf16.mxu0 0
      %1306 = vmatpush1.bf16.msra.mxu0 %v1290
      %1307 = vmatprep.subr.bf16.mxu0 0
      %1308 = vmatpush1.bf16.msra.mxu0 %v1289
      %1309 = vmatprep.subr.bf16.mxu0 0
      %1310 = vmatpush1.bf16.msra.mxu0 %v1288
      %1311 = vmatprep.subr.bf16.mxu0 0
      %1312 = vmatpush1.bf16.msra.mxu0 %v1287
      %1313 = vmatprep.subr.bf16.mxu0 0
      %1314 = vmatpush1.bf16.msra.mxu0 %v1286
      %1315 = vmatprep.subr.bf16.mxu0 0
      %1316 = vmatpush1.bf16.msra.mxu0 %v1285
      %1317 = vmatprep.subr.bf16.mxu0 0
      %1318 = vmatpush2.bf16.msra.mxu0 0
      %1319 = vmatprep.subr.bf16.mxu0 0
      %1320 = vmatpush2.bf16.msra.mxu0 0
      %1321 = vmatprep.subr.bf16.mxu0 0
      %1322 = vmatpush2.bf16.msra.mxu0 0
      %1323 = vmatprep.subr.bf16.mxu0 0
      %1324 = vmatpush2.bf16.msra.mxu0 0
      %1325 = vmatprep.subr.bf16.mxu0 0
      %1326 = vmatpush2.bf16.msra.mxu0 0
      %1327 = vmatprep.subr.bf16.mxu0 0
      %1328 = vmatpush2.bf16.msra.mxu0 0
      %1329 = vmatprep.subr.bf16.mxu0 0
      %1330 = vmatpush2.bf16.msra.mxu0 0
      %1331 = vmatprep.subr.bf16.mxu0 0
      %1332 = vmatpush2.bf16.msra.mxu0 0
      %1333 = vmatprep.mubr.bf16.mxu0 0
      %1334 = vmatmul.mubr.bf16.gmra.mxu0 %v1236
      %v1335 = vpop.f32.mrf.mxu0
      %v1336 = vadd.f32 0.0, %v1335
      %v1337 = vpop.f32.mrf.mxu0
      %v1338 = vpop.f32.mrf.mxu0
      %v1339 = vpop.f32.mrf.mxu0
      %1340 = vdwg.mxu0
      %v1357 = vunpack.c.l.b16 %v1220
      %v1358 = vunpack.c.l.b16 %v1221
      %v1359 = vunpack.c.l.b16 %v1222
      %v1360 = vunpack.c.l.b16 %v1223
      %v1361 = vunpack.c.l.b16 %v1224
      %v1362 = vunpack.c.l.b16 %v1225
      %v1363 = vunpack.c.l.b16 %v1226
      %v1364 = vunpack.c.l.b16 %v1227
      %v1365 = vunpack.c.l.b16 %v1228
      %v1366 = vunpack.c.l.b16 %v1229
      %v1367 = vunpack.c.l.b16 %v1230
      %v1368 = vunpack.c.l.b16 %v1231
      %v1369 = vunpack.c.l.b16 %v1232
      %v1370 = vunpack.c.l.b16 %v1233
      %v1371 = vunpack.c.l.b16 %v1234
      %v1372 = vunpack.c.l.b16 %v1235
      %v1373 = vpack.c.b16 %v1358, %v1357
      %v1374 = vpack.c.b16 %v1360, %v1359
      %v1375 = vpack.c.b16 %v1362, %v1361
      %v1376 = vpack.c.b16 %v1364, %v1363
      %v1377 = vpack.c.b16 %v1366, %v1365
      %v1378 = vpack.c.b16 %v1368, %v1367
      %v1379 = vpack.c.b16 %v1370, %v1369
      %v1380 = vpack.c.b16 %v1372, %v1371
      %1389 = vmatprep.subr.bf16.mxu0 0
      %1390 = vmatpush1.bf16.msra.mxu0 %v1380
      %1391 = vmatprep.subr.bf16.mxu0 0
      %1392 = vmatpush1.bf16.msra.mxu0 %v1379
      %1393 = vmatprep.subr.bf16.mxu0 0
      %1394 = vmatpush1.bf16.msra.mxu0 %v1378
      %1395 = vmatprep.subr.bf16.mxu0 0
      %1396 = vmatpush1.bf16.msra.mxu0 %v1377
      %1397 = vmatprep.subr.bf16.mxu0 0
      %1398 = vmatpush1.bf16.msra.mxu0 %v1376
      %1399 = vmatprep.subr.bf16.mxu0 0
      %1400 = vmatpush1.bf16.msra.mxu0 %v1375
      %1401 = vmatprep.subr.bf16.mxu0 0
      %1402 = vmatpush1.bf16.msra.mxu0 %v1374
      %1403 = vmatprep.subr.bf16.mxu0 0
      %1404 = vmatpush1.bf16.msra.mxu0 %v1373
      %1405 = vmatprep.subr.bf16.mxu0 0
      %1406 = vmatpush2.bf16.msra.mxu0 0
      %1407 = vmatprep.subr.bf16.mxu0 0
      %1408 = vmatpush2.bf16.msra.mxu0 0
      %1409 = vmatprep.subr.bf16.mxu0 0
      %1410 = vmatpush2.bf16.msra.mxu0 0
      %1411 = vmatprep.subr.bf16.mxu0 0
      %1412 = vmatpush2.bf16.msra.mxu0 0
      %1413 = vmatprep.subr.bf16.mxu0 0
      %1414 = vmatpush2.bf16.msra.mxu0 0
      %1415 = vmatprep.subr.bf16.mxu0 0
      %1416 = vmatpush2.bf16.msra.mxu0 0
      %1417 = vmatprep.subr.bf16.mxu0 0
      %1418 = vmatpush2.bf16.msra.mxu0 0
      %1419 = vmatprep.subr.bf16.mxu0 0
      %1420 = vmatpush2.bf16.msra.mxu0 0
      %1421 = vmatprep.mubr.bf16.mxu0 0
      %1422 = vmatmul.mubr.bf16.gmra.mxu0 %v1219
      %v1423 = vpop.f32.mrf.mxu0
      %v1424 = vadd.f32 %v1336, %v1423
      %v1425 = vpop.f32.mrf.mxu0
      %v1426 = vpop.f32.mrf.mxu0
      %v1427 = vpop.f32.mrf.mxu0
      %1428 = vdwg.mxu0
      %v1429 = vld [vmem:[%s881] sm:$0xf]
      %v1430 = vld [vmem:[%s881 + $0x4] sm:$0x1]
      %v1431 = vld [vmem:[%s425] sm:$0xf]
      %v1432 = vld [vmem:[%s425 + $0x4] sm:$0xf]
      %v1433 = vld [vmem:[%s425 + $0x8] sm:$0xf]
      %v1434 = vld [vmem:[%s425 + $0xc] sm:$0xf]
      %v1435 = vld [vmem:[%s425 + $0x10] sm:$0xf]
      %v1436 = vld [vmem:[%s425 + $0x14] sm:$0xf]
      %v1437 = vld [vmem:[%s425 + $0x18] sm:$0xf]
      %v1438 = vld [vmem:[%s425 + $0x1c] sm:$0xf]
      %v1439 = vld [vmem:[%s425 + $0x20] sm:$0xf]
      %v1440 = vld [vmem:[%s425 + $0x24] sm:$0xf]
      %v1441 = vld [vmem:[%s425 + $0x28] sm:$0xf]
      %v1442 = vld [vmem:[%s425 + $0x2c] sm:$0xf]
      %v1443 = vld [vmem:[%s425 + $0x30] sm:$0xf]
      %v1444 = vld [vmem:[%s425 + $0x34] sm:$0xf]
      %v1445 = vld [vmem:[%s425 + $0x38] sm:$0xf]
      %v1446 = vld [vmem:[%s425 + $0x3c] sm:$0xf]
      %v1449 = vunpack.c.l.b16 %v1429
      %v1450 = vunpack.c.l.b16 %v1430
      %v1451 = vpack.c.b16 %v1450, %v1449
      %v1453 = vshrl.u32 %v1451, 16
      %v1455 = vshll.u32 %v1451, 16
      %v1457 = vrot.slane %v1455, 1
      %v1458 = vor.u32 %v1453, %v1457
      %v1476 = vunpack.c.l.b16 %v1431
      %v1477 = vunpack.c.l.b16 %v1432
      %v1478 = vunpack.c.l.b16 %v1433
      %v1479 = vunpack.c.l.b16 %v1434
      %v1480 = vunpack.c.l.b16 %v1435
      %v1481 = vunpack.c.l.b16 %v1436
      %v1482 = vunpack.c.l.b16 %v1437
      %v1483 = vunpack.c.l.b16 %v1438
      %v1484 = vunpack.c.l.b16 %v1439
      %v1485 = vunpack.c.l.b16 %v1440
      %v1486 = vunpack.c.l.b16 %v1441
      %v1487 = vunpack.c.l.b16 %v1442
      %v1488 = vunpack.c.l.b16 %v1443
      %v1489 = vunpack.c.l.b16 %v1444
      %v1490 = vunpack.c.l.b16 %v1445
      %v1491 = vunpack.c.l.b16 %v1446
      %v1492 = vpack.c.b16 %v1477, %v1476
      %v1493 = vpack.c.b16 %v1479, %v1478
      %v1494 = vpack.c.b16 %v1481, %v1480
      %v1495 = vpack.c.b16 %v1483, %v1482
      %v1496 = vpack.c.b16 %v1485, %v1484
      %v1497 = vpack.c.b16 %v1487, %v1486
      %v1498 = vpack.c.b16 %v1489, %v1488
      %v1499 = vpack.c.b16 %v1491, %v1490
      %1508 = vmatprep.subr.bf16.mxu0 0
      %1509 = vmatpush1.bf16.msra.mxu0 %v1499
      %1510 = vmatprep.subr.bf16.mxu0 0
      %1511 = vmatpush1.bf16.msra.mxu0 %v1498
      %1512 = vmatprep.subr.bf16.mxu0 0
      %1513 = vmatpush1.bf16.msra.mxu0 %v1497
      %1514 = vmatprep.subr.bf16.mxu0 0
      %1515 = vmatpush1.bf16.msra.mxu0 %v1496
      %1516 = vmatprep.subr.bf16.mxu0 0
      %1517 = vmatpush1.bf16.msra.mxu0 %v1495
      %1518 = vmatprep.subr.bf16.mxu0 0
      %1519 = vmatpush1.bf16.msra.mxu0 %v1494
      %1520 = vmatprep.subr.bf16.mxu0 0
      %1521 = vmatpush1.bf16.msra.mxu0 %v1493
      %1522 = vmatprep.subr.bf16.mxu0 0
      %1523 = vmatpush1.bf16.msra.mxu0 %v1492
      %1524 = vmatprep.subr.bf16.mxu0 0
      %1525 = vmatpush2.bf16.msra.mxu0 0
      %1526 = vmatprep.subr.bf16.mxu0 0
      %1527 = vmatpush2.bf16.msra.mxu0 0
      %1528 = vmatprep.subr.bf16.mxu0 0
      %1529 = vmatpush2.bf16.msra.mxu0 0
      %1530 = vmatprep.subr.bf16.mxu0 0
      %1531 = vmatpush2.bf16.msra.mxu0 0
      %1532 = vmatprep.subr.bf16.mxu0 0
      %1533 = vmatpush2.bf16.msra.mxu0 0
      %1534 = vmatprep.subr.bf16.mxu0 0
      %1535 = vmatpush2.bf16.msra.mxu0 0
      %1536 = vmatprep.subr.bf16.mxu0 0
      %1537 = vmatpush2.bf16.msra.mxu0 0
      %1538 = vmatprep.subr.bf16.mxu0 0
      %1539 = vmatpush2.bf16.msra.mxu0 0
      %1540 = vmatprep.mubr.bf16.mxu0 0
      %1541 = vmatmul.mubr.bf16.gmra.mxu0 %v1458
      %v1542 = vpop.f32.mrf.mxu0
      %v1543 = vadd.f32 0.0, %v1542
      %v1544 = vpop.f32.mrf.mxu0
      %v1545 = vpop.f32.mrf.mxu0
      %v1546 = vpop.f32.mrf.mxu0
      %1547 = vdwg.mxu0
      %v1548 = vadd.f32 %v1424, %v1543
      %s1549 = scalar_lea.vmem %s204, 152
      %v1550 = vld [vmem:[%s1549] sm:$0xf]
      %v1551 = vld [vmem:[%s546] sm:$0xf]
      %v1552 = vld [vmem:[%s546 + $0x4] sm:$0xf]
      %v1553 = vld [vmem:[%s546 + $0x8] sm:$0xf]
      %v1554 = vld [vmem:[%s546 + $0xc] sm:$0xf]
      %v1555 = vld [vmem:[%s546 + $0x10] sm:$0xf]
      %v1556 = vld [vmem:[%s546 + $0x14] sm:$0xf]
      %v1557 = vld [vmem:[%s546 + $0x18] sm:$0xf]
      %v1558 = vld [vmem:[%s546 + $0x1c] sm:$0xf]
      %v1559 = vld [vmem:[%s546 + $0x20] sm:$0xf]
      %v1560 = vld [vmem:[%s546 + $0x24] sm:$0xf]
      %v1561 = vld [vmem:[%s546 + $0x28] sm:$0xf]
      %v1562 = vld [vmem:[%s546 + $0x2c] sm:$0xf]
      %v1563 = vld [vmem:[%s546 + $0x30] sm:$0xf]
      %v1564 = vld [vmem:[%s546 + $0x34] sm:$0xf]
      %v1565 = vld [vmem:[%s546 + $0x38] sm:$0xf]
      %v1566 = vld [vmem:[%s546 + $0x3c] sm:$0xf]
      %v1583 = vunpack.c.l.b16 %v1551
      %v1584 = vunpack.c.l.b16 %v1552
      %v1585 = vunpack.c.l.b16 %v1553
      %v1586 = vunpack.c.l.b16 %v1554
      %v1587 = vunpack.c.l.b16 %v1555
      %v1588 = vunpack.c.l.b16 %v1556
      %v1589 = vunpack.c.l.b16 %v1557
      %v1590 = vunpack.c.l.b16 %v1558
      %v1591 = vunpack.c.l.b16 %v1559
      %v1592 = vunpack.c.l.b16 %v1560
      %v1593 = vunpack.c.l.b16 %v1561
      %v1594 = vunpack.c.l.b16 %v1562
      %v1595 = vunpack.c.l.b16 %v1563
      %v1596 = vunpack.c.l.b16 %v1564
      %v1597 = vunpack.c.l.b16 %v1565
      %v1598 = vunpack.c.l.b16 %v1566
      %v1599 = vpack.c.b16 %v1584, %v1583
      %v1600 = vpack.c.b16 %v1586, %v1585
      %v1601 = vpack.c.b16 %v1588, %v1587
      %v1602 = vpack.c.b16 %v1590, %v1589
      %v1603 = vpack.c.b16 %v1592, %v1591
      %v1604 = vpack.c.b16 %v1594, %v1593
      %v1605 = vpack.c.b16 %v1596, %v1595
      %v1606 = vpack.c.b16 %v1598, %v1597
      %1615 = vmatprep.subr.bf16.mxu0 0
      %1616 = vmatpush1.bf16.msra.mxu0 %v1606
      %1617 = vmatprep.subr.bf16.mxu0 0
      %1618 = vmatpush1.bf16.msra.mxu0 %v1605
      %1619 = vmatprep.subr.bf16.mxu0 0
      %1620 = vmatpush1.bf16.msra.mxu0 %v1604
      %1621 = vmatprep.subr.bf16.mxu0 0
      %1622 = vmatpush1.bf16.msra.mxu0 %v1603
      %1623 = vmatprep.subr.bf16.mxu0 0
      %1624 = vmatpush1.bf16.msra.mxu0 %v1602
      %1625 = vmatprep.subr.bf16.mxu0 0
      %1626 = vmatpush1.bf16.msra.mxu0 %v1601
      %1627 = vmatprep.subr.bf16.mxu0 0
      %1628 = vmatpush1.bf16.msra.mxu0 %v1600
      %1629 = vmatprep.subr.bf16.mxu0 0
      %1630 = vmatpush1.bf16.msra.mxu0 %v1599
      %1631 = vmatprep.subr.bf16.mxu0 0
      %1632 = vmatpush2.bf16.msra.mxu0 0
      %1633 = vmatprep.subr.bf16.mxu0 0
      %1634 = vmatpush2.bf16.msra.mxu0 0
      %1635 = vmatprep.subr.bf16.mxu0 0
      %1636 = vmatpush2.bf16.msra.mxu0 0
      %1637 = vmatprep.subr.bf16.mxu0 0
      %1638 = vmatpush2.bf16.msra.mxu0 0
      %1639 = vmatprep.subr.bf16.mxu0 0
      %1640 = vmatpush2.bf16.msra.mxu0 0
      %1641 = vmatprep.subr.bf16.mxu0 0
      %1642 = vmatpush2.bf16.msra.mxu0 0
      %1643 = vmatprep.subr.bf16.mxu0 0
      %1644 = vmatpush2.bf16.msra.mxu0 0
      %1645 = vmatprep.subr.bf16.mxu0 0
      %1646 = vmatpush2.bf16.msra.mxu0 0
      %1647 = vmatprep.mubr.bf16.mxu0 0
      %1648 = vmatmul.mubr.bf16.gmra.mxu0 %v1550
      %v1649 = vpop.f32.mrf.mxu0
      %v1650 = vadd.f32 0.0, %v1649
      %v1651 = vpop.f32.mrf.mxu0
      %v1652 = vpop.f32.mrf.mxu0
      %v1653 = vpop.f32.mrf.mxu0
      %1654 = vdwg.mxu0
      %v1655 = vadd.f32 %v1548, %v1650
      %s1656 = scalar_lea.vmem %s204, 224
      %v1657 = vld [vmem:[%s1656] sm:$0xf]
      %v1658 = vld [vmem:[%s654] sm:$0xf]
      %v1659 = vld [vmem:[%s654 + $0x4] sm:$0xf]
      %v1660 = vld [vmem:[%s654 + $0x8] sm:$0xf]
      %v1661 = vld [vmem:[%s654 + $0xc] sm:$0xf]
      %v1662 = vld [vmem:[%s654 + $0x10] sm:$0xf]
      %v1663 = vld [vmem:[%s654 + $0x14] sm:$0xf]
      %v1664 = vld [vmem:[%s654 + $0x18] sm:$0xf]
      %v1665 = vld [vmem:[%s654 + $0x1c] sm:$0xf]
      %v1666 = vld [vmem:[%s654 + $0x20] sm:$0xf]
      %v1667 = vld [vmem:[%s654 + $0x24] sm:$0xf]
      %v1668 = vld [vmem:[%s654 + $0x28] sm:$0xf]
      %v1669 = vld [vmem:[%s654 + $0x2c] sm:$0xf]
      %v1670 = vld [vmem:[%s654 + $0x30] sm:$0xf]
      %v1671 = vld [vmem:[%s654 + $0x34] sm:$0xf]
      %v1672 = vld [vmem:[%s654 + $0x38] sm:$0xf]
      %v1673 = vld [vmem:[%s654 + $0x3c] sm:$0xf]
      %v1690 = vunpack.c.l.b16 %v1658
      %v1691 = vunpack.c.l.b16 %v1659
      %v1692 = vunpack.c.l.b16 %v1660
      %v1693 = vunpack.c.l.b16 %v1661
      %v1694 = vunpack.c.l.b16 %v1662
      %v1695 = vunpack.c.l.b16 %v1663
      %v1696 = vunpack.c.l.b16 %v1664
      %v1697 = vunpack.c.l.b16 %v1665
      %v1698 = vunpack.c.l.b16 %v1666
      %v1699 = vunpack.c.l.b16 %v1667
      %v1700 = vunpack.c.l.b16 %v1668
      %v1701 = vunpack.c.l.b16 %v1669
      %v1702 = vunpack.c.l.b16 %v1670
      %v1703 = vunpack.c.l.b16 %v1671
      %v1704 = vunpack.c.l.b16 %v1672
      %v1705 = vunpack.c.l.b16 %v1673
      %v1706 = vpack.c.b16 %v1691, %v1690
      %v1707 = vpack.c.b16 %v1693, %v1692
      %v1708 = vpack.c.b16 %v1695, %v1694
      %v1709 = vpack.c.b16 %v1697, %v1696
      %v1710 = vpack.c.b16 %v1699, %v1698
      %v1711 = vpack.c.b16 %v1701, %v1700
      %v1712 = vpack.c.b16 %v1703, %v1702
      %v1713 = vpack.c.b16 %v1705, %v1704
      %1722 = vmatprep.subr.bf16.mxu0 0
      %1723 = vmatpush1.bf16.msra.mxu0 %v1713
      %1724 = vmatprep.subr.bf16.mxu0 0
      %1725 = vmatpush1.bf16.msra.mxu0 %v1712
      %1726 = vmatprep.subr.bf16.mxu0 0
      %1727 = vmatpush1.bf16.msra.mxu0 %v1711
      %1728 = vmatprep.subr.bf16.mxu0 0
      %1729 = vmatpush1.bf16.msra.mxu0 %v1710
      %1730 = vmatprep.subr.bf16.mxu0 0
      %1731 = vmatpush1.bf16.msra.mxu0 %v1709
      %1732 = vmatprep.subr.bf16.mxu0 0
      %1733 = vmatpush1.bf16.msra.mxu0 %v1708
      %1734 = vmatprep.subr.bf16.mxu0 0
      %1735 = vmatpush1.bf16.msra.mxu0 %v1707
      %1736 = vmatprep.subr.bf16.mxu0 0
      %1737 = vmatpush1.bf16.msra.mxu0 %v1706
      %1738 = vmatprep.subr.bf16.mxu0 0
      %1739 = vmatpush2.bf16.msra.mxu0 0
      %1740 = vmatprep.subr.bf16.mxu0 0
      %1741 = vmatpush2.bf16.msra.mxu0 0
      %1742 = vmatprep.subr.bf16.mxu0 0
      %1743 = vmatpush2.bf16.msra.mxu0 0
      %1744 = vmatprep.subr.bf16.mxu0 0
      %1745 = vmatpush2.bf16.msra.mxu0 0
      %1746 = vmatprep.subr.bf16.mxu0 0
      %1747 = vmatpush2.bf16.msra.mxu0 0
      %1748 = vmatprep.subr.bf16.mxu0 0
      %1749 = vmatpush2.bf16.msra.mxu0 0
      %1750 = vmatprep.subr.bf16.mxu0 0
      %1751 = vmatpush2.bf16.msra.mxu0 0
      %1752 = vmatprep.subr.bf16.mxu0 0
      %1753 = vmatpush2.bf16.msra.mxu0 0
      %1754 = vmatprep.mubr.bf16.mxu0 0
      %1755 = vmatmul.mubr.bf16.gmra.mxu0 %v1657
      %v1756 = vpop.f32.mrf.mxu0
      %v1757 = vadd.f32 0.0, %v1756
      %v1758 = vpop.f32.mrf.mxu0
      %v1759 = vpop.f32.mrf.mxu0
      %v1760 = vpop.f32.mrf.mxu0
      %1761 = vdwg.mxu0
      %v1762 = vadd.f32 %v1655, %v1757
      %v1763 = vld [vmem:[%s1549] sm:$0xf]
      %v1764 = vld [vmem:[%s1549 + $0x4] sm:$0x1]
      %v1765 = vld [vmem:[%s762] sm:$0xf]
      %v1766 = vld [vmem:[%s762 + $0x4] sm:$0xf]
      %v1767 = vld [vmem:[%s762 + $0x8] sm:$0xf]
      %v1768 = vld [vmem:[%s762 + $0xc] sm:$0xf]
      %v1769 = vld [vmem:[%s762 + $0x10] sm:$0xf]
      %v1770 = vld [vmem:[%s762 + $0x14] sm:$0xf]
      %v1771 = vld [vmem:[%s762 + $0x18] sm:$0xf]
      %v1772 = vld [vmem:[%s762 + $0x1c] sm:$0xf]
      %v1773 = vld [vmem:[%s762 + $0x20] sm:$0xf]
      %v1774 = vld [vmem:[%s762 + $0x24] sm:$0xf]
      %v1775 = vld [vmem:[%s762 + $0x28] sm:$0xf]
      %v1776 = vld [vmem:[%s762 + $0x2c] sm:$0xf]
      %v1777 = vld [vmem:[%s762 + $0x30] sm:$0xf]
      %v1778 = vld [vmem:[%s762 + $0x34] sm:$0xf]
      %v1779 = vld [vmem:[%s762 + $0x38] sm:$0xf]
      %v1780 = vld [vmem:[%s762 + $0x3c] sm:$0xf]
      %v1783 = vunpack.c.l.b16 %v1763
      %v1784 = vunpack.c.l.b16 %v1764
      %v1785 = vpack.c.b16 %v1784, %v1783
      %v1787 = vshrl.u32 %v1785, 16
      %v1789 = vshll.u32 %v1785, 16
      %v1791 = vrot.slane %v1789, 1
      %v1792 = vor.u32 %v1787, %v1791
      %v1810 = vunpack.c.l.b16 %v1765
      %v1811 = vunpack.c.l.b16 %v1766
      %v1812 = vunpack.c.l.b16 %v1767
      %v1813 = vunpack.c.l.b16 %v1768
      %v1814 = vunpack.c.l.b16 %v1769
      %v1815 = vunpack.c.l.b16 %v1770
      %v1816 = vunpack.c.l.b16 %v1771
      %v1817 = vunpack.c.l.b16 %v1772
      %v1818 = vunpack.c.l.b16 %v1773
      %v1819 = vunpack.c.l.b16 %v1774
      %v1820 = vunpack.c.l.b16 %v1775
      %v1821 = vunpack.c.l.b16 %v1776
      %v1822 = vunpack.c.l.b16 %v1777
      %v1823 = vunpack.c.l.b16 %v1778
      %v1824 = vunpack.c.l.b16 %v1779
      %v1825 = vunpack.c.l.b16 %v1780
      %v1826 = vpack.c.b16 %v1811, %v1810
      %v1827 = vpack.c.b16 %v1813, %v1812
      %v1828 = vpack.c.b16 %v1815, %v1814
      %v1829 = vpack.c.b16 %v1817, %v1816
      %v1830 = vpack.c.b16 %v1819, %v1818
      %v1831 = vpack.c.b16 %v1821, %v1820
      %v1832 = vpack.c.b16 %v1823, %v1822
      %v1833 = vpack.c.b16 %v1825, %v1824
      %1842 = vmatprep.subr.bf16.mxu0 0
      %1843 = vmatpush1.bf16.msra.mxu0 %v1833
      %1844 = vmatprep.subr.bf16.mxu0 0
      %1845 = vmatpush1.bf16.msra.mxu0 %v1832
      %1846 = vmatprep.subr.bf16.mxu0 0
      %1847 = vmatpush1.bf16.msra.mxu0 %v1831
      %1848 = vmatprep.subr.bf16.mxu0 0
      %1849 = vmatpush1.bf16.msra.mxu0 %v1830
      %1850 = vmatprep.subr.bf16.mxu0 0
      %1851 = vmatpush1.bf16.msra.mxu0 %v1829
      %1852 = vmatprep.subr.bf16.mxu0 0
      %1853 = vmatpush1.bf16.msra.mxu0 %v1828
      %1854 = vmatprep.subr.bf16.mxu0 0
      %1855 = vmatpush1.bf16.msra.mxu0 %v1827
      %1856 = vmatprep.subr.bf16.mxu0 0
      %1857 = vmatpush1.bf16.msra.mxu0 %v1826
      %1858 = vmatprep.subr.bf16.mxu0 0
      %1859 = vmatpush2.bf16.msra.mxu0 0
      %1860 = vmatprep.subr.bf16.mxu0 0
      %1861 = vmatpush2.bf16.msra.mxu0 0
      %1862 = vmatprep.subr.bf16.mxu0 0
      %1863 = vmatpush2.bf16.msra.mxu0 0
      %1864 = vmatprep.subr.bf16.mxu0 0
      %1865 = vmatpush2.bf16.msra.mxu0 0
      %1866 = vmatprep.subr.bf16.mxu0 0
      %1867 = vmatpush2.bf16.msra.mxu0 0
      %1868 = vmatprep.subr.bf16.mxu0 0
      %1869 = vmatpush2.bf16.msra.mxu0 0
      %1870 = vmatprep.subr.bf16.mxu0 0
      %1871 = vmatpush2.bf16.msra.mxu0 0
      %1872 = vmatprep.subr.bf16.mxu0 0
      %1873 = vmatpush2.bf16.msra.mxu0 0
      %1874 = vmatprep.mubr.bf16.mxu0 0
      %1875 = vmatmul.mubr.bf16.gmra.mxu0 %v1792
      %v1876 = vpop.f32.mrf.mxu0
      %v1877 = vadd.f32 0.0, %v1876
      %v1878 = vpop.f32.mrf.mxu0
      %v1879 = vpop.f32.mrf.mxu0
      %v1880 = vpop.f32.mrf.mxu0
      %1881 = vdwg.mxu0
      %v1882 = vadd.f32 %v1762, %v1877
      %s1883 = scalar_lea.vmem %s204, 16
      %v1884 = vld [vmem:[%s1883] sm:$0xf]
      %v1885 = vld [vmem:[%s883] sm:$0xf]
      %v1886 = vld [vmem:[%s883 + $0x4] sm:$0xf]
      %v1887 = vld [vmem:[%s883 + $0x8] sm:$0xf]
      %v1888 = vld [vmem:[%s883 + $0xc] sm:$0xf]
      %v1889 = vld [vmem:[%s883 + $0x10] sm:$0xf]
      %v1890 = vld [vmem:[%s883 + $0x14] sm:$0xf]
      %v1891 = vld [vmem:[%s883 + $0x18] sm:$0xf]
      %v1892 = vld [vmem:[%s883 + $0x1c] sm:$0xf]
      %v1893 = vld [vmem:[%s883 + $0x20] sm:$0xf]
      %v1894 = vld [vmem:[%s883 + $0x24] sm:$0xf]
      %v1895 = vld [vmem:[%s883 + $0x28] sm:$0xf]
      %v1896 = vld [vmem:[%s883 + $0x2c] sm:$0xf]
      %v1897 = vld [vmem:[%s883 + $0x30] sm:$0xf]
      %v1898 = vld [vmem:[%s883 + $0x34] sm:$0xf]
      %v1899 = vld [vmem:[%s883 + $0x38] sm:$0xf]
      %v1900 = vld [vmem:[%s883 + $0x3c] sm:$0xf]
      %v1917 = vunpack.c.l.b16 %v1885
      %v1918 = vunpack.c.l.b16 %v1886
      %v1919 = vunpack.c.l.b16 %v1887
      %v1920 = vunpack.c.l.b16 %v1888
      %v1921 = vunpack.c.l.b16 %v1889
      %v1922 = vunpack.c.l.b16 %v1890
      %v1923 = vunpack.c.l.b16 %v1891
      %v1924 = vunpack.c.l.b16 %v1892
      %v1925 = vunpack.c.l.b16 %v1893
      %v1926 = vunpack.c.l.b16 %v1894
      %v1927 = vunpack.c.l.b16 %v1895
      %v1928 = vunpack.c.l.b16 %v1896
      %v1929 = vunpack.c.l.b16 %v1897
      %v1930 = vunpack.c.l.b16 %v1898
      %v1931 = vunpack.c.l.b16 %v1899
      %v1932 = vunpack.c.l.b16 %v1900
      %v1933 = vpack.c.b16 %v1918, %v1917
      %v1934 = vpack.c.b16 %v1920, %v1919
      %v1935 = vpack.c.b16 %v1922, %v1921
      %v1936 = vpack.c.b16 %v1924, %v1923
      %v1937 = vpack.c.b16 %v1926, %v1925
      %v1938 = vpack.c.b16 %v1928, %v1927
      %v1939 = vpack.c.b16 %v1930, %v1929
      %v1940 = vpack.c.b16 %v1932, %v1931
      %1949 = vmatprep.subr.bf16.mxu0 0
      %1950 = vmatpush1.bf16.msra.mxu0 %v1940
      %1951 = vmatprep.subr.bf16.mxu0 0
      %1952 = vmatpush1.bf16.msra.mxu0 %v1939
      %1953 = vmatprep.subr.bf16.mxu0 0
      %1954 = vmatpush1.bf16.msra.mxu0 %v1938
      %1955 = vmatprep.subr.bf16.mxu0 0
      %1956 = vmatpush1.bf16.msra.mxu0 %v1937
      %1957 = vmatprep.subr.bf16.mxu0 0
      %1958 = vmatpush1.bf16.msra.mxu0 %v1936
      %1959 = vmatprep.subr.bf16.mxu0 0
      %1960 = vmatpush1.bf16.msra.mxu0 %v1935
      %1961 = vmatprep.subr.bf16.mxu0 0
      %1962 = vmatpush1.bf16.msra.mxu0 %v1934
      %1963 = vmatprep.subr.bf16.mxu0 0
      %1964 = vmatpush1.bf16.msra.mxu0 %v1933
      %1965 = vmatprep.subr.bf16.mxu0 0
      %1966 = vmatpush2.bf16.msra.mxu0 0
      %1967 = vmatprep.subr.bf16.mxu0 0
      %1968 = vmatpush2.bf16.msra.mxu0 0
      %1969 = vmatprep.subr.bf16.mxu0 0
      %1970 = vmatpush2.bf16.msra.mxu0 0
      %1971 = vmatprep.subr.bf16.mxu0 0
      %1972 = vmatpush2.bf16.msra.mxu0 0
      %1973 = vmatprep.subr.bf16.mxu0 0
      %1974 = vmatpush2.bf16.msra.mxu0 0
      %1975 = vmatprep.subr.bf16.mxu0 0
      %1976 = vmatpush2.bf16.msra.mxu0 0
      %1977 = vmatprep.subr.bf16.mxu0 0
      %1978 = vmatpush2.bf16.msra.mxu0 0
      %1979 = vmatprep.subr.bf16.mxu0 0
      %1980 = vmatpush2.bf16.msra.mxu0 0
      %1981 = vmatprep.mubr.bf16.mxu0 0
      %1982 = vmatmul.mubr.bf16.gmra.mxu0 %v1884
      %v1983 = vpop.f32.mrf.mxu0
      %v1984 = vadd.f32 0.0, %v1983
      %v1985 = vpop.f32.mrf.mxu0
      %v1986 = vpop.f32.mrf.mxu0
      %v1987 = vpop.f32.mrf.mxu0
      %1988 = vdwg.mxu0
      %v1989 = vadd.f32 %v1882, %v1984
      %s1990 = scalar_lea.vmem %s204, 88
      %v1991 = vld [vmem:[%s1990] sm:$0xf]
      %v1992 = vld [vmem:[%s991] sm:$0xf]
      %v1993 = vld [vmem:[%s991 + $0x4] sm:$0xf]
      %v1994 = vld [vmem:[%s991 + $0x8] sm:$0xf]
      %v1995 = vld [vmem:[%s991 + $0xc] sm:$0xf]
      %v1996 = vld [vmem:[%s991 + $0x10] sm:$0xf]
      %v1997 = vld [vmem:[%s991 + $0x14] sm:$0xf]
      %v1998 = vld [vmem:[%s991 + $0x18] sm:$0xf]
      %v1999 = vld [vmem:[%s991 + $0x1c] sm:$0xf]
      %v2000 = vld [vmem:[%s991 + $0x20] sm:$0xf]
      %v2001 = vld [vmem:[%s991 + $0x24] sm:$0xf]
      %v2002 = vld [vmem:[%s991 + $0x28] sm:$0xf]
      %v2003 = vld [vmem:[%s991 + $0x2c] sm:$0xf]
      %v2004 = vld [vmem:[%s991 + $0x30] sm:$0xf]
      %v2005 = vld [vmem:[%s991 + $0x34] sm:$0xf]
      %v2006 = vld [vmem:[%s991 + $0x38] sm:$0xf]
      %v2007 = vld [vmem:[%s991 + $0x3c] sm:$0xf]
      %v2024 = vunpack.c.l.b16 %v1992
      %v2025 = vunpack.c.l.b16 %v1993
      %v2026 = vunpack.c.l.b16 %v1994
      %v2027 = vunpack.c.l.b16 %v1995
      %v2028 = vunpack.c.l.b16 %v1996
      %v2029 = vunpack.c.l.b16 %v1997
      %v2030 = vunpack.c.l.b16 %v1998
      %v2031 = vunpack.c.l.b16 %v1999
      %v2032 = vunpack.c.l.b16 %v2000
      %v2033 = vunpack.c.l.b16 %v2001
      %v2034 = vunpack.c.l.b16 %v2002
      %v2035 = vunpack.c.l.b16 %v2003
      %v2036 = vunpack.c.l.b16 %v2004
      %v2037 = vunpack.c.l.b16 %v2005
      %v2038 = vunpack.c.l.b16 %v2006
      %v2039 = vunpack.c.l.b16 %v2007
      %v2040 = vpack.c.b16 %v2025, %v2024
      %v2041 = vpack.c.b16 %v2027, %v2026
      %v2042 = vpack.c.b16 %v2029, %v2028
      %v2043 = vpack.c.b16 %v2031, %v2030
      %v2044 = vpack.c.b16 %v2033, %v2032
      %v2045 = vpack.c.b16 %v2035, %v2034
      %v2046 = vpack.c.b16 %v2037, %v2036
      %v2047 = vpack.c.b16 %v2039, %v2038
      %2056 = vmatprep.subr.bf16.mxu0 0
      %2057 = vmatpush1.bf16.msra.mxu0 %v2047
      %2058 = vmatprep.subr.bf16.mxu0 0
      %2059 = vmatpush1.bf16.msra.mxu0 %v2046
      %2060 = vmatprep.subr.bf16.mxu0 0
      %2061 = vmatpush1.bf16.msra.mxu0 %v2045
      %2062 = vmatprep.subr.bf16.mxu0 0
      %2063 = vmatpush1.bf16.msra.mxu0 %v2044
      %2064 = vmatprep.subr.bf16.mxu0 0
      %2065 = vmatpush1.bf16.msra.mxu0 %v2043
      %2066 = vmatprep.subr.bf16.mxu0 0
      %2067 = vmatpush1.bf16.msra.mxu0 %v2042
      %2068 = vmatprep.subr.bf16.mxu0 0
      %2069 = vmatpush1.bf16.msra.mxu0 %v2041
      %2070 = vmatprep.subr.bf16.mxu0 0
      %2071 = vmatpush1.bf16.msra.mxu0 %v2040
      %2072 = vmatprep.subr.bf16.mxu0 0
      %2073 = vmatpush2.bf16.msra.mxu0 0
      %2074 = vmatprep.subr.bf16.mxu0 0
      %2075 = vmatpush2.bf16.msra.mxu0 0
      %2076 = vmatprep.subr.bf16.mxu0 0
      %2077 = vmatpush2.bf16.msra.mxu0 0
      %2078 = vmatprep.subr.bf16.mxu0 0
      %2079 = vmatpush2.bf16.msra.mxu0 0
      %2080 = vmatprep.subr.bf16.mxu0 0
      %2081 = vmatpush2.bf16.msra.mxu0 0
      %2082 = vmatprep.subr.bf16.mxu0 0
      %2083 = vmatpush2.bf16.msra.mxu0 0
      %2084 = vmatprep.subr.bf16.mxu0 0
      %2085 = vmatpush2.bf16.msra.mxu0 0
      %2086 = vmatprep.subr.bf16.mxu0 0
      %2087 = vmatpush2.bf16.msra.mxu0 0
      %2088 = vmatprep.mubr.bf16.mxu0 0
      %2089 = vmatmul.mubr.bf16.gmra.mxu0 %v1991
      %v2090 = vpop.f32.mrf.mxu0
      %v2091 = vadd.f32 0.0, %v2090
      %v2092 = vpop.f32.mrf.mxu0
      %v2093 = vpop.f32.mrf.mxu0
      %v2094 = vpop.f32.mrf.mxu0
      %2095 = vdwg.mxu0
      %v2096 = vadd.f32 %v1989, %v2091
      %v2097 = vld [vmem:[%s1883] sm:$0xf]
      %v2098 = vld [vmem:[%s1883 + $0x4] sm:$0x1]
      %v2099 = vld [vmem:[%s1099] sm:$0xf]
      %v2100 = vld [vmem:[%s1099 + $0x4] sm:$0xf]
      %v2101 = vld [vmem:[%s1099 + $0x8] sm:$0xf]
      %v2102 = vld [vmem:[%s1099 + $0xc] sm:$0xf]
      %v2103 = vld [vmem:[%s1099 + $0x10] sm:$0xf]
      %v2104 = vld [vmem:[%s1099 + $0x14] sm:$0xf]
      %v2105 = vld [vmem:[%s1099 + $0x18] sm:$0xf]
      %v2106 = vld [vmem:[%s1099 + $0x1c] sm:$0xf]
      %v2107 = vld [vmem:[%s1099 + $0x20] sm:$0xf]
      %v2108 = vld [vmem:[%s1099 + $0x24] sm:$0xf]
      %v2109 = vld [vmem:[%s1099 + $0x28] sm:$0xf]
      %v2110 = vld [vmem:[%s1099 + $0x2c] sm:$0xf]
      %v2111 = vld [vmem:[%s1099 + $0x30] sm:$0xf]
      %v2112 = vld [vmem:[%s1099 + $0x34] sm:$0xf]
      %v2113 = vld [vmem:[%s1099 + $0x38] sm:$0xf]
      %v2114 = vld [vmem:[%s1099 + $0x3c] sm:$0xf]
      %v2117 = vunpack.c.l.b16 %v2097
      %v2118 = vunpack.c.l.b16 %v2098
      %v2119 = vpack.c.b16 %v2118, %v2117
      %v2121 = vshrl.u32 %v2119, 16
      %v2123 = vshll.u32 %v2119, 16
      %v2125 = vrot.slane %v2123, 1
      %v2126 = vor.u32 %v2121, %v2125
      %v2144 = vunpack.c.l.b16 %v2099
      %v2145 = vunpack.c.l.b16 %v2100
      %v2146 = vunpack.c.l.b16 %v2101
      %v2147 = vunpack.c.l.b16 %v2102
      %v2148 = vunpack.c.l.b16 %v2103
      %v2149 = vunpack.c.l.b16 %v2104
      %v2150 = vunpack.c.l.b16 %v2105
      %v2151 = vunpack.c.l.b16 %v2106
      %v2152 = vunpack.c.l.b16 %v2107
      %v2153 = vunpack.c.l.b16 %v2108
      %v2154 = vunpack.c.l.b16 %v2109
      %v2155 = vunpack.c.l.b16 %v2110
      %v2156 = vunpack.c.l.b16 %v2111
      %v2157 = vunpack.c.l.b16 %v2112
      %v2158 = vunpack.c.l.b16 %v2113
      %v2159 = vunpack.c.l.b16 %v2114
      %v2160 = vpack.c.b16 %v2145, %v2144
      %v2161 = vpack.c.b16 %v2147, %v2146
      %v2162 = vpack.c.b16 %v2149, %v2148
      %v2163 = vpack.c.b16 %v2151, %v2150
      %v2164 = vpack.c.b16 %v2153, %v2152
      %v2165 = vpack.c.b16 %v2155, %v2154
      %v2166 = vpack.c.b16 %v2157, %v2156
      %v2167 = vpack.c.b16 %v2159, %v2158
      %2176 = vmatprep.subr.bf16.mxu0 0
      %2177 = vmatpush1.bf16.msra.mxu0 %v2167
      %2178 = vmatprep.subr.bf16.mxu0 0
      %2179 = vmatpush1.bf16.msra.mxu0 %v2166
      %2180 = vmatprep.subr.bf16.mxu0 0
      %2181 = vmatpush1.bf16.msra.mxu0 %v2165
      %2182 = vmatprep.subr.bf16.mxu0 0
      %2183 = vmatpush1.bf16.msra.mxu0 %v2164
      %2184 = vmatprep.subr.bf16.mxu0 0
      %2185 = vmatpush1.bf16.msra.mxu0 %v2163
      %2186 = vmatprep.subr.bf16.mxu0 0
      %2187 = vmatpush1.bf16.msra.mxu0 %v2162
      %2188 = vmatprep.subr.bf16.mxu0 0
      %2189 = vmatpush1.bf16.msra.mxu0 %v2161
      %2190 = vmatprep.subr.bf16.mxu0 0
      %2191 = vmatpush1.bf16.msra.mxu0 %v2160
      %2192 = vmatprep.subr.bf16.mxu0 0
      %2193 = vmatpush2.bf16.msra.mxu0 0
      %2194 = vmatprep.subr.bf16.mxu0 0
      %2195 = vmatpush2.bf16.msra.mxu0 0
      %2196 = vmatprep.subr.bf16.mxu0 0
      %2197 = vmatpush2.bf16.msra.mxu0 0
      %2198 = vmatprep.subr.bf16.mxu0 0
      %2199 = vmatpush2.bf16.msra.mxu0 0
      %2200 = vmatprep.subr.bf16.mxu0 0
      %2201 = vmatpush2.bf16.msra.mxu0 0
      %2202 = vmatprep.subr.bf16.mxu0 0
      %2203 = vmatpush2.bf16.msra.mxu0 0
      %2204 = vmatprep.subr.bf16.mxu0 0
      %2205 = vmatpush2.bf16.msra.mxu0 0
      %2206 = vmatprep.subr.bf16.mxu0 0
      %2207 = vmatpush2.bf16.msra.mxu0 0
      %2208 = vmatprep.mubr.bf16.mxu0 0
      %2209 = vmatmul.mubr.bf16.gmra.mxu0 %v2126
      %v2210 = vpop.f32.mrf.mxu0
      %v2211 = vadd.f32 0.0, %v2210
      %v2212 = vpop.f32.mrf.mxu0
      %v2213 = vpop.f32.mrf.mxu0
      %v2214 = vpop.f32.mrf.mxu0
      %2215 = vdwg.mxu0
      %v2216 = vadd.f32 %v2096, %v2211
      %2217 = vst [vmem:[#allocation2 + $0x8] sm:$0xff] %v2216
      %v2218 = vld [vmem:[%s1883] sm:$0xf]
      %v2219 = vld [vmem:[%s1] sm:$0xf]
      %v2220 = vld [vmem:[%s1 + $0x4] sm:$0xf]
      %v2221 = vld [vmem:[%s1 + $0x8] sm:$0xf]
      %v2222 = vld [vmem:[%s1 + $0xc] sm:$0xf]
      %v2223 = vld [vmem:[%s1 + $0x10] sm:$0xf]
      %v2224 = vld [vmem:[%s1 + $0x14] sm:$0xf]
      %v2225 = vld [vmem:[%s1 + $0x18] sm:$0xf]
      %v2226 = vld [vmem:[%s1 + $0x1c] sm:$0xf]
      %v2227 = vld [vmem:[%s1 + $0x20] sm:$0xf]
      %v2228 = vld [vmem:[%s1 + $0x24] sm:$0xf]
      %v2229 = vld [vmem:[%s1 + $0x28] sm:$0xf]
      %v2230 = vld [vmem:[%s1 + $0x2c] sm:$0xf]
      %v2231 = vld [vmem:[%s1 + $0x30] sm:$0xf]
      %v2232 = vld [vmem:[%s1 + $0x34] sm:$0xf]
      %v2233 = vld [vmem:[%s1 + $0x38] sm:$0xf]
      %v2234 = vld [vmem:[%s1 + $0x3c] sm:$0xf]
      %v2235 = vld [vmem:[%s1990] sm:$0xf]
      %v2236 = vld [vmem:[%s230] sm:$0xf]
      %v2237 = vld [vmem:[%s230 + $0x4] sm:$0xf]
      %v2238 = vld [vmem:[%s230 + $0x8] sm:$0xf]
      %v2239 = vld [vmem:[%s230 + $0xc] sm:$0xf]
      %v2240 = vld [vmem:[%s230 + $0x10] sm:$0xf]
      %v2241 = vld [vmem:[%s230 + $0x14] sm:$0xf]
      %v2242 = vld [vmem:[%s230 + $0x18] sm:$0xf]
      %v2243 = vld [vmem:[%s230 + $0x1c] sm:$0xf]
      %v2244 = vld [vmem:[%s230 + $0x20] sm:$0xf]
      %v2245 = vld [vmem:[%s230 + $0x24] sm:$0xf]
      %v2246 = vld [vmem:[%s230 + $0x28] sm:$0xf]
      %v2247 = vld [vmem:[%s230 + $0x2c] sm:$0xf]
      %v2248 = vld [vmem:[%s230 + $0x30] sm:$0xf]
      %v2249 = vld [vmem:[%s230 + $0x34] sm:$0xf]
      %v2250 = vld [vmem:[%s230 + $0x38] sm:$0xf]
      %v2251 = vld [vmem:[%s230 + $0x3c] sm:$0xf]
      %v2268 = vunpack.c.l.b16 %v2236
      %v2269 = vunpack.c.l.b16 %v2237
      %v2270 = vunpack.c.l.b16 %v2238
      %v2271 = vunpack.c.l.b16 %v2239
      %v2272 = vunpack.c.l.b16 %v2240
      %v2273 = vunpack.c.l.b16 %v2241
      %v2274 = vunpack.c.l.b16 %v2242
      %v2275 = vunpack.c.l.b16 %v2243
      %v2276 = vunpack.c.l.b16 %v2244
      %v2277 = vunpack.c.l.b16 %v2245
      %v2278 = vunpack.c.l.b16 %v2246
      %v2279 = vunpack.c.l.b16 %v2247
      %v2280 = vunpack.c.l.b16 %v2248
      %v2281 = vunpack.c.l.b16 %v2249
      %v2282 = vunpack.c.l.b16 %v2250
      %v2283 = vunpack.c.l.b16 %v2251
      %v2284 = vpack.c.b16 %v2269, %v2268
      %v2285 = vpack.c.b16 %v2271, %v2270
      %v2286 = vpack.c.b16 %v2273, %v2272
      %v2287 = vpack.c.b16 %v2275, %v2274
      %v2288 = vpack.c.b16 %v2277, %v2276
      %v2289 = vpack.c.b16 %v2279, %v2278
      %v2290 = vpack.c.b16 %v2281, %v2280
      %v2291 = vpack.c.b16 %v2283, %v2282
      %2300 = vmatprep.subr.bf16.mxu0 0
      %2301 = vmatpush1.bf16.msra.mxu0 %v2291
      %2302 = vmatprep.subr.bf16.mxu0 0
      %2303 = vmatpush1.bf16.msra.mxu0 %v2290
      %2304 = vmatprep.subr.bf16.mxu0 0
      %2305 = vmatpush1.bf16.msra.mxu0 %v2289
      %2306 = vmatprep.subr.bf16.mxu0 0
      %2307 = vmatpush1.bf16.msra.mxu0 %v2288
      %2308 = vmatprep.subr.bf16.mxu0 0
      %2309 = vmatpush1.bf16.msra.mxu0 %v2287
      %2310 = vmatprep.subr.bf16.mxu0 0
      %2311 = vmatpush1.bf16.msra.mxu0 %v2286
      %2312 = vmatprep.subr.bf16.mxu0 0
      %2313 = vmatpush1.bf16.msra.mxu0 %v2285
      %2314 = vmatprep.subr.bf16.mxu0 0
      %2315 = vmatpush1.bf16.msra.mxu0 %v2284
      %2316 = vmatprep.subr.bf16.mxu0 0
      %2317 = vmatpush2.bf16.msra.mxu0 0
      %2318 = vmatprep.subr.bf16.mxu0 0
      %2319 = vmatpush2.bf16.msra.mxu0 0
      %2320 = vmatprep.subr.bf16.mxu0 0
      %2321 = vmatpush2.bf16.msra.mxu0 0
      %2322 = vmatprep.subr.bf16.mxu0 0
      %2323 = vmatpush2.bf16.msra.mxu0 0
      %2324 = vmatprep.subr.bf16.mxu0 0
      %2325 = vmatpush2.bf16.msra.mxu0 0
      %2326 = vmatprep.subr.bf16.mxu0 0
      %2327 = vmatpush2.bf16.msra.mxu0 0
      %2328 = vmatprep.subr.bf16.mxu0 0
      %2329 = vmatpush2.bf16.msra.mxu0 0
      %2330 = vmatprep.subr.bf16.mxu0 0
      %2331 = vmatpush2.bf16.msra.mxu0 0
      %2332 = vmatprep.mubr.bf16.mxu0 0
      %2333 = vmatmul.mubr.bf16.gmra.mxu0 %v2235
      %v2334 = vpop.f32.mrf.mxu0
      %v2335 = vadd.f32 0.0, %v2334
      %v2336 = vpop.f32.mrf.mxu0
      %v2337 = vpop.f32.mrf.mxu0
      %v2338 = vpop.f32.mrf.mxu0
      %2339 = vdwg.mxu0
      %v2356 = vunpack.c.l.b16 %v2219
      %v2357 = vunpack.c.l.b16 %v2220
      %v2358 = vunpack.c.l.b16 %v2221
      %v2359 = vunpack.c.l.b16 %v2222
      %v2360 = vunpack.c.l.b16 %v2223
      %v2361 = vunpack.c.l.b16 %v2224
      %v2362 = vunpack.c.l.b16 %v2225
      %v2363 = vunpack.c.l.b16 %v2226
      %v2364 = vunpack.c.l.b16 %v2227
      %v2365 = vunpack.c.l.b16 %v2228
      %v2366 = vunpack.c.l.b16 %v2229
      %v2367 = vunpack.c.l.b16 %v2230
      %v2368 = vunpack.c.l.b16 %v2231
      %v2369 = vunpack.c.l.b16 %v2232
      %v2370 = vunpack.c.l.b16 %v2233
      %v2371 = vunpack.c.l.b16 %v2234
      %v2372 = vpack.c.b16 %v2357, %v2356
      %v2373 = vpack.c.b16 %v2359, %v2358
      %v2374 = vpack.c.b16 %v2361, %v2360
      %v2375 = vpack.c.b16 %v2363, %v2362
      %v2376 = vpack.c.b16 %v2365, %v2364
      %v2377 = vpack.c.b16 %v2367, %v2366
      %v2378 = vpack.c.b16 %v2369, %v2368
      %v2379 = vpack.c.b16 %v2371, %v2370
      %2388 = vmatprep.subr.bf16.mxu0 0
      %2389 = vmatpush1.bf16.msra.mxu0 %v2379
      %2390 = vmatprep.subr.bf16.mxu0 0
      %2391 = vmatpush1.bf16.msra.mxu0 %v2378
      %2392 = vmatprep.subr.bf16.mxu0 0
      %2393 = vmatpush1.bf16.msra.mxu0 %v2377
      %2394 = vmatprep.subr.bf16.mxu0 0
      %2395 = vmatpush1.bf16.msra.mxu0 %v2376
      %2396 = vmatprep.subr.bf16.mxu0 0
      %2397 = vmatpush1.bf16.msra.mxu0 %v2375
      %2398 = vmatprep.subr.bf16.mxu0 0
      %2399 = vmatpush1.bf16.msra.mxu0 %v2374
      %2400 = vmatprep.subr.bf16.mxu0 0
      %2401 = vmatpush1.bf16.msra.mxu0 %v2373
      %2402 = vmatprep.subr.bf16.mxu0 0
      %2403 = vmatpush1.bf16.msra.mxu0 %v2372
      %2404 = vmatprep.subr.bf16.mxu0 0
      %2405 = vmatpush2.bf16.msra.mxu0 0
      %2406 = vmatprep.subr.bf16.mxu0 0
      %2407 = vmatpush2.bf16.msra.mxu0 0
      %2408 = vmatprep.subr.bf16.mxu0 0
      %2409 = vmatpush2.bf16.msra.mxu0 0
      %2410 = vmatprep.subr.bf16.mxu0 0
      %2411 = vmatpush2.bf16.msra.mxu0 0
      %2412 = vmatprep.subr.bf16.mxu0 0
      %2413 = vmatpush2.bf16.msra.mxu0 0
      %2414 = vmatprep.subr.bf16.mxu0 0
      %2415 = vmatpush2.bf16.msra.mxu0 0
      %2416 = vmatprep.subr.bf16.mxu0 0
      %2417 = vmatpush2.bf16.msra.mxu0 0
      %2418 = vmatprep.subr.bf16.mxu0 0
      %2419 = vmatpush2.bf16.msra.mxu0 0
      %2420 = vmatprep.mubr.bf16.mxu0 0
      %2421 = vmatmul.mubr.bf16.gmra.mxu0 %v2218
      %v2422 = vpop.f32.mrf.mxu0
      %v2423 = vadd.f32 %v2335, %v2422
      %v2424 = vpop.f32.mrf.mxu0
      %v2425 = vpop.f32.mrf.mxu0
      %v2426 = vpop.f32.mrf.mxu0
      %2427 = vdwg.mxu0
      %v2428 = vld [vmem:[%s1883] sm:$0xf]
      %v2429 = vld [vmem:[%s1883 + $0x4] sm:$0x1]
      %v2430 = vld [vmem:[%s425] sm:$0xf]
      %v2431 = vld [vmem:[%s425 + $0x4] sm:$0xf]
      %v2432 = vld [vmem:[%s425 + $0x8] sm:$0xf]
      %v2433 = vld [vmem:[%s425 + $0xc] sm:$0xf]
      %v2434 = vld [vmem:[%s425 + $0x10] sm:$0xf]
      %v2435 = vld [vmem:[%s425 + $0x14] sm:$0xf]
      %v2436 = vld [vmem:[%s425 + $0x18] sm:$0xf]
      %v2437 = vld [vmem:[%s425 + $0x1c] sm:$0xf]
      %v2438 = vld [vmem:[%s425 + $0x20] sm:$0xf]
      %v2439 = vld [vmem:[%s425 + $0x24] sm:$0xf]
      %v2440 = vld [vmem:[%s425 + $0x28] sm:$0xf]
      %v2441 = vld [vmem:[%s425 + $0x2c] sm:$0xf]
      %v2442 = vld [vmem:[%s425 + $0x30] sm:$0xf]
      %v2443 = vld [vmem:[%s425 + $0x34] sm:$0xf]
      %v2444 = vld [vmem:[%s425 + $0x38] sm:$0xf]
      %v2445 = vld [vmem:[%s425 + $0x3c] sm:$0xf]
      %v2448 = vunpack.c.l.b16 %v2428
      %v2449 = vunpack.c.l.b16 %v2429
      %v2450 = vpack.c.b16 %v2449, %v2448
      %v2452 = vshrl.u32 %v2450, 16
      %v2454 = vshll.u32 %v2450, 16
      %v2456 = vrot.slane %v2454, 1
      %v2457 = vor.u32 %v2452, %v2456
      %v2475 = vunpack.c.l.b16 %v2430
      %v2476 = vunpack.c.l.b16 %v2431
      %v2477 = vunpack.c.l.b16 %v2432
      %v2478 = vunpack.c.l.b16 %v2433
      %v2479 = vunpack.c.l.b16 %v2434
      %v2480 = vunpack.c.l.b16 %v2435
      %v2481 = vunpack.c.l.b16 %v2436
      %v2482 = vunpack.c.l.b16 %v2437
      %v2483 = vunpack.c.l.b16 %v2438
      %v2484 = vunpack.c.l.b16 %v2439
      %v2485 = vunpack.c.l.b16 %v2440
      %v2486 = vunpack.c.l.b16 %v2441
      %v2487 = vunpack.c.l.b16 %v2442
      %v2488 = vunpack.c.l.b16 %v2443
      %v2489 = vunpack.c.l.b16 %v2444
      %v2490 = vunpack.c.l.b16 %v2445
      %v2491 = vpack.c.b16 %v2476, %v2475
      %v2492 = vpack.c.b16 %v2478, %v2477
      %v2493 = vpack.c.b16 %v2480, %v2479
      %v2494 = vpack.c.b16 %v2482, %v2481
      %v2495 = vpack.c.b16 %v2484, %v2483
      %v2496 = vpack.c.b16 %v2486, %v2485
      %v2497 = vpack.c.b16 %v2488, %v2487
      %v2498 = vpack.c.b16 %v2490, %v2489
      %2507 = vmatprep.subr.bf16.mxu0 0
      %2508 = vmatpush1.bf16.msra.mxu0 %v2498
      %2509 = vmatprep.subr.bf16.mxu0 0
      %2510 = vmatpush1.bf16.msra.mxu0 %v2497
      %2511 = vmatprep.subr.bf16.mxu0 0
      %2512 = vmatpush1.bf16.msra.mxu0 %v2496
      %2513 = vmatprep.subr.bf16.mxu0 0
      %2514 = vmatpush1.bf16.msra.mxu0 %v2495
      %2515 = vmatprep.subr.bf16.mxu0 0
      %2516 = vmatpush1.bf16.msra.mxu0 %v2494
      %2517 = vmatprep.subr.bf16.mxu0 0
      %2518 = vmatpush1.bf16.msra.mxu0 %v2493
      %2519 = vmatprep.subr.bf16.mxu0 0
      %2520 = vmatpush1.bf16.msra.mxu0 %v2492
      %2521 = vmatprep.subr.bf16.mxu0 0
      %2522 = vmatpush1.bf16.msra.mxu0 %v2491
      %2523 = vmatprep.subr.bf16.mxu0 0
      %2524 = vmatpush2.bf16.msra.mxu0 0
      %2525 = vmatprep.subr.bf16.mxu0 0
      %2526 = vmatpush2.bf16.msra.mxu0 0
      %2527 = vmatprep.subr.bf16.mxu0 0
      %2528 = vmatpush2.bf16.msra.mxu0 0
      %2529 = vmatprep.subr.bf16.mxu0 0
      %2530 = vmatpush2.bf16.msra.mxu0 0
      %2531 = vmatprep.subr.bf16.mxu0 0
      %2532 = vmatpush2.bf16.msra.mxu0 0
      %2533 = vmatprep.subr.bf16.mxu0 0
      %2534 = vmatpush2.bf16.msra.mxu0 0
      %2535 = vmatprep.subr.bf16.mxu0 0
      %2536 = vmatpush2.bf16.msra.mxu0 0
      %2537 = vmatprep.subr.bf16.mxu0 0
      %2538 = vmatpush2.bf16.msra.mxu0 0
      %2539 = vmatprep.mubr.bf16.mxu0 0
      %2540 = vmatmul.mubr.bf16.gmra.mxu0 %v2457
      %v2541 = vpop.f32.mrf.mxu0
      %v2542 = vadd.f32 0.0, %v2541
      %v2543 = vpop.f32.mrf.mxu0
      %v2544 = vpop.f32.mrf.mxu0
      %v2545 = vpop.f32.mrf.mxu0
      %2546 = vdwg.mxu0
      %v2547 = vadd.f32 %v2423, %v2542
      %s2548 = scalar_lea.vmem %s204, 160
      %v2549 = vld [vmem:[%s2548] sm:$0xf]
      %v2550 = vld [vmem:[%s546] sm:$0xf]
      %v2551 = vld [vmem:[%s546 + $0x4] sm:$0xf]
      %v2552 = vld [vmem:[%s546 + $0x8] sm:$0xf]
      %v2553 = vld [vmem:[%s546 + $0xc] sm:$0xf]
      %v2554 = vld [vmem:[%s546 + $0x10] sm:$0xf]
      %v2555 = vld [vmem:[%s546 + $0x14] sm:$0xf]
      %v2556 = vld [vmem:[%s546 + $0x18] sm:$0xf]
      %v2557 = vld [vmem:[%s546 + $0x1c] sm:$0xf]
      %v2558 = vld [vmem:[%s546 + $0x20] sm:$0xf]
      %v2559 = vld [vmem:[%s546 + $0x24] sm:$0xf]
      %v2560 = vld [vmem:[%s546 + $0x28] sm:$0xf]
      %v2561 = vld [vmem:[%s546 + $0x2c] sm:$0xf]
      %v2562 = vld [vmem:[%s546 + $0x30] sm:$0xf]
      %v2563 = vld [vmem:[%s546 + $0x34] sm:$0xf]
      %v2564 = vld [vmem:[%s546 + $0x38] sm:$0xf]
      %v2565 = vld [vmem:[%s546 + $0x3c] sm:$0xf]
      %v2582 = vunpack.c.l.b16 %v2550
      %v2583 = vunpack.c.l.b16 %v2551
      %v2584 = vunpack.c.l.b16 %v2552
      %v2585 = vunpack.c.l.b16 %v2553
      %v2586 = vunpack.c.l.b16 %v2554
      %v2587 = vunpack.c.l.b16 %v2555
      %v2588 = vunpack.c.l.b16 %v2556
      %v2589 = vunpack.c.l.b16 %v2557
      %v2590 = vunpack.c.l.b16 %v2558
      %v2591 = vunpack.c.l.b16 %v2559
      %v2592 = vunpack.c.l.b16 %v2560
      %v2593 = vunpack.c.l.b16 %v2561
      %v2594 = vunpack.c.l.b16 %v2562
      %v2595 = vunpack.c.l.b16 %v2563
      %v2596 = vunpack.c.l.b16 %v2564
      %v2597 = vunpack.c.l.b16 %v2565
      %v2598 = vpack.c.b16 %v2583, %v2582
      %v2599 = vpack.c.b16 %v2585, %v2584
      %v2600 = vpack.c.b16 %v2587, %v2586
      %v2601 = vpack.c.b16 %v2589, %v2588
      %v2602 = vpack.c.b16 %v2591, %v2590
      %v2603 = vpack.c.b16 %v2593, %v2592
      %v2604 = vpack.c.b16 %v2595, %v2594
      %v2605 = vpack.c.b16 %v2597, %v2596
      %2614 = vmatprep.subr.bf16.mxu0 0
      %2615 = vmatpush1.bf16.msra.mxu0 %v2605
      %2616 = vmatprep.subr.bf16.mxu0 0
      %2617 = vmatpush1.bf16.msra.mxu0 %v2604
      %2618 = vmatprep.subr.bf16.mxu0 0
      %2619 = vmatpush1.bf16.msra.mxu0 %v2603
      %2620 = vmatprep.subr.bf16.mxu0 0
      %2621 = vmatpush1.bf16.msra.mxu0 %v2602
      %2622 = vmatprep.subr.bf16.mxu0 0
      %2623 = vmatpush1.bf16.msra.mxu0 %v2601
      %2624 = vmatprep.subr.bf16.mxu0 0
      %2625 = vmatpush1.bf16.msra.mxu0 %v2600
      %2626 = vmatprep.subr.bf16.mxu0 0
      %2627 = vmatpush1.bf16.msra.mxu0 %v2599
      %2628 = vmatprep.subr.bf16.mxu0 0
      %2629 = vmatpush1.bf16.msra.mxu0 %v2598
      %2630 = vmatprep.subr.bf16.mxu0 0
      %2631 = vmatpush2.bf16.msra.mxu0 0
      %2632 = vmatprep.subr.bf16.mxu0 0
      %2633 = vmatpush2.bf16.msra.mxu0 0
      %2634 = vmatprep.subr.bf16.mxu0 0
      %2635 = vmatpush2.bf16.msra.mxu0 0
      %2636 = vmatprep.subr.bf16.mxu0 0
      %2637 = vmatpush2.bf16.msra.mxu0 0
      %2638 = vmatprep.subr.bf16.mxu0 0
      %2639 = vmatpush2.bf16.msra.mxu0 0
      %2640 = vmatprep.subr.bf16.mxu0 0
      %2641 = vmatpush2.bf16.msra.mxu0 0
      %2642 = vmatprep.subr.bf16.mxu0 0
      %2643 = vmatpush2.bf16.msra.mxu0 0
      %2644 = vmatprep.subr.bf16.mxu0 0
      %2645 = vmatpush2.bf16.msra.mxu0 0
      %2646 = vmatprep.mubr.bf16.mxu0 0
      %2647 = vmatmul.mubr.bf16.gmra.mxu0 %v2549
      %v2648 = vpop.f32.mrf.mxu0
      %v2649 = vadd.f32 0.0, %v2648
      %v2650 = vpop.f32.mrf.mxu0
      %v2651 = vpop.f32.mrf.mxu0
      %v2652 = vpop.f32.mrf.mxu0
      %2653 = vdwg.mxu0
      %v2654 = vadd.f32 %v2547, %v2649
      %s2655 = scalar_lea.vmem %s204, 232
      %v2656 = vld [vmem:[%s2655] sm:$0xf]
      %v2657 = vld [vmem:[%s654] sm:$0xf]
      %v2658 = vld [vmem:[%s654 + $0x4] sm:$0xf]
      %v2659 = vld [vmem:[%s654 + $0x8] sm:$0xf]
      %v2660 = vld [vmem:[%s654 + $0xc] sm:$0xf]
      %v2661 = vld [vmem:[%s654 + $0x10] sm:$0xf]
      %v2662 = vld [vmem:[%s654 + $0x14] sm:$0xf]
      %v2663 = vld [vmem:[%s654 + $0x18] sm:$0xf]
      %v2664 = vld [vmem:[%s654 + $0x1c] sm:$0xf]
      %v2665 = vld [vmem:[%s654 + $0x20] sm:$0xf]
      %v2666 = vld [vmem:[%s654 + $0x24] sm:$0xf]
      %v2667 = vld [vmem:[%s654 + $0x28] sm:$0xf]
      %v2668 = vld [vmem:[%s654 + $0x2c] sm:$0xf]
      %v2669 = vld [vmem:[%s654 + $0x30] sm:$0xf]
      %v2670 = vld [vmem:[%s654 + $0x34] sm:$0xf]
      %v2671 = vld [vmem:[%s654 + $0x38] sm:$0xf]
      %v2672 = vld [vmem:[%s654 + $0x3c] sm:$0xf]
      %v2689 = vunpack.c.l.b16 %v2657
      %v2690 = vunpack.c.l.b16 %v2658
      %v2691 = vunpack.c.l.b16 %v2659
      %v2692 = vunpack.c.l.b16 %v2660
      %v2693 = vunpack.c.l.b16 %v2661
      %v2694 = vunpack.c.l.b16 %v2662
      %v2695 = vunpack.c.l.b16 %v2663
      %v2696 = vunpack.c.l.b16 %v2664
      %v2697 = vunpack.c.l.b16 %v2665
      %v2698 = vunpack.c.l.b16 %v2666
      %v2699 = vunpack.c.l.b16 %v2667
      %v2700 = vunpack.c.l.b16 %v2668
      %v2701 = vunpack.c.l.b16 %v2669
      %v2702 = vunpack.c.l.b16 %v2670
      %v2703 = vunpack.c.l.b16 %v2671
      %v2704 = vunpack.c.l.b16 %v2672
      %v2705 = vpack.c.b16 %v2690, %v2689
      %v2706 = vpack.c.b16 %v2692, %v2691
      %v2707 = vpack.c.b16 %v2694, %v2693
      %v2708 = vpack.c.b16 %v2696, %v2695
      %v2709 = vpack.c.b16 %v2698, %v2697
      %v2710 = vpack.c.b16 %v2700, %v2699
      %v2711 = vpack.c.b16 %v2702, %v2701
      %v2712 = vpack.c.b16 %v2704, %v2703
      %2721 = vmatprep.subr.bf16.mxu0 0
      %2722 = vmatpush1.bf16.msra.mxu0 %v2712
      %2723 = vmatprep.subr.bf16.mxu0 0
      %2724 = vmatpush1.bf16.msra.mxu0 %v2711
      %2725 = vmatprep.subr.bf16.mxu0 0
      %2726 = vmatpush1.bf16.msra.mxu0 %v2710
      %2727 = vmatprep.subr.bf16.mxu0 0
      %2728 = vmatpush1.bf16.msra.mxu0 %v2709
      %2729 = vmatprep.subr.bf16.mxu0 0
      %2730 = vmatpush1.bf16.msra.mxu0 %v2708
      %2731 = vmatprep.subr.bf16.mxu0 0
      %2732 = vmatpush1.bf16.msra.mxu0 %v2707
      %2733 = vmatprep.subr.bf16.mxu0 0
      %2734 = vmatpush1.bf16.msra.mxu0 %v2706
      %2735 = vmatprep.subr.bf16.mxu0 0
      %2736 = vmatpush1.bf16.msra.mxu0 %v2705
      %2737 = vmatprep.subr.bf16.mxu0 0
      %2738 = vmatpush2.bf16.msra.mxu0 0
      %2739 = vmatprep.subr.bf16.mxu0 0
      %2740 = vmatpush2.bf16.msra.mxu0 0
      %2741 = vmatprep.subr.bf16.mxu0 0
      %2742 = vmatpush2.bf16.msra.mxu0 0
      %2743 = vmatprep.subr.bf16.mxu0 0
      %2744 = vmatpush2.bf16.msra.mxu0 0
      %2745 = vmatprep.subr.bf16.mxu0 0
      %2746 = vmatpush2.bf16.msra.mxu0 0
      %2747 = vmatprep.subr.bf16.mxu0 0
      %2748 = vmatpush2.bf16.msra.mxu0 0
      %2749 = vmatprep.subr.bf16.mxu0 0
      %2750 = vmatpush2.bf16.msra.mxu0 0
      %2751 = vmatprep.subr.bf16.mxu0 0
      %2752 = vmatpush2.bf16.msra.mxu0 0
      %2753 = vmatprep.mubr.bf16.mxu0 0
      %2754 = vmatmul.mubr.bf16.gmra.mxu0 %v2656
      %v2755 = vpop.f32.mrf.mxu0
      %v2756 = vadd.f32 0.0, %v2755
      %v2757 = vpop.f32.mrf.mxu0
      %v2758 = vpop.f32.mrf.mxu0
      %v2759 = vpop.f32.mrf.mxu0
      %2760 = vdwg.mxu0
      %v2761 = vadd.f32 %v2654, %v2756
      %v2762 = vld [vmem:[%s2548] sm:$0xf]
      %v2763 = vld [vmem:[%s2548 + $0x4] sm:$0x1]
      %v2764 = vld [vmem:[%s762] sm:$0xf]
      %v2765 = vld [vmem:[%s762 + $0x4] sm:$0xf]
      %v2766 = vld [vmem:[%s762 + $0x8] sm:$0xf]
      %v2767 = vld [vmem:[%s762 + $0xc] sm:$0xf]
      %v2768 = vld [vmem:[%s762 + $0x10] sm:$0xf]
      %v2769 = vld [vmem:[%s762 + $0x14] sm:$0xf]
      %v2770 = vld [vmem:[%s762 + $0x18] sm:$0xf]
      %v2771 = vld [vmem:[%s762 + $0x1c] sm:$0xf]
      %v2772 = vld [vmem:[%s762 + $0x20] sm:$0xf]
      %v2773 = vld [vmem:[%s762 + $0x24] sm:$0xf]
      %v2774 = vld [vmem:[%s762 + $0x28] sm:$0xf]
      %v2775 = vld [vmem:[%s762 + $0x2c] sm:$0xf]
      %v2776 = vld [vmem:[%s762 + $0x30] sm:$0xf]
      %v2777 = vld [vmem:[%s762 + $0x34] sm:$0xf]
      %v2778 = vld [vmem:[%s762 + $0x38] sm:$0xf]
      %v2779 = vld [vmem:[%s762 + $0x3c] sm:$0xf]
      %v2782 = vunpack.c.l.b16 %v2762
      %v2783 = vunpack.c.l.b16 %v2763
      %v2784 = vpack.c.b16 %v2783, %v2782
      %v2786 = vshrl.u32 %v2784, 16
      %v2788 = vshll.u32 %v2784, 16
      %v2790 = vrot.slane %v2788, 1
      %v2791 = vor.u32 %v2786, %v2790
      %v2809 = vunpack.c.l.b16 %v2764
      %v2810 = vunpack.c.l.b16 %v2765
      %v2811 = vunpack.c.l.b16 %v2766
      %v2812 = vunpack.c.l.b16 %v2767
      %v2813 = vunpack.c.l.b16 %v2768
      %v2814 = vunpack.c.l.b16 %v2769
      %v2815 = vunpack.c.l.b16 %v2770
      %v2816 = vunpack.c.l.b16 %v2771
      %v2817 = vunpack.c.l.b16 %v2772
      %v2818 = vunpack.c.l.b16 %v2773
      %v2819 = vunpack.c.l.b16 %v2774
      %v2820 = vunpack.c.l.b16 %v2775
      %v2821 = vunpack.c.l.b16 %v2776
      %v2822 = vunpack.c.l.b16 %v2777
      %v2823 = vunpack.c.l.b16 %v2778
      %v2824 = vunpack.c.l.b16 %v2779
      %v2825 = vpack.c.b16 %v2810, %v2809
      %v2826 = vpack.c.b16 %v2812, %v2811
      %v2827 = vpack.c.b16 %v2814, %v2813
      %v2828 = vpack.c.b16 %v2816, %v2815
      %v2829 = vpack.c.b16 %v2818, %v2817
      %v2830 = vpack.c.b16 %v2820, %v2819
      %v2831 = vpack.c.b16 %v2822, %v2821
      %v2832 = vpack.c.b16 %v2824, %v2823
      %2841 = vmatprep.subr.bf16.mxu0 0
      %2842 = vmatpush1.bf16.msra.mxu0 %v2832
      %2843 = vmatprep.subr.bf16.mxu0 0
      %2844 = vmatpush1.bf16.msra.mxu0 %v2831
      %2845 = vmatprep.subr.bf16.mxu0 0
      %2846 = vmatpush1.bf16.msra.mxu0 %v2830
      %2847 = vmatprep.subr.bf16.mxu0 0
      %2848 = vmatpush1.bf16.msra.mxu0 %v2829
      %2849 = vmatprep.subr.bf16.mxu0 0
      %2850 = vmatpush1.bf16.msra.mxu0 %v2828
      %2851 = vmatprep.subr.bf16.mxu0 0
      %2852 = vmatpush1.bf16.msra.mxu0 %v2827
      %2853 = vmatprep.subr.bf16.mxu0 0
      %2854 = vmatpush1.bf16.msra.mxu0 %v2826
      %2855 = vmatprep.subr.bf16.mxu0 0
      %2856 = vmatpush1.bf16.msra.mxu0 %v2825
      %2857 = vmatprep.subr.bf16.mxu0 0
      %2858 = vmatpush2.bf16.msra.mxu0 0
      %2859 = vmatprep.subr.bf16.mxu0 0
      %2860 = vmatpush2.bf16.msra.mxu0 0
      %2861 = vmatprep.subr.bf16.mxu0 0
      %2862 = vmatpush2.bf16.msra.mxu0 0
      %2863 = vmatprep.subr.bf16.mxu0 0
      %2864 = vmatpush2.bf16.msra.mxu0 0
      %2865 = vmatprep.subr.bf16.mxu0 0
      %2866 = vmatpush2.bf16.msra.mxu0 0
      %2867 = vmatprep.subr.bf16.mxu0 0
      %2868 = vmatpush2.bf16.msra.mxu0 0
      %2869 = vmatprep.subr.bf16.mxu0 0
      %2870 = vmatpush2.bf16.msra.mxu0 0
      %2871 = vmatprep.subr.bf16.mxu0 0
      %2872 = vmatpush2.bf16.msra.mxu0 0
      %2873 = vmatprep.mubr.bf16.mxu0 0
      %2874 = vmatmul.mubr.bf16.gmra.mxu0 %v2791
      %v2875 = vpop.f32.mrf.mxu0
      %v2876 = vadd.f32 0.0, %v2875
      %v2877 = vpop.f32.mrf.mxu0
      %v2878 = vpop.f32.mrf.mxu0
      %v2879 = vpop.f32.mrf.mxu0
      %2880 = vdwg.mxu0
      %v2881 = vadd.f32 %v2761, %v2876
      %s2882 = scalar_lea.vmem %s204, 24
      %v2883 = vld [vmem:[%s2882] sm:$0xf]
      %v2884 = vld [vmem:[%s883] sm:$0xf]
      %v2885 = vld [vmem:[%s883 + $0x4] sm:$0xf]
      %v2886 = vld [vmem:[%s883 + $0x8] sm:$0xf]
      %v2887 = vld [vmem:[%s883 + $0xc] sm:$0xf]
      %v2888 = vld [vmem:[%s883 + $0x10] sm:$0xf]
      %v2889 = vld [vmem:[%s883 + $0x14] sm:$0xf]
      %v2890 = vld [vmem:[%s883 + $0x18] sm:$0xf]
      %v2891 = vld [vmem:[%s883 + $0x1c] sm:$0xf]
      %v2892 = vld [vmem:[%s883 + $0x20] sm:$0xf]
      %v2893 = vld [vmem:[%s883 + $0x24] sm:$0xf]
      %v2894 = vld [vmem:[%s883 + $0x28] sm:$0xf]
      %v2895 = vld [vmem:[%s883 + $0x2c] sm:$0xf]
      %v2896 = vld [vmem:[%s883 + $0x30] sm:$0xf]
      %v2897 = vld [vmem:[%s883 + $0x34] sm:$0xf]
      %v2898 = vld [vmem:[%s883 + $0x38] sm:$0xf]
      %v2899 = vld [vmem:[%s883 + $0x3c] sm:$0xf]
      %v2916 = vunpack.c.l.b16 %v2884
      %v2917 = vunpack.c.l.b16 %v2885
      %v2918 = vunpack.c.l.b16 %v2886
      %v2919 = vunpack.c.l.b16 %v2887
      %v2920 = vunpack.c.l.b16 %v2888
      %v2921 = vunpack.c.l.b16 %v2889
      %v2922 = vunpack.c.l.b16 %v2890
      %v2923 = vunpack.c.l.b16 %v2891
      %v2924 = vunpack.c.l.b16 %v2892
      %v2925 = vunpack.c.l.b16 %v2893
      %v2926 = vunpack.c.l.b16 %v2894
      %v2927 = vunpack.c.l.b16 %v2895
      %v2928 = vunpack.c.l.b16 %v2896
      %v2929 = vunpack.c.l.b16 %v2897
      %v2930 = vunpack.c.l.b16 %v2898
      %v2931 = vunpack.c.l.b16 %v2899
      %v2932 = vpack.c.b16 %v2917, %v2916
      %v2933 = vpack.c.b16 %v2919, %v2918
      %v2934 = vpack.c.b16 %v2921, %v2920
      %v2935 = vpack.c.b16 %v2923, %v2922
      %v2936 = vpack.c.b16 %v2925, %v2924
      %v2937 = vpack.c.b16 %v2927, %v2926
      %v2938 = vpack.c.b16 %v2929, %v2928
      %v2939 = vpack.c.b16 %v2931, %v2930
      %2948 = vmatprep.subr.bf16.mxu0 0
      %2949 = vmatpush1.bf16.msra.mxu0 %v2939
      %2950 = vmatprep.subr.bf16.mxu0 0
      %2951 = vmatpush1.bf16.msra.mxu0 %v2938
      %2952 = vmatprep.subr.bf16.mxu0 0
      %2953 = vmatpush1.bf16.msra.mxu0 %v2937
      %2954 = vmatprep.subr.bf16.mxu0 0
      %2955 = vmatpush1.bf16.msra.mxu0 %v2936
      %2956 = vmatprep.subr.bf16.mxu0 0
      %2957 = vmatpush1.bf16.msra.mxu0 %v2935
      %2958 = vmatprep.subr.bf16.mxu0 0
      %2959 = vmatpush1.bf16.msra.mxu0 %v2934
      %2960 = vmatprep.subr.bf16.mxu0 0
      %2961 = vmatpush1.bf16.msra.mxu0 %v2933
      %2962 = vmatprep.subr.bf16.mxu0 0
      %2963 = vmatpush1.bf16.msra.mxu0 %v2932
      %2964 = vmatprep.subr.bf16.mxu0 0
      %2965 = vmatpush2.bf16.msra.mxu0 0
      %2966 = vmatprep.subr.bf16.mxu0 0
      %2967 = vmatpush2.bf16.msra.mxu0 0
      %2968 = vmatprep.subr.bf16.mxu0 0
      %2969 = vmatpush2.bf16.msra.mxu0 0
      %2970 = vmatprep.subr.bf16.mxu0 0
      %2971 = vmatpush2.bf16.msra.mxu0 0
      %2972 = vmatprep.subr.bf16.mxu0 0
      %2973 = vmatpush2.bf16.msra.mxu0 0
      %2974 = vmatprep.subr.bf16.mxu0 0
      %2975 = vmatpush2.bf16.msra.mxu0 0
      %2976 = vmatprep.subr.bf16.mxu0 0
      %2977 = vmatpush2.bf16.msra.mxu0 0
      %2978 = vmatprep.subr.bf16.mxu0 0
      %2979 = vmatpush2.bf16.msra.mxu0 0
      %2980 = vmatprep.mubr.bf16.mxu0 0
      %2981 = vmatmul.mubr.bf16.gmra.mxu0 %v2883
      %v2982 = vpop.f32.mrf.mxu0
      %v2983 = vadd.f32 0.0, %v2982
      %v2984 = vpop.f32.mrf.mxu0
      %v2985 = vpop.f32.mrf.mxu0
      %v2986 = vpop.f32.mrf.mxu0
      %2987 = vdwg.mxu0
      %v2988 = vadd.f32 %v2881, %v2983
      %s2989 = scalar_lea.vmem %s204, 96
      %v2990 = vld [vmem:[%s2989] sm:$0xf]
      %v2991 = vld [vmem:[%s991] sm:$0xf]
      %v2992 = vld [vmem:[%s991 + $0x4] sm:$0xf]
      %v2993 = vld [vmem:[%s991 + $0x8] sm:$0xf]
      %v2994 = vld [vmem:[%s991 + $0xc] sm:$0xf]
      %v2995 = vld [vmem:[%s991 + $0x10] sm:$0xf]
      %v2996 = vld [vmem:[%s991 + $0x14] sm:$0xf]
      %v2997 = vld [vmem:[%s991 + $0x18] sm:$0xf]
      %v2998 = vld [vmem:[%s991 + $0x1c] sm:$0xf]
      %v2999 = vld [vmem:[%s991 + $0x20] sm:$0xf]
      %v3000 = vld [vmem:[%s991 + $0x24] sm:$0xf]
      %v3001 = vld [vmem:[%s991 + $0x28] sm:$0xf]
      %v3002 = vld [vmem:[%s991 + $0x2c] sm:$0xf]
      %v3003 = vld [vmem:[%s991 + $0x30] sm:$0xf]
      %v3004 = vld [vmem:[%s991 + $0x34] sm:$0xf]
      %v3005 = vld [vmem:[%s991 + $0x38] sm:$0xf]
      %v3006 = vld [vmem:[%s991 + $0x3c] sm:$0xf]
      %v3023 = vunpack.c.l.b16 %v2991
      %v3024 = vunpack.c.l.b16 %v2992
      %v3025 = vunpack.c.l.b16 %v2993
      %v3026 = vunpack.c.l.b16 %v2994
      %v3027 = vunpack.c.l.b16 %v2995
      %v3028 = vunpack.c.l.b16 %v2996
      %v3029 = vunpack.c.l.b16 %v2997
      %v3030 = vunpack.c.l.b16 %v2998
      %v3031 = vunpack.c.l.b16 %v2999
      %v3032 = vunpack.c.l.b16 %v3000
      %v3033 = vunpack.c.l.b16 %v3001
      %v3034 = vunpack.c.l.b16 %v3002
      %v3035 = vunpack.c.l.b16 %v3003
      %v3036 = vunpack.c.l.b16 %v3004
      %v3037 = vunpack.c.l.b16 %v3005
      %v3038 = vunpack.c.l.b16 %v3006
      %v3039 = vpack.c.b16 %v3024, %v3023
      %v3040 = vpack.c.b16 %v3026, %v3025
      %v3041 = vpack.c.b16 %v3028, %v3027
      %v3042 = vpack.c.b16 %v3030, %v3029
      %v3043 = vpack.c.b16 %v3032, %v3031
      %v3044 = vpack.c.b16 %v3034, %v3033
      %v3045 = vpack.c.b16 %v3036, %v3035
      %v3046 = vpack.c.b16 %v3038, %v3037
      %3055 = vmatprep.subr.bf16.mxu0 0
      %3056 = vmatpush1.bf16.msra.mxu0 %v3046
      %3057 = vmatprep.subr.bf16.mxu0 0
      %3058 = vmatpush1.bf16.msra.mxu0 %v3045
      %3059 = vmatprep.subr.bf16.mxu0 0
      %3060 = vmatpush1.bf16.msra.mxu0 %v3044
      %3061 = vmatprep.subr.bf16.mxu0 0
      %3062 = vmatpush1.bf16.msra.mxu0 %v3043
      %3063 = vmatprep.subr.bf16.mxu0 0
      %3064 = vmatpush1.bf16.msra.mxu0 %v3042
      %3065 = vmatprep.subr.bf16.mxu0 0
      %3066 = vmatpush1.bf16.msra.mxu0 %v3041
      %3067 = vmatprep.subr.bf16.mxu0 0
      %3068 = vmatpush1.bf16.msra.mxu0 %v3040
      %3069 = vmatprep.subr.bf16.mxu0 0
      %3070 = vmatpush1.bf16.msra.mxu0 %v3039
      %3071 = vmatprep.subr.bf16.mxu0 0
      %3072 = vmatpush2.bf16.msra.mxu0 0
      %3073 = vmatprep.subr.bf16.mxu0 0
      %3074 = vmatpush2.bf16.msra.mxu0 0
      %3075 = vmatprep.subr.bf16.mxu0 0
      %3076 = vmatpush2.bf16.msra.mxu0 0
      %3077 = vmatprep.subr.bf16.mxu0 0
      %3078 = vmatpush2.bf16.msra.mxu0 0
      %3079 = vmatprep.subr.bf16.mxu0 0
      %3080 = vmatpush2.bf16.msra.mxu0 0
      %3081 = vmatprep.subr.bf16.mxu0 0
      %3082 = vmatpush2.bf16.msra.mxu0 0
      %3083 = vmatprep.subr.bf16.mxu0 0
      %3084 = vmatpush2.bf16.msra.mxu0 0
      %3085 = vmatprep.subr.bf16.mxu0 0
      %3086 = vmatpush2.bf16.msra.mxu0 0
      %3087 = vmatprep.mubr.bf16.mxu0 0
      %3088 = vmatmul.mubr.bf16.gmra.mxu0 %v2990
      %v3089 = vpop.f32.mrf.mxu0
      %v3090 = vadd.f32 0.0, %v3089
      %v3091 = vpop.f32.mrf.mxu0
      %v3092 = vpop.f32.mrf.mxu0
      %v3093 = vpop.f32.mrf.mxu0
      %3094 = vdwg.mxu0
      %v3095 = vadd.f32 %v2988, %v3090
      %v3096 = vld [vmem:[%s2882] sm:$0xf]
      %v3097 = vld [vmem:[%s2882 + $0x4] sm:$0x1]
      %v3098 = vld [vmem:[%s1099] sm:$0xf]
      %v3099 = vld [vmem:[%s1099 + $0x4] sm:$0xf]
      %v3100 = vld [vmem:[%s1099 + $0x8] sm:$0xf]
      %v3101 = vld [vmem:[%s1099 + $0xc] sm:$0xf]
      %v3102 = vld [vmem:[%s1099 + $0x10] sm:$0xf]
      %v3103 = vld [vmem:[%s1099 + $0x14] sm:$0xf]
      %v3104 = vld [vmem:[%s1099 + $0x18] sm:$0xf]
      %v3105 = vld [vmem:[%s1099 + $0x1c] sm:$0xf]
      %v3106 = vld [vmem:[%s1099 + $0x20] sm:$0xf]
      %v3107 = vld [vmem:[%s1099 + $0x24] sm:$0xf]
      %v3108 = vld [vmem:[%s1099 + $0x28] sm:$0xf]
      %v3109 = vld [vmem:[%s1099 + $0x2c] sm:$0xf]
      %v3110 = vld [vmem:[%s1099 + $0x30] sm:$0xf]
      %v3111 = vld [vmem:[%s1099 + $0x34] sm:$0xf]
      %v3112 = vld [vmem:[%s1099 + $0x38] sm:$0xf]
      %v3113 = vld [vmem:[%s1099 + $0x3c] sm:$0xf]
      %v3116 = vunpack.c.l.b16 %v3096
      %v3117 = vunpack.c.l.b16 %v3097
      %v3118 = vpack.c.b16 %v3117, %v3116
      %v3120 = vshrl.u32 %v3118, 16
      %v3122 = vshll.u32 %v3118, 16
      %v3124 = vrot.slane %v3122, 1
      %v3125 = vor.u32 %v3120, %v3124
      %v3143 = vunpack.c.l.b16 %v3098
      %v3144 = vunpack.c.l.b16 %v3099
      %v3145 = vunpack.c.l.b16 %v3100
      %v3146 = vunpack.c.l.b16 %v3101
      %v3147 = vunpack.c.l.b16 %v3102
      %v3148 = vunpack.c.l.b16 %v3103
      %v3149 = vunpack.c.l.b16 %v3104
      %v3150 = vunpack.c.l.b16 %v3105
      %v3151 = vunpack.c.l.b16 %v3106
      %v3152 = vunpack.c.l.b16 %v3107
      %v3153 = vunpack.c.l.b16 %v3108
      %v3154 = vunpack.c.l.b16 %v3109
      %v3155 = vunpack.c.l.b16 %v3110
      %v3156 = vunpack.c.l.b16 %v3111
      %v3157 = vunpack.c.l.b16 %v3112
      %v3158 = vunpack.c.l.b16 %v3113
      %v3159 = vpack.c.b16 %v3144, %v3143
      %v3160 = vpack.c.b16 %v3146, %v3145
      %v3161 = vpack.c.b16 %v3148, %v3147
      %v3162 = vpack.c.b16 %v3150, %v3149
      %v3163 = vpack.c.b16 %v3152, %v3151
      %v3164 = vpack.c.b16 %v3154, %v3153
      %v3165 = vpack.c.b16 %v3156, %v3155
      %v3166 = vpack.c.b16 %v3158, %v3157
      %3175 = vmatprep.subr.bf16.mxu0 0
      %3176 = vmatpush1.bf16.msra.mxu0 %v3166
      %3177 = vmatprep.subr.bf16.mxu0 0
      %3178 = vmatpush1.bf16.msra.mxu0 %v3165
      %3179 = vmatprep.subr.bf16.mxu0 0
      %3180 = vmatpush1.bf16.msra.mxu0 %v3164
      %3181 = vmatprep.subr.bf16.mxu0 0
      %3182 = vmatpush1.bf16.msra.mxu0 %v3163
      %3183 = vmatprep.subr.bf16.mxu0 0
      %3184 = vmatpush1.bf16.msra.mxu0 %v3162
      %3185 = vmatprep.subr.bf16.mxu0 0
      %3186 = vmatpush1.bf16.msra.mxu0 %v3161
      %3187 = vmatprep.subr.bf16.mxu0 0
      %3188 = vmatpush1.bf16.msra.mxu0 %v3160
      %3189 = vmatprep.subr.bf16.mxu0 0
      %3190 = vmatpush1.bf16.msra.mxu0 %v3159
      %3191 = vmatprep.subr.bf16.mxu0 0
      %3192 = vmatpush2.bf16.msra.mxu0 0
      %3193 = vmatprep.subr.bf16.mxu0 0
      %3194 = vmatpush2.bf16.msra.mxu0 0
      %3195 = vmatprep.subr.bf16.mxu0 0
      %3196 = vmatpush2.bf16.msra.mxu0 0
      %3197 = vmatprep.subr.bf16.mxu0 0
      %3198 = vmatpush2.bf16.msra.mxu0 0
      %3199 = vmatprep.subr.bf16.mxu0 0
      %3200 = vmatpush2.bf16.msra.mxu0 0
      %3201 = vmatprep.subr.bf16.mxu0 0
      %3202 = vmatpush2.bf16.msra.mxu0 0
      %3203 = vmatprep.subr.bf16.mxu0 0
      %3204 = vmatpush2.bf16.msra.mxu0 0
      %3205 = vmatprep.subr.bf16.mxu0 0
      %3206 = vmatpush2.bf16.msra.mxu0 0
      %3207 = vmatprep.mubr.bf16.mxu0 0
      %3208 = vmatmul.mubr.bf16.gmra.mxu0 %v3125
      %v3209 = vpop.f32.mrf.mxu0
      %v3210 = vadd.f32 0.0, %v3209
      %v3211 = vpop.f32.mrf.mxu0
      %v3212 = vpop.f32.mrf.mxu0
      %v3213 = vpop.f32.mrf.mxu0
      %3214 = vdwg.mxu0
      %v3215 = vadd.f32 %v3095, %v3210
      %3216 = vst [vmem:[#allocation2 + $0x10] sm:$0xff] %v3215
      %v3217 = vld [vmem:[%s2882] sm:$0xf]
      %v3218 = vld [vmem:[%s1] sm:$0xf]
      %v3219 = vld [vmem:[%s1 + $0x4] sm:$0xf]
      %v3220 = vld [vmem:[%s1 + $0x8] sm:$0xf]
      %v3221 = vld [vmem:[%s1 + $0xc] sm:$0xf]
      %v3222 = vld [vmem:[%s1 + $0x10] sm:$0xf]
      %v3223 = vld [vmem:[%s1 + $0x14] sm:$0xf]
      %v3224 = vld [vmem:[%s1 + $0x18] sm:$0xf]
      %v3225 = vld [vmem:[%s1 + $0x1c] sm:$0xf]
      %v3226 = vld [vmem:[%s1 + $0x20] sm:$0xf]
      %v3227 = vld [vmem:[%s1 + $0x24] sm:$0xf]
      %v3228 = vld [vmem:[%s1 + $0x28] sm:$0xf]
      %v3229 = vld [vmem:[%s1 + $0x2c] sm:$0xf]
      %v3230 = vld [vmem:[%s1 + $0x30] sm:$0xf]
      %v3231 = vld [vmem:[%s1 + $0x34] sm:$0xf]
      %v3232 = vld [vmem:[%s1 + $0x38] sm:$0xf]
      %v3233 = vld [vmem:[%s1 + $0x3c] sm:$0xf]
      %v3234 = vld [vmem:[%s2989] sm:$0xf]
      %v3235 = vld [vmem:[%s230] sm:$0xf]
      %v3236 = vld [vmem:[%s230 + $0x4] sm:$0xf]
      %v3237 = vld [vmem:[%s230 + $0x8] sm:$0xf]
      %v3238 = vld [vmem:[%s230 + $0xc] sm:$0xf]
      %v3239 = vld [vmem:[%s230 + $0x10] sm:$0xf]
      %v3240 = vld [vmem:[%s230 + $0x14] sm:$0xf]
      %v3241 = vld [vmem:[%s230 + $0x18] sm:$0xf]
      %v3242 = vld [vmem:[%s230 + $0x1c] sm:$0xf]
      %v3243 = vld [vmem:[%s230 + $0x20] sm:$0xf]
      %v3244 = vld [vmem:[%s230 + $0x24] sm:$0xf]
      %v3245 = vld [vmem:[%s230 + $0x28] sm:$0xf]
      %v3246 = vld [vmem:[%s230 + $0x2c] sm:$0xf]
      %v3247 = vld [vmem:[%s230 + $0x30] sm:$0xf]
      %v3248 = vld [vmem:[%s230 + $0x34] sm:$0xf]
      %v3249 = vld [vmem:[%s230 + $0x38] sm:$0xf]
      %v3250 = vld [vmem:[%s230 + $0x3c] sm:$0xf]
      %v3267 = vunpack.c.l.b16 %v3235
      %v3268 = vunpack.c.l.b16 %v3236
      %v3269 = vunpack.c.l.b16 %v3237
      %v3270 = vunpack.c.l.b16 %v3238
      %v3271 = vunpack.c.l.b16 %v3239
      %v3272 = vunpack.c.l.b16 %v3240
      %v3273 = vunpack.c.l.b16 %v3241
      %v3274 = vunpack.c.l.b16 %v3242
      %v3275 = vunpack.c.l.b16 %v3243
      %v3276 = vunpack.c.l.b16 %v3244
      %v3277 = vunpack.c.l.b16 %v3245
      %v3278 = vunpack.c.l.b16 %v3246
      %v3279 = vunpack.c.l.b16 %v3247
      %v3280 = vunpack.c.l.b16 %v3248
      %v3281 = vunpack.c.l.b16 %v3249
      %v3282 = vunpack.c.l.b16 %v3250
      %v3283 = vpack.c.b16 %v3268, %v3267
      %v3284 = vpack.c.b16 %v3270, %v3269
      %v3285 = vpack.c.b16 %v3272, %v3271
      %v3286 = vpack.c.b16 %v3274, %v3273
      %v3287 = vpack.c.b16 %v3276, %v3275
      %v3288 = vpack.c.b16 %v3278, %v3277
      %v3289 = vpack.c.b16 %v3280, %v3279
      %v3290 = vpack.c.b16 %v3282, %v3281
      %3299 = vmatprep.subr.bf16.mxu0 0
      %3300 = vmatpush1.bf16.msra.mxu0 %v3290
      %3301 = vmatprep.subr.bf16.mxu0 0
      %3302 = vmatpush1.bf16.msra.mxu0 %v3289
      %3303 = vmatprep.subr.bf16.mxu0 0
      %3304 = vmatpush1.bf16.msra.mxu0 %v3288
      %3305 = vmatprep.subr.bf16.mxu0 0
      %3306 = vmatpush1.bf16.msra.mxu0 %v3287
      %3307 = vmatprep.subr.bf16.mxu0 0
      %3308 = vmatpush1.bf16.msra.mxu0 %v3286
      %3309 = vmatprep.subr.bf16.mxu0 0
      %3310 = vmatpush1.bf16.msra.mxu0 %v3285
      %3311 = vmatprep.subr.bf16.mxu0 0
      %3312 = vmatpush1.bf16.msra.mxu0 %v3284
      %3313 = vmatprep.subr.bf16.mxu0 0
      %3314 = vmatpush1.bf16.msra.mxu0 %v3283
      %3315 = vmatprep.subr.bf16.mxu0 0
      %3316 = vmatpush2.bf16.msra.mxu0 0
      %3317 = vmatprep.subr.bf16.mxu0 0
      %3318 = vmatpush2.bf16.msra.mxu0 0
      %3319 = vmatprep.subr.bf16.mxu0 0
      %3320 = vmatpush2.bf16.msra.mxu0 0
      %3321 = vmatprep.subr.bf16.mxu0 0
      %3322 = vmatpush2.bf16.msra.mxu0 0
      %3323 = vmatprep.subr.bf16.mxu0 0
      %3324 = vmatpush2.bf16.msra.mxu0 0
      %3325 = vmatprep.subr.bf16.mxu0 0
      %3326 = vmatpush2.bf16.msra.mxu0 0
      %3327 = vmatprep.subr.bf16.mxu0 0
      %3328 = vmatpush2.bf16.msra.mxu0 0
      %3329 = vmatprep.subr.bf16.mxu0 0
      %3330 = vmatpush2.bf16.msra.mxu0 0
      %3331 = vmatprep.mubr.bf16.mxu0 0
      %3332 = vmatmul.mubr.bf16.gmra.mxu0 %v3234
      %v3333 = vpop.f32.mrf.mxu0
      %v3334 = vadd.f32 0.0, %v3333
      %v3335 = vpop.f32.mrf.mxu0
      %v3336 = vpop.f32.mrf.mxu0
      %v3337 = vpop.f32.mrf.mxu0
      %3338 = vdwg.mxu0
      %v3355 = vunpack.c.l.b16 %v3218
      %v3356 = vunpack.c.l.b16 %v3219
      %v3357 = vunpack.c.l.b16 %v3220
      %v3358 = vunpack.c.l.b16 %v3221
      %v3359 = vunpack.c.l.b16 %v3222
      %v3360 = vunpack.c.l.b16 %v3223
      %v3361 = vunpack.c.l.b16 %v3224
      %v3362 = vunpack.c.l.b16 %v3225
      %v3363 = vunpack.c.l.b16 %v3226
      %v3364 = vunpack.c.l.b16 %v3227
      %v3365 = vunpack.c.l.b16 %v3228
      %v3366 = vunpack.c.l.b16 %v3229
      %v3367 = vunpack.c.l.b16 %v3230
      %v3368 = vunpack.c.l.b16 %v3231
      %v3369 = vunpack.c.l.b16 %v3232
      %v3370 = vunpack.c.l.b16 %v3233
      %v3371 = vpack.c.b16 %v3356, %v3355
      %v3372 = vpack.c.b16 %v3358, %v3357
      %v3373 = vpack.c.b16 %v3360, %v3359
      %v3374 = vpack.c.b16 %v3362, %v3361
      %v3375 = vpack.c.b16 %v3364, %v3363
      %v3376 = vpack.c.b16 %v3366, %v3365
      %v3377 = vpack.c.b16 %v3368, %v3367
      %v3378 = vpack.c.b16 %v3370, %v3369
      %3387 = vmatprep.subr.bf16.mxu0 0
      %3388 = vmatpush1.bf16.msra.mxu0 %v3378
      %3389 = vmatprep.subr.bf16.mxu0 0
      %3390 = vmatpush1.bf16.msra.mxu0 %v3377
      %3391 = vmatprep.subr.bf16.mxu0 0
      %3392 = vmatpush1.bf16.msra.mxu0 %v3376
      %3393 = vmatprep.subr.bf16.mxu0 0
      %3394 = vmatpush1.bf16.msra.mxu0 %v3375
      %3395 = vmatprep.subr.bf16.mxu0 0
      %3396 = vmatpush1.bf16.msra.mxu0 %v3374
      %3397 = vmatprep.subr.bf16.mxu0 0
      %3398 = vmatpush1.bf16.msra.mxu0 %v3373
      %3399 = vmatprep.subr.bf16.mxu0 0
      %3400 = vmatpush1.bf16.msra.mxu0 %v3372
      %3401 = vmatprep.subr.bf16.mxu0 0
      %3402 = vmatpush1.bf16.msra.mxu0 %v3371
      %3403 = vmatprep.subr.bf16.mxu0 0
      %3404 = vmatpush2.bf16.msra.mxu0 0
      %3405 = vmatprep.subr.bf16.mxu0 0
      %3406 = vmatpush2.bf16.msra.mxu0 0
      %3407 = vmatprep.subr.bf16.mxu0 0
      %3408 = vmatpush2.bf16.msra.mxu0 0
      %3409 = vmatprep.subr.bf16.mxu0 0
      %3410 = vmatpush2.bf16.msra.mxu0 0
      %3411 = vmatprep.subr.bf16.mxu0 0
      %3412 = vmatpush2.bf16.msra.mxu0 0
      %3413 = vmatprep.subr.bf16.mxu0 0
      %3414 = vmatpush2.bf16.msra.mxu0 0
      %3415 = vmatprep.subr.bf16.mxu0 0
      %3416 = vmatpush2.bf16.msra.mxu0 0
      %3417 = vmatprep.subr.bf16.mxu0 0
      %3418 = vmatpush2.bf16.msra.mxu0 0
      %3419 = vmatprep.mubr.bf16.mxu0 0
      %3420 = vmatmul.mubr.bf16.gmra.mxu0 %v3217
      %v3421 = vpop.f32.mrf.mxu0
      %v3422 = vadd.f32 %v3334, %v3421
      %v3423 = vpop.f32.mrf.mxu0
      %v3424 = vpop.f32.mrf.mxu0
      %v3425 = vpop.f32.mrf.mxu0
      %3426 = vdwg.mxu0
      %v3427 = vld [vmem:[%s2882] sm:$0xf]
      %v3428 = vld [vmem:[%s2882 + $0x4] sm:$0x1]
      %v3429 = vld [vmem:[%s425] sm:$0xf]
      %v3430 = vld [vmem:[%s425 + $0x4] sm:$0xf]
      %v3431 = vld [vmem:[%s425 + $0x8] sm:$0xf]
      %v3432 = vld [vmem:[%s425 + $0xc] sm:$0xf]
      %v3433 = vld [vmem:[%s425 + $0x10] sm:$0xf]
      %v3434 = vld [vmem:[%s425 + $0x14] sm:$0xf]
      %v3435 = vld [vmem:[%s425 + $0x18] sm:$0xf]
      %v3436 = vld [vmem:[%s425 + $0x1c] sm:$0xf]
      %v3437 = vld [vmem:[%s425 + $0x20] sm:$0xf]
      %v3438 = vld [vmem:[%s425 + $0x24] sm:$0xf]
      %v3439 = vld [vmem:[%s425 + $0x28] sm:$0xf]
      %v3440 = vld [vmem:[%s425 + $0x2c] sm:$0xf]
      %v3441 = vld [vmem:[%s425 + $0x30] sm:$0xf]
      %v3442 = vld [vmem:[%s425 + $0x34] sm:$0xf]
      %v3443 = vld [vmem:[%s425 + $0x38] sm:$0xf]
      %v3444 = vld [vmem:[%s425 + $0x3c] sm:$0xf]
      %v3447 = vunpack.c.l.b16 %v3427
      %v3448 = vunpack.c.l.b16 %v3428
      %v3449 = vpack.c.b16 %v3448, %v3447
      %v3451 = vshrl.u32 %v3449, 16
      %v3453 = vshll.u32 %v3449, 16
      %v3455 = vrot.slane %v3453, 1
      %v3456 = vor.u32 %v3451, %v3455
      %v3474 = vunpack.c.l.b16 %v3429
      %v3475 = vunpack.c.l.b16 %v3430
      %v3476 = vunpack.c.l.b16 %v3431
      %v3477 = vunpack.c.l.b16 %v3432
      %v3478 = vunpack.c.l.b16 %v3433
      %v3479 = vunpack.c.l.b16 %v3434
      %v3480 = vunpack.c.l.b16 %v3435
      %v3481 = vunpack.c.l.b16 %v3436
      %v3482 = vunpack.c.l.b16 %v3437
      %v3483 = vunpack.c.l.b16 %v3438
      %v3484 = vunpack.c.l.b16 %v3439
      %v3485 = vunpack.c.l.b16 %v3440
      %v3486 = vunpack.c.l.b16 %v3441
      %v3487 = vunpack.c.l.b16 %v3442
      %v3488 = vunpack.c.l.b16 %v3443
      %v3489 = vunpack.c.l.b16 %v3444
      %v3490 = vpack.c.b16 %v3475, %v3474
      %v3491 = vpack.c.b16 %v3477, %v3476
      %v3492 = vpack.c.b16 %v3479, %v3478
      %v3493 = vpack.c.b16 %v3481, %v3480
      %v3494 = vpack.c.b16 %v3483, %v3482
      %v3495 = vpack.c.b16 %v3485, %v3484
      %v3496 = vpack.c.b16 %v3487, %v3486
      %v3497 = vpack.c.b16 %v3489, %v3488
      %3506 = vmatprep.subr.bf16.mxu0 0
      %3507 = vmatpush1.bf16.msra.mxu0 %v3497
      %3508 = vmatprep.subr.bf16.mxu0 0
      %3509 = vmatpush1.bf16.msra.mxu0 %v3496
      %3510 = vmatprep.subr.bf16.mxu0 0
      %3511 = vmatpush1.bf16.msra.mxu0 %v3495
      %3512 = vmatprep.subr.bf16.mxu0 0
      %3513 = vmatpush1.bf16.msra.mxu0 %v3494
      %3514 = vmatprep.subr.bf16.mxu0 0
      %3515 = vmatpush1.bf16.msra.mxu0 %v3493
      %3516 = vmatprep.subr.bf16.mxu0 0
      %3517 = vmatpush1.bf16.msra.mxu0 %v3492
      %3518 = vmatprep.subr.bf16.mxu0 0
      %3519 = vmatpush1.bf16.msra.mxu0 %v3491
      %3520 = vmatprep.subr.bf16.mxu0 0
      %3521 = vmatpush1.bf16.msra.mxu0 %v3490
      %3522 = vmatprep.subr.bf16.mxu0 0
      %3523 = vmatpush2.bf16.msra.mxu0 0
      %3524 = vmatprep.subr.bf16.mxu0 0
      %3525 = vmatpush2.bf16.msra.mxu0 0
      %3526 = vmatprep.subr.bf16.mxu0 0
      %3527 = vmatpush2.bf16.msra.mxu0 0
      %3528 = vmatprep.subr.bf16.mxu0 0
      %3529 = vmatpush2.bf16.msra.mxu0 0
      %3530 = vmatprep.subr.bf16.mxu0 0
      %3531 = vmatpush2.bf16.msra.mxu0 0
      %3532 = vmatprep.subr.bf16.mxu0 0
      %3533 = vmatpush2.bf16.msra.mxu0 0
      %3534 = vmatprep.subr.bf16.mxu0 0
      %3535 = vmatpush2.bf16.msra.mxu0 0
      %3536 = vmatprep.subr.bf16.mxu0 0
      %3537 = vmatpush2.bf16.msra.mxu0 0
      %3538 = vmatprep.mubr.bf16.mxu0 0
      %3539 = vmatmul.mubr.bf16.gmra.mxu0 %v3456
      %v3540 = vpop.f32.mrf.mxu0
      %v3541 = vadd.f32 0.0, %v3540
      %v3542 = vpop.f32.mrf.mxu0
      %v3543 = vpop.f32.mrf.mxu0
      %v3544 = vpop.f32.mrf.mxu0
      %3545 = vdwg.mxu0
      %v3546 = vadd.f32 %v3422, %v3541
      %s3547 = scalar_lea.vmem %s204, 168
      %v3548 = vld [vmem:[%s3547] sm:$0xf]
      %v3549 = vld [vmem:[%s546] sm:$0xf]
      %v3550 = vld [vmem:[%s546 + $0x4] sm:$0xf]
      %v3551 = vld [vmem:[%s546 + $0x8] sm:$0xf]
      %v3552 = vld [vmem:[%s546 + $0xc] sm:$0xf]
      %v3553 = vld [vmem:[%s546 + $0x10] sm:$0xf]
      %v3554 = vld [vmem:[%s546 + $0x14] sm:$0xf]
      %v3555 = vld [vmem:[%s546 + $0x18] sm:$0xf]
      %v3556 = vld [vmem:[%s546 + $0x1c] sm:$0xf]
      %v3557 = vld [vmem:[%s546 + $0x20] sm:$0xf]
      %v3558 = vld [vmem:[%s546 + $0x24] sm:$0xf]
      %v3559 = vld [vmem:[%s546 + $0x28] sm:$0xf]
      %v3560 = vld [vmem:[%s546 + $0x2c] sm:$0xf]
      %v3561 = vld [vmem:[%s546 + $0x30] sm:$0xf]
      %v3562 = vld [vmem:[%s546 + $0x34] sm:$0xf]
      %v3563 = vld [vmem:[%s546 + $0x38] sm:$0xf]
      %v3564 = vld [vmem:[%s546 + $0x3c] sm:$0xf]
      %v3581 = vunpack.c.l.b16 %v3549
      %v3582 = vunpack.c.l.b16 %v3550
      %v3583 = vunpack.c.l.b16 %v3551
      %v3584 = vunpack.c.l.b16 %v3552
      %v3585 = vunpack.c.l.b16 %v3553
      %v3586 = vunpack.c.l.b16 %v3554
      %v3587 = vunpack.c.l.b16 %v3555
      %v3588 = vunpack.c.l.b16 %v3556
      %v3589 = vunpack.c.l.b16 %v3557
      %v3590 = vunpack.c.l.b16 %v3558
      %v3591 = vunpack.c.l.b16 %v3559
      %v3592 = vunpack.c.l.b16 %v3560
      %v3593 = vunpack.c.l.b16 %v3561
      %v3594 = vunpack.c.l.b16 %v3562
      %v3595 = vunpack.c.l.b16 %v3563
      %v3596 = vunpack.c.l.b16 %v3564
      %v3597 = vpack.c.b16 %v3582, %v3581
      %v3598 = vpack.c.b16 %v3584, %v3583
      %v3599 = vpack.c.b16 %v3586, %v3585
      %v3600 = vpack.c.b16 %v3588, %v3587
      %v3601 = vpack.c.b16 %v3590, %v3589
      %v3602 = vpack.c.b16 %v3592, %v3591
      %v3603 = vpack.c.b16 %v3594, %v3593
      %v3604 = vpack.c.b16 %v3596, %v3595
      %3613 = vmatprep.subr.bf16.mxu0 0
      %3614 = vmatpush1.bf16.msra.mxu0 %v3604
      %3615 = vmatprep.subr.bf16.mxu0 0
      %3616 = vmatpush1.bf16.msra.mxu0 %v3603
      %3617 = vmatprep.subr.bf16.mxu0 0
      %3618 = vmatpush1.bf16.msra.mxu0 %v3602
      %3619 = vmatprep.subr.bf16.mxu0 0
      %3620 = vmatpush1.bf16.msra.mxu0 %v3601
      %3621 = vmatprep.subr.bf16.mxu0 0
      %3622 = vmatpush1.bf16.msra.mxu0 %v3600
      %3623 = vmatprep.subr.bf16.mxu0 0
      %3624 = vmatpush1.bf16.msra.mxu0 %v3599
      %3625 = vmatprep.subr.bf16.mxu0 0
      %3626 = vmatpush1.bf16.msra.mxu0 %v3598
      %3627 = vmatprep.subr.bf16.mxu0 0
      %3628 = vmatpush1.bf16.msra.mxu0 %v3597
      %3629 = vmatprep.subr.bf16.mxu0 0
      %3630 = vmatpush2.bf16.msra.mxu0 0
      %3631 = vmatprep.subr.bf16.mxu0 0
      %3632 = vmatpush2.bf16.msra.mxu0 0
      %3633 = vmatprep.subr.bf16.mxu0 0
      %3634 = vmatpush2.bf16.msra.mxu0 0
      %3635 = vmatprep.subr.bf16.mxu0 0
      %3636 = vmatpush2.bf16.msra.mxu0 0
      %3637 = vmatprep.subr.bf16.mxu0 0
      %3638 = vmatpush2.bf16.msra.mxu0 0
      %3639 = vmatprep.subr.bf16.mxu0 0
      %3640 = vmatpush2.bf16.msra.mxu0 0
      %3641 = vmatprep.subr.bf16.mxu0 0
      %3642 = vmatpush2.bf16.msra.mxu0 0
      %3643 = vmatprep.subr.bf16.mxu0 0
      %3644 = vmatpush2.bf16.msra.mxu0 0
      %3645 = vmatprep.mubr.bf16.mxu0 0
      %3646 = vmatmul.mubr.bf16.gmra.mxu0 %v3548
      %v3647 = vpop.f32.mrf.mxu0
      %v3648 = vadd.f32 0.0, %v3647
      %v3649 = vpop.f32.mrf.mxu0
      %v3650 = vpop.f32.mrf.mxu0
      %v3651 = vpop.f32.mrf.mxu0
      %3652 = vdwg.mxu0
      %v3653 = vadd.f32 %v3546, %v3648
      %s3654 = scalar_lea.vmem %s204, 240
      %v3655 = vld [vmem:[%s3654] sm:$0xf]
      %v3656 = vld [vmem:[%s654] sm:$0xf]
      %v3657 = vld [vmem:[%s654 + $0x4] sm:$0xf]
      %v3658 = vld [vmem:[%s654 + $0x8] sm:$0xf]
      %v3659 = vld [vmem:[%s654 + $0xc] sm:$0xf]
      %v3660 = vld [vmem:[%s654 + $0x10] sm:$0xf]
      %v3661 = vld [vmem:[%s654 + $0x14] sm:$0xf]
      %v3662 = vld [vmem:[%s654 + $0x18] sm:$0xf]
      %v3663 = vld [vmem:[%s654 + $0x1c] sm:$0xf]
      %v3664 = vld [vmem:[%s654 + $0x20] sm:$0xf]
      %v3665 = vld [vmem:[%s654 + $0x24] sm:$0xf]
      %v3666 = vld [vmem:[%s654 + $0x28] sm:$0xf]
      %v3667 = vld [vmem:[%s654 + $0x2c] sm:$0xf]
      %v3668 = vld [vmem:[%s654 + $0x30] sm:$0xf]
      %v3669 = vld [vmem:[%s654 + $0x34] sm:$0xf]
      %v3670 = vld [vmem:[%s654 + $0x38] sm:$0xf]
      %v3671 = vld [vmem:[%s654 + $0x3c] sm:$0xf]
      %v3688 = vunpack.c.l.b16 %v3656
      %v3689 = vunpack.c.l.b16 %v3657
      %v3690 = vunpack.c.l.b16 %v3658
      %v3691 = vunpack.c.l.b16 %v3659
      %v3692 = vunpack.c.l.b16 %v3660
      %v3693 = vunpack.c.l.b16 %v3661
      %v3694 = vunpack.c.l.b16 %v3662
      %v3695 = vunpack.c.l.b16 %v3663
      %v3696 = vunpack.c.l.b16 %v3664
      %v3697 = vunpack.c.l.b16 %v3665
      %v3698 = vunpack.c.l.b16 %v3666
      %v3699 = vunpack.c.l.b16 %v3667
      %v3700 = vunpack.c.l.b16 %v3668
      %v3701 = vunpack.c.l.b16 %v3669
      %v3702 = vunpack.c.l.b16 %v3670
      %v3703 = vunpack.c.l.b16 %v3671
      %v3704 = vpack.c.b16 %v3689, %v3688
      %v3705 = vpack.c.b16 %v3691, %v3690
      %v3706 = vpack.c.b16 %v3693, %v3692
      %v3707 = vpack.c.b16 %v3695, %v3694
      %v3708 = vpack.c.b16 %v3697, %v3696
      %v3709 = vpack.c.b16 %v3699, %v3698
      %v3710 = vpack.c.b16 %v3701, %v3700
      %v3711 = vpack.c.b16 %v3703, %v3702
      %3720 = vmatprep.subr.bf16.mxu0 0
      %3721 = vmatpush1.bf16.msra.mxu0 %v3711
      %3722 = vmatprep.subr.bf16.mxu0 0
      %3723 = vmatpush1.bf16.msra.mxu0 %v3710
      %3724 = vmatprep.subr.bf16.mxu0 0
      %3725 = vmatpush1.bf16.msra.mxu0 %v3709
      %3726 = vmatprep.subr.bf16.mxu0 0
      %3727 = vmatpush1.bf16.msra.mxu0 %v3708
      %3728 = vmatprep.subr.bf16.mxu0 0
      %3729 = vmatpush1.bf16.msra.mxu0 %v3707
      %3730 = vmatprep.subr.bf16.mxu0 0
      %3731 = vmatpush1.bf16.msra.mxu0 %v3706
      %3732 = vmatprep.subr.bf16.mxu0 0
      %3733 = vmatpush1.bf16.msra.mxu0 %v3705
      %3734 = vmatprep.subr.bf16.mxu0 0
      %3735 = vmatpush1.bf16.msra.mxu0 %v3704
      %3736 = vmatprep.subr.bf16.mxu0 0
      %3737 = vmatpush2.bf16.msra.mxu0 0
      %3738 = vmatprep.subr.bf16.mxu0 0
      %3739 = vmatpush2.bf16.msra.mxu0 0
      %3740 = vmatprep.subr.bf16.mxu0 0
      %3741 = vmatpush2.bf16.msra.mxu0 0
      %3742 = vmatprep.subr.bf16.mxu0 0
      %3743 = vmatpush2.bf16.msra.mxu0 0
      %3744 = vmatprep.subr.bf16.mxu0 0
      %3745 = vmatpush2.bf16.msra.mxu0 0
      %3746 = vmatprep.subr.bf16.mxu0 0
      %3747 = vmatpush2.bf16.msra.mxu0 0
      %3748 = vmatprep.subr.bf16.mxu0 0
      %3749 = vmatpush2.bf16.msra.mxu0 0
      %3750 = vmatprep.subr.bf16.mxu0 0
      %3751 = vmatpush2.bf16.msra.mxu0 0
      %3752 = vmatprep.mubr.bf16.mxu0 0
      %3753 = vmatmul.mubr.bf16.gmra.mxu0 %v3655
      %v3754 = vpop.f32.mrf.mxu0
      %v3755 = vadd.f32 0.0, %v3754
      %v3756 = vpop.f32.mrf.mxu0
      %v3757 = vpop.f32.mrf.mxu0
      %v3758 = vpop.f32.mrf.mxu0
      %3759 = vdwg.mxu0
      %v3760 = vadd.f32 %v3653, %v3755
      %v3761 = vld [vmem:[%s3547] sm:$0xf]
      %v3762 = vld [vmem:[%s3547 + $0x4] sm:$0x1]
      %v3763 = vld [vmem:[%s762] sm:$0xf]
      %v3764 = vld [vmem:[%s762 + $0x4] sm:$0xf]
      %v3765 = vld [vmem:[%s762 + $0x8] sm:$0xf]
      %v3766 = vld [vmem:[%s762 + $0xc] sm:$0xf]
      %v3767 = vld [vmem:[%s762 + $0x10] sm:$0xf]
      %v3768 = vld [vmem:[%s762 + $0x14] sm:$0xf]
      %v3769 = vld [vmem:[%s762 + $0x18] sm:$0xf]
      %v3770 = vld [vmem:[%s762 + $0x1c] sm:$0xf]
      %v3771 = vld [vmem:[%s762 + $0x20] sm:$0xf]
      %v3772 = vld [vmem:[%s762 + $0x24] sm:$0xf]
      %v3773 = vld [vmem:[%s762 + $0x28] sm:$0xf]
      %v3774 = vld [vmem:[%s762 + $0x2c] sm:$0xf]
      %v3775 = vld [vmem:[%s762 + $0x30] sm:$0xf]
      %v3776 = vld [vmem:[%s762 + $0x34] sm:$0xf]
      %v3777 = vld [vmem:[%s762 + $0x38] sm:$0xf]
      %v3778 = vld [vmem:[%s762 + $0x3c] sm:$0xf]
      %v3781 = vunpack.c.l.b16 %v3761
      %v3782 = vunpack.c.l.b16 %v3762
      %v3783 = vpack.c.b16 %v3782, %v3781
      %v3785 = vshrl.u32 %v3783, 16
      %v3787 = vshll.u32 %v3783, 16
      %v3789 = vrot.slane %v3787, 1
      %v3790 = vor.u32 %v3785, %v3789
      %v3808 = vunpack.c.l.b16 %v3763
      %v3809 = vunpack.c.l.b16 %v3764
      %v3810 = vunpack.c.l.b16 %v3765
      %v3811 = vunpack.c.l.b16 %v3766
      %v3812 = vunpack.c.l.b16 %v3767
      %v3813 = vunpack.c.l.b16 %v3768
      %v3814 = vunpack.c.l.b16 %v3769
      %v3815 = vunpack.c.l.b16 %v3770
      %v3816 = vunpack.c.l.b16 %v3771
      %v3817 = vunpack.c.l.b16 %v3772
      %v3818 = vunpack.c.l.b16 %v3773
      %v3819 = vunpack.c.l.b16 %v3774
      %v3820 = vunpack.c.l.b16 %v3775
      %v3821 = vunpack.c.l.b16 %v3776
      %v3822 = vunpack.c.l.b16 %v3777
      %v3823 = vunpack.c.l.b16 %v3778
      %v3824 = vpack.c.b16 %v3809, %v3808
      %v3825 = vpack.c.b16 %v3811, %v3810
      %v3826 = vpack.c.b16 %v3813, %v3812
      %v3827 = vpack.c.b16 %v3815, %v3814
      %v3828 = vpack.c.b16 %v3817, %v3816
      %v3829 = vpack.c.b16 %v3819, %v3818
      %v3830 = vpack.c.b16 %v3821, %v3820
      %v3831 = vpack.c.b16 %v3823, %v3822
      %3840 = vmatprep.subr.bf16.mxu0 0
      %3841 = vmatpush1.bf16.msra.mxu0 %v3831
      %3842 = vmatprep.subr.bf16.mxu0 0
      %3843 = vmatpush1.bf16.msra.mxu0 %v3830
      %3844 = vmatprep.subr.bf16.mxu0 0
      %3845 = vmatpush1.bf16.msra.mxu0 %v3829
      %3846 = vmatprep.subr.bf16.mxu0 0
      %3847 = vmatpush1.bf16.msra.mxu0 %v3828
      %3848 = vmatprep.subr.bf16.mxu0 0
      %3849 = vmatpush1.bf16.msra.mxu0 %v3827
      %3850 = vmatprep.subr.bf16.mxu0 0
      %3851 = vmatpush1.bf16.msra.mxu0 %v3826
      %3852 = vmatprep.subr.bf16.mxu0 0
      %3853 = vmatpush1.bf16.msra.mxu0 %v3825
      %3854 = vmatprep.subr.bf16.mxu0 0
      %3855 = vmatpush1.bf16.msra.mxu0 %v3824
      %3856 = vmatprep.subr.bf16.mxu0 0
      %3857 = vmatpush2.bf16.msra.mxu0 0
      %3858 = vmatprep.subr.bf16.mxu0 0
      %3859 = vmatpush2.bf16.msra.mxu0 0
      %3860 = vmatprep.subr.bf16.mxu0 0
      %3861 = vmatpush2.bf16.msra.mxu0 0
      %3862 = vmatprep.subr.bf16.mxu0 0
      %3863 = vmatpush2.bf16.msra.mxu0 0
      %3864 = vmatprep.subr.bf16.mxu0 0
      %3865 = vmatpush2.bf16.msra.mxu0 0
      %3866 = vmatprep.subr.bf16.mxu0 0
      %3867 = vmatpush2.bf16.msra.mxu0 0
      %3868 = vmatprep.subr.bf16.mxu0 0
      %3869 = vmatpush2.bf16.msra.mxu0 0
      %3870 = vmatprep.subr.bf16.mxu0 0
      %3871 = vmatpush2.bf16.msra.mxu0 0
      %3872 = vmatprep.mubr.bf16.mxu0 0
      %3873 = vmatmul.mubr.bf16.gmra.mxu0 %v3790
      %v3874 = vpop.f32.mrf.mxu0
      %v3875 = vadd.f32 0.0, %v3874
      %v3876 = vpop.f32.mrf.mxu0
      %v3877 = vpop.f32.mrf.mxu0
      %v3878 = vpop.f32.mrf.mxu0
      %3879 = vdwg.mxu0
      %v3880 = vadd.f32 %v3760, %v3875
      %s3881 = scalar_lea.vmem %s204, 32
      %v3882 = vld [vmem:[%s3881] sm:$0xf]
      %v3883 = vld [vmem:[%s883] sm:$0xf]
      %v3884 = vld [vmem:[%s883 + $0x4] sm:$0xf]
      %v3885 = vld [vmem:[%s883 + $0x8] sm:$0xf]
      %v3886 = vld [vmem:[%s883 + $0xc] sm:$0xf]
      %v3887 = vld [vmem:[%s883 + $0x10] sm:$0xf]
      %v3888 = vld [vmem:[%s883 + $0x14] sm:$0xf]
      %v3889 = vld [vmem:[%s883 + $0x18] sm:$0xf]
      %v3890 = vld [vmem:[%s883 + $0x1c] sm:$0xf]
      %v3891 = vld [vmem:[%s883 + $0x20] sm:$0xf]
      %v3892 = vld [vmem:[%s883 + $0x24] sm:$0xf]
      %v3893 = vld [vmem:[%s883 + $0x28] sm:$0xf]
      %v3894 = vld [vmem:[%s883 + $0x2c] sm:$0xf]
      %v3895 = vld [vmem:[%s883 + $0x30] sm:$0xf]
      %v3896 = vld [vmem:[%s883 + $0x34] sm:$0xf]
      %v3897 = vld [vmem:[%s883 + $0x38] sm:$0xf]
      %v3898 = vld [vmem:[%s883 + $0x3c] sm:$0xf]
      %v3915 = vunpack.c.l.b16 %v3883
      %v3916 = vunpack.c.l.b16 %v3884
      %v3917 = vunpack.c.l.b16 %v3885
      %v3918 = vunpack.c.l.b16 %v3886
      %v3919 = vunpack.c.l.b16 %v3887
      %v3920 = vunpack.c.l.b16 %v3888
      %v3921 = vunpack.c.l.b16 %v3889
      %v3922 = vunpack.c.l.b16 %v3890
      %v3923 = vunpack.c.l.b16 %v3891
      %v3924 = vunpack.c.l.b16 %v3892
      %v3925 = vunpack.c.l.b16 %v3893
      %v3926 = vunpack.c.l.b16 %v3894
      %v3927 = vunpack.c.l.b16 %v3895
      %v3928 = vunpack.c.l.b16 %v3896
      %v3929 = vunpack.c.l.b16 %v3897
      %v3930 = vunpack.c.l.b16 %v3898
      %v3931 = vpack.c.b16 %v3916, %v3915
      %v3932 = vpack.c.b16 %v3918, %v3917
      %v3933 = vpack.c.b16 %v3920, %v3919
      %v3934 = vpack.c.b16 %v3922, %v3921
      %v3935 = vpack.c.b16 %v3924, %v3923
      %v3936 = vpack.c.b16 %v3926, %v3925
      %v3937 = vpack.c.b16 %v3928, %v3927
      %v3938 = vpack.c.b16 %v3930, %v3929
      %3947 = vmatprep.subr.bf16.mxu0 0
      %3948 = vmatpush1.bf16.msra.mxu0 %v3938
      %3949 = vmatprep.subr.bf16.mxu0 0
      %3950 = vmatpush1.bf16.msra.mxu0 %v3937
      %3951 = vmatprep.subr.bf16.mxu0 0
      %3952 = vmatpush1.bf16.msra.mxu0 %v3936
      %3953 = vmatprep.subr.bf16.mxu0 0
      %3954 = vmatpush1.bf16.msra.mxu0 %v3935
      %3955 = vmatprep.subr.bf16.mxu0 0
      %3956 = vmatpush1.bf16.msra.mxu0 %v3934
      %3957 = vmatprep.subr.bf16.mxu0 0
      %3958 = vmatpush1.bf16.msra.mxu0 %v3933
      %3959 = vmatprep.subr.bf16.mxu0 0
      %3960 = vmatpush1.bf16.msra.mxu0 %v3932
      %3961 = vmatprep.subr.bf16.mxu0 0
      %3962 = vmatpush1.bf16.msra.mxu0 %v3931
      %3963 = vmatprep.subr.bf16.mxu0 0
      %3964 = vmatpush2.bf16.msra.mxu0 0
      %3965 = vmatprep.subr.bf16.mxu0 0
      %3966 = vmatpush2.bf16.msra.mxu0 0
      %3967 = vmatprep.subr.bf16.mxu0 0
      %3968 = vmatpush2.bf16.msra.mxu0 0
      %3969 = vmatprep.subr.bf16.mxu0 0
      %3970 = vmatpush2.bf16.msra.mxu0 0
      %3971 = vmatprep.subr.bf16.mxu0 0
      %3972 = vmatpush2.bf16.msra.mxu0 0
      %3973 = vmatprep.subr.bf16.mxu0 0
      %3974 = vmatpush2.bf16.msra.mxu0 0
      %3975 = vmatprep.subr.bf16.mxu0 0
      %3976 = vmatpush2.bf16.msra.mxu0 0
      %3977 = vmatprep.subr.bf16.mxu0 0
      %3978 = vmatpush2.bf16.msra.mxu0 0
      %3979 = vmatprep.mubr.bf16.mxu0 0
      %3980 = vmatmul.mubr.bf16.gmra.mxu0 %v3882
      %v3981 = vpop.f32.mrf.mxu0
      %v3982 = vadd.f32 0.0, %v3981
      %v3983 = vpop.f32.mrf.mxu0
      %v3984 = vpop.f32.mrf.mxu0
      %v3985 = vpop.f32.mrf.mxu0
      %3986 = vdwg.mxu0
      %v3987 = vadd.f32 %v3880, %v3982
      %s3988 = scalar_lea.vmem %s204, 104
      %v3989 = vld [vmem:[%s3988] sm:$0xf]
      %v3990 = vld [vmem:[%s991] sm:$0xf]
      %v3991 = vld [vmem:[%s991 + $0x4] sm:$0xf]
      %v3992 = vld [vmem:[%s991 + $0x8] sm:$0xf]
      %v3993 = vld [vmem:[%s991 + $0xc] sm:$0xf]
      %v3994 = vld [vmem:[%s991 + $0x10] sm:$0xf]
      %v3995 = vld [vmem:[%s991 + $0x14] sm:$0xf]
      %v3996 = vld [vmem:[%s991 + $0x18] sm:$0xf]
      %v3997 = vld [vmem:[%s991 + $0x1c] sm:$0xf]
      %v3998 = vld [vmem:[%s991 + $0x20] sm:$0xf]
      %v3999 = vld [vmem:[%s991 + $0x24] sm:$0xf]
      %v4000 = vld [vmem:[%s991 + $0x28] sm:$0xf]
      %v4001 = vld [vmem:[%s991 + $0x2c] sm:$0xf]
      %v4002 = vld [vmem:[%s991 + $0x30] sm:$0xf]
      %v4003 = vld [vmem:[%s991 + $0x34] sm:$0xf]
      %v4004 = vld [vmem:[%s991 + $0x38] sm:$0xf]
      %v4005 = vld [vmem:[%s991 + $0x3c] sm:$0xf]
      %v4022 = vunpack.c.l.b16 %v3990
      %v4023 = vunpack.c.l.b16 %v3991
      %v4024 = vunpack.c.l.b16 %v3992
      %v4025 = vunpack.c.l.b16 %v3993
      %v4026 = vunpack.c.l.b16 %v3994
      %v4027 = vunpack.c.l.b16 %v3995
      %v4028 = vunpack.c.l.b16 %v3996
      %v4029 = vunpack.c.l.b16 %v3997
      %v4030 = vunpack.c.l.b16 %v3998
      %v4031 = vunpack.c.l.b16 %v3999
      %v4032 = vunpack.c.l.b16 %v4000
      %v4033 = vunpack.c.l.b16 %v4001
      %v4034 = vunpack.c.l.b16 %v4002
      %v4035 = vunpack.c.l.b16 %v4003
      %v4036 = vunpack.c.l.b16 %v4004
      %v4037 = vunpack.c.l.b16 %v4005
      %v4038 = vpack.c.b16 %v4023, %v4022
      %v4039 = vpack.c.b16 %v4025, %v4024
      %v4040 = vpack.c.b16 %v4027, %v4026
      %v4041 = vpack.c.b16 %v4029, %v4028
      %v4042 = vpack.c.b16 %v4031, %v4030
      %v4043 = vpack.c.b16 %v4033, %v4032
      %v4044 = vpack.c.b16 %v4035, %v4034
      %v4045 = vpack.c.b16 %v4037, %v4036
      %4054 = vmatprep.subr.bf16.mxu0 0
      %4055 = vmatpush1.bf16.msra.mxu0 %v4045
      %4056 = vmatprep.subr.bf16.mxu0 0
      %4057 = vmatpush1.bf16.msra.mxu0 %v4044
      %4058 = vmatprep.subr.bf16.mxu0 0
      %4059 = vmatpush1.bf16.msra.mxu0 %v4043
      %4060 = vmatprep.subr.bf16.mxu0 0
      %4061 = vmatpush1.bf16.msra.mxu0 %v4042
      %4062 = vmatprep.subr.bf16.mxu0 0
      %4063 = vmatpush1.bf16.msra.mxu0 %v4041
      %4064 = vmatprep.subr.bf16.mxu0 0
      %4065 = vmatpush1.bf16.msra.mxu0 %v4040
      %4066 = vmatprep.subr.bf16.mxu0 0
      %4067 = vmatpush1.bf16.msra.mxu0 %v4039
      %4068 = vmatprep.subr.bf16.mxu0 0
      %4069 = vmatpush1.bf16.msra.mxu0 %v4038
      %4070 = vmatprep.subr.bf16.mxu0 0
      %4071 = vmatpush2.bf16.msra.mxu0 0
      %4072 = vmatprep.subr.bf16.mxu0 0
      %4073 = vmatpush2.bf16.msra.mxu0 0
      %4074 = vmatprep.subr.bf16.mxu0 0
      %4075 = vmatpush2.bf16.msra.mxu0 0
      %4076 = vmatprep.subr.bf16.mxu0 0
      %4077 = vmatpush2.bf16.msra.mxu0 0
      %4078 = vmatprep.subr.bf16.mxu0 0
      %4079 = vmatpush2.bf16.msra.mxu0 0
      %4080 = vmatprep.subr.bf16.mxu0 0
      %4081 = vmatpush2.bf16.msra.mxu0 0
      %4082 = vmatprep.subr.bf16.mxu0 0
      %4083 = vmatpush2.bf16.msra.mxu0 0
      %4084 = vmatprep.subr.bf16.mxu0 0
      %4085 = vmatpush2.bf16.msra.mxu0 0
      %4086 = vmatprep.mubr.bf16.mxu0 0
      %4087 = vmatmul.mubr.bf16.gmra.mxu0 %v3989
      %v4088 = vpop.f32.mrf.mxu0
      %v4089 = vadd.f32 0.0, %v4088
      %v4090 = vpop.f32.mrf.mxu0
      %v4091 = vpop.f32.mrf.mxu0
      %v4092 = vpop.f32.mrf.mxu0
      %4093 = vdwg.mxu0
      %v4094 = vadd.f32 %v3987, %v4089
      %v4095 = vld [vmem:[%s3881] sm:$0xf]
      %v4096 = vld [vmem:[%s3881 + $0x4] sm:$0x1]
      %v4097 = vld [vmem:[%s1099] sm:$0xf]
      %v4098 = vld [vmem:[%s1099 + $0x4] sm:$0xf]
      %v4099 = vld [vmem:[%s1099 + $0x8] sm:$0xf]
      %v4100 = vld [vmem:[%s1099 + $0xc] sm:$0xf]
      %v4101 = vld [vmem:[%s1099 + $0x10] sm:$0xf]
      %v4102 = vld [vmem:[%s1099 + $0x14] sm:$0xf]
      %v4103 = vld [vmem:[%s1099 + $0x18] sm:$0xf]
      %v4104 = vld [vmem:[%s1099 + $0x1c] sm:$0xf]
      %v4105 = vld [vmem:[%s1099 + $0x20] sm:$0xf]
      %v4106 = vld [vmem:[%s1099 + $0x24] sm:$0xf]
      %v4107 = vld [vmem:[%s1099 + $0x28] sm:$0xf]
      %v4108 = vld [vmem:[%s1099 + $0x2c] sm:$0xf]
      %v4109 = vld [vmem:[%s1099 + $0x30] sm:$0xf]
      %v4110 = vld [vmem:[%s1099 + $0x34] sm:$0xf]
      %v4111 = vld [vmem:[%s1099 + $0x38] sm:$0xf]
      %v4112 = vld [vmem:[%s1099 + $0x3c] sm:$0xf]
      %v4115 = vunpack.c.l.b16 %v4095
      %v4116 = vunpack.c.l.b16 %v4096
      %v4117 = vpack.c.b16 %v4116, %v4115
      %v4119 = vshrl.u32 %v4117, 16
      %v4121 = vshll.u32 %v4117, 16
      %v4123 = vrot.slane %v4121, 1
      %v4124 = vor.u32 %v4119, %v4123
      %v4142 = vunpack.c.l.b16 %v4097
      %v4143 = vunpack.c.l.b16 %v4098
      %v4144 = vunpack.c.l.b16 %v4099
      %v4145 = vunpack.c.l.b16 %v4100
      %v4146 = vunpack.c.l.b16 %v4101
      %v4147 = vunpack.c.l.b16 %v4102
      %v4148 = vunpack.c.l.b16 %v4103
      %v4149 = vunpack.c.l.b16 %v4104
      %v4150 = vunpack.c.l.b16 %v4105
      %v4151 = vunpack.c.l.b16 %v4106
      %v4152 = vunpack.c.l.b16 %v4107
      %v4153 = vunpack.c.l.b16 %v4108
      %v4154 = vunpack.c.l.b16 %v4109
      %v4155 = vunpack.c.l.b16 %v4110
      %v4156 = vunpack.c.l.b16 %v4111
      %v4157 = vunpack.c.l.b16 %v4112
      %v4158 = vpack.c.b16 %v4143, %v4142
      %v4159 = vpack.c.b16 %v4145, %v4144
      %v4160 = vpack.c.b16 %v4147, %v4146
      %v4161 = vpack.c.b16 %v4149, %v4148
      %v4162 = vpack.c.b16 %v4151, %v4150
      %v4163 = vpack.c.b16 %v4153, %v4152
      %v4164 = vpack.c.b16 %v4155, %v4154
      %v4165 = vpack.c.b16 %v4157, %v4156
      %4174 = vmatprep.subr.bf16.mxu0 0
      %4175 = vmatpush1.bf16.msra.mxu0 %v4165
      %4176 = vmatprep.subr.bf16.mxu0 0
      %4177 = vmatpush1.bf16.msra.mxu0 %v4164
      %4178 = vmatprep.subr.bf16.mxu0 0
      %4179 = vmatpush1.bf16.msra.mxu0 %v4163
      %4180 = vmatprep.subr.bf16.mxu0 0
      %4181 = vmatpush1.bf16.msra.mxu0 %v4162
      %4182 = vmatprep.subr.bf16.mxu0 0
      %4183 = vmatpush1.bf16.msra.mxu0 %v4161
      %4184 = vmatprep.subr.bf16.mxu0 0
      %4185 = vmatpush1.bf16.msra.mxu0 %v4160
      %4186 = vmatprep.subr.bf16.mxu0 0
      %4187 = vmatpush1.bf16.msra.mxu0 %v4159
      %4188 = vmatprep.subr.bf16.mxu0 0
      %4189 = vmatpush1.bf16.msra.mxu0 %v4158
      %4190 = vmatprep.subr.bf16.mxu0 0
      %4191 = vmatpush2.bf16.msra.mxu0 0
      %4192 = vmatprep.subr.bf16.mxu0 0
      %4193 = vmatpush2.bf16.msra.mxu0 0
      %4194 = vmatprep.subr.bf16.mxu0 0
      %4195 = vmatpush2.bf16.msra.mxu0 0
      %4196 = vmatprep.subr.bf16.mxu0 0
      %4197 = vmatpush2.bf16.msra.mxu0 0
      %4198 = vmatprep.subr.bf16.mxu0 0
      %4199 = vmatpush2.bf16.msra.mxu0 0
      %4200 = vmatprep.subr.bf16.mxu0 0
      %4201 = vmatpush2.bf16.msra.mxu0 0
      %4202 = vmatprep.subr.bf16.mxu0 0
      %4203 = vmatpush2.bf16.msra.mxu0 0
      %4204 = vmatprep.subr.bf16.mxu0 0
      %4205 = vmatpush2.bf16.msra.mxu0 0
      %4206 = vmatprep.mubr.bf16.mxu0 0
      %4207 = vmatmul.mubr.bf16.gmra.mxu0 %v4124
      %v4208 = vpop.f32.mrf.mxu0
      %v4209 = vadd.f32 0.0, %v4208
      %v4210 = vpop.f32.mrf.mxu0
      %v4211 = vpop.f32.mrf.mxu0
      %v4212 = vpop.f32.mrf.mxu0
      %4213 = vdwg.mxu0
      %v4214 = vadd.f32 %v4094, %v4209
      %4215 = vst [vmem:[#allocation2 + $0x18] sm:$0xff] %v4214
      %v4216 = vld [vmem:[%s3881] sm:$0xf]
      %v4217 = vld [vmem:[%s1] sm:$0xf]
      %v4218 = vld [vmem:[%s1 + $0x4] sm:$0xf]
      %v4219 = vld [vmem:[%s1 + $0x8] sm:$0xf]
      %v4220 = vld [vmem:[%s1 + $0xc] sm:$0xf]
      %v4221 = vld [vmem:[%s1 + $0x10] sm:$0xf]
      %v4222 = vld [vmem:[%s1 + $0x14] sm:$0xf]
      %v4223 = vld [vmem:[%s1 + $0x18] sm:$0xf]
      %v4224 = vld [vmem:[%s1 + $0x1c] sm:$0xf]
      %v4225 = vld [vmem:[%s1 + $0x20] sm:$0xf]
      %v4226 = vld [vmem:[%s1 + $0x24] sm:$0xf]
      %v4227 = vld [vmem:[%s1 + $0x28] sm:$0xf]
      %v4228 = vld [vmem:[%s1 + $0x2c] sm:$0xf]
      %v4229 = vld [vmem:[%s1 + $0x30] sm:$0xf]
      %v4230 = vld [vmem:[%s1 + $0x34] sm:$0xf]
      %v4231 = vld [vmem:[%s1 + $0x38] sm:$0xf]
      %v4232 = vld [vmem:[%s1 + $0x3c] sm:$0xf]
      %v4233 = vld [vmem:[%s3988] sm:$0xf]
      %v4234 = vld [vmem:[%s230] sm:$0xf]
      %v4235 = vld [vmem:[%s230 + $0x4] sm:$0xf]
      %v4236 = vld [vmem:[%s230 + $0x8] sm:$0xf]
      %v4237 = vld [vmem:[%s230 + $0xc] sm:$0xf]
      %v4238 = vld [vmem:[%s230 + $0x10] sm:$0xf]
      %v4239 = vld [vmem:[%s230 + $0x14] sm:$0xf]
      %v4240 = vld [vmem:[%s230 + $0x18] sm:$0xf]
      %v4241 = vld [vmem:[%s230 + $0x1c] sm:$0xf]
      %v4242 = vld [vmem:[%s230 + $0x20] sm:$0xf]
      %v4243 = vld [vmem:[%s230 + $0x24] sm:$0xf]
      %v4244 = vld [vmem:[%s230 + $0x28] sm:$0xf]
      %v4245 = vld [vmem:[%s230 + $0x2c] sm:$0xf]
      %v4246 = vld [vmem:[%s230 + $0x30] sm:$0xf]
      %v4247 = vld [vmem:[%s230 + $0x34] sm:$0xf]
      %v4248 = vld [vmem:[%s230 + $0x38] sm:$0xf]
      %v4249 = vld [vmem:[%s230 + $0x3c] sm:$0xf]
      %v4266 = vunpack.c.l.b16 %v4234
      %v4267 = vunpack.c.l.b16 %v4235
      %v4268 = vunpack.c.l.b16 %v4236
      %v4269 = vunpack.c.l.b16 %v4237
      %v4270 = vunpack.c.l.b16 %v4238
      %v4271 = vunpack.c.l.b16 %v4239
      %v4272 = vunpack.c.l.b16 %v4240
      %v4273 = vunpack.c.l.b16 %v4241
      %v4274 = vunpack.c.l.b16 %v4242
      %v4275 = vunpack.c.l.b16 %v4243
      %v4276 = vunpack.c.l.b16 %v4244
      %v4277 = vunpack.c.l.b16 %v4245
      %v4278 = vunpack.c.l.b16 %v4246
      %v4279 = vunpack.c.l.b16 %v4247
      %v4280 = vunpack.c.l.b16 %v4248
      %v4281 = vunpack.c.l.b16 %v4249
      %v4282 = vpack.c.b16 %v4267, %v4266
      %v4283 = vpack.c.b16 %v4269, %v4268
      %v4284 = vpack.c.b16 %v4271, %v4270
      %v4285 = vpack.c.b16 %v4273, %v4272
      %v4286 = vpack.c.b16 %v4275, %v4274
      %v4287 = vpack.c.b16 %v4277, %v4276
      %v4288 = vpack.c.b16 %v4279, %v4278
      %v4289 = vpack.c.b16 %v4281, %v4280
      %4298 = vmatprep.subr.bf16.mxu0 0
      %4299 = vmatpush1.bf16.msra.mxu0 %v4289
      %4300 = vmatprep.subr.bf16.mxu0 0
      %4301 = vmatpush1.bf16.msra.mxu0 %v4288
      %4302 = vmatprep.subr.bf16.mxu0 0
      %4303 = vmatpush1.bf16.msra.mxu0 %v4287
      %4304 = vmatprep.subr.bf16.mxu0 0
      %4305 = vmatpush1.bf16.msra.mxu0 %v4286
      %4306 = vmatprep.subr.bf16.mxu0 0
      %4307 = vmatpush1.bf16.msra.mxu0 %v4285
      %4308 = vmatprep.subr.bf16.mxu0 0
      %4309 = vmatpush1.bf16.msra.mxu0 %v4284
      %4310 = vmatprep.subr.bf16.mxu0 0
      %4311 = vmatpush1.bf16.msra.mxu0 %v4283
      %4312 = vmatprep.subr.bf16.mxu0 0
      %4313 = vmatpush1.bf16.msra.mxu0 %v4282
      %4314 = vmatprep.subr.bf16.mxu0 0
      %4315 = vmatpush2.bf16.msra.mxu0 0
      %4316 = vmatprep.subr.bf16.mxu0 0
      %4317 = vmatpush2.bf16.msra.mxu0 0
      %4318 = vmatprep.subr.bf16.mxu0 0
      %4319 = vmatpush2.bf16.msra.mxu0 0
      %4320 = vmatprep.subr.bf16.mxu0 0
      %4321 = vmatpush2.bf16.msra.mxu0 0
      %4322 = vmatprep.subr.bf16.mxu0 0
      %4323 = vmatpush2.bf16.msra.mxu0 0
      %4324 = vmatprep.subr.bf16.mxu0 0
      %4325 = vmatpush2.bf16.msra.mxu0 0
      %4326 = vmatprep.subr.bf16.mxu0 0
      %4327 = vmatpush2.bf16.msra.mxu0 0
      %4328 = vmatprep.subr.bf16.mxu0 0
      %4329 = vmatpush2.bf16.msra.mxu0 0
      %4330 = vmatprep.mubr.bf16.mxu0 0
      %4331 = vmatmul.mubr.bf16.gmra.mxu0 %v4233
      %v4332 = vpop.f32.mrf.mxu0
      %v4333 = vadd.f32 0.0, %v4332
      %v4334 = vpop.f32.mrf.mxu0
      %v4335 = vpop.f32.mrf.mxu0
      %v4336 = vpop.f32.mrf.mxu0
      %4337 = vdwg.mxu0
      %v4354 = vunpack.c.l.b16 %v4217
      %v4355 = vunpack.c.l.b16 %v4218
      %v4356 = vunpack.c.l.b16 %v4219
      %v4357 = vunpack.c.l.b16 %v4220
      %v4358 = vunpack.c.l.b16 %v4221
      %v4359 = vunpack.c.l.b16 %v4222
      %v4360 = vunpack.c.l.b16 %v4223
      %v4361 = vunpack.c.l.b16 %v4224
      %v4362 = vunpack.c.l.b16 %v4225
      %v4363 = vunpack.c.l.b16 %v4226
      %v4364 = vunpack.c.l.b16 %v4227
      %v4365 = vunpack.c.l.b16 %v4228
      %v4366 = vunpack.c.l.b16 %v4229
      %v4367 = vunpack.c.l.b16 %v4230
      %v4368 = vunpack.c.l.b16 %v4231
      %v4369 = vunpack.c.l.b16 %v4232
      %v4370 = vpack.c.b16 %v4355, %v4354
      %v4371 = vpack.c.b16 %v4357, %v4356
      %v4372 = vpack.c.b16 %v4359, %v4358
      %v4373 = vpack.c.b16 %v4361, %v4360
      %v4374 = vpack.c.b16 %v4363, %v4362
      %v4375 = vpack.c.b16 %v4365, %v4364
      %v4376 = vpack.c.b16 %v4367, %v4366
      %v4377 = vpack.c.b16 %v4369, %v4368
      %4386 = vmatprep.subr.bf16.mxu0 0
      %4387 = vmatpush1.bf16.msra.mxu0 %v4377
      %4388 = vmatprep.subr.bf16.mxu0 0
      %4389 = vmatpush1.bf16.msra.mxu0 %v4376
      %4390 = vmatprep.subr.bf16.mxu0 0
      %4391 = vmatpush1.bf16.msra.mxu0 %v4375
      %4392 = vmatprep.subr.bf16.mxu0 0
      %4393 = vmatpush1.bf16.msra.mxu0 %v4374
      %4394 = vmatprep.subr.bf16.mxu0 0
      %4395 = vmatpush1.bf16.msra.mxu0 %v4373
      %4396 = vmatprep.subr.bf16.mxu0 0
      %4397 = vmatpush1.bf16.msra.mxu0 %v4372
      %4398 = vmatprep.subr.bf16.mxu0 0
      %4399 = vmatpush1.bf16.msra.mxu0 %v4371
      %4400 = vmatprep.subr.bf16.mxu0 0
      %4401 = vmatpush1.bf16.msra.mxu0 %v4370
      %4402 = vmatprep.subr.bf16.mxu0 0
      %4403 = vmatpush2.bf16.msra.mxu0 0
      %4404 = vmatprep.subr.bf16.mxu0 0
      %4405 = vmatpush2.bf16.msra.mxu0 0
      %4406 = vmatprep.subr.bf16.mxu0 0
      %4407 = vmatpush2.bf16.msra.mxu0 0
      %4408 = vmatprep.subr.bf16.mxu0 0
      %4409 = vmatpush2.bf16.msra.mxu0 0
      %4410 = vmatprep.subr.bf16.mxu0 0
      %4411 = vmatpush2.bf16.msra.mxu0 0
      %4412 = vmatprep.subr.bf16.mxu0 0
      %4413 = vmatpush2.bf16.msra.mxu0 0
      %4414 = vmatprep.subr.bf16.mxu0 0
      %4415 = vmatpush2.bf16.msra.mxu0 0
      %4416 = vmatprep.subr.bf16.mxu0 0
      %4417 = vmatpush2.bf16.msra.mxu0 0
      %4418 = vmatprep.mubr.bf16.mxu0 0
      %4419 = vmatmul.mubr.bf16.gmra.mxu0 %v4216
      %v4420 = vpop.f32.mrf.mxu0
      %v4421 = vadd.f32 %v4333, %v4420
      %v4422 = vpop.f32.mrf.mxu0
      %v4423 = vpop.f32.mrf.mxu0
      %v4424 = vpop.f32.mrf.mxu0
      %4425 = vdwg.mxu0
      %v4426 = vld [vmem:[%s3881] sm:$0xf]
      %v4427 = vld [vmem:[%s3881 + $0x4] sm:$0x1]
      %v4428 = vld [vmem:[%s425] sm:$0xf]
      %v4429 = vld [vmem:[%s425 + $0x4] sm:$0xf]
      %v4430 = vld [vmem:[%s425 + $0x8] sm:$0xf]
      %v4431 = vld [vmem:[%s425 + $0xc] sm:$0xf]
      %v4432 = vld [vmem:[%s425 + $0x10] sm:$0xf]
      %v4433 = vld [vmem:[%s425 + $0x14] sm:$0xf]
      %v4434 = vld [vmem:[%s425 + $0x18] sm:$0xf]
      %v4435 = vld [vmem:[%s425 + $0x1c] sm:$0xf]
      %v4436 = vld [vmem:[%s425 + $0x20] sm:$0xf]
      %v4437 = vld [vmem:[%s425 + $0x24] sm:$0xf]
      %v4438 = vld [vmem:[%s425 + $0x28] sm:$0xf]
      %v4439 = vld [vmem:[%s425 + $0x2c] sm:$0xf]
      %v4440 = vld [vmem:[%s425 + $0x30] sm:$0xf]
      %v4441 = vld [vmem:[%s425 + $0x34] sm:$0xf]
      %v4442 = vld [vmem:[%s425 + $0x38] sm:$0xf]
      %v4443 = vld [vmem:[%s425 + $0x3c] sm:$0xf]
      %v4446 = vunpack.c.l.b16 %v4426
      %v4447 = vunpack.c.l.b16 %v4427
      %v4448 = vpack.c.b16 %v4447, %v4446
      %v4450 = vshrl.u32 %v4448, 16
      %v4452 = vshll.u32 %v4448, 16
      %v4454 = vrot.slane %v4452, 1
      %v4455 = vor.u32 %v4450, %v4454
      %v4473 = vunpack.c.l.b16 %v4428
      %v4474 = vunpack.c.l.b16 %v4429
      %v4475 = vunpack.c.l.b16 %v4430
      %v4476 = vunpack.c.l.b16 %v4431
      %v4477 = vunpack.c.l.b16 %v4432
      %v4478 = vunpack.c.l.b16 %v4433
      %v4479 = vunpack.c.l.b16 %v4434
      %v4480 = vunpack.c.l.b16 %v4435
      %v4481 = vunpack.c.l.b16 %v4436
      %v4482 = vunpack.c.l.b16 %v4437
      %v4483 = vunpack.c.l.b16 %v4438
      %v4484 = vunpack.c.l.b16 %v4439
      %v4485 = vunpack.c.l.b16 %v4440
      %v4486 = vunpack.c.l.b16 %v4441
      %v4487 = vunpack.c.l.b16 %v4442
      %v4488 = vunpack.c.l.b16 %v4443
      %v4489 = vpack.c.b16 %v4474, %v4473
      %v4490 = vpack.c.b16 %v4476, %v4475
      %v4491 = vpack.c.b16 %v4478, %v4477
      %v4492 = vpack.c.b16 %v4480, %v4479
      %v4493 = vpack.c.b16 %v4482, %v4481
      %v4494 = vpack.c.b16 %v4484, %v4483
      %v4495 = vpack.c.b16 %v4486, %v4485
      %v4496 = vpack.c.b16 %v4488, %v4487
      %4505 = vmatprep.subr.bf16.mxu0 0
      %4506 = vmatpush1.bf16.msra.mxu0 %v4496
      %4507 = vmatprep.subr.bf16.mxu0 0
      %4508 = vmatpush1.bf16.msra.mxu0 %v4495
      %4509 = vmatprep.subr.bf16.mxu0 0
      %4510 = vmatpush1.bf16.msra.mxu0 %v4494
      %4511 = vmatprep.subr.bf16.mxu0 0
      %4512 = vmatpush1.bf16.msra.mxu0 %v4493
      %4513 = vmatprep.subr.bf16.mxu0 0
      %4514 = vmatpush1.bf16.msra.mxu0 %v4492
      %4515 = vmatprep.subr.bf16.mxu0 0
      %4516 = vmatpush1.bf16.msra.mxu0 %v4491
      %4517 = vmatprep.subr.bf16.mxu0 0
      %4518 = vmatpush1.bf16.msra.mxu0 %v4490
      %4519 = vmatprep.subr.bf16.mxu0 0
      %4520 = vmatpush1.bf16.msra.mxu0 %v4489
      %4521 = vmatprep.subr.bf16.mxu0 0
      %4522 = vmatpush2.bf16.msra.mxu0 0
      %4523 = vmatprep.subr.bf16.mxu0 0
      %4524 = vmatpush2.bf16.msra.mxu0 0
      %4525 = vmatprep.subr.bf16.mxu0 0
      %4526 = vmatpush2.bf16.msra.mxu0 0
      %4527 = vmatprep.subr.bf16.mxu0 0
      %4528 = vmatpush2.bf16.msra.mxu0 0
      %4529 = vmatprep.subr.bf16.mxu0 0
      %4530 = vmatpush2.bf16.msra.mxu0 0
      %4531 = vmatprep.subr.bf16.mxu0 0
      %4532 = vmatpush2.bf16.msra.mxu0 0
      %4533 = vmatprep.subr.bf16.mxu0 0
      %4534 = vmatpush2.bf16.msra.mxu0 0
      %4535 = vmatprep.subr.bf16.mxu0 0
      %4536 = vmatpush2.bf16.msra.mxu0 0
      %4537 = vmatprep.mubr.bf16.mxu0 0
      %4538 = vmatmul.mubr.bf16.gmra.mxu0 %v4455
      %v4539 = vpop.f32.mrf.mxu0
      %v4540 = vadd.f32 0.0, %v4539
      %v4541 = vpop.f32.mrf.mxu0
      %v4542 = vpop.f32.mrf.mxu0
      %v4543 = vpop.f32.mrf.mxu0
      %4544 = vdwg.mxu0
      %v4545 = vadd.f32 %v4421, %v4540
      %s4546 = scalar_lea.vmem %s204, 176
      %v4547 = vld [vmem:[%s4546] sm:$0xf]
      %v4548 = vld [vmem:[%s546] sm:$0xf]
      %v4549 = vld [vmem:[%s546 + $0x4] sm:$0xf]
      %v4550 = vld [vmem:[%s546 + $0x8] sm:$0xf]
      %v4551 = vld [vmem:[%s546 + $0xc] sm:$0xf]
      %v4552 = vld [vmem:[%s546 + $0x10] sm:$0xf]
      %v4553 = vld [vmem:[%s546 + $0x14] sm:$0xf]
      %v4554 = vld [vmem:[%s546 + $0x18] sm:$0xf]
      %v4555 = vld [vmem:[%s546 + $0x1c] sm:$0xf]
      %v4556 = vld [vmem:[%s546 + $0x20] sm:$0xf]
      %v4557 = vld [vmem:[%s546 + $0x24] sm:$0xf]
      %v4558 = vld [vmem:[%s546 + $0x28] sm:$0xf]
      %v4559 = vld [vmem:[%s546 + $0x2c] sm:$0xf]
      %v4560 = vld [vmem:[%s546 + $0x30] sm:$0xf]
      %v4561 = vld [vmem:[%s546 + $0x34] sm:$0xf]
      %v4562 = vld [vmem:[%s546 + $0x38] sm:$0xf]
      %v4563 = vld [vmem:[%s546 + $0x3c] sm:$0xf]
      %v4580 = vunpack.c.l.b16 %v4548
      %v4581 = vunpack.c.l.b16 %v4549
      %v4582 = vunpack.c.l.b16 %v4550
      %v4583 = vunpack.c.l.b16 %v4551
      %v4584 = vunpack.c.l.b16 %v4552
      %v4585 = vunpack.c.l.b16 %v4553
      %v4586 = vunpack.c.l.b16 %v4554
      %v4587 = vunpack.c.l.b16 %v4555
      %v4588 = vunpack.c.l.b16 %v4556
      %v4589 = vunpack.c.l.b16 %v4557
      %v4590 = vunpack.c.l.b16 %v4558
      %v4591 = vunpack.c.l.b16 %v4559
      %v4592 = vunpack.c.l.b16 %v4560
      %v4593 = vunpack.c.l.b16 %v4561
      %v4594 = vunpack.c.l.b16 %v4562
      %v4595 = vunpack.c.l.b16 %v4563
      %v4596 = vpack.c.b16 %v4581, %v4580
      %v4597 = vpack.c.b16 %v4583, %v4582
      %v4598 = vpack.c.b16 %v4585, %v4584
      %v4599 = vpack.c.b16 %v4587, %v4586
      %v4600 = vpack.c.b16 %v4589, %v4588
      %v4601 = vpack.c.b16 %v4591, %v4590
      %v4602 = vpack.c.b16 %v4593, %v4592
      %v4603 = vpack.c.b16 %v4595, %v4594
      %4612 = vmatprep.subr.bf16.mxu0 0
      %4613 = vmatpush1.bf16.msra.mxu0 %v4603
      %4614 = vmatprep.subr.bf16.mxu0 0
      %4615 = vmatpush1.bf16.msra.mxu0 %v4602
      %4616 = vmatprep.subr.bf16.mxu0 0
      %4617 = vmatpush1.bf16.msra.mxu0 %v4601
      %4618 = vmatprep.subr.bf16.mxu0 0
      %4619 = vmatpush1.bf16.msra.mxu0 %v4600
      %4620 = vmatprep.subr.bf16.mxu0 0
      %4621 = vmatpush1.bf16.msra.mxu0 %v4599
      %4622 = vmatprep.subr.bf16.mxu0 0
      %4623 = vmatpush1.bf16.msra.mxu0 %v4598
      %4624 = vmatprep.subr.bf16.mxu0 0
      %4625 = vmatpush1.bf16.msra.mxu0 %v4597
      %4626 = vmatprep.subr.bf16.mxu0 0
      %4627 = vmatpush1.bf16.msra.mxu0 %v4596
      %4628 = vmatprep.subr.bf16.mxu0 0
      %4629 = vmatpush2.bf16.msra.mxu0 0
      %4630 = vmatprep.subr.bf16.mxu0 0
      %4631 = vmatpush2.bf16.msra.mxu0 0
      %4632 = vmatprep.subr.bf16.mxu0 0
      %4633 = vmatpush2.bf16.msra.mxu0 0
      %4634 = vmatprep.subr.bf16.mxu0 0
      %4635 = vmatpush2.bf16.msra.mxu0 0
      %4636 = vmatprep.subr.bf16.mxu0 0
      %4637 = vmatpush2.bf16.msra.mxu0 0
      %4638 = vmatprep.subr.bf16.mxu0 0
      %4639 = vmatpush2.bf16.msra.mxu0 0
      %4640 = vmatprep.subr.bf16.mxu0 0
      %4641 = vmatpush2.bf16.msra.mxu0 0
      %4642 = vmatprep.subr.bf16.mxu0 0
      %4643 = vmatpush2.bf16.msra.mxu0 0
      %4644 = vmatprep.mubr.bf16.mxu0 0
      %4645 = vmatmul.mubr.bf16.gmra.mxu0 %v4547
      %v4646 = vpop.f32.mrf.mxu0
      %v4647 = vadd.f32 0.0, %v4646
      %v4648 = vpop.f32.mrf.mxu0
      %v4649 = vpop.f32.mrf.mxu0
      %v4650 = vpop.f32.mrf.mxu0
      %4651 = vdwg.mxu0
      %v4652 = vadd.f32 %v4545, %v4647
      %s4653 = scalar_lea.vmem %s204, 248
      %v4654 = vld [vmem:[%s4653] sm:$0xf]
      %v4655 = vld [vmem:[%s654] sm:$0xf]
      %v4656 = vld [vmem:[%s654 + $0x4] sm:$0xf]
      %v4657 = vld [vmem:[%s654 + $0x8] sm:$0xf]
      %v4658 = vld [vmem:[%s654 + $0xc] sm:$0xf]
      %v4659 = vld [vmem:[%s654 + $0x10] sm:$0xf]
      %v4660 = vld [vmem:[%s654 + $0x14] sm:$0xf]
      %v4661 = vld [vmem:[%s654 + $0x18] sm:$0xf]
      %v4662 = vld [vmem:[%s654 + $0x1c] sm:$0xf]
      %v4663 = vld [vmem:[%s654 + $0x20] sm:$0xf]
      %v4664 = vld [vmem:[%s654 + $0x24] sm:$0xf]
      %v4665 = vld [vmem:[%s654 + $0x28] sm:$0xf]
      %v4666 = vld [vmem:[%s654 + $0x2c] sm:$0xf]
      %v4667 = vld [vmem:[%s654 + $0x30] sm:$0xf]
      %v4668 = vld [vmem:[%s654 + $0x34] sm:$0xf]
      %v4669 = vld [vmem:[%s654 + $0x38] sm:$0xf]
      %v4670 = vld [vmem:[%s654 + $0x3c] sm:$0xf]
      %v4687 = vunpack.c.l.b16 %v4655
      %v4688 = vunpack.c.l.b16 %v4656
      %v4689 = vunpack.c.l.b16 %v4657
      %v4690 = vunpack.c.l.b16 %v4658
      %v4691 = vunpack.c.l.b16 %v4659
      %v4692 = vunpack.c.l.b16 %v4660
      %v4693 = vunpack.c.l.b16 %v4661
      %v4694 = vunpack.c.l.b16 %v4662
      %v4695 = vunpack.c.l.b16 %v4663
      %v4696 = vunpack.c.l.b16 %v4664
      %v4697 = vunpack.c.l.b16 %v4665
      %v4698 = vunpack.c.l.b16 %v4666
      %v4699 = vunpack.c.l.b16 %v4667
      %v4700 = vunpack.c.l.b16 %v4668
      %v4701 = vunpack.c.l.b16 %v4669
      %v4702 = vunpack.c.l.b16 %v4670
      %v4703 = vpack.c.b16 %v4688, %v4687
      %v4704 = vpack.c.b16 %v4690, %v4689
      %v4705 = vpack.c.b16 %v4692, %v4691
      %v4706 = vpack.c.b16 %v4694, %v4693
      %v4707 = vpack.c.b16 %v4696, %v4695
      %v4708 = vpack.c.b16 %v4698, %v4697
      %v4709 = vpack.c.b16 %v4700, %v4699
      %v4710 = vpack.c.b16 %v4702, %v4701
      %4719 = vmatprep.subr.bf16.mxu0 0
      %4720 = vmatpush1.bf16.msra.mxu0 %v4710
      %4721 = vmatprep.subr.bf16.mxu0 0
      %4722 = vmatpush1.bf16.msra.mxu0 %v4709
      %4723 = vmatprep.subr.bf16.mxu0 0
      %4724 = vmatpush1.bf16.msra.mxu0 %v4708
      %4725 = vmatprep.subr.bf16.mxu0 0
      %4726 = vmatpush1.bf16.msra.mxu0 %v4707
      %4727 = vmatprep.subr.bf16.mxu0 0
      %4728 = vmatpush1.bf16.msra.mxu0 %v4706
      %4729 = vmatprep.subr.bf16.mxu0 0
      %4730 = vmatpush1.bf16.msra.mxu0 %v4705
      %4731 = vmatprep.subr.bf16.mxu0 0
      %4732 = vmatpush1.bf16.msra.mxu0 %v4704
      %4733 = vmatprep.subr.bf16.mxu0 0
      %4734 = vmatpush1.bf16.msra.mxu0 %v4703
      %4735 = vmatprep.subr.bf16.mxu0 0
      %4736 = vmatpush2.bf16.msra.mxu0 0
      %4737 = vmatprep.subr.bf16.mxu0 0
      %4738 = vmatpush2.bf16.msra.mxu0 0
      %4739 = vmatprep.subr.bf16.mxu0 0
      %4740 = vmatpush2.bf16.msra.mxu0 0
      %4741 = vmatprep.subr.bf16.mxu0 0
      %4742 = vmatpush2.bf16.msra.mxu0 0
      %4743 = vmatprep.subr.bf16.mxu0 0
      %4744 = vmatpush2.bf16.msra.mxu0 0
      %4745 = vmatprep.subr.bf16.mxu0 0
      %4746 = vmatpush2.bf16.msra.mxu0 0
      %4747 = vmatprep.subr.bf16.mxu0 0
      %4748 = vmatpush2.bf16.msra.mxu0 0
      %4749 = vmatprep.subr.bf16.mxu0 0
      %4750 = vmatpush2.bf16.msra.mxu0 0
      %4751 = vmatprep.mubr.bf16.mxu0 0
      %4752 = vmatmul.mubr.bf16.gmra.mxu0 %v4654
      %v4753 = vpop.f32.mrf.mxu0
      %v4754 = vadd.f32 0.0, %v4753
      %v4755 = vpop.f32.mrf.mxu0
      %v4756 = vpop.f32.mrf.mxu0
      %v4757 = vpop.f32.mrf.mxu0
      %4758 = vdwg.mxu0
      %v4759 = vadd.f32 %v4652, %v4754
      %v4760 = vld [vmem:[%s4546] sm:$0xf]
      %v4761 = vld [vmem:[%s4546 + $0x4] sm:$0x1]
      %v4762 = vld [vmem:[%s762] sm:$0xf]
      %v4763 = vld [vmem:[%s762 + $0x4] sm:$0xf]
      %v4764 = vld [vmem:[%s762 + $0x8] sm:$0xf]
      %v4765 = vld [vmem:[%s762 + $0xc] sm:$0xf]
      %v4766 = vld [vmem:[%s762 + $0x10] sm:$0xf]
      %v4767 = vld [vmem:[%s762 + $0x14] sm:$0xf]
      %v4768 = vld [vmem:[%s762 + $0x18] sm:$0xf]
      %v4769 = vld [vmem:[%s762 + $0x1c] sm:$0xf]
      %v4770 = vld [vmem:[%s762 + $0x20] sm:$0xf]
      %v4771 = vld [vmem:[%s762 + $0x24] sm:$0xf]
      %v4772 = vld [vmem:[%s762 + $0x28] sm:$0xf]
      %v4773 = vld [vmem:[%s762 + $0x2c] sm:$0xf]
      %v4774 = vld [vmem:[%s762 + $0x30] sm:$0xf]
      %v4775 = vld [vmem:[%s762 + $0x34] sm:$0xf]
      %v4776 = vld [vmem:[%s762 + $0x38] sm:$0xf]
      %v4777 = vld [vmem:[%s762 + $0x3c] sm:$0xf]
      %v4780 = vunpack.c.l.b16 %v4760
      %v4781 = vunpack.c.l.b16 %v4761
      %v4782 = vpack.c.b16 %v4781, %v4780
      %v4784 = vshrl.u32 %v4782, 16
      %v4786 = vshll.u32 %v4782, 16
      %v4788 = vrot.slane %v4786, 1
      %v4789 = vor.u32 %v4784, %v4788
      %v4807 = vunpack.c.l.b16 %v4762
      %v4808 = vunpack.c.l.b16 %v4763
      %v4809 = vunpack.c.l.b16 %v4764
      %v4810 = vunpack.c.l.b16 %v4765
      %v4811 = vunpack.c.l.b16 %v4766
      %v4812 = vunpack.c.l.b16 %v4767
      %v4813 = vunpack.c.l.b16 %v4768
      %v4814 = vunpack.c.l.b16 %v4769
      %v4815 = vunpack.c.l.b16 %v4770
      %v4816 = vunpack.c.l.b16 %v4771
      %v4817 = vunpack.c.l.b16 %v4772
      %v4818 = vunpack.c.l.b16 %v4773
      %v4819 = vunpack.c.l.b16 %v4774
      %v4820 = vunpack.c.l.b16 %v4775
      %v4821 = vunpack.c.l.b16 %v4776
      %v4822 = vunpack.c.l.b16 %v4777
      %v4823 = vpack.c.b16 %v4808, %v4807
      %v4824 = vpack.c.b16 %v4810, %v4809
      %v4825 = vpack.c.b16 %v4812, %v4811
      %v4826 = vpack.c.b16 %v4814, %v4813
      %v4827 = vpack.c.b16 %v4816, %v4815
      %v4828 = vpack.c.b16 %v4818, %v4817
      %v4829 = vpack.c.b16 %v4820, %v4819
      %v4830 = vpack.c.b16 %v4822, %v4821
      %4839 = vmatprep.subr.bf16.mxu0 0
      %4840 = vmatpush1.bf16.msra.mxu0 %v4830
      %4841 = vmatprep.subr.bf16.mxu0 0
      %4842 = vmatpush1.bf16.msra.mxu0 %v4829
      %4843 = vmatprep.subr.bf16.mxu0 0
      %4844 = vmatpush1.bf16.msra.mxu0 %v4828
      %4845 = vmatprep.subr.bf16.mxu0 0
      %4846 = vmatpush1.bf16.msra.mxu0 %v4827
      %4847 = vmatprep.subr.bf16.mxu0 0
      %4848 = vmatpush1.bf16.msra.mxu0 %v4826
      %4849 = vmatprep.subr.bf16.mxu0 0
      %4850 = vmatpush1.bf16.msra.mxu0 %v4825
      %4851 = vmatprep.subr.bf16.mxu0 0
      %4852 = vmatpush1.bf16.msra.mxu0 %v4824
      %4853 = vmatprep.subr.bf16.mxu0 0
      %4854 = vmatpush1.bf16.msra.mxu0 %v4823
      %4855 = vmatprep.subr.bf16.mxu0 0
      %4856 = vmatpush2.bf16.msra.mxu0 0
      %4857 = vmatprep.subr.bf16.mxu0 0
      %4858 = vmatpush2.bf16.msra.mxu0 0
      %4859 = vmatprep.subr.bf16.mxu0 0
      %4860 = vmatpush2.bf16.msra.mxu0 0
      %4861 = vmatprep.subr.bf16.mxu0 0
      %4862 = vmatpush2.bf16.msra.mxu0 0
      %4863 = vmatprep.subr.bf16.mxu0 0
      %4864 = vmatpush2.bf16.msra.mxu0 0
      %4865 = vmatprep.subr.bf16.mxu0 0
      %4866 = vmatpush2.bf16.msra.mxu0 0
      %4867 = vmatprep.subr.bf16.mxu0 0
      %4868 = vmatpush2.bf16.msra.mxu0 0
      %4869 = vmatprep.subr.bf16.mxu0 0
      %4870 = vmatpush2.bf16.msra.mxu0 0
      %4871 = vmatprep.mubr.bf16.mxu0 0
      %4872 = vmatmul.mubr.bf16.gmra.mxu0 %v4789
      %v4873 = vpop.f32.mrf.mxu0
      %v4874 = vadd.f32 0.0, %v4873
      %v4875 = vpop.f32.mrf.mxu0
      %v4876 = vpop.f32.mrf.mxu0
      %v4877 = vpop.f32.mrf.mxu0
      %4878 = vdwg.mxu0
      %v4879 = vadd.f32 %v4759, %v4874
      %s4880 = scalar_lea.vmem %s204, 40
      %v4881 = vld [vmem:[%s4880] sm:$0xf]
      %v4882 = vld [vmem:[%s883] sm:$0xf]
      %v4883 = vld [vmem:[%s883 + $0x4] sm:$0xf]
      %v4884 = vld [vmem:[%s883 + $0x8] sm:$0xf]
      %v4885 = vld [vmem:[%s883 + $0xc] sm:$0xf]
      %v4886 = vld [vmem:[%s883 + $0x10] sm:$0xf]
      %v4887 = vld [vmem:[%s883 + $0x14] sm:$0xf]
      %v4888 = vld [vmem:[%s883 + $0x18] sm:$0xf]
      %v4889 = vld [vmem:[%s883 + $0x1c] sm:$0xf]
      %v4890 = vld [vmem:[%s883 + $0x20] sm:$0xf]
      %v4891 = vld [vmem:[%s883 + $0x24] sm:$0xf]
      %v4892 = vld [vmem:[%s883 + $0x28] sm:$0xf]
      %v4893 = vld [vmem:[%s883 + $0x2c] sm:$0xf]
      %v4894 = vld [vmem:[%s883 + $0x30] sm:$0xf]
      %v4895 = vld [vmem:[%s883 + $0x34] sm:$0xf]
      %v4896 = vld [vmem:[%s883 + $0x38] sm:$0xf]
      %v4897 = vld [vmem:[%s883 + $0x3c] sm:$0xf]
      %v4914 = vunpack.c.l.b16 %v4882
      %v4915 = vunpack.c.l.b16 %v4883
      %v4916 = vunpack.c.l.b16 %v4884
      %v4917 = vunpack.c.l.b16 %v4885
      %v4918 = vunpack.c.l.b16 %v4886
      %v4919 = vunpack.c.l.b16 %v4887
      %v4920 = vunpack.c.l.b16 %v4888
      %v4921 = vunpack.c.l.b16 %v4889
      %v4922 = vunpack.c.l.b16 %v4890
      %v4923 = vunpack.c.l.b16 %v4891
      %v4924 = vunpack.c.l.b16 %v4892
      %v4925 = vunpack.c.l.b16 %v4893
      %v4926 = vunpack.c.l.b16 %v4894
      %v4927 = vunpack.c.l.b16 %v4895
      %v4928 = vunpack.c.l.b16 %v4896
      %v4929 = vunpack.c.l.b16 %v4897
      %v4930 = vpack.c.b16 %v4915, %v4914
      %v4931 = vpack.c.b16 %v4917, %v4916
      %v4932 = vpack.c.b16 %v4919, %v4918
      %v4933 = vpack.c.b16 %v4921, %v4920
      %v4934 = vpack.c.b16 %v4923, %v4922
      %v4935 = vpack.c.b16 %v4925, %v4924
      %v4936 = vpack.c.b16 %v4927, %v4926
      %v4937 = vpack.c.b16 %v4929, %v4928
      %4946 = vmatprep.subr.bf16.mxu0 0
      %4947 = vmatpush1.bf16.msra.mxu0 %v4937
      %4948 = vmatprep.subr.bf16.mxu0 0
      %4949 = vmatpush1.bf16.msra.mxu0 %v4936
      %4950 = vmatprep.subr.bf16.mxu0 0
      %4951 = vmatpush1.bf16.msra.mxu0 %v4935
      %4952 = vmatprep.subr.bf16.mxu0 0
      %4953 = vmatpush1.bf16.msra.mxu0 %v4934
      %4954 = vmatprep.subr.bf16.mxu0 0
      %4955 = vmatpush1.bf16.msra.mxu0 %v4933
      %4956 = vmatprep.subr.bf16.mxu0 0
      %4957 = vmatpush1.bf16.msra.mxu0 %v4932
      %4958 = vmatprep.subr.bf16.mxu0 0
      %4959 = vmatpush1.bf16.msra.mxu0 %v4931
      %4960 = vmatprep.subr.bf16.mxu0 0
      %4961 = vmatpush1.bf16.msra.mxu0 %v4930
      %4962 = vmatprep.subr.bf16.mxu0 0
      %4963 = vmatpush2.bf16.msra.mxu0 0
      %4964 = vmatprep.subr.bf16.mxu0 0
      %4965 = vmatpush2.bf16.msra.mxu0 0
      %4966 = vmatprep.subr.bf16.mxu0 0
      %4967 = vmatpush2.bf16.msra.mxu0 0
      %4968 = vmatprep.subr.bf16.mxu0 0
      %4969 = vmatpush2.bf16.msra.mxu0 0
      %4970 = vmatprep.subr.bf16.mxu0 0
      %4971 = vmatpush2.bf16.msra.mxu0 0
      %4972 = vmatprep.subr.bf16.mxu0 0
      %4973 = vmatpush2.bf16.msra.mxu0 0
      %4974 = vmatprep.subr.bf16.mxu0 0
      %4975 = vmatpush2.bf16.msra.mxu0 0
      %4976 = vmatprep.subr.bf16.mxu0 0
      %4977 = vmatpush2.bf16.msra.mxu0 0
      %4978 = vmatprep.mubr.bf16.mxu0 0
      %4979 = vmatmul.mubr.bf16.gmra.mxu0 %v4881
      %v4980 = vpop.f32.mrf.mxu0
      %v4981 = vadd.f32 0.0, %v4980
      %v4982 = vpop.f32.mrf.mxu0
      %v4983 = vpop.f32.mrf.mxu0
      %v4984 = vpop.f32.mrf.mxu0
      %4985 = vdwg.mxu0
      %v4986 = vadd.f32 %v4879, %v4981
      %s4987 = scalar_lea.vmem %s204, 112
      %v4988 = vld [vmem:[%s4987] sm:$0xf]
      %v4989 = vld [vmem:[%s991] sm:$0xf]
      %v4990 = vld [vmem:[%s991 + $0x4] sm:$0xf]
      %v4991 = vld [vmem:[%s991 + $0x8] sm:$0xf]
      %v4992 = vld [vmem:[%s991 + $0xc] sm:$0xf]
      %v4993 = vld [vmem:[%s991 + $0x10] sm:$0xf]
      %v4994 = vld [vmem:[%s991 + $0x14] sm:$0xf]
      %v4995 = vld [vmem:[%s991 + $0x18] sm:$0xf]
      %v4996 = vld [vmem:[%s991 + $0x1c] sm:$0xf]
      %v4997 = vld [vmem:[%s991 + $0x20] sm:$0xf]
      %v4998 = vld [vmem:[%s991 + $0x24] sm:$0xf]
      %v4999 = vld [vmem:[%s991 + $0x28] sm:$0xf]
      %v5000 = vld [vmem:[%s991 + $0x2c] sm:$0xf]
      %v5001 = vld [vmem:[%s991 + $0x30] sm:$0xf]
      %v5002 = vld [vmem:[%s991 + $0x34] sm:$0xf]
      %v5003 = vld [vmem:[%s991 + $0x38] sm:$0xf]
      %v5004 = vld [vmem:[%s991 + $0x3c] sm:$0xf]
      %v5021 = vunpack.c.l.b16 %v4989
      %v5022 = vunpack.c.l.b16 %v4990
      %v5023 = vunpack.c.l.b16 %v4991
      %v5024 = vunpack.c.l.b16 %v4992
      %v5025 = vunpack.c.l.b16 %v4993
      %v5026 = vunpack.c.l.b16 %v4994
      %v5027 = vunpack.c.l.b16 %v4995
      %v5028 = vunpack.c.l.b16 %v4996
      %v5029 = vunpack.c.l.b16 %v4997
      %v5030 = vunpack.c.l.b16 %v4998
      %v5031 = vunpack.c.l.b16 %v4999
      %v5032 = vunpack.c.l.b16 %v5000
      %v5033 = vunpack.c.l.b16 %v5001
      %v5034 = vunpack.c.l.b16 %v5002
      %v5035 = vunpack.c.l.b16 %v5003
      %v5036 = vunpack.c.l.b16 %v5004
      %v5037 = vpack.c.b16 %v5022, %v5021
      %v5038 = vpack.c.b16 %v5024, %v5023
      %v5039 = vpack.c.b16 %v5026, %v5025
      %v5040 = vpack.c.b16 %v5028, %v5027
      %v5041 = vpack.c.b16 %v5030, %v5029
      %v5042 = vpack.c.b16 %v5032, %v5031
      %v5043 = vpack.c.b16 %v5034, %v5033
      %v5044 = vpack.c.b16 %v5036, %v5035
      %5053 = vmatprep.subr.bf16.mxu0 0
      %5054 = vmatpush1.bf16.msra.mxu0 %v5044
      %5055 = vmatprep.subr.bf16.mxu0 0
      %5056 = vmatpush1.bf16.msra.mxu0 %v5043
      %5057 = vmatprep.subr.bf16.mxu0 0
      %5058 = vmatpush1.bf16.msra.mxu0 %v5042
      %5059 = vmatprep.subr.bf16.mxu0 0
      %5060 = vmatpush1.bf16.msra.mxu0 %v5041
      %5061 = vmatprep.subr.bf16.mxu0 0
      %5062 = vmatpush1.bf16.msra.mxu0 %v5040
      %5063 = vmatprep.subr.bf16.mxu0 0
      %5064 = vmatpush1.bf16.msra.mxu0 %v5039
      %5065 = vmatprep.subr.bf16.mxu0 0
      %5066 = vmatpush1.bf16.msra.mxu0 %v5038
      %5067 = vmatprep.subr.bf16.mxu0 0
      %5068 = vmatpush1.bf16.msra.mxu0 %v5037
      %5069 = vmatprep.subr.bf16.mxu0 0
      %5070 = vmatpush2.bf16.msra.mxu0 0
      %5071 = vmatprep.subr.bf16.mxu0 0
      %5072 = vmatpush2.bf16.msra.mxu0 0
      %5073 = vmatprep.subr.bf16.mxu0 0
      %5074 = vmatpush2.bf16.msra.mxu0 0
      %5075 = vmatprep.subr.bf16.mxu0 0
      %5076 = vmatpush2.bf16.msra.mxu0 0
      %5077 = vmatprep.subr.bf16.mxu0 0
      %5078 = vmatpush2.bf16.msra.mxu0 0
      %5079 = vmatprep.subr.bf16.mxu0 0
      %5080 = vmatpush2.bf16.msra.mxu0 0
      %5081 = vmatprep.subr.bf16.mxu0 0
      %5082 = vmatpush2.bf16.msra.mxu0 0
      %5083 = vmatprep.subr.bf16.mxu0 0
      %5084 = vmatpush2.bf16.msra.mxu0 0
      %5085 = vmatprep.mubr.bf16.mxu0 0
      %5086 = vmatmul.mubr.bf16.gmra.mxu0 %v4988
      %v5087 = vpop.f32.mrf.mxu0
      %v5088 = vadd.f32 0.0, %v5087
      %v5089 = vpop.f32.mrf.mxu0
      %v5090 = vpop.f32.mrf.mxu0
      %v5091 = vpop.f32.mrf.mxu0
      %5092 = vdwg.mxu0
      %v5093 = vadd.f32 %v4986, %v5088
      %v5094 = vld [vmem:[%s4880] sm:$0xf]
      %v5095 = vld [vmem:[%s4880 + $0x4] sm:$0x1]
      %v5096 = vld [vmem:[%s1099] sm:$0xf]
      %v5097 = vld [vmem:[%s1099 + $0x4] sm:$0xf]
      %v5098 = vld [vmem:[%s1099 + $0x8] sm:$0xf]
      %v5099 = vld [vmem:[%s1099 + $0xc] sm:$0xf]
      %v5100 = vld [vmem:[%s1099 + $0x10] sm:$0xf]
      %v5101 = vld [vmem:[%s1099 + $0x14] sm:$0xf]
      %v5102 = vld [vmem:[%s1099 + $0x18] sm:$0xf]
      %v5103 = vld [vmem:[%s1099 + $0x1c] sm:$0xf]
      %v5104 = vld [vmem:[%s1099 + $0x20] sm:$0xf]
      %v5105 = vld [vmem:[%s1099 + $0x24] sm:$0xf]
      %v5106 = vld [vmem:[%s1099 + $0x28] sm:$0xf]
      %v5107 = vld [vmem:[%s1099 + $0x2c] sm:$0xf]
      %v5108 = vld [vmem:[%s1099 + $0x30] sm:$0xf]
      %v5109 = vld [vmem:[%s1099 + $0x34] sm:$0xf]
      %v5110 = vld [vmem:[%s1099 + $0x38] sm:$0xf]
      %v5111 = vld [vmem:[%s1099 + $0x3c] sm:$0xf]
      %v5114 = vunpack.c.l.b16 %v5094
      %v5115 = vunpack.c.l.b16 %v5095
      %v5116 = vpack.c.b16 %v5115, %v5114
      %v5118 = vshrl.u32 %v5116, 16
      %v5120 = vshll.u32 %v5116, 16
      %v5122 = vrot.slane %v5120, 1
      %v5123 = vor.u32 %v5118, %v5122
      %v5141 = vunpack.c.l.b16 %v5096
      %v5142 = vunpack.c.l.b16 %v5097
      %v5143 = vunpack.c.l.b16 %v5098
      %v5144 = vunpack.c.l.b16 %v5099
      %v5145 = vunpack.c.l.b16 %v5100
      %v5146 = vunpack.c.l.b16 %v5101
      %v5147 = vunpack.c.l.b16 %v5102
      %v5148 = vunpack.c.l.b16 %v5103
      %v5149 = vunpack.c.l.b16 %v5104
      %v5150 = vunpack.c.l.b16 %v5105
      %v5151 = vunpack.c.l.b16 %v5106
      %v5152 = vunpack.c.l.b16 %v5107
      %v5153 = vunpack.c.l.b16 %v5108
      %v5154 = vunpack.c.l.b16 %v5109
      %v5155 = vunpack.c.l.b16 %v5110
      %v5156 = vunpack.c.l.b16 %v5111
      %v5157 = vpack.c.b16 %v5142, %v5141
      %v5158 = vpack.c.b16 %v5144, %v5143
      %v5159 = vpack.c.b16 %v5146, %v5145
      %v5160 = vpack.c.b16 %v5148, %v5147
      %v5161 = vpack.c.b16 %v5150, %v5149
      %v5162 = vpack.c.b16 %v5152, %v5151
      %v5163 = vpack.c.b16 %v5154, %v5153
      %v5164 = vpack.c.b16 %v5156, %v5155
      %5173 = vmatprep.subr.bf16.mxu0 0
      %5174 = vmatpush1.bf16.msra.mxu0 %v5164
      %5175 = vmatprep.subr.bf16.mxu0 0
      %5176 = vmatpush1.bf16.msra.mxu0 %v5163
      %5177 = vmatprep.subr.bf16.mxu0 0
      %5178 = vmatpush1.bf16.msra.mxu0 %v5162
      %5179 = vmatprep.subr.bf16.mxu0 0
      %5180 = vmatpush1.bf16.msra.mxu0 %v5161
      %5181 = vmatprep.subr.bf16.mxu0 0
      %5182 = vmatpush1.bf16.msra.mxu0 %v5160
      %5183 = vmatprep.subr.bf16.mxu0 0
      %5184 = vmatpush1.bf16.msra.mxu0 %v5159
      %5185 = vmatprep.subr.bf16.mxu0 0
      %5186 = vmatpush1.bf16.msra.mxu0 %v5158
      %5187 = vmatprep.subr.bf16.mxu0 0
      %5188 = vmatpush1.bf16.msra.mxu0 %v5157
      %5189 = vmatprep.subr.bf16.mxu0 0
      %5190 = vmatpush2.bf16.msra.mxu0 0
      %5191 = vmatprep.subr.bf16.mxu0 0
      %5192 = vmatpush2.bf16.msra.mxu0 0
      %5193 = vmatprep.subr.bf16.mxu0 0
      %5194 = vmatpush2.bf16.msra.mxu0 0
      %5195 = vmatprep.subr.bf16.mxu0 0
      %5196 = vmatpush2.bf16.msra.mxu0 0
      %5197 = vmatprep.subr.bf16.mxu0 0
      %5198 = vmatpush2.bf16.msra.mxu0 0
      %5199 = vmatprep.subr.bf16.mxu0 0
      %5200 = vmatpush2.bf16.msra.mxu0 0
      %5201 = vmatprep.subr.bf16.mxu0 0
      %5202 = vmatpush2.bf16.msra.mxu0 0
      %5203 = vmatprep.subr.bf16.mxu0 0
      %5204 = vmatpush2.bf16.msra.mxu0 0
      %5205 = vmatprep.mubr.bf16.mxu0 0
      %5206 = vmatmul.mubr.bf16.gmra.mxu0 %v5123
      %v5207 = vpop.f32.mrf.mxu0
      %v5208 = vadd.f32 0.0, %v5207
      %v5209 = vpop.f32.mrf.mxu0
      %v5210 = vpop.f32.mrf.mxu0
      %v5211 = vpop.f32.mrf.mxu0
      %5212 = vdwg.mxu0
      %v5213 = vadd.f32 %v5093, %v5208
      %5214 = vst [vmem:[#allocation2 + $0x20] sm:$0xff] %v5213
      %v5215 = vld [vmem:[%s4880] sm:$0xf]
      %v5216 = vld [vmem:[%s1] sm:$0xf]
      %v5217 = vld [vmem:[%s1 + $0x4] sm:$0xf]
      %v5218 = vld [vmem:[%s1 + $0x8] sm:$0xf]
      %v5219 = vld [vmem:[%s1 + $0xc] sm:$0xf]
      %v5220 = vld [vmem:[%s1 + $0x10] sm:$0xf]
      %v5221 = vld [vmem:[%s1 + $0x14] sm:$0xf]
      %v5222 = vld [vmem:[%s1 + $0x18] sm:$0xf]
      %v5223 = vld [vmem:[%s1 + $0x1c] sm:$0xf]
      %v5224 = vld [vmem:[%s1 + $0x20] sm:$0xf]
      %v5225 = vld [vmem:[%s1 + $0x24] sm:$0xf]
      %v5226 = vld [vmem:[%s1 + $0x28] sm:$0xf]
      %v5227 = vld [vmem:[%s1 + $0x2c] sm:$0xf]
      %v5228 = vld [vmem:[%s1 + $0x30] sm:$0xf]
      %v5229 = vld [vmem:[%s1 + $0x34] sm:$0xf]
      %v5230 = vld [vmem:[%s1 + $0x38] sm:$0xf]
      %v5231 = vld [vmem:[%s1 + $0x3c] sm:$0xf]
      %v5232 = vld [vmem:[%s4987] sm:$0xf]
      %v5233 = vld [vmem:[%s230] sm:$0xf]
      %v5234 = vld [vmem:[%s230 + $0x4] sm:$0xf]
      %v5235 = vld [vmem:[%s230 + $0x8] sm:$0xf]
      %v5236 = vld [vmem:[%s230 + $0xc] sm:$0xf]
      %v5237 = vld [vmem:[%s230 + $0x10] sm:$0xf]
      %v5238 = vld [vmem:[%s230 + $0x14] sm:$0xf]
      %v5239 = vld [vmem:[%s230 + $0x18] sm:$0xf]
      %v5240 = vld [vmem:[%s230 + $0x1c] sm:$0xf]
      %v5241 = vld [vmem:[%s230 + $0x20] sm:$0xf]
      %v5242 = vld [vmem:[%s230 + $0x24] sm:$0xf]
      %v5243 = vld [vmem:[%s230 + $0x28] sm:$0xf]
      %v5244 = vld [vmem:[%s230 + $0x2c] sm:$0xf]
      %v5245 = vld [vmem:[%s230 + $0x30] sm:$0xf]
      %v5246 = vld [vmem:[%s230 + $0x34] sm:$0xf]
      %v5247 = vld [vmem:[%s230 + $0x38] sm:$0xf]
      %v5248 = vld [vmem:[%s230 + $0x3c] sm:$0xf]
      %v5265 = vunpack.c.l.b16 %v5233
      %v5266 = vunpack.c.l.b16 %v5234
      %v5267 = vunpack.c.l.b16 %v5235
      %v5268 = vunpack.c.l.b16 %v5236
      %v5269 = vunpack.c.l.b16 %v5237
      %v5270 = vunpack.c.l.b16 %v5238
      %v5271 = vunpack.c.l.b16 %v5239
      %v5272 = vunpack.c.l.b16 %v5240
      %v5273 = vunpack.c.l.b16 %v5241
      %v5274 = vunpack.c.l.b16 %v5242
      %v5275 = vunpack.c.l.b16 %v5243
      %v5276 = vunpack.c.l.b16 %v5244
      %v5277 = vunpack.c.l.b16 %v5245
      %v5278 = vunpack.c.l.b16 %v5246
      %v5279 = vunpack.c.l.b16 %v5247
      %v5280 = vunpack.c.l.b16 %v5248
      %v5281 = vpack.c.b16 %v5266, %v5265
      %v5282 = vpack.c.b16 %v5268, %v5267
      %v5283 = vpack.c.b16 %v5270, %v5269
      %v5284 = vpack.c.b16 %v5272, %v5271
      %v5285 = vpack.c.b16 %v5274, %v5273
      %v5286 = vpack.c.b16 %v5276, %v5275
      %v5287 = vpack.c.b16 %v5278, %v5277
      %v5288 = vpack.c.b16 %v5280, %v5279
      %5297 = vmatprep.subr.bf16.mxu0 0
      %5298 = vmatpush1.bf16.msra.mxu0 %v5288
      %5299 = vmatprep.subr.bf16.mxu0 0
      %5300 = vmatpush1.bf16.msra.mxu0 %v5287
      %5301 = vmatprep.subr.bf16.mxu0 0
      %5302 = vmatpush1.bf16.msra.mxu0 %v5286
      %5303 = vmatprep.subr.bf16.mxu0 0
      %5304 = vmatpush1.bf16.msra.mxu0 %v5285
      %5305 = vmatprep.subr.bf16.mxu0 0
      %5306 = vmatpush1.bf16.msra.mxu0 %v5284
      %5307 = vmatprep.subr.bf16.mxu0 0
      %5308 = vmatpush1.bf16.msra.mxu0 %v5283
      %5309 = vmatprep.subr.bf16.mxu0 0
      %5310 = vmatpush1.bf16.msra.mxu0 %v5282
      %5311 = vmatprep.subr.bf16.mxu0 0
      %5312 = vmatpush1.bf16.msra.mxu0 %v5281
      %5313 = vmatprep.subr.bf16.mxu0 0
      %5314 = vmatpush2.bf16.msra.mxu0 0
      %5315 = vmatprep.subr.bf16.mxu0 0
      %5316 = vmatpush2.bf16.msra.mxu0 0
      %5317 = vmatprep.subr.bf16.mxu0 0
      %5318 = vmatpush2.bf16.msra.mxu0 0
      %5319 = vmatprep.subr.bf16.mxu0 0
      %5320 = vmatpush2.bf16.msra.mxu0 0
      %5321 = vmatprep.subr.bf16.mxu0 0
      %5322 = vmatpush2.bf16.msra.mxu0 0
      %5323 = vmatprep.subr.bf16.mxu0 0
      %5324 = vmatpush2.bf16.msra.mxu0 0
      %5325 = vmatprep.subr.bf16.mxu0 0
      %5326 = vmatpush2.bf16.msra.mxu0 0
      %5327 = vmatprep.subr.bf16.mxu0 0
      %5328 = vmatpush2.bf16.msra.mxu0 0
      %5329 = vmatprep.mubr.bf16.mxu0 0
      %5330 = vmatmul.mubr.bf16.gmra.mxu0 %v5232
      %v5331 = vpop.f32.mrf.mxu0
      %v5332 = vadd.f32 0.0, %v5331
      %v5333 = vpop.f32.mrf.mxu0
      %v5334 = vpop.f32.mrf.mxu0
      %v5335 = vpop.f32.mrf.mxu0
      %5336 = vdwg.mxu0
      %v5353 = vunpack.c.l.b16 %v5216
      %v5354 = vunpack.c.l.b16 %v5217
      %v5355 = vunpack.c.l.b16 %v5218
      %v5356 = vunpack.c.l.b16 %v5219
      %v5357 = vunpack.c.l.b16 %v5220
      %v5358 = vunpack.c.l.b16 %v5221
      %v5359 = vunpack.c.l.b16 %v5222
      %v5360 = vunpack.c.l.b16 %v5223
      %v5361 = vunpack.c.l.b16 %v5224
      %v5362 = vunpack.c.l.b16 %v5225
      %v5363 = vunpack.c.l.b16 %v5226
      %v5364 = vunpack.c.l.b16 %v5227
      %v5365 = vunpack.c.l.b16 %v5228
      %v5366 = vunpack.c.l.b16 %v5229
      %v5367 = vunpack.c.l.b16 %v5230
      %v5368 = vunpack.c.l.b16 %v5231
      %v5369 = vpack.c.b16 %v5354, %v5353
      %v5370 = vpack.c.b16 %v5356, %v5355
      %v5371 = vpack.c.b16 %v5358, %v5357
      %v5372 = vpack.c.b16 %v5360, %v5359
      %v5373 = vpack.c.b16 %v5362, %v5361
      %v5374 = vpack.c.b16 %v5364, %v5363
      %v5375 = vpack.c.b16 %v5366, %v5365
      %v5376 = vpack.c.b16 %v5368, %v5367
      %5385 = vmatprep.subr.bf16.mxu0 0
      %5386 = vmatpush1.bf16.msra.mxu0 %v5376
      %5387 = vmatprep.subr.bf16.mxu0 0
      %5388 = vmatpush1.bf16.msra.mxu0 %v5375
      %5389 = vmatprep.subr.bf16.mxu0 0
      %5390 = vmatpush1.bf16.msra.mxu0 %v5374
      %5391 = vmatprep.subr.bf16.mxu0 0
      %5392 = vmatpush1.bf16.msra.mxu0 %v5373
      %5393 = vmatprep.subr.bf16.mxu0 0
      %5394 = vmatpush1.bf16.msra.mxu0 %v5372
      %5395 = vmatprep.subr.bf16.mxu0 0
      %5396 = vmatpush1.bf16.msra.mxu0 %v5371
      %5397 = vmatprep.subr.bf16.mxu0 0
      %5398 = vmatpush1.bf16.msra.mxu0 %v5370
      %5399 = vmatprep.subr.bf16.mxu0 0
      %5400 = vmatpush1.bf16.msra.mxu0 %v5369
      %5401 = vmatprep.subr.bf16.mxu0 0
      %5402 = vmatpush2.bf16.msra.mxu0 0
      %5403 = vmatprep.subr.bf16.mxu0 0
      %5404 = vmatpush2.bf16.msra.mxu0 0
      %5405 = vmatprep.subr.bf16.mxu0 0
      %5406 = vmatpush2.bf16.msra.mxu0 0
      %5407 = vmatprep.subr.bf16.mxu0 0
      %5408 = vmatpush2.bf16.msra.mxu0 0
      %5409 = vmatprep.subr.bf16.mxu0 0
      %5410 = vmatpush2.bf16.msra.mxu0 0
      %5411 = vmatprep.subr.bf16.mxu0 0
      %5412 = vmatpush2.bf16.msra.mxu0 0
      %5413 = vmatprep.subr.bf16.mxu0 0
      %5414 = vmatpush2.bf16.msra.mxu0 0
      %5415 = vmatprep.subr.bf16.mxu0 0
      %5416 = vmatpush2.bf16.msra.mxu0 0
      %5417 = vmatprep.mubr.bf16.mxu0 0
      %5418 = vmatmul.mubr.bf16.gmra.mxu0 %v5215
      %v5419 = vpop.f32.mrf.mxu0
      %v5420 = vadd.f32 %v5332, %v5419
      %v5421 = vpop.f32.mrf.mxu0
      %v5422 = vpop.f32.mrf.mxu0
      %v5423 = vpop.f32.mrf.mxu0
      %5424 = vdwg.mxu0
      %v5425 = vld [vmem:[%s4880] sm:$0xf]
      %v5426 = vld [vmem:[%s4880 + $0x4] sm:$0x1]
      %v5427 = vld [vmem:[%s425] sm:$0xf]
      %v5428 = vld [vmem:[%s425 + $0x4] sm:$0xf]
      %v5429 = vld [vmem:[%s425 + $0x8] sm:$0xf]
      %v5430 = vld [vmem:[%s425 + $0xc] sm:$0xf]
      %v5431 = vld [vmem:[%s425 + $0x10] sm:$0xf]
      %v5432 = vld [vmem:[%s425 + $0x14] sm:$0xf]
      %v5433 = vld [vmem:[%s425 + $0x18] sm:$0xf]
      %v5434 = vld [vmem:[%s425 + $0x1c] sm:$0xf]
      %v5435 = vld [vmem:[%s425 + $0x20] sm:$0xf]
      %v5436 = vld [vmem:[%s425 + $0x24] sm:$0xf]
      %v5437 = vld [vmem:[%s425 + $0x28] sm:$0xf]
      %v5438 = vld [vmem:[%s425 + $0x2c] sm:$0xf]
      %v5439 = vld [vmem:[%s425 + $0x30] sm:$0xf]
      %v5440 = vld [vmem:[%s425 + $0x34] sm:$0xf]
      %v5441 = vld [vmem:[%s425 + $0x38] sm:$0xf]
      %v5442 = vld [vmem:[%s425 + $0x3c] sm:$0xf]
      %v5445 = vunpack.c.l.b16 %v5425
      %v5446 = vunpack.c.l.b16 %v5426
      %v5447 = vpack.c.b16 %v5446, %v5445
      %v5449 = vshrl.u32 %v5447, 16
      %v5451 = vshll.u32 %v5447, 16
      %v5453 = vrot.slane %v5451, 1
      %v5454 = vor.u32 %v5449, %v5453
      %v5472 = vunpack.c.l.b16 %v5427
      %v5473 = vunpack.c.l.b16 %v5428
      %v5474 = vunpack.c.l.b16 %v5429
      %v5475 = vunpack.c.l.b16 %v5430
      %v5476 = vunpack.c.l.b16 %v5431
      %v5477 = vunpack.c.l.b16 %v5432
      %v5478 = vunpack.c.l.b16 %v5433
      %v5479 = vunpack.c.l.b16 %v5434
      %v5480 = vunpack.c.l.b16 %v5435
      %v5481 = vunpack.c.l.b16 %v5436
      %v5482 = vunpack.c.l.b16 %v5437
      %v5483 = vunpack.c.l.b16 %v5438
      %v5484 = vunpack.c.l.b16 %v5439
      %v5485 = vunpack.c.l.b16 %v5440
      %v5486 = vunpack.c.l.b16 %v5441
      %v5487 = vunpack.c.l.b16 %v5442
      %v5488 = vpack.c.b16 %v5473, %v5472
      %v5489 = vpack.c.b16 %v5475, %v5474
      %v5490 = vpack.c.b16 %v5477, %v5476
      %v5491 = vpack.c.b16 %v5479, %v5478
      %v5492 = vpack.c.b16 %v5481, %v5480
      %v5493 = vpack.c.b16 %v5483, %v5482
      %v5494 = vpack.c.b16 %v5485, %v5484
      %v5495 = vpack.c.b16 %v5487, %v5486
      %5504 = vmatprep.subr.bf16.mxu0 0
      %5505 = vmatpush1.bf16.msra.mxu0 %v5495
      %5506 = vmatprep.subr.bf16.mxu0 0
      %5507 = vmatpush1.bf16.msra.mxu0 %v5494
      %5508 = vmatprep.subr.bf16.mxu0 0
      %5509 = vmatpush1.bf16.msra.mxu0 %v5493
      %5510 = vmatprep.subr.bf16.mxu0 0
      %5511 = vmatpush1.bf16.msra.mxu0 %v5492
      %5512 = vmatprep.subr.bf16.mxu0 0
      %5513 = vmatpush1.bf16.msra.mxu0 %v5491
      %5514 = vmatprep.subr.bf16.mxu0 0
      %5515 = vmatpush1.bf16.msra.mxu0 %v5490
      %5516 = vmatprep.subr.bf16.mxu0 0
      %5517 = vmatpush1.bf16.msra.mxu0 %v5489
      %5518 = vmatprep.subr.bf16.mxu0 0
      %5519 = vmatpush1.bf16.msra.mxu0 %v5488
      %5520 = vmatprep.subr.bf16.mxu0 0
      %5521 = vmatpush2.bf16.msra.mxu0 0
      %5522 = vmatprep.subr.bf16.mxu0 0
      %5523 = vmatpush2.bf16.msra.mxu0 0
      %5524 = vmatprep.subr.bf16.mxu0 0
      %5525 = vmatpush2.bf16.msra.mxu0 0
      %5526 = vmatprep.subr.bf16.mxu0 0
      %5527 = vmatpush2.bf16.msra.mxu0 0
      %5528 = vmatprep.subr.bf16.mxu0 0
      %5529 = vmatpush2.bf16.msra.mxu0 0
      %5530 = vmatprep.subr.bf16.mxu0 0
      %5531 = vmatpush2.bf16.msra.mxu0 0
      %5532 = vmatprep.subr.bf16.mxu0 0
      %5533 = vmatpush2.bf16.msra.mxu0 0
      %5534 = vmatprep.subr.bf16.mxu0 0
      %5535 = vmatpush2.bf16.msra.mxu0 0
      %5536 = vmatprep.mubr.bf16.mxu0 0
      %5537 = vmatmul.mubr.bf16.gmra.mxu0 %v5454
      %v5538 = vpop.f32.mrf.mxu0
      %v5539 = vadd.f32 0.0, %v5538
      %v5540 = vpop.f32.mrf.mxu0
      %v5541 = vpop.f32.mrf.mxu0
      %v5542 = vpop.f32.mrf.mxu0
      %5543 = vdwg.mxu0
      %v5544 = vadd.f32 %v5420, %v5539
      %s5545 = scalar_lea.vmem %s204, 184
      %v5546 = vld [vmem:[%s5545] sm:$0xf]
      %v5547 = vld [vmem:[%s546] sm:$0xf]
      %v5548 = vld [vmem:[%s546 + $0x4] sm:$0xf]
      %v5549 = vld [vmem:[%s546 + $0x8] sm:$0xf]
      %v5550 = vld [vmem:[%s546 + $0xc] sm:$0xf]
      %v5551 = vld [vmem:[%s546 + $0x10] sm:$0xf]
      %v5552 = vld [vmem:[%s546 + $0x14] sm:$0xf]
      %v5553 = vld [vmem:[%s546 + $0x18] sm:$0xf]
      %v5554 = vld [vmem:[%s546 + $0x1c] sm:$0xf]
      %v5555 = vld [vmem:[%s546 + $0x20] sm:$0xf]
      %v5556 = vld [vmem:[%s546 + $0x24] sm:$0xf]
      %v5557 = vld [vmem:[%s546 + $0x28] sm:$0xf]
      %v5558 = vld [vmem:[%s546 + $0x2c] sm:$0xf]
      %v5559 = vld [vmem:[%s546 + $0x30] sm:$0xf]
      %v5560 = vld [vmem:[%s546 + $0x34] sm:$0xf]
      %v5561 = vld [vmem:[%s546 + $0x38] sm:$0xf]
      %v5562 = vld [vmem:[%s546 + $0x3c] sm:$0xf]
      %v5579 = vunpack.c.l.b16 %v5547
      %v5580 = vunpack.c.l.b16 %v5548
      %v5581 = vunpack.c.l.b16 %v5549
      %v5582 = vunpack.c.l.b16 %v5550
      %v5583 = vunpack.c.l.b16 %v5551
      %v5584 = vunpack.c.l.b16 %v5552
      %v5585 = vunpack.c.l.b16 %v5553
      %v5586 = vunpack.c.l.b16 %v5554
      %v5587 = vunpack.c.l.b16 %v5555
      %v5588 = vunpack.c.l.b16 %v5556
      %v5589 = vunpack.c.l.b16 %v5557
      %v5590 = vunpack.c.l.b16 %v5558
      %v5591 = vunpack.c.l.b16 %v5559
      %v5592 = vunpack.c.l.b16 %v5560
      %v5593 = vunpack.c.l.b16 %v5561
      %v5594 = vunpack.c.l.b16 %v5562
      %v5595 = vpack.c.b16 %v5580, %v5579
      %v5596 = vpack.c.b16 %v5582, %v5581
      %v5597 = vpack.c.b16 %v5584, %v5583
      %v5598 = vpack.c.b16 %v5586, %v5585
      %v5599 = vpack.c.b16 %v5588, %v5587
      %v5600 = vpack.c.b16 %v5590, %v5589
      %v5601 = vpack.c.b16 %v5592, %v5591
      %v5602 = vpack.c.b16 %v5594, %v5593
      %5611 = vmatprep.subr.bf16.mxu0 0
      %5612 = vmatpush1.bf16.msra.mxu0 %v5602
      %5613 = vmatprep.subr.bf16.mxu0 0
      %5614 = vmatpush1.bf16.msra.mxu0 %v5601
      %5615 = vmatprep.subr.bf16.mxu0 0
      %5616 = vmatpush1.bf16.msra.mxu0 %v5600
      %5617 = vmatprep.subr.bf16.mxu0 0
      %5618 = vmatpush1.bf16.msra.mxu0 %v5599
      %5619 = vmatprep.subr.bf16.mxu0 0
      %5620 = vmatpush1.bf16.msra.mxu0 %v5598
      %5621 = vmatprep.subr.bf16.mxu0 0
      %5622 = vmatpush1.bf16.msra.mxu0 %v5597
      %5623 = vmatprep.subr.bf16.mxu0 0
      %5624 = vmatpush1.bf16.msra.mxu0 %v5596
      %5625 = vmatprep.subr.bf16.mxu0 0
      %5626 = vmatpush1.bf16.msra.mxu0 %v5595
      %5627 = vmatprep.subr.bf16.mxu0 0
      %5628 = vmatpush2.bf16.msra.mxu0 0
      %5629 = vmatprep.subr.bf16.mxu0 0
      %5630 = vmatpush2.bf16.msra.mxu0 0
      %5631 = vmatprep.subr.bf16.mxu0 0
      %5632 = vmatpush2.bf16.msra.mxu0 0
      %5633 = vmatprep.subr.bf16.mxu0 0
      %5634 = vmatpush2.bf16.msra.mxu0 0
      %5635 = vmatprep.subr.bf16.mxu0 0
      %5636 = vmatpush2.bf16.msra.mxu0 0
      %5637 = vmatprep.subr.bf16.mxu0 0
      %5638 = vmatpush2.bf16.msra.mxu0 0
      %5639 = vmatprep.subr.bf16.mxu0 0
      %5640 = vmatpush2.bf16.msra.mxu0 0
      %5641 = vmatprep.subr.bf16.mxu0 0
      %5642 = vmatpush2.bf16.msra.mxu0 0
      %5643 = vmatprep.mubr.bf16.mxu0 0
      %5644 = vmatmul.mubr.bf16.gmra.mxu0 %v5546
      %v5645 = vpop.f32.mrf.mxu0
      %v5646 = vadd.f32 0.0, %v5645
      %v5647 = vpop.f32.mrf.mxu0
      %v5648 = vpop.f32.mrf.mxu0
      %v5649 = vpop.f32.mrf.mxu0
      %5650 = vdwg.mxu0
      %v5651 = vadd.f32 %v5544, %v5646
      %s5652 = scalar_lea.vmem %s204, 256
      %v5653 = vld [vmem:[%s5652] sm:$0xf]
      %v5654 = vld [vmem:[%s654] sm:$0xf]
      %v5655 = vld [vmem:[%s654 + $0x4] sm:$0xf]
      %v5656 = vld [vmem:[%s654 + $0x8] sm:$0xf]
      %v5657 = vld [vmem:[%s654 + $0xc] sm:$0xf]
      %v5658 = vld [vmem:[%s654 + $0x10] sm:$0xf]
      %v5659 = vld [vmem:[%s654 + $0x14] sm:$0xf]
      %v5660 = vld [vmem:[%s654 + $0x18] sm:$0xf]
      %v5661 = vld [vmem:[%s654 + $0x1c] sm:$0xf]
      %v5662 = vld [vmem:[%s654 + $0x20] sm:$0xf]
      %v5663 = vld [vmem:[%s654 + $0x24] sm:$0xf]
      %v5664 = vld [vmem:[%s654 + $0x28] sm:$0xf]
      %v5665 = vld [vmem:[%s654 + $0x2c] sm:$0xf]
      %v5666 = vld [vmem:[%s654 + $0x30] sm:$0xf]
      %v5667 = vld [vmem:[%s654 + $0x34] sm:$0xf]
      %v5668 = vld [vmem:[%s654 + $0x38] sm:$0xf]
      %v5669 = vld [vmem:[%s654 + $0x3c] sm:$0xf]
      %v5686 = vunpack.c.l.b16 %v5654
      %v5687 = vunpack.c.l.b16 %v5655
      %v5688 = vunpack.c.l.b16 %v5656
      %v5689 = vunpack.c.l.b16 %v5657
      %v5690 = vunpack.c.l.b16 %v5658
      %v5691 = vunpack.c.l.b16 %v5659
      %v5692 = vunpack.c.l.b16 %v5660
      %v5693 = vunpack.c.l.b16 %v5661
      %v5694 = vunpack.c.l.b16 %v5662
      %v5695 = vunpack.c.l.b16 %v5663
      %v5696 = vunpack.c.l.b16 %v5664
      %v5697 = vunpack.c.l.b16 %v5665
      %v5698 = vunpack.c.l.b16 %v5666
      %v5699 = vunpack.c.l.b16 %v5667
      %v5700 = vunpack.c.l.b16 %v5668
      %v5701 = vunpack.c.l.b16 %v5669
      %v5702 = vpack.c.b16 %v5687, %v5686
      %v5703 = vpack.c.b16 %v5689, %v5688
      %v5704 = vpack.c.b16 %v5691, %v5690
      %v5705 = vpack.c.b16 %v5693, %v5692
      %v5706 = vpack.c.b16 %v5695, %v5694
      %v5707 = vpack.c.b16 %v5697, %v5696
      %v5708 = vpack.c.b16 %v5699, %v5698
      %v5709 = vpack.c.b16 %v5701, %v5700
      %5718 = vmatprep.subr.bf16.mxu0 0
      %5719 = vmatpush1.bf16.msra.mxu0 %v5709
      %5720 = vmatprep.subr.bf16.mxu0 0
      %5721 = vmatpush1.bf16.msra.mxu0 %v5708
      %5722 = vmatprep.subr.bf16.mxu0 0
      %5723 = vmatpush1.bf16.msra.mxu0 %v5707
      %5724 = vmatprep.subr.bf16.mxu0 0
      %5725 = vmatpush1.bf16.msra.mxu0 %v5706
      %5726 = vmatprep.subr.bf16.mxu0 0
      %5727 = vmatpush1.bf16.msra.mxu0 %v5705
      %5728 = vmatprep.subr.bf16.mxu0 0
      %5729 = vmatpush1.bf16.msra.mxu0 %v5704
      %5730 = vmatprep.subr.bf16.mxu0 0
      %5731 = vmatpush1.bf16.msra.mxu0 %v5703
      %5732 = vmatprep.subr.bf16.mxu0 0
      %5733 = vmatpush1.bf16.msra.mxu0 %v5702
      %5734 = vmatprep.subr.bf16.mxu0 0
      %5735 = vmatpush2.bf16.msra.mxu0 0
      %5736 = vmatprep.subr.bf16.mxu0 0
      %5737 = vmatpush2.bf16.msra.mxu0 0
      %5738 = vmatprep.subr.bf16.mxu0 0
      %5739 = vmatpush2.bf16.msra.mxu0 0
      %5740 = vmatprep.subr.bf16.mxu0 0
      %5741 = vmatpush2.bf16.msra.mxu0 0
      %5742 = vmatprep.subr.bf16.mxu0 0
      %5743 = vmatpush2.bf16.msra.mxu0 0
      %5744 = vmatprep.subr.bf16.mxu0 0
      %5745 = vmatpush2.bf16.msra.mxu0 0
      %5746 = vmatprep.subr.bf16.mxu0 0
      %5747 = vmatpush2.bf16.msra.mxu0 0
      %5748 = vmatprep.subr.bf16.mxu0 0
      %5749 = vmatpush2.bf16.msra.mxu0 0
      %5750 = vmatprep.mubr.bf16.mxu0 0
      %5751 = vmatmul.mubr.bf16.gmra.mxu0 %v5653
      %v5752 = vpop.f32.mrf.mxu0
      %v5753 = vadd.f32 0.0, %v5752
      %v5754 = vpop.f32.mrf.mxu0
      %v5755 = vpop.f32.mrf.mxu0
      %v5756 = vpop.f32.mrf.mxu0
      %5757 = vdwg.mxu0
      %v5758 = vadd.f32 %v5651, %v5753
      %v5759 = vld [vmem:[%s5545] sm:$0xf]
      %v5760 = vld [vmem:[%s5545 + $0x4] sm:$0x1]
      %v5761 = vld [vmem:[%s762] sm:$0xf]
      %v5762 = vld [vmem:[%s762 + $0x4] sm:$0xf]
      %v5763 = vld [vmem:[%s762 + $0x8] sm:$0xf]
      %v5764 = vld [vmem:[%s762 + $0xc] sm:$0xf]
      %v5765 = vld [vmem:[%s762 + $0x10] sm:$0xf]
      %v5766 = vld [vmem:[%s762 + $0x14] sm:$0xf]
      %v5767 = vld [vmem:[%s762 + $0x18] sm:$0xf]
      %v5768 = vld [vmem:[%s762 + $0x1c] sm:$0xf]
      %v5769 = vld [vmem:[%s762 + $0x20] sm:$0xf]
      %v5770 = vld [vmem:[%s762 + $0x24] sm:$0xf]
      %v5771 = vld [vmem:[%s762 + $0x28] sm:$0xf]
      %v5772 = vld [vmem:[%s762 + $0x2c] sm:$0xf]
      %v5773 = vld [vmem:[%s762 + $0x30] sm:$0xf]
      %v5774 = vld [vmem:[%s762 + $0x34] sm:$0xf]
      %v5775 = vld [vmem:[%s762 + $0x38] sm:$0xf]
      %v5776 = vld [vmem:[%s762 + $0x3c] sm:$0xf]
      %v5779 = vunpack.c.l.b16 %v5759
      %v5780 = vunpack.c.l.b16 %v5760
      %v5781 = vpack.c.b16 %v5780, %v5779
      %v5783 = vshrl.u32 %v5781, 16
      %v5785 = vshll.u32 %v5781, 16
      %v5787 = vrot.slane %v5785, 1
      %v5788 = vor.u32 %v5783, %v5787
      %v5806 = vunpack.c.l.b16 %v5761
      %v5807 = vunpack.c.l.b16 %v5762
      %v5808 = vunpack.c.l.b16 %v5763
      %v5809 = vunpack.c.l.b16 %v5764
      %v5810 = vunpack.c.l.b16 %v5765
      %v5811 = vunpack.c.l.b16 %v5766
      %v5812 = vunpack.c.l.b16 %v5767
      %v5813 = vunpack.c.l.b16 %v5768
      %v5814 = vunpack.c.l.b16 %v5769
      %v5815 = vunpack.c.l.b16 %v5770
      %v5816 = vunpack.c.l.b16 %v5771
      %v5817 = vunpack.c.l.b16 %v5772
      %v5818 = vunpack.c.l.b16 %v5773
      %v5819 = vunpack.c.l.b16 %v5774
      %v5820 = vunpack.c.l.b16 %v5775
      %v5821 = vunpack.c.l.b16 %v5776
      %v5822 = vpack.c.b16 %v5807, %v5806
      %v5823 = vpack.c.b16 %v5809, %v5808
      %v5824 = vpack.c.b16 %v5811, %v5810
      %v5825 = vpack.c.b16 %v5813, %v5812
      %v5826 = vpack.c.b16 %v5815, %v5814
      %v5827 = vpack.c.b16 %v5817, %v5816
      %v5828 = vpack.c.b16 %v5819, %v5818
      %v5829 = vpack.c.b16 %v5821, %v5820
      %5838 = vmatprep.subr.bf16.mxu0 0
      %5839 = vmatpush1.bf16.msra.mxu0 %v5829
      %5840 = vmatprep.subr.bf16.mxu0 0
      %5841 = vmatpush1.bf16.msra.mxu0 %v5828
      %5842 = vmatprep.subr.bf16.mxu0 0
      %5843 = vmatpush1.bf16.msra.mxu0 %v5827
      %5844 = vmatprep.subr.bf16.mxu0 0
      %5845 = vmatpush1.bf16.msra.mxu0 %v5826
      %5846 = vmatprep.subr.bf16.mxu0 0
      %5847 = vmatpush1.bf16.msra.mxu0 %v5825
      %5848 = vmatprep.subr.bf16.mxu0 0
      %5849 = vmatpush1.bf16.msra.mxu0 %v5824
      %5850 = vmatprep.subr.bf16.mxu0 0
      %5851 = vmatpush1.bf16.msra.mxu0 %v5823
      %5852 = vmatprep.subr.bf16.mxu0 0
      %5853 = vmatpush1.bf16.msra.mxu0 %v5822
      %5854 = vmatprep.subr.bf16.mxu0 0
      %5855 = vmatpush2.bf16.msra.mxu0 0
      %5856 = vmatprep.subr.bf16.mxu0 0
      %5857 = vmatpush2.bf16.msra.mxu0 0
      %5858 = vmatprep.subr.bf16.mxu0 0
      %5859 = vmatpush2.bf16.msra.mxu0 0
      %5860 = vmatprep.subr.bf16.mxu0 0
      %5861 = vmatpush2.bf16.msra.mxu0 0
      %5862 = vmatprep.subr.bf16.mxu0 0
      %5863 = vmatpush2.bf16.msra.mxu0 0
      %5864 = vmatprep.subr.bf16.mxu0 0
      %5865 = vmatpush2.bf16.msra.mxu0 0
      %5866 = vmatprep.subr.bf16.mxu0 0
      %5867 = vmatpush2.bf16.msra.mxu0 0
      %5868 = vmatprep.subr.bf16.mxu0 0
      %5869 = vmatpush2.bf16.msra.mxu0 0
      %5870 = vmatprep.mubr.bf16.mxu0 0
      %5871 = vmatmul.mubr.bf16.gmra.mxu0 %v5788
      %v5872 = vpop.f32.mrf.mxu0
      %v5873 = vadd.f32 0.0, %v5872
      %v5874 = vpop.f32.mrf.mxu0
      %v5875 = vpop.f32.mrf.mxu0
      %v5876 = vpop.f32.mrf.mxu0
      %5877 = vdwg.mxu0
      %v5878 = vadd.f32 %v5758, %v5873
      %s5879 = scalar_lea.vmem %s204, 48
      %v5880 = vld [vmem:[%s5879] sm:$0xf]
      %v5881 = vld [vmem:[%s883] sm:$0xf]
      %v5882 = vld [vmem:[%s883 + $0x4] sm:$0xf]
      %v5883 = vld [vmem:[%s883 + $0x8] sm:$0xf]
      %v5884 = vld [vmem:[%s883 + $0xc] sm:$0xf]
      %v5885 = vld [vmem:[%s883 + $0x10] sm:$0xf]
      %v5886 = vld [vmem:[%s883 + $0x14] sm:$0xf]
      %v5887 = vld [vmem:[%s883 + $0x18] sm:$0xf]
      %v5888 = vld [vmem:[%s883 + $0x1c] sm:$0xf]
      %v5889 = vld [vmem:[%s883 + $0x20] sm:$0xf]
      %v5890 = vld [vmem:[%s883 + $0x24] sm:$0xf]
      %v5891 = vld [vmem:[%s883 + $0x28] sm:$0xf]
      %v5892 = vld [vmem:[%s883 + $0x2c] sm:$0xf]
      %v5893 = vld [vmem:[%s883 + $0x30] sm:$0xf]
      %v5894 = vld [vmem:[%s883 + $0x34] sm:$0xf]
      %v5895 = vld [vmem:[%s883 + $0x38] sm:$0xf]
      %v5896 = vld [vmem:[%s883 + $0x3c] sm:$0xf]
      %v5913 = vunpack.c.l.b16 %v5881
      %v5914 = vunpack.c.l.b16 %v5882
      %v5915 = vunpack.c.l.b16 %v5883
      %v5916 = vunpack.c.l.b16 %v5884
      %v5917 = vunpack.c.l.b16 %v5885
      %v5918 = vunpack.c.l.b16 %v5886
      %v5919 = vunpack.c.l.b16 %v5887
      %v5920 = vunpack.c.l.b16 %v5888
      %v5921 = vunpack.c.l.b16 %v5889
      %v5922 = vunpack.c.l.b16 %v5890
      %v5923 = vunpack.c.l.b16 %v5891
      %v5924 = vunpack.c.l.b16 %v5892
      %v5925 = vunpack.c.l.b16 %v5893
      %v5926 = vunpack.c.l.b16 %v5894
      %v5927 = vunpack.c.l.b16 %v5895
      %v5928 = vunpack.c.l.b16 %v5896
      %v5929 = vpack.c.b16 %v5914, %v5913
      %v5930 = vpack.c.b16 %v5916, %v5915
      %v5931 = vpack.c.b16 %v5918, %v5917
      %v5932 = vpack.c.b16 %v5920, %v5919
      %v5933 = vpack.c.b16 %v5922, %v5921
      %v5934 = vpack.c.b16 %v5924, %v5923
      %v5935 = vpack.c.b16 %v5926, %v5925
      %v5936 = vpack.c.b16 %v5928, %v5927
      %5945 = vmatprep.subr.bf16.mxu0 0
      %5946 = vmatpush1.bf16.msra.mxu0 %v5936
      %5947 = vmatprep.subr.bf16.mxu0 0
      %5948 = vmatpush1.bf16.msra.mxu0 %v5935
      %5949 = vmatprep.subr.bf16.mxu0 0
      %5950 = vmatpush1.bf16.msra.mxu0 %v5934
      %5951 = vmatprep.subr.bf16.mxu0 0
      %5952 = vmatpush1.bf16.msra.mxu0 %v5933
      %5953 = vmatprep.subr.bf16.mxu0 0
      %5954 = vmatpush1.bf16.msra.mxu0 %v5932
      %5955 = vmatprep.subr.bf16.mxu0 0
      %5956 = vmatpush1.bf16.msra.mxu0 %v5931
      %5957 = vmatprep.subr.bf16.mxu0 0
      %5958 = vmatpush1.bf16.msra.mxu0 %v5930
      %5959 = vmatprep.subr.bf16.mxu0 0
      %5960 = vmatpush1.bf16.msra.mxu0 %v5929
      %5961 = vmatprep.subr.bf16.mxu0 0
      %5962 = vmatpush2.bf16.msra.mxu0 0
      %5963 = vmatprep.subr.bf16.mxu0 0
      %5964 = vmatpush2.bf16.msra.mxu0 0
      %5965 = vmatprep.subr.bf16.mxu0 0
      %5966 = vmatpush2.bf16.msra.mxu0 0
      %5967 = vmatprep.subr.bf16.mxu0 0
      %5968 = vmatpush2.bf16.msra.mxu0 0
      %5969 = vmatprep.subr.bf16.mxu0 0
      %5970 = vmatpush2.bf16.msra.mxu0 0
      %5971 = vmatprep.subr.bf16.mxu0 0
      %5972 = vmatpush2.bf16.msra.mxu0 0
      %5973 = vmatprep.subr.bf16.mxu0 0
      %5974 = vmatpush2.bf16.msra.mxu0 0
      %5975 = vmatprep.subr.bf16.mxu0 0
      %5976 = vmatpush2.bf16.msra.mxu0 0
      %5977 = vmatprep.mubr.bf16.mxu0 0
      %5978 = vmatmul.mubr.bf16.gmra.mxu0 %v5880
      %v5979 = vpop.f32.mrf.mxu0
      %v5980 = vadd.f32 0.0, %v5979
      %v5981 = vpop.f32.mrf.mxu0
      %v5982 = vpop.f32.mrf.mxu0
      %v5983 = vpop.f32.mrf.mxu0
      %5984 = vdwg.mxu0
      %v5985 = vadd.f32 %v5878, %v5980
      %s5986 = scalar_lea.vmem %s204, 120
      %v5987 = vld [vmem:[%s5986] sm:$0xf]
      %v5988 = vld [vmem:[%s991] sm:$0xf]
      %v5989 = vld [vmem:[%s991 + $0x4] sm:$0xf]
      %v5990 = vld [vmem:[%s991 + $0x8] sm:$0xf]
      %v5991 = vld [vmem:[%s991 + $0xc] sm:$0xf]
      %v5992 = vld [vmem:[%s991 + $0x10] sm:$0xf]
      %v5993 = vld [vmem:[%s991 + $0x14] sm:$0xf]
      %v5994 = vld [vmem:[%s991 + $0x18] sm:$0xf]
      %v5995 = vld [vmem:[%s991 + $0x1c] sm:$0xf]
      %v5996 = vld [vmem:[%s991 + $0x20] sm:$0xf]
      %v5997 = vld [vmem:[%s991 + $0x24] sm:$0xf]
      %v5998 = vld [vmem:[%s991 + $0x28] sm:$0xf]
      %v5999 = vld [vmem:[%s991 + $0x2c] sm:$0xf]
      %v6000 = vld [vmem:[%s991 + $0x30] sm:$0xf]
      %v6001 = vld [vmem:[%s991 + $0x34] sm:$0xf]
      %v6002 = vld [vmem:[%s991 + $0x38] sm:$0xf]
      %v6003 = vld [vmem:[%s991 + $0x3c] sm:$0xf]
      %v6020 = vunpack.c.l.b16 %v5988
      %v6021 = vunpack.c.l.b16 %v5989
      %v6022 = vunpack.c.l.b16 %v5990
      %v6023 = vunpack.c.l.b16 %v5991
      %v6024 = vunpack.c.l.b16 %v5992
      %v6025 = vunpack.c.l.b16 %v5993
      %v6026 = vunpack.c.l.b16 %v5994
      %v6027 = vunpack.c.l.b16 %v5995
      %v6028 = vunpack.c.l.b16 %v5996
      %v6029 = vunpack.c.l.b16 %v5997
      %v6030 = vunpack.c.l.b16 %v5998
      %v6031 = vunpack.c.l.b16 %v5999
      %v6032 = vunpack.c.l.b16 %v6000
      %v6033 = vunpack.c.l.b16 %v6001
      %v6034 = vunpack.c.l.b16 %v6002
      %v6035 = vunpack.c.l.b16 %v6003
      %v6036 = vpack.c.b16 %v6021, %v6020
      %v6037 = vpack.c.b16 %v6023, %v6022
      %v6038 = vpack.c.b16 %v6025, %v6024
      %v6039 = vpack.c.b16 %v6027, %v6026
      %v6040 = vpack.c.b16 %v6029, %v6028
      %v6041 = vpack.c.b16 %v6031, %v6030
      %v6042 = vpack.c.b16 %v6033, %v6032
      %v6043 = vpack.c.b16 %v6035, %v6034
      %6052 = vmatprep.subr.bf16.mxu0 0
      %6053 = vmatpush1.bf16.msra.mxu0 %v6043
      %6054 = vmatprep.subr.bf16.mxu0 0
      %6055 = vmatpush1.bf16.msra.mxu0 %v6042
      %6056 = vmatprep.subr.bf16.mxu0 0
      %6057 = vmatpush1.bf16.msra.mxu0 %v6041
      %6058 = vmatprep.subr.bf16.mxu0 0
      %6059 = vmatpush1.bf16.msra.mxu0 %v6040
      %6060 = vmatprep.subr.bf16.mxu0 0
      %6061 = vmatpush1.bf16.msra.mxu0 %v6039
      %6062 = vmatprep.subr.bf16.mxu0 0
      %6063 = vmatpush1.bf16.msra.mxu0 %v6038
      %6064 = vmatprep.subr.bf16.mxu0 0
      %6065 = vmatpush1.bf16.msra.mxu0 %v6037
      %6066 = vmatprep.subr.bf16.mxu0 0
      %6067 = vmatpush1.bf16.msra.mxu0 %v6036
      %6068 = vmatprep.subr.bf16.mxu0 0
      %6069 = vmatpush2.bf16.msra.mxu0 0
      %6070 = vmatprep.subr.bf16.mxu0 0
      %6071 = vmatpush2.bf16.msra.mxu0 0
      %6072 = vmatprep.subr.bf16.mxu0 0
      %6073 = vmatpush2.bf16.msra.mxu0 0
      %6074 = vmatprep.subr.bf16.mxu0 0
      %6075 = vmatpush2.bf16.msra.mxu0 0
      %6076 = vmatprep.subr.bf16.mxu0 0
      %6077 = vmatpush2.bf16.msra.mxu0 0
      %6078 = vmatprep.subr.bf16.mxu0 0
      %6079 = vmatpush2.bf16.msra.mxu0 0
      %6080 = vmatprep.subr.bf16.mxu0 0
      %6081 = vmatpush2.bf16.msra.mxu0 0
      %6082 = vmatprep.subr.bf16.mxu0 0
      %6083 = vmatpush2.bf16.msra.mxu0 0
      %6084 = vmatprep.mubr.bf16.mxu0 0
      %6085 = vmatmul.mubr.bf16.gmra.mxu0 %v5987
      %v6086 = vpop.f32.mrf.mxu0
      %v6087 = vadd.f32 0.0, %v6086
      %v6088 = vpop.f32.mrf.mxu0
      %v6089 = vpop.f32.mrf.mxu0
      %v6090 = vpop.f32.mrf.mxu0
      %6091 = vdwg.mxu0
      %v6092 = vadd.f32 %v5985, %v6087
      %v6093 = vld [vmem:[%s5879] sm:$0xf]
      %v6094 = vld [vmem:[%s5879 + $0x4] sm:$0x1]
      %v6095 = vld [vmem:[%s1099] sm:$0xf]
      %v6096 = vld [vmem:[%s1099 + $0x4] sm:$0xf]
      %v6097 = vld [vmem:[%s1099 + $0x8] sm:$0xf]
      %v6098 = vld [vmem:[%s1099 + $0xc] sm:$0xf]
      %v6099 = vld [vmem:[%s1099 + $0x10] sm:$0xf]
      %v6100 = vld [vmem:[%s1099 + $0x14] sm:$0xf]
      %v6101 = vld [vmem:[%s1099 + $0x18] sm:$0xf]
      %v6102 = vld [vmem:[%s1099 + $0x1c] sm:$0xf]
      %v6103 = vld [vmem:[%s1099 + $0x20] sm:$0xf]
      %v6104 = vld [vmem:[%s1099 + $0x24] sm:$0xf]
      %v6105 = vld [vmem:[%s1099 + $0x28] sm:$0xf]
      %v6106 = vld [vmem:[%s1099 + $0x2c] sm:$0xf]
      %v6107 = vld [vmem:[%s1099 + $0x30] sm:$0xf]
      %v6108 = vld [vmem:[%s1099 + $0x34] sm:$0xf]
      %v6109 = vld [vmem:[%s1099 + $0x38] sm:$0xf]
      %v6110 = vld [vmem:[%s1099 + $0x3c] sm:$0xf]
      %v6113 = vunpack.c.l.b16 %v6093
      %v6114 = vunpack.c.l.b16 %v6094
      %v6115 = vpack.c.b16 %v6114, %v6113
      %v6117 = vshrl.u32 %v6115, 16
      %v6119 = vshll.u32 %v6115, 16
      %v6121 = vrot.slane %v6119, 1
      %v6122 = vor.u32 %v6117, %v6121
      %v6140 = vunpack.c.l.b16 %v6095
      %v6141 = vunpack.c.l.b16 %v6096
      %v6142 = vunpack.c.l.b16 %v6097
      %v6143 = vunpack.c.l.b16 %v6098
      %v6144 = vunpack.c.l.b16 %v6099
      %v6145 = vunpack.c.l.b16 %v6100
      %v6146 = vunpack.c.l.b16 %v6101
      %v6147 = vunpack.c.l.b16 %v6102
      %v6148 = vunpack.c.l.b16 %v6103
      %v6149 = vunpack.c.l.b16 %v6104
      %v6150 = vunpack.c.l.b16 %v6105
      %v6151 = vunpack.c.l.b16 %v6106
      %v6152 = vunpack.c.l.b16 %v6107
      %v6153 = vunpack.c.l.b16 %v6108
      %v6154 = vunpack.c.l.b16 %v6109
      %v6155 = vunpack.c.l.b16 %v6110
      %v6156 = vpack.c.b16 %v6141, %v6140
      %v6157 = vpack.c.b16 %v6143, %v6142
      %v6158 = vpack.c.b16 %v6145, %v6144
      %v6159 = vpack.c.b16 %v6147, %v6146
      %v6160 = vpack.c.b16 %v6149, %v6148
      %v6161 = vpack.c.b16 %v6151, %v6150
      %v6162 = vpack.c.b16 %v6153, %v6152
      %v6163 = vpack.c.b16 %v6155, %v6154
      %6172 = vmatprep.subr.bf16.mxu0 0
      %6173 = vmatpush1.bf16.msra.mxu0 %v6163
      %6174 = vmatprep.subr.bf16.mxu0 0
      %6175 = vmatpush1.bf16.msra.mxu0 %v6162
      %6176 = vmatprep.subr.bf16.mxu0 0
      %6177 = vmatpush1.bf16.msra.mxu0 %v6161
      %6178 = vmatprep.subr.bf16.mxu0 0
      %6179 = vmatpush1.bf16.msra.mxu0 %v6160
      %6180 = vmatprep.subr.bf16.mxu0 0
      %6181 = vmatpush1.bf16.msra.mxu0 %v6159
      %6182 = vmatprep.subr.bf16.mxu0 0
      %6183 = vmatpush1.bf16.msra.mxu0 %v6158
      %6184 = vmatprep.subr.bf16.mxu0 0
      %6185 = vmatpush1.bf16.msra.mxu0 %v6157
      %6186 = vmatprep.subr.bf16.mxu0 0
      %6187 = vmatpush1.bf16.msra.mxu0 %v6156
      %6188 = vmatprep.subr.bf16.mxu0 0
      %6189 = vmatpush2.bf16.msra.mxu0 0
      %6190 = vmatprep.subr.bf16.mxu0 0
      %6191 = vmatpush2.bf16.msra.mxu0 0
      %6192 = vmatprep.subr.bf16.mxu0 0
      %6193 = vmatpush2.bf16.msra.mxu0 0
      %6194 = vmatprep.subr.bf16.mxu0 0
      %6195 = vmatpush2.bf16.msra.mxu0 0
      %6196 = vmatprep.subr.bf16.mxu0 0
      %6197 = vmatpush2.bf16.msra.mxu0 0
      %6198 = vmatprep.subr.bf16.mxu0 0
      %6199 = vmatpush2.bf16.msra.mxu0 0
      %6200 = vmatprep.subr.bf16.mxu0 0
      %6201 = vmatpush2.bf16.msra.mxu0 0
      %6202 = vmatprep.subr.bf16.mxu0 0
      %6203 = vmatpush2.bf16.msra.mxu0 0
      %6204 = vmatprep.mubr.bf16.mxu0 0
      %6205 = vmatmul.mubr.bf16.gmra.mxu0 %v6122
      %v6206 = vpop.f32.mrf.mxu0
      %v6207 = vadd.f32 0.0, %v6206
      %v6208 = vpop.f32.mrf.mxu0
      %v6209 = vpop.f32.mrf.mxu0
      %v6210 = vpop.f32.mrf.mxu0
      %6211 = vdwg.mxu0
      %v6212 = vadd.f32 %v6092, %v6207
      %6213 = vst [vmem:[#allocation2 + $0x28] sm:$0xff] %v6212
      %v6214 = vld [vmem:[%s5879] sm:$0xf]
      %v6215 = vld [vmem:[%s1] sm:$0xf]
      %v6216 = vld [vmem:[%s1 + $0x4] sm:$0xf]
      %v6217 = vld [vmem:[%s1 + $0x8] sm:$0xf]
      %v6218 = vld [vmem:[%s1 + $0xc] sm:$0xf]
      %v6219 = vld [vmem:[%s1 + $0x10] sm:$0xf]
      %v6220 = vld [vmem:[%s1 + $0x14] sm:$0xf]
      %v6221 = vld [vmem:[%s1 + $0x18] sm:$0xf]
      %v6222 = vld [vmem:[%s1 + $0x1c] sm:$0xf]
      %v6223 = vld [vmem:[%s1 + $0x20] sm:$0xf]
      %v6224 = vld [vmem:[%s1 + $0x24] sm:$0xf]
      %v6225 = vld [vmem:[%s1 + $0x28] sm:$0xf]
      %v6226 = vld [vmem:[%s1 + $0x2c] sm:$0xf]
      %v6227 = vld [vmem:[%s1 + $0x30] sm:$0xf]
      %v6228 = vld [vmem:[%s1 + $0x34] sm:$0xf]
      %v6229 = vld [vmem:[%s1 + $0x38] sm:$0xf]
      %v6230 = vld [vmem:[%s1 + $0x3c] sm:$0xf]
      %v6231 = vld [vmem:[%s5986] sm:$0xf]
      %v6232 = vld [vmem:[%s230] sm:$0xf]
      %v6233 = vld [vmem:[%s230 + $0x4] sm:$0xf]
      %v6234 = vld [vmem:[%s230 + $0x8] sm:$0xf]
      %v6235 = vld [vmem:[%s230 + $0xc] sm:$0xf]
      %v6236 = vld [vmem:[%s230 + $0x10] sm:$0xf]
      %v6237 = vld [vmem:[%s230 + $0x14] sm:$0xf]
      %v6238 = vld [vmem:[%s230 + $0x18] sm:$0xf]
      %v6239 = vld [vmem:[%s230 + $0x1c] sm:$0xf]
      %v6240 = vld [vmem:[%s230 + $0x20] sm:$0xf]
      %v6241 = vld [vmem:[%s230 + $0x24] sm:$0xf]
      %v6242 = vld [vmem:[%s230 + $0x28] sm:$0xf]
      %v6243 = vld [vmem:[%s230 + $0x2c] sm:$0xf]
      %v6244 = vld [vmem:[%s230 + $0x30] sm:$0xf]
      %v6245 = vld [vmem:[%s230 + $0x34] sm:$0xf]
      %v6246 = vld [vmem:[%s230 + $0x38] sm:$0xf]
      %v6247 = vld [vmem:[%s230 + $0x3c] sm:$0xf]
      %v6264 = vunpack.c.l.b16 %v6232
      %v6265 = vunpack.c.l.b16 %v6233
      %v6266 = vunpack.c.l.b16 %v6234
      %v6267 = vunpack.c.l.b16 %v6235
      %v6268 = vunpack.c.l.b16 %v6236
      %v6269 = vunpack.c.l.b16 %v6237
      %v6270 = vunpack.c.l.b16 %v6238
      %v6271 = vunpack.c.l.b16 %v6239
      %v6272 = vunpack.c.l.b16 %v6240
      %v6273 = vunpack.c.l.b16 %v6241
      %v6274 = vunpack.c.l.b16 %v6242
      %v6275 = vunpack.c.l.b16 %v6243
      %v6276 = vunpack.c.l.b16 %v6244
      %v6277 = vunpack.c.l.b16 %v6245
      %v6278 = vunpack.c.l.b16 %v6246
      %v6279 = vunpack.c.l.b16 %v6247
      %v6280 = vpack.c.b16 %v6265, %v6264
      %v6281 = vpack.c.b16 %v6267, %v6266
      %v6282 = vpack.c.b16 %v6269, %v6268
      %v6283 = vpack.c.b16 %v6271, %v6270
      %v6284 = vpack.c.b16 %v6273, %v6272
      %v6285 = vpack.c.b16 %v6275, %v6274
      %v6286 = vpack.c.b16 %v6277, %v6276
      %v6287 = vpack.c.b16 %v6279, %v6278
      %6296 = vmatprep.subr.bf16.mxu0 0
      %6297 = vmatpush1.bf16.msra.mxu0 %v6287
      %6298 = vmatprep.subr.bf16.mxu0 0
      %6299 = vmatpush1.bf16.msra.mxu0 %v6286
      %6300 = vmatprep.subr.bf16.mxu0 0
      %6301 = vmatpush1.bf16.msra.mxu0 %v6285
      %6302 = vmatprep.subr.bf16.mxu0 0
      %6303 = vmatpush1.bf16.msra.mxu0 %v6284
      %6304 = vmatprep.subr.bf16.mxu0 0
      %6305 = vmatpush1.bf16.msra.mxu0 %v6283
      %6306 = vmatprep.subr.bf16.mxu0 0
      %6307 = vmatpush1.bf16.msra.mxu0 %v6282
      %6308 = vmatprep.subr.bf16.mxu0 0
      %6309 = vmatpush1.bf16.msra.mxu0 %v6281
      %6310 = vmatprep.subr.bf16.mxu0 0
      %6311 = vmatpush1.bf16.msra.mxu0 %v6280
      %6312 = vmatprep.subr.bf16.mxu0 0
      %6313 = vmatpush2.bf16.msra.mxu0 0
      %6314 = vmatprep.subr.bf16.mxu0 0
      %6315 = vmatpush2.bf16.msra.mxu0 0
      %6316 = vmatprep.subr.bf16.mxu0 0
      %6317 = vmatpush2.bf16.msra.mxu0 0
      %6318 = vmatprep.subr.bf16.mxu0 0
      %6319 = vmatpush2.bf16.msra.mxu0 0
      %6320 = vmatprep.subr.bf16.mxu0 0
      %6321 = vmatpush2.bf16.msra.mxu0 0
      %6322 = vmatprep.subr.bf16.mxu0 0
      %6323 = vmatpush2.bf16.msra.mxu0 0
      %6324 = vmatprep.subr.bf16.mxu0 0
      %6325 = vmatpush2.bf16.msra.mxu0 0
      %6326 = vmatprep.subr.bf16.mxu0 0
      %6327 = vmatpush2.bf16.msra.mxu0 0
      %6328 = vmatprep.mubr.bf16.mxu0 0
      %6329 = vmatmul.mubr.bf16.gmra.mxu0 %v6231
      %v6330 = vpop.f32.mrf.mxu0
      %v6331 = vadd.f32 0.0, %v6330
      %v6332 = vpop.f32.mrf.mxu0
      %v6333 = vpop.f32.mrf.mxu0
      %v6334 = vpop.f32.mrf.mxu0
      %6335 = vdwg.mxu0
      %v6352 = vunpack.c.l.b16 %v6215
      %v6353 = vunpack.c.l.b16 %v6216
      %v6354 = vunpack.c.l.b16 %v6217
      %v6355 = vunpack.c.l.b16 %v6218
      %v6356 = vunpack.c.l.b16 %v6219
      %v6357 = vunpack.c.l.b16 %v6220
      %v6358 = vunpack.c.l.b16 %v6221
      %v6359 = vunpack.c.l.b16 %v6222
      %v6360 = vunpack.c.l.b16 %v6223
      %v6361 = vunpack.c.l.b16 %v6224
      %v6362 = vunpack.c.l.b16 %v6225
      %v6363 = vunpack.c.l.b16 %v6226
      %v6364 = vunpack.c.l.b16 %v6227
      %v6365 = vunpack.c.l.b16 %v6228
      %v6366 = vunpack.c.l.b16 %v6229
      %v6367 = vunpack.c.l.b16 %v6230
      %v6368 = vpack.c.b16 %v6353, %v6352
      %v6369 = vpack.c.b16 %v6355, %v6354
      %v6370 = vpack.c.b16 %v6357, %v6356
      %v6371 = vpack.c.b16 %v6359, %v6358
      %v6372 = vpack.c.b16 %v6361, %v6360
      %v6373 = vpack.c.b16 %v6363, %v6362
      %v6374 = vpack.c.b16 %v6365, %v6364
      %v6375 = vpack.c.b16 %v6367, %v6366
      %6384 = vmatprep.subr.bf16.mxu0 0
      %6385 = vmatpush1.bf16.msra.mxu0 %v6375
      %6386 = vmatprep.subr.bf16.mxu0 0
      %6387 = vmatpush1.bf16.msra.mxu0 %v6374
      %6388 = vmatprep.subr.bf16.mxu0 0
      %6389 = vmatpush1.bf16.msra.mxu0 %v6373
      %6390 = vmatprep.subr.bf16.mxu0 0
      %6391 = vmatpush1.bf16.msra.mxu0 %v6372
      %6392 = vmatprep.subr.bf16.mxu0 0
      %6393 = vmatpush1.bf16.msra.mxu0 %v6371
      %6394 = vmatprep.subr.bf16.mxu0 0
      %6395 = vmatpush1.bf16.msra.mxu0 %v6370
      %6396 = vmatprep.subr.bf16.mxu0 0
      %6397 = vmatpush1.bf16.msra.mxu0 %v6369
      %6398 = vmatprep.subr.bf16.mxu0 0
      %6399 = vmatpush1.bf16.msra.mxu0 %v6368
      %6400 = vmatprep.subr.bf16.mxu0 0
      %6401 = vmatpush2.bf16.msra.mxu0 0
      %6402 = vmatprep.subr.bf16.mxu0 0
      %6403 = vmatpush2.bf16.msra.mxu0 0
      %6404 = vmatprep.subr.bf16.mxu0 0
      %6405 = vmatpush2.bf16.msra.mxu0 0
      %6406 = vmatprep.subr.bf16.mxu0 0
      %6407 = vmatpush2.bf16.msra.mxu0 0
      %6408 = vmatprep.subr.bf16.mxu0 0
      %6409 = vmatpush2.bf16.msra.mxu0 0
      %6410 = vmatprep.subr.bf16.mxu0 0
      %6411 = vmatpush2.bf16.msra.mxu0 0
      %6412 = vmatprep.subr.bf16.mxu0 0
      %6413 = vmatpush2.bf16.msra.mxu0 0
      %6414 = vmatprep.subr.bf16.mxu0 0
      %6415 = vmatpush2.bf16.msra.mxu0 0
      %6416 = vmatprep.mubr.bf16.mxu0 0
      %6417 = vmatmul.mubr.bf16.gmra.mxu0 %v6214
      %v6418 = vpop.f32.mrf.mxu0
      %v6419 = vadd.f32 %v6331, %v6418
      %v6420 = vpop.f32.mrf.mxu0
      %v6421 = vpop.f32.mrf.mxu0
      %v6422 = vpop.f32.mrf.mxu0
      %6423 = vdwg.mxu0
      %v6424 = vld [vmem:[%s5879] sm:$0xf]
      %v6425 = vld [vmem:[%s5879 + $0x4] sm:$0x1]
      %v6426 = vld [vmem:[%s425] sm:$0xf]
      %v6427 = vld [vmem:[%s425 + $0x4] sm:$0xf]
      %v6428 = vld [vmem:[%s425 + $0x8] sm:$0xf]
      %v6429 = vld [vmem:[%s425 + $0xc] sm:$0xf]
      %v6430 = vld [vmem:[%s425 + $0x10] sm:$0xf]
      %v6431 = vld [vmem:[%s425 + $0x14] sm:$0xf]
      %v6432 = vld [vmem:[%s425 + $0x18] sm:$0xf]
      %v6433 = vld [vmem:[%s425 + $0x1c] sm:$0xf]
      %v6434 = vld [vmem:[%s425 + $0x20] sm:$0xf]
      %v6435 = vld [vmem:[%s425 + $0x24] sm:$0xf]
      %v6436 = vld [vmem:[%s425 + $0x28] sm:$0xf]
      %v6437 = vld [vmem:[%s425 + $0x2c] sm:$0xf]
      %v6438 = vld [vmem:[%s425 + $0x30] sm:$0xf]
      %v6439 = vld [vmem:[%s425 + $0x34] sm:$0xf]
      %v6440 = vld [vmem:[%s425 + $0x38] sm:$0xf]
      %v6441 = vld [vmem:[%s425 + $0x3c] sm:$0xf]
      %v6444 = vunpack.c.l.b16 %v6424
      %v6445 = vunpack.c.l.b16 %v6425
      %v6446 = vpack.c.b16 %v6445, %v6444
      %v6448 = vshrl.u32 %v6446, 16
      %v6450 = vshll.u32 %v6446, 16
      %v6452 = vrot.slane %v6450, 1
      %v6453 = vor.u32 %v6448, %v6452
      %v6471 = vunpack.c.l.b16 %v6426
      %v6472 = vunpack.c.l.b16 %v6427
      %v6473 = vunpack.c.l.b16 %v6428
      %v6474 = vunpack.c.l.b16 %v6429
      %v6475 = vunpack.c.l.b16 %v6430
      %v6476 = vunpack.c.l.b16 %v6431
      %v6477 = vunpack.c.l.b16 %v6432
      %v6478 = vunpack.c.l.b16 %v6433
      %v6479 = vunpack.c.l.b16 %v6434
      %v6480 = vunpack.c.l.b16 %v6435
      %v6481 = vunpack.c.l.b16 %v6436
      %v6482 = vunpack.c.l.b16 %v6437
      %v6483 = vunpack.c.l.b16 %v6438
      %v6484 = vunpack.c.l.b16 %v6439
      %v6485 = vunpack.c.l.b16 %v6440
      %v6486 = vunpack.c.l.b16 %v6441
      %v6487 = vpack.c.b16 %v6472, %v6471
      %v6488 = vpack.c.b16 %v6474, %v6473
      %v6489 = vpack.c.b16 %v6476, %v6475
      %v6490 = vpack.c.b16 %v6478, %v6477
      %v6491 = vpack.c.b16 %v6480, %v6479
      %v6492 = vpack.c.b16 %v6482, %v6481
      %v6493 = vpack.c.b16 %v6484, %v6483
      %v6494 = vpack.c.b16 %v6486, %v6485
      %6503 = vmatprep.subr.bf16.mxu0 0
      %6504 = vmatpush1.bf16.msra.mxu0 %v6494
      %6505 = vmatprep.subr.bf16.mxu0 0
      %6506 = vmatpush1.bf16.msra.mxu0 %v6493
      %6507 = vmatprep.subr.bf16.mxu0 0
      %6508 = vmatpush1.bf16.msra.mxu0 %v6492
      %6509 = vmatprep.subr.bf16.mxu0 0
      %6510 = vmatpush1.bf16.msra.mxu0 %v6491
      %6511 = vmatprep.subr.bf16.mxu0 0
      %6512 = vmatpush1.bf16.msra.mxu0 %v6490
      %6513 = vmatprep.subr.bf16.mxu0 0
      %6514 = vmatpush1.bf16.msra.mxu0 %v6489
      %6515 = vmatprep.subr.bf16.mxu0 0
      %6516 = vmatpush1.bf16.msra.mxu0 %v6488
      %6517 = vmatprep.subr.bf16.mxu0 0
      %6518 = vmatpush1.bf16.msra.mxu0 %v6487
      %6519 = vmatprep.subr.bf16.mxu0 0
      %6520 = vmatpush2.bf16.msra.mxu0 0
      %6521 = vmatprep.subr.bf16.mxu0 0
      %6522 = vmatpush2.bf16.msra.mxu0 0
      %6523 = vmatprep.subr.bf16.mxu0 0
      %6524 = vmatpush2.bf16.msra.mxu0 0
      %6525 = vmatprep.subr.bf16.mxu0 0
      %6526 = vmatpush2.bf16.msra.mxu0 0
      %6527 = vmatprep.subr.bf16.mxu0 0
      %6528 = vmatpush2.bf16.msra.mxu0 0
      %6529 = vmatprep.subr.bf16.mxu0 0
      %6530 = vmatpush2.bf16.msra.mxu0 0
      %6531 = vmatprep.subr.bf16.mxu0 0
      %6532 = vmatpush2.bf16.msra.mxu0 0
      %6533 = vmatprep.subr.bf16.mxu0 0
      %6534 = vmatpush2.bf16.msra.mxu0 0
      %6535 = vmatprep.mubr.bf16.mxu0 0
      %6536 = vmatmul.mubr.bf16.gmra.mxu0 %v6453
      %v6537 = vpop.f32.mrf.mxu0
      %v6538 = vadd.f32 0.0, %v6537
      %v6539 = vpop.f32.mrf.mxu0
      %v6540 = vpop.f32.mrf.mxu0
      %v6541 = vpop.f32.mrf.mxu0
      %6542 = vdwg.mxu0
      %v6543 = vadd.f32 %v6419, %v6538
      %s6544 = scalar_lea.vmem %s204, 192
      %v6545 = vld [vmem:[%s6544] sm:$0xf]
      %v6546 = vld [vmem:[%s546] sm:$0xf]
      %v6547 = vld [vmem:[%s546 + $0x4] sm:$0xf]
      %v6548 = vld [vmem:[%s546 + $0x8] sm:$0xf]
      %v6549 = vld [vmem:[%s546 + $0xc] sm:$0xf]
      %v6550 = vld [vmem:[%s546 + $0x10] sm:$0xf]
      %v6551 = vld [vmem:[%s546 + $0x14] sm:$0xf]
      %v6552 = vld [vmem:[%s546 + $0x18] sm:$0xf]
      %v6553 = vld [vmem:[%s546 + $0x1c] sm:$0xf]
      %v6554 = vld [vmem:[%s546 + $0x20] sm:$0xf]
      %v6555 = vld [vmem:[%s546 + $0x24] sm:$0xf]
      %v6556 = vld [vmem:[%s546 + $0x28] sm:$0xf]
      %v6557 = vld [vmem:[%s546 + $0x2c] sm:$0xf]
      %v6558 = vld [vmem:[%s546 + $0x30] sm:$0xf]
      %v6559 = vld [vmem:[%s546 + $0x34] sm:$0xf]
      %v6560 = vld [vmem:[%s546 + $0x38] sm:$0xf]
      %v6561 = vld [vmem:[%s546 + $0x3c] sm:$0xf]
      %v6578 = vunpack.c.l.b16 %v6546
      %v6579 = vunpack.c.l.b16 %v6547
      %v6580 = vunpack.c.l.b16 %v6548
      %v6581 = vunpack.c.l.b16 %v6549
      %v6582 = vunpack.c.l.b16 %v6550
      %v6583 = vunpack.c.l.b16 %v6551
      %v6584 = vunpack.c.l.b16 %v6552
      %v6585 = vunpack.c.l.b16 %v6553
      %v6586 = vunpack.c.l.b16 %v6554
      %v6587 = vunpack.c.l.b16 %v6555
      %v6588 = vunpack.c.l.b16 %v6556
      %v6589 = vunpack.c.l.b16 %v6557
      %v6590 = vunpack.c.l.b16 %v6558
      %v6591 = vunpack.c.l.b16 %v6559
      %v6592 = vunpack.c.l.b16 %v6560
      %v6593 = vunpack.c.l.b16 %v6561
      %v6594 = vpack.c.b16 %v6579, %v6578
      %v6595 = vpack.c.b16 %v6581, %v6580
      %v6596 = vpack.c.b16 %v6583, %v6582
      %v6597 = vpack.c.b16 %v6585, %v6584
      %v6598 = vpack.c.b16 %v6587, %v6586
      %v6599 = vpack.c.b16 %v6589, %v6588
      %v6600 = vpack.c.b16 %v6591, %v6590
      %v6601 = vpack.c.b16 %v6593, %v6592
      %6610 = vmatprep.subr.bf16.mxu0 0
      %6611 = vmatpush1.bf16.msra.mxu0 %v6601
      %6612 = vmatprep.subr.bf16.mxu0 0
      %6613 = vmatpush1.bf16.msra.mxu0 %v6600
      %6614 = vmatprep.subr.bf16.mxu0 0
      %6615 = vmatpush1.bf16.msra.mxu0 %v6599
      %6616 = vmatprep.subr.bf16.mxu0 0
      %6617 = vmatpush1.bf16.msra.mxu0 %v6598
      %6618 = vmatprep.subr.bf16.mxu0 0
      %6619 = vmatpush1.bf16.msra.mxu0 %v6597
      %6620 = vmatprep.subr.bf16.mxu0 0
      %6621 = vmatpush1.bf16.msra.mxu0 %v6596
      %6622 = vmatprep.subr.bf16.mxu0 0
      %6623 = vmatpush1.bf16.msra.mxu0 %v6595
      %6624 = vmatprep.subr.bf16.mxu0 0
      %6625 = vmatpush1.bf16.msra.mxu0 %v6594
      %6626 = vmatprep.subr.bf16.mxu0 0
      %6627 = vmatpush2.bf16.msra.mxu0 0
      %6628 = vmatprep.subr.bf16.mxu0 0
      %6629 = vmatpush2.bf16.msra.mxu0 0
      %6630 = vmatprep.subr.bf16.mxu0 0
      %6631 = vmatpush2.bf16.msra.mxu0 0
      %6632 = vmatprep.subr.bf16.mxu0 0
      %6633 = vmatpush2.bf16.msra.mxu0 0
      %6634 = vmatprep.subr.bf16.mxu0 0
      %6635 = vmatpush2.bf16.msra.mxu0 0
      %6636 = vmatprep.subr.bf16.mxu0 0
      %6637 = vmatpush2.bf16.msra.mxu0 0
      %6638 = vmatprep.subr.bf16.mxu0 0
      %6639 = vmatpush2.bf16.msra.mxu0 0
      %6640 = vmatprep.subr.bf16.mxu0 0
      %6641 = vmatpush2.bf16.msra.mxu0 0
      %6642 = vmatprep.mubr.bf16.mxu0 0
      %6643 = vmatmul.mubr.bf16.gmra.mxu0 %v6545
      %v6644 = vpop.f32.mrf.mxu0
      %v6645 = vadd.f32 0.0, %v6644
      %v6646 = vpop.f32.mrf.mxu0
      %v6647 = vpop.f32.mrf.mxu0
      %v6648 = vpop.f32.mrf.mxu0
      %6649 = vdwg.mxu0
      %v6650 = vadd.f32 %v6543, %v6645
      %s6651 = scalar_lea.vmem %s204, 264
      %v6652 = vld [vmem:[%s6651] sm:$0xf]
      %v6653 = vld [vmem:[%s654] sm:$0xf]
      %v6654 = vld [vmem:[%s654 + $0x4] sm:$0xf]
      %v6655 = vld [vmem:[%s654 + $0x8] sm:$0xf]
      %v6656 = vld [vmem:[%s654 + $0xc] sm:$0xf]
      %v6657 = vld [vmem:[%s654 + $0x10] sm:$0xf]
      %v6658 = vld [vmem:[%s654 + $0x14] sm:$0xf]
      %v6659 = vld [vmem:[%s654 + $0x18] sm:$0xf]
      %v6660 = vld [vmem:[%s654 + $0x1c] sm:$0xf]
      %v6661 = vld [vmem:[%s654 + $0x20] sm:$0xf]
      %v6662 = vld [vmem:[%s654 + $0x24] sm:$0xf]
      %v6663 = vld [vmem:[%s654 + $0x28] sm:$0xf]
      %v6664 = vld [vmem:[%s654 + $0x2c] sm:$0xf]
      %v6665 = vld [vmem:[%s654 + $0x30] sm:$0xf]
      %v6666 = vld [vmem:[%s654 + $0x34] sm:$0xf]
      %v6667 = vld [vmem:[%s654 + $0x38] sm:$0xf]
      %v6668 = vld [vmem:[%s654 + $0x3c] sm:$0xf]
      %v6685 = vunpack.c.l.b16 %v6653
      %v6686 = vunpack.c.l.b16 %v6654
      %v6687 = vunpack.c.l.b16 %v6655
      %v6688 = vunpack.c.l.b16 %v6656
      %v6689 = vunpack.c.l.b16 %v6657
      %v6690 = vunpack.c.l.b16 %v6658
      %v6691 = vunpack.c.l.b16 %v6659
      %v6692 = vunpack.c.l.b16 %v6660
      %v6693 = vunpack.c.l.b16 %v6661
      %v6694 = vunpack.c.l.b16 %v6662
      %v6695 = vunpack.c.l.b16 %v6663
      %v6696 = vunpack.c.l.b16 %v6664
      %v6697 = vunpack.c.l.b16 %v6665
      %v6698 = vunpack.c.l.b16 %v6666
      %v6699 = vunpack.c.l.b16 %v6667
      %v6700 = vunpack.c.l.b16 %v6668
      %v6701 = vpack.c.b16 %v6686, %v6685
      %v6702 = vpack.c.b16 %v6688, %v6687
      %v6703 = vpack.c.b16 %v6690, %v6689
      %v6704 = vpack.c.b16 %v6692, %v6691
      %v6705 = vpack.c.b16 %v6694, %v6693
      %v6706 = vpack.c.b16 %v6696, %v6695
      %v6707 = vpack.c.b16 %v6698, %v6697
      %v6708 = vpack.c.b16 %v6700, %v6699
      %6717 = vmatprep.subr.bf16.mxu0 0
      %6718 = vmatpush1.bf16.msra.mxu0 %v6708
      %6719 = vmatprep.subr.bf16.mxu0 0
      %6720 = vmatpush1.bf16.msra.mxu0 %v6707
      %6721 = vmatprep.subr.bf16.mxu0 0
      %6722 = vmatpush1.bf16.msra.mxu0 %v6706
      %6723 = vmatprep.subr.bf16.mxu0 0
      %6724 = vmatpush1.bf16.msra.mxu0 %v6705
      %6725 = vmatprep.subr.bf16.mxu0 0
      %6726 = vmatpush1.bf16.msra.mxu0 %v6704
      %6727 = vmatprep.subr.bf16.mxu0 0
      %6728 = vmatpush1.bf16.msra.mxu0 %v6703
      %6729 = vmatprep.subr.bf16.mxu0 0
      %6730 = vmatpush1.bf16.msra.mxu0 %v6702
      %6731 = vmatprep.subr.bf16.mxu0 0
      %6732 = vmatpush1.bf16.msra.mxu0 %v6701
      %6733 = vmatprep.subr.bf16.mxu0 0
      %6734 = vmatpush2.bf16.msra.mxu0 0
      %6735 = vmatprep.subr.bf16.mxu0 0
      %6736 = vmatpush2.bf16.msra.mxu0 0
      %6737 = vmatprep.subr.bf16.mxu0 0
      %6738 = vmatpush2.bf16.msra.mxu0 0
      %6739 = vmatprep.subr.bf16.mxu0 0
      %6740 = vmatpush2.bf16.msra.mxu0 0
      %6741 = vmatprep.subr.bf16.mxu0 0
      %6742 = vmatpush2.bf16.msra.mxu0 0
      %6743 = vmatprep.subr.bf16.mxu0 0
      %6744 = vmatpush2.bf16.msra.mxu0 0
      %6745 = vmatprep.subr.bf16.mxu0 0
      %6746 = vmatpush2.bf16.msra.mxu0 0
      %6747 = vmatprep.subr.bf16.mxu0 0
      %6748 = vmatpush2.bf16.msra.mxu0 0
      %6749 = vmatprep.mubr.bf16.mxu0 0
      %6750 = vmatmul.mubr.bf16.gmra.mxu0 %v6652
      %v6751 = vpop.f32.mrf.mxu0
      %v6752 = vadd.f32 0.0, %v6751
      %v6753 = vpop.f32.mrf.mxu0
      %v6754 = vpop.f32.mrf.mxu0
      %v6755 = vpop.f32.mrf.mxu0
      %6756 = vdwg.mxu0
      %v6757 = vadd.f32 %v6650, %v6752
      %v6758 = vld [vmem:[%s6544] sm:$0xf]
      %v6759 = vld [vmem:[%s6544 + $0x4] sm:$0x1]
      %v6760 = vld [vmem:[%s762] sm:$0xf]
      %v6761 = vld [vmem:[%s762 + $0x4] sm:$0xf]
      %v6762 = vld [vmem:[%s762 + $0x8] sm:$0xf]
      %v6763 = vld [vmem:[%s762 + $0xc] sm:$0xf]
      %v6764 = vld [vmem:[%s762 + $0x10] sm:$0xf]
      %v6765 = vld [vmem:[%s762 + $0x14] sm:$0xf]
      %v6766 = vld [vmem:[%s762 + $0x18] sm:$0xf]
      %v6767 = vld [vmem:[%s762 + $0x1c] sm:$0xf]
      %v6768 = vld [vmem:[%s762 + $0x20] sm:$0xf]
      %v6769 = vld [vmem:[%s762 + $0x24] sm:$0xf]
      %v6770 = vld [vmem:[%s762 + $0x28] sm:$0xf]
      %v6771 = vld [vmem:[%s762 + $0x2c] sm:$0xf]
      %v6772 = vld [vmem:[%s762 + $0x30] sm:$0xf]
      %v6773 = vld [vmem:[%s762 + $0x34] sm:$0xf]
      %v6774 = vld [vmem:[%s762 + $0x38] sm:$0xf]
      %v6775 = vld [vmem:[%s762 + $0x3c] sm:$0xf]
      %v6778 = vunpack.c.l.b16 %v6758
      %v6779 = vunpack.c.l.b16 %v6759
      %v6780 = vpack.c.b16 %v6779, %v6778
      %v6782 = vshrl.u32 %v6780, 16
      %v6784 = vshll.u32 %v6780, 16
      %v6786 = vrot.slane %v6784, 1
      %v6787 = vor.u32 %v6782, %v6786
      %v6805 = vunpack.c.l.b16 %v6760
      %v6806 = vunpack.c.l.b16 %v6761
      %v6807 = vunpack.c.l.b16 %v6762
      %v6808 = vunpack.c.l.b16 %v6763
      %v6809 = vunpack.c.l.b16 %v6764
      %v6810 = vunpack.c.l.b16 %v6765
      %v6811 = vunpack.c.l.b16 %v6766
      %v6812 = vunpack.c.l.b16 %v6767
      %v6813 = vunpack.c.l.b16 %v6768
      %v6814 = vunpack.c.l.b16 %v6769
      %v6815 = vunpack.c.l.b16 %v6770
      %v6816 = vunpack.c.l.b16 %v6771
      %v6817 = vunpack.c.l.b16 %v6772
      %v6818 = vunpack.c.l.b16 %v6773
      %v6819 = vunpack.c.l.b16 %v6774
      %v6820 = vunpack.c.l.b16 %v6775
      %v6821 = vpack.c.b16 %v6806, %v6805
      %v6822 = vpack.c.b16 %v6808, %v6807
      %v6823 = vpack.c.b16 %v6810, %v6809
      %v6824 = vpack.c.b16 %v6812, %v6811
      %v6825 = vpack.c.b16 %v6814, %v6813
      %v6826 = vpack.c.b16 %v6816, %v6815
      %v6827 = vpack.c.b16 %v6818, %v6817
      %v6828 = vpack.c.b16 %v6820, %v6819
      %6837 = vmatprep.subr.bf16.mxu0 0
      %6838 = vmatpush1.bf16.msra.mxu0 %v6828
      %6839 = vmatprep.subr.bf16.mxu0 0
      %6840 = vmatpush1.bf16.msra.mxu0 %v6827
      %6841 = vmatprep.subr.bf16.mxu0 0
      %6842 = vmatpush1.bf16.msra.mxu0 %v6826
      %6843 = vmatprep.subr.bf16.mxu0 0
      %6844 = vmatpush1.bf16.msra.mxu0 %v6825
      %6845 = vmatprep.subr.bf16.mxu0 0
      %6846 = vmatpush1.bf16.msra.mxu0 %v6824
      %6847 = vmatprep.subr.bf16.mxu0 0
      %6848 = vmatpush1.bf16.msra.mxu0 %v6823
      %6849 = vmatprep.subr.bf16.mxu0 0
      %6850 = vmatpush1.bf16.msra.mxu0 %v6822
      %6851 = vmatprep.subr.bf16.mxu0 0
      %6852 = vmatpush1.bf16.msra.mxu0 %v6821
      %6853 = vmatprep.subr.bf16.mxu0 0
      %6854 = vmatpush2.bf16.msra.mxu0 0
      %6855 = vmatprep.subr.bf16.mxu0 0
      %6856 = vmatpush2.bf16.msra.mxu0 0
      %6857 = vmatprep.subr.bf16.mxu0 0
      %6858 = vmatpush2.bf16.msra.mxu0 0
      %6859 = vmatprep.subr.bf16.mxu0 0
      %6860 = vmatpush2.bf16.msra.mxu0 0
      %6861 = vmatprep.subr.bf16.mxu0 0
      %6862 = vmatpush2.bf16.msra.mxu0 0
      %6863 = vmatprep.subr.bf16.mxu0 0
      %6864 = vmatpush2.bf16.msra.mxu0 0
      %6865 = vmatprep.subr.bf16.mxu0 0
      %6866 = vmatpush2.bf16.msra.mxu0 0
      %6867 = vmatprep.subr.bf16.mxu0 0
      %6868 = vmatpush2.bf16.msra.mxu0 0
      %6869 = vmatprep.mubr.bf16.mxu0 0
      %6870 = vmatmul.mubr.bf16.gmra.mxu0 %v6787
      %v6871 = vpop.f32.mrf.mxu0
      %v6872 = vadd.f32 0.0, %v6871
      %v6873 = vpop.f32.mrf.mxu0
      %v6874 = vpop.f32.mrf.mxu0
      %v6875 = vpop.f32.mrf.mxu0
      %6876 = vdwg.mxu0
      %v6877 = vadd.f32 %v6757, %v6872
      %s6878 = scalar_lea.vmem %s204, 56
      %v6879 = vld [vmem:[%s6878] sm:$0xf]
      %v6880 = vld [vmem:[%s883] sm:$0xf]
      %v6881 = vld [vmem:[%s883 + $0x4] sm:$0xf]
      %v6882 = vld [vmem:[%s883 + $0x8] sm:$0xf]
      %v6883 = vld [vmem:[%s883 + $0xc] sm:$0xf]
      %v6884 = vld [vmem:[%s883 + $0x10] sm:$0xf]
      %v6885 = vld [vmem:[%s883 + $0x14] sm:$0xf]
      %v6886 = vld [vmem:[%s883 + $0x18] sm:$0xf]
      %v6887 = vld [vmem:[%s883 + $0x1c] sm:$0xf]
      %v6888 = vld [vmem:[%s883 + $0x20] sm:$0xf]
      %v6889 = vld [vmem:[%s883 + $0x24] sm:$0xf]
      %v6890 = vld [vmem:[%s883 + $0x28] sm:$0xf]
      %v6891 = vld [vmem:[%s883 + $0x2c] sm:$0xf]
      %v6892 = vld [vmem:[%s883 + $0x30] sm:$0xf]
      %v6893 = vld [vmem:[%s883 + $0x34] sm:$0xf]
      %v6894 = vld [vmem:[%s883 + $0x38] sm:$0xf]
      %v6895 = vld [vmem:[%s883 + $0x3c] sm:$0xf]
      %v6912 = vunpack.c.l.b16 %v6880
      %v6913 = vunpack.c.l.b16 %v6881
      %v6914 = vunpack.c.l.b16 %v6882
      %v6915 = vunpack.c.l.b16 %v6883
      %v6916 = vunpack.c.l.b16 %v6884
      %v6917 = vunpack.c.l.b16 %v6885
      %v6918 = vunpack.c.l.b16 %v6886
      %v6919 = vunpack.c.l.b16 %v6887
      %v6920 = vunpack.c.l.b16 %v6888
      %v6921 = vunpack.c.l.b16 %v6889
      %v6922 = vunpack.c.l.b16 %v6890
      %v6923 = vunpack.c.l.b16 %v6891
      %v6924 = vunpack.c.l.b16 %v6892
      %v6925 = vunpack.c.l.b16 %v6893
      %v6926 = vunpack.c.l.b16 %v6894
      %v6927 = vunpack.c.l.b16 %v6895
      %v6928 = vpack.c.b16 %v6913, %v6912
      %v6929 = vpack.c.b16 %v6915, %v6914
      %v6930 = vpack.c.b16 %v6917, %v6916
      %v6931 = vpack.c.b16 %v6919, %v6918
      %v6932 = vpack.c.b16 %v6921, %v6920
      %v6933 = vpack.c.b16 %v6923, %v6922
      %v6934 = vpack.c.b16 %v6925, %v6924
      %v6935 = vpack.c.b16 %v6927, %v6926
      %6944 = vmatprep.subr.bf16.mxu0 0
      %6945 = vmatpush1.bf16.msra.mxu0 %v6935
      %6946 = vmatprep.subr.bf16.mxu0 0
      %6947 = vmatpush1.bf16.msra.mxu0 %v6934
      %6948 = vmatprep.subr.bf16.mxu0 0
      %6949 = vmatpush1.bf16.msra.mxu0 %v6933
      %6950 = vmatprep.subr.bf16.mxu0 0
      %6951 = vmatpush1.bf16.msra.mxu0 %v6932
      %6952 = vmatprep.subr.bf16.mxu0 0
      %6953 = vmatpush1.bf16.msra.mxu0 %v6931
      %6954 = vmatprep.subr.bf16.mxu0 0
      %6955 = vmatpush1.bf16.msra.mxu0 %v6930
      %6956 = vmatprep.subr.bf16.mxu0 0
      %6957 = vmatpush1.bf16.msra.mxu0 %v6929
      %6958 = vmatprep.subr.bf16.mxu0 0
      %6959 = vmatpush1.bf16.msra.mxu0 %v6928
      %6960 = vmatprep.subr.bf16.mxu0 0
      %6961 = vmatpush2.bf16.msra.mxu0 0
      %6962 = vmatprep.subr.bf16.mxu0 0
      %6963 = vmatpush2.bf16.msra.mxu0 0
      %6964 = vmatprep.subr.bf16.mxu0 0
      %6965 = vmatpush2.bf16.msra.mxu0 0
      %6966 = vmatprep.subr.bf16.mxu0 0
      %6967 = vmatpush2.bf16.msra.mxu0 0
      %6968 = vmatprep.subr.bf16.mxu0 0
      %6969 = vmatpush2.bf16.msra.mxu0 0
      %6970 = vmatprep.subr.bf16.mxu0 0
      %6971 = vmatpush2.bf16.msra.mxu0 0
      %6972 = vmatprep.subr.bf16.mxu0 0
      %6973 = vmatpush2.bf16.msra.mxu0 0
      %6974 = vmatprep.subr.bf16.mxu0 0
      %6975 = vmatpush2.bf16.msra.mxu0 0
      %6976 = vmatprep.mubr.bf16.mxu0 0
      %6977 = vmatmul.mubr.bf16.gmra.mxu0 %v6879
      %v6978 = vpop.f32.mrf.mxu0
      %v6979 = vadd.f32 0.0, %v6978
      %v6980 = vpop.f32.mrf.mxu0
      %v6981 = vpop.f32.mrf.mxu0
      %v6982 = vpop.f32.mrf.mxu0
      %6983 = vdwg.mxu0
      %v6984 = vadd.f32 %v6877, %v6979
      %s6985 = scalar_lea.vmem %s204, 128
      %v6986 = vld [vmem:[%s6985] sm:$0xf]
      %v6987 = vld [vmem:[%s991] sm:$0xf]
      %v6988 = vld [vmem:[%s991 + $0x4] sm:$0xf]
      %v6989 = vld [vmem:[%s991 + $0x8] sm:$0xf]
      %v6990 = vld [vmem:[%s991 + $0xc] sm:$0xf]
      %v6991 = vld [vmem:[%s991 + $0x10] sm:$0xf]
      %v6992 = vld [vmem:[%s991 + $0x14] sm:$0xf]
      %v6993 = vld [vmem:[%s991 + $0x18] sm:$0xf]
      %v6994 = vld [vmem:[%s991 + $0x1c] sm:$0xf]
      %v6995 = vld [vmem:[%s991 + $0x20] sm:$0xf]
      %v6996 = vld [vmem:[%s991 + $0x24] sm:$0xf]
      %v6997 = vld [vmem:[%s991 + $0x28] sm:$0xf]
      %v6998 = vld [vmem:[%s991 + $0x2c] sm:$0xf]
      %v6999 = vld [vmem:[%s991 + $0x30] sm:$0xf]
      %v7000 = vld [vmem:[%s991 + $0x34] sm:$0xf]
      %v7001 = vld [vmem:[%s991 + $0x38] sm:$0xf]
      %v7002 = vld [vmem:[%s991 + $0x3c] sm:$0xf]
      %v7019 = vunpack.c.l.b16 %v6987
      %v7020 = vunpack.c.l.b16 %v6988
      %v7021 = vunpack.c.l.b16 %v6989
      %v7022 = vunpack.c.l.b16 %v6990
      %v7023 = vunpack.c.l.b16 %v6991
      %v7024 = vunpack.c.l.b16 %v6992
      %v7025 = vunpack.c.l.b16 %v6993
      %v7026 = vunpack.c.l.b16 %v6994
      %v7027 = vunpack.c.l.b16 %v6995
      %v7028 = vunpack.c.l.b16 %v6996
      %v7029 = vunpack.c.l.b16 %v6997
      %v7030 = vunpack.c.l.b16 %v6998
      %v7031 = vunpack.c.l.b16 %v6999
      %v7032 = vunpack.c.l.b16 %v7000
      %v7033 = vunpack.c.l.b16 %v7001
      %v7034 = vunpack.c.l.b16 %v7002
      %v7035 = vpack.c.b16 %v7020, %v7019
      %v7036 = vpack.c.b16 %v7022, %v7021
      %v7037 = vpack.c.b16 %v7024, %v7023
      %v7038 = vpack.c.b16 %v7026, %v7025
      %v7039 = vpack.c.b16 %v7028, %v7027
      %v7040 = vpack.c.b16 %v7030, %v7029
      %v7041 = vpack.c.b16 %v7032, %v7031
      %v7042 = vpack.c.b16 %v7034, %v7033
      %7051 = vmatprep.subr.bf16.mxu0 0
      %7052 = vmatpush1.bf16.msra.mxu0 %v7042
      %7053 = vmatprep.subr.bf16.mxu0 0
      %7054 = vmatpush1.bf16.msra.mxu0 %v7041
      %7055 = vmatprep.subr.bf16.mxu0 0
      %7056 = vmatpush1.bf16.msra.mxu0 %v7040
      %7057 = vmatprep.subr.bf16.mxu0 0
      %7058 = vmatpush1.bf16.msra.mxu0 %v7039
      %7059 = vmatprep.subr.bf16.mxu0 0
      %7060 = vmatpush1.bf16.msra.mxu0 %v7038
      %7061 = vmatprep.subr.bf16.mxu0 0
      %7062 = vmatpush1.bf16.msra.mxu0 %v7037
      %7063 = vmatprep.subr.bf16.mxu0 0
      %7064 = vmatpush1.bf16.msra.mxu0 %v7036
      %7065 = vmatprep.subr.bf16.mxu0 0
      %7066 = vmatpush1.bf16.msra.mxu0 %v7035
      %7067 = vmatprep.subr.bf16.mxu0 0
      %7068 = vmatpush2.bf16.msra.mxu0 0
      %7069 = vmatprep.subr.bf16.mxu0 0
      %7070 = vmatpush2.bf16.msra.mxu0 0
      %7071 = vmatprep.subr.bf16.mxu0 0
      %7072 = vmatpush2.bf16.msra.mxu0 0
      %7073 = vmatprep.subr.bf16.mxu0 0
      %7074 = vmatpush2.bf16.msra.mxu0 0
      %7075 = vmatprep.subr.bf16.mxu0 0
      %7076 = vmatpush2.bf16.msra.mxu0 0
      %7077 = vmatprep.subr.bf16.mxu0 0
      %7078 = vmatpush2.bf16.msra.mxu0 0
      %7079 = vmatprep.subr.bf16.mxu0 0
      %7080 = vmatpush2.bf16.msra.mxu0 0
      %7081 = vmatprep.subr.bf16.mxu0 0
      %7082 = vmatpush2.bf16.msra.mxu0 0
      %7083 = vmatprep.mubr.bf16.mxu0 0
      %7084 = vmatmul.mubr.bf16.gmra.mxu0 %v6986
      %v7085 = vpop.f32.mrf.mxu0
      %v7086 = vadd.f32 0.0, %v7085
      %v7087 = vpop.f32.mrf.mxu0
      %v7088 = vpop.f32.mrf.mxu0
      %v7089 = vpop.f32.mrf.mxu0
      %7090 = vdwg.mxu0
      %v7091 = vadd.f32 %v6984, %v7086
      %v7092 = vld [vmem:[%s6878] sm:$0xf]
      %v7093 = vld [vmem:[%s6878 + $0x4] sm:$0x1]
      %v7094 = vld [vmem:[%s1099] sm:$0xf]
      %v7095 = vld [vmem:[%s1099 + $0x4] sm:$0xf]
      %v7096 = vld [vmem:[%s1099 + $0x8] sm:$0xf]
      %v7097 = vld [vmem:[%s1099 + $0xc] sm:$0xf]
      %v7098 = vld [vmem:[%s1099 + $0x10] sm:$0xf]
      %v7099 = vld [vmem:[%s1099 + $0x14] sm:$0xf]
      %v7100 = vld [vmem:[%s1099 + $0x18] sm:$0xf]
      %v7101 = vld [vmem:[%s1099 + $0x1c] sm:$0xf]
      %v7102 = vld [vmem:[%s1099 + $0x20] sm:$0xf]
      %v7103 = vld [vmem:[%s1099 + $0x24] sm:$0xf]
      %v7104 = vld [vmem:[%s1099 + $0x28] sm:$0xf]
      %v7105 = vld [vmem:[%s1099 + $0x2c] sm:$0xf]
      %v7106 = vld [vmem:[%s1099 + $0x30] sm:$0xf]
      %v7107 = vld [vmem:[%s1099 + $0x34] sm:$0xf]
      %v7108 = vld [vmem:[%s1099 + $0x38] sm:$0xf]
      %v7109 = vld [vmem:[%s1099 + $0x3c] sm:$0xf]
      %v7112 = vunpack.c.l.b16 %v7092
      %v7113 = vunpack.c.l.b16 %v7093
      %v7114 = vpack.c.b16 %v7113, %v7112
      %v7116 = vshrl.u32 %v7114, 16
      %v7118 = vshll.u32 %v7114, 16
      %v7120 = vrot.slane %v7118, 1
      %v7121 = vor.u32 %v7116, %v7120
      %v7139 = vunpack.c.l.b16 %v7094
      %v7140 = vunpack.c.l.b16 %v7095
      %v7141 = vunpack.c.l.b16 %v7096
      %v7142 = vunpack.c.l.b16 %v7097
      %v7143 = vunpack.c.l.b16 %v7098
      %v7144 = vunpack.c.l.b16 %v7099
      %v7145 = vunpack.c.l.b16 %v7100
      %v7146 = vunpack.c.l.b16 %v7101
      %v7147 = vunpack.c.l.b16 %v7102
      %v7148 = vunpack.c.l.b16 %v7103
      %v7149 = vunpack.c.l.b16 %v7104
      %v7150 = vunpack.c.l.b16 %v7105
      %v7151 = vunpack.c.l.b16 %v7106
      %v7152 = vunpack.c.l.b16 %v7107
      %v7153 = vunpack.c.l.b16 %v7108
      %v7154 = vunpack.c.l.b16 %v7109
      %v7155 = vpack.c.b16 %v7140, %v7139
      %v7156 = vpack.c.b16 %v7142, %v7141
      %v7157 = vpack.c.b16 %v7144, %v7143
      %v7158 = vpack.c.b16 %v7146, %v7145
      %v7159 = vpack.c.b16 %v7148, %v7147
      %v7160 = vpack.c.b16 %v7150, %v7149
      %v7161 = vpack.c.b16 %v7152, %v7151
      %v7162 = vpack.c.b16 %v7154, %v7153
      %7171 = vmatprep.subr.bf16.mxu0 0
      %7172 = vmatpush1.bf16.msra.mxu0 %v7162
      %7173 = vmatprep.subr.bf16.mxu0 0
      %7174 = vmatpush1.bf16.msra.mxu0 %v7161
      %7175 = vmatprep.subr.bf16.mxu0 0
      %7176 = vmatpush1.bf16.msra.mxu0 %v7160
      %7177 = vmatprep.subr.bf16.mxu0 0
      %7178 = vmatpush1.bf16.msra.mxu0 %v7159
      %7179 = vmatprep.subr.bf16.mxu0 0
      %7180 = vmatpush1.bf16.msra.mxu0 %v7158
      %7181 = vmatprep.subr.bf16.mxu0 0
      %7182 = vmatpush1.bf16.msra.mxu0 %v7157
      %7183 = vmatprep.subr.bf16.mxu0 0
      %7184 = vmatpush1.bf16.msra.mxu0 %v7156
      %7185 = vmatprep.subr.bf16.mxu0 0
      %7186 = vmatpush1.bf16.msra.mxu0 %v7155
      %7187 = vmatprep.subr.bf16.mxu0 0
      %7188 = vmatpush2.bf16.msra.mxu0 0
      %7189 = vmatprep.subr.bf16.mxu0 0
      %7190 = vmatpush2.bf16.msra.mxu0 0
      %7191 = vmatprep.subr.bf16.mxu0 0
      %7192 = vmatpush2.bf16.msra.mxu0 0
      %7193 = vmatprep.subr.bf16.mxu0 0
      %7194 = vmatpush2.bf16.msra.mxu0 0
      %7195 = vmatprep.subr.bf16.mxu0 0
      %7196 = vmatpush2.bf16.msra.mxu0 0
      %7197 = vmatprep.subr.bf16.mxu0 0
      %7198 = vmatpush2.bf16.msra.mxu0 0
      %7199 = vmatprep.subr.bf16.mxu0 0
      %7200 = vmatpush2.bf16.msra.mxu0 0
      %7201 = vmatprep.subr.bf16.mxu0 0
      %7202 = vmatpush2.bf16.msra.mxu0 0
      %7203 = vmatprep.mubr.bf16.mxu0 0
      %7204 = vmatmul.mubr.bf16.gmra.mxu0 %v7121
      %v7205 = vpop.f32.mrf.mxu0
      %v7206 = vadd.f32 0.0, %v7205
      %v7207 = vpop.f32.mrf.mxu0
      %v7208 = vpop.f32.mrf.mxu0
      %v7209 = vpop.f32.mrf.mxu0
      %7210 = vdwg.mxu0
      %v7211 = vadd.f32 %v7091, %v7206
      %7212 = vst [vmem:[#allocation2 + $0x30] sm:$0xff] %v7211
      %v7213 = vld [vmem:[%s6878] sm:$0xf]
      %v7214 = vld [vmem:[%s1] sm:$0xf]
      %v7215 = vld [vmem:[%s1 + $0x4] sm:$0xf]
      %v7216 = vld [vmem:[%s1 + $0x8] sm:$0xf]
      %v7217 = vld [vmem:[%s1 + $0xc] sm:$0xf]
      %v7218 = vld [vmem:[%s1 + $0x10] sm:$0xf]
      %v7219 = vld [vmem:[%s1 + $0x14] sm:$0xf]
      %v7220 = vld [vmem:[%s1 + $0x18] sm:$0xf]
      %v7221 = vld [vmem:[%s1 + $0x1c] sm:$0xf]
      %v7222 = vld [vmem:[%s1 + $0x20] sm:$0xf]
      %v7223 = vld [vmem:[%s1 + $0x24] sm:$0xf]
      %v7224 = vld [vmem:[%s1 + $0x28] sm:$0xf]
      %v7225 = vld [vmem:[%s1 + $0x2c] sm:$0xf]
      %v7226 = vld [vmem:[%s1 + $0x30] sm:$0xf]
      %v7227 = vld [vmem:[%s1 + $0x34] sm:$0xf]
      %v7228 = vld [vmem:[%s1 + $0x38] sm:$0xf]
      %v7229 = vld [vmem:[%s1 + $0x3c] sm:$0xf]
      %v7230 = vld [vmem:[%s6985] sm:$0xf]
      %v7231 = vld [vmem:[%s230] sm:$0xf]
      %v7232 = vld [vmem:[%s230 + $0x4] sm:$0xf]
      %v7233 = vld [vmem:[%s230 + $0x8] sm:$0xf]
      %v7234 = vld [vmem:[%s230 + $0xc] sm:$0xf]
      %v7235 = vld [vmem:[%s230 + $0x10] sm:$0xf]
      %v7236 = vld [vmem:[%s230 + $0x14] sm:$0xf]
      %v7237 = vld [vmem:[%s230 + $0x18] sm:$0xf]
      %v7238 = vld [vmem:[%s230 + $0x1c] sm:$0xf]
      %v7239 = vld [vmem:[%s230 + $0x20] sm:$0xf]
      %v7240 = vld [vmem:[%s230 + $0x24] sm:$0xf]
      %v7241 = vld [vmem:[%s230 + $0x28] sm:$0xf]
      %v7242 = vld [vmem:[%s230 + $0x2c] sm:$0xf]
      %v7243 = vld [vmem:[%s230 + $0x30] sm:$0xf]
      %v7244 = vld [vmem:[%s230 + $0x34] sm:$0xf]
      %v7245 = vld [vmem:[%s230 + $0x38] sm:$0xf]
      %v7246 = vld [vmem:[%s230 + $0x3c] sm:$0xf]
      %v7263 = vunpack.c.l.b16 %v7231
      %v7264 = vunpack.c.l.b16 %v7232
      %v7265 = vunpack.c.l.b16 %v7233
      %v7266 = vunpack.c.l.b16 %v7234
      %v7267 = vunpack.c.l.b16 %v7235
      %v7268 = vunpack.c.l.b16 %v7236
      %v7269 = vunpack.c.l.b16 %v7237
      %v7270 = vunpack.c.l.b16 %v7238
      %v7271 = vunpack.c.l.b16 %v7239
      %v7272 = vunpack.c.l.b16 %v7240
      %v7273 = vunpack.c.l.b16 %v7241
      %v7274 = vunpack.c.l.b16 %v7242
      %v7275 = vunpack.c.l.b16 %v7243
      %v7276 = vunpack.c.l.b16 %v7244
      %v7277 = vunpack.c.l.b16 %v7245
      %v7278 = vunpack.c.l.b16 %v7246
      %v7279 = vpack.c.b16 %v7264, %v7263
      %v7280 = vpack.c.b16 %v7266, %v7265
      %v7281 = vpack.c.b16 %v7268, %v7267
      %v7282 = vpack.c.b16 %v7270, %v7269
      %v7283 = vpack.c.b16 %v7272, %v7271
      %v7284 = vpack.c.b16 %v7274, %v7273
      %v7285 = vpack.c.b16 %v7276, %v7275
      %v7286 = vpack.c.b16 %v7278, %v7277
      %7295 = vmatprep.subr.bf16.mxu0 0
      %7296 = vmatpush1.bf16.msra.mxu0 %v7286
      %7297 = vmatprep.subr.bf16.mxu0 0
      %7298 = vmatpush1.bf16.msra.mxu0 %v7285
      %7299 = vmatprep.subr.bf16.mxu0 0
      %7300 = vmatpush1.bf16.msra.mxu0 %v7284
      %7301 = vmatprep.subr.bf16.mxu0 0
      %7302 = vmatpush1.bf16.msra.mxu0 %v7283
      %7303 = vmatprep.subr.bf16.mxu0 0
      %7304 = vmatpush1.bf16.msra.mxu0 %v7282
      %7305 = vmatprep.subr.bf16.mxu0 0
      %7306 = vmatpush1.bf16.msra.mxu0 %v7281
      %7307 = vmatprep.subr.bf16.mxu0 0
      %7308 = vmatpush1.bf16.msra.mxu0 %v7280
      %7309 = vmatprep.subr.bf16.mxu0 0
      %7310 = vmatpush1.bf16.msra.mxu0 %v7279
      %7311 = vmatprep.subr.bf16.mxu0 0
      %7312 = vmatpush2.bf16.msra.mxu0 0
      %7313 = vmatprep.subr.bf16.mxu0 0
      %7314 = vmatpush2.bf16.msra.mxu0 0
      %7315 = vmatprep.subr.bf16.mxu0 0
      %7316 = vmatpush2.bf16.msra.mxu0 0
      %7317 = vmatprep.subr.bf16.mxu0 0
      %7318 = vmatpush2.bf16.msra.mxu0 0
      %7319 = vmatprep.subr.bf16.mxu0 0
      %7320 = vmatpush2.bf16.msra.mxu0 0
      %7321 = vmatprep.subr.bf16.mxu0 0
      %7322 = vmatpush2.bf16.msra.mxu0 0
      %7323 = vmatprep.subr.bf16.mxu0 0
      %7324 = vmatpush2.bf16.msra.mxu0 0
      %7325 = vmatprep.subr.bf16.mxu0 0
      %7326 = vmatpush2.bf16.msra.mxu0 0
      %7327 = vmatprep.mubr.bf16.mxu0 0
      %7328 = vmatmul.mubr.bf16.gmra.mxu0 %v7230
      %v7329 = vpop.f32.mrf.mxu0
      %v7330 = vadd.f32 0.0, %v7329
      %v7331 = vpop.f32.mrf.mxu0
      %v7332 = vpop.f32.mrf.mxu0
      %v7333 = vpop.f32.mrf.mxu0
      %7334 = vdwg.mxu0
      %v7351 = vunpack.c.l.b16 %v7214
      %v7352 = vunpack.c.l.b16 %v7215
      %v7353 = vunpack.c.l.b16 %v7216
      %v7354 = vunpack.c.l.b16 %v7217
      %v7355 = vunpack.c.l.b16 %v7218
      %v7356 = vunpack.c.l.b16 %v7219
      %v7357 = vunpack.c.l.b16 %v7220
      %v7358 = vunpack.c.l.b16 %v7221
      %v7359 = vunpack.c.l.b16 %v7222
      %v7360 = vunpack.c.l.b16 %v7223
      %v7361 = vunpack.c.l.b16 %v7224
      %v7362 = vunpack.c.l.b16 %v7225
      %v7363 = vunpack.c.l.b16 %v7226
      %v7364 = vunpack.c.l.b16 %v7227
      %v7365 = vunpack.c.l.b16 %v7228
      %v7366 = vunpack.c.l.b16 %v7229
      %v7367 = vpack.c.b16 %v7352, %v7351
      %v7368 = vpack.c.b16 %v7354, %v7353
      %v7369 = vpack.c.b16 %v7356, %v7355
      %v7370 = vpack.c.b16 %v7358, %v7357
      %v7371 = vpack.c.b16 %v7360, %v7359
      %v7372 = vpack.c.b16 %v7362, %v7361
      %v7373 = vpack.c.b16 %v7364, %v7363
      %v7374 = vpack.c.b16 %v7366, %v7365
      %7383 = vmatprep.subr.bf16.mxu0 0
      %7384 = vmatpush1.bf16.msra.mxu0 %v7374
      %7385 = vmatprep.subr.bf16.mxu0 0
      %7386 = vmatpush1.bf16.msra.mxu0 %v7373
      %7387 = vmatprep.subr.bf16.mxu0 0
      %7388 = vmatpush1.bf16.msra.mxu0 %v7372
      %7389 = vmatprep.subr.bf16.mxu0 0
      %7390 = vmatpush1.bf16.msra.mxu0 %v7371
      %7391 = vmatprep.subr.bf16.mxu0 0
      %7392 = vmatpush1.bf16.msra.mxu0 %v7370
      %7393 = vmatprep.subr.bf16.mxu0 0
      %7394 = vmatpush1.bf16.msra.mxu0 %v7369
      %7395 = vmatprep.subr.bf16.mxu0 0
      %7396 = vmatpush1.bf16.msra.mxu0 %v7368
      %7397 = vmatprep.subr.bf16.mxu0 0
      %7398 = vmatpush1.bf16.msra.mxu0 %v7367
      %7399 = vmatprep.subr.bf16.mxu0 0
      %7400 = vmatpush2.bf16.msra.mxu0 0
      %7401 = vmatprep.subr.bf16.mxu0 0
      %7402 = vmatpush2.bf16.msra.mxu0 0
      %7403 = vmatprep.subr.bf16.mxu0 0
      %7404 = vmatpush2.bf16.msra.mxu0 0
      %7405 = vmatprep.subr.bf16.mxu0 0
      %7406 = vmatpush2.bf16.msra.mxu0 0
      %7407 = vmatprep.subr.bf16.mxu0 0
      %7408 = vmatpush2.bf16.msra.mxu0 0
      %7409 = vmatprep.subr.bf16.mxu0 0
      %7410 = vmatpush2.bf16.msra.mxu0 0
      %7411 = vmatprep.subr.bf16.mxu0 0
      %7412 = vmatpush2.bf16.msra.mxu0 0
      %7413 = vmatprep.subr.bf16.mxu0 0
      %7414 = vmatpush2.bf16.msra.mxu0 0
      %7415 = vmatprep.mubr.bf16.mxu0 0
      %7416 = vmatmul.mubr.bf16.gmra.mxu0 %v7213
      %v7417 = vpop.f32.mrf.mxu0
      %v7418 = vadd.f32 %v7330, %v7417
      %v7419 = vpop.f32.mrf.mxu0
      %v7420 = vpop.f32.mrf.mxu0
      %v7421 = vpop.f32.mrf.mxu0
      %7422 = vdwg.mxu0
      %v7423 = vld [vmem:[%s6878] sm:$0xf]
      %v7424 = vld [vmem:[%s6878 + $0x4] sm:$0x1]
      %v7425 = vld [vmem:[%s425] sm:$0xf]
      %v7426 = vld [vmem:[%s425 + $0x4] sm:$0xf]
      %v7427 = vld [vmem:[%s425 + $0x8] sm:$0xf]
      %v7428 = vld [vmem:[%s425 + $0xc] sm:$0xf]
      %v7429 = vld [vmem:[%s425 + $0x10] sm:$0xf]
      %v7430 = vld [vmem:[%s425 + $0x14] sm:$0xf]
      %v7431 = vld [vmem:[%s425 + $0x18] sm:$0xf]
      %v7432 = vld [vmem:[%s425 + $0x1c] sm:$0xf]
      %v7433 = vld [vmem:[%s425 + $0x20] sm:$0xf]
      %v7434 = vld [vmem:[%s425 + $0x24] sm:$0xf]
      %v7435 = vld [vmem:[%s425 + $0x28] sm:$0xf]
      %v7436 = vld [vmem:[%s425 + $0x2c] sm:$0xf]
      %v7437 = vld [vmem:[%s425 + $0x30] sm:$0xf]
      %v7438 = vld [vmem:[%s425 + $0x34] sm:$0xf]
      %v7439 = vld [vmem:[%s425 + $0x38] sm:$0xf]
      %v7440 = vld [vmem:[%s425 + $0x3c] sm:$0xf]
      %v7443 = vunpack.c.l.b16 %v7423
      %v7444 = vunpack.c.l.b16 %v7424
      %v7445 = vpack.c.b16 %v7444, %v7443
      %v7447 = vshrl.u32 %v7445, 16
      %v7449 = vshll.u32 %v7445, 16
      %v7451 = vrot.slane %v7449, 1
      %v7452 = vor.u32 %v7447, %v7451
      %v7470 = vunpack.c.l.b16 %v7425
      %v7471 = vunpack.c.l.b16 %v7426
      %v7472 = vunpack.c.l.b16 %v7427
      %v7473 = vunpack.c.l.b16 %v7428
      %v7474 = vunpack.c.l.b16 %v7429
      %v7475 = vunpack.c.l.b16 %v7430
      %v7476 = vunpack.c.l.b16 %v7431
      %v7477 = vunpack.c.l.b16 %v7432
      %v7478 = vunpack.c.l.b16 %v7433
      %v7479 = vunpack.c.l.b16 %v7434
      %v7480 = vunpack.c.l.b16 %v7435
      %v7481 = vunpack.c.l.b16 %v7436
      %v7482 = vunpack.c.l.b16 %v7437
      %v7483 = vunpack.c.l.b16 %v7438
      %v7484 = vunpack.c.l.b16 %v7439
      %v7485 = vunpack.c.l.b16 %v7440
      %v7486 = vpack.c.b16 %v7471, %v7470
      %v7487 = vpack.c.b16 %v7473, %v7472
      %v7488 = vpack.c.b16 %v7475, %v7474
      %v7489 = vpack.c.b16 %v7477, %v7476
      %v7490 = vpack.c.b16 %v7479, %v7478
      %v7491 = vpack.c.b16 %v7481, %v7480
      %v7492 = vpack.c.b16 %v7483, %v7482
      %v7493 = vpack.c.b16 %v7485, %v7484
      %7502 = vmatprep.subr.bf16.mxu0 0
      %7503 = vmatpush1.bf16.msra.mxu0 %v7493
      %7504 = vmatprep.subr.bf16.mxu0 0
      %7505 = vmatpush1.bf16.msra.mxu0 %v7492
      %7506 = vmatprep.subr.bf16.mxu0 0
      %7507 = vmatpush1.bf16.msra.mxu0 %v7491
      %7508 = vmatprep.subr.bf16.mxu0 0
      %7509 = vmatpush1.bf16.msra.mxu0 %v7490
      %7510 = vmatprep.subr.bf16.mxu0 0
      %7511 = vmatpush1.bf16.msra.mxu0 %v7489
      %7512 = vmatprep.subr.bf16.mxu0 0
      %7513 = vmatpush1.bf16.msra.mxu0 %v7488
      %7514 = vmatprep.subr.bf16.mxu0 0
      %7515 = vmatpush1.bf16.msra.mxu0 %v7487
      %7516 = vmatprep.subr.bf16.mxu0 0
      %7517 = vmatpush1.bf16.msra.mxu0 %v7486
      %7518 = vmatprep.subr.bf16.mxu0 0
      %7519 = vmatpush2.bf16.msra.mxu0 0
      %7520 = vmatprep.subr.bf16.mxu0 0
      %7521 = vmatpush2.bf16.msra.mxu0 0
      %7522 = vmatprep.subr.bf16.mxu0 0
      %7523 = vmatpush2.bf16.msra.mxu0 0
      %7524 = vmatprep.subr.bf16.mxu0 0
      %7525 = vmatpush2.bf16.msra.mxu0 0
      %7526 = vmatprep.subr.bf16.mxu0 0
      %7527 = vmatpush2.bf16.msra.mxu0 0
      %7528 = vmatprep.subr.bf16.mxu0 0
      %7529 = vmatpush2.bf16.msra.mxu0 0
      %7530 = vmatprep.subr.bf16.mxu0 0
      %7531 = vmatpush2.bf16.msra.mxu0 0
      %7532 = vmatprep.subr.bf16.mxu0 0
      %7533 = vmatpush2.bf16.msra.mxu0 0
      %7534 = vmatprep.mubr.bf16.mxu0 0
      %7535 = vmatmul.mubr.bf16.gmra.mxu0 %v7452
      %v7536 = vpop.f32.mrf.mxu0
      %v7537 = vadd.f32 0.0, %v7536
      %v7538 = vpop.f32.mrf.mxu0
      %v7539 = vpop.f32.mrf.mxu0
      %v7540 = vpop.f32.mrf.mxu0
      %7541 = vdwg.mxu0
      %v7542 = vadd.f32 %v7418, %v7537
      %s7543 = scalar_lea.vmem %s204, 200
      %v7544 = vld [vmem:[%s7543] sm:$0xf]
      %v7545 = vld [vmem:[%s546] sm:$0xf]
      %v7546 = vld [vmem:[%s546 + $0x4] sm:$0xf]
      %v7547 = vld [vmem:[%s546 + $0x8] sm:$0xf]
      %v7548 = vld [vmem:[%s546 + $0xc] sm:$0xf]
      %v7549 = vld [vmem:[%s546 + $0x10] sm:$0xf]
      %v7550 = vld [vmem:[%s546 + $0x14] sm:$0xf]
      %v7551 = vld [vmem:[%s546 + $0x18] sm:$0xf]
      %v7552 = vld [vmem:[%s546 + $0x1c] sm:$0xf]
      %v7553 = vld [vmem:[%s546 + $0x20] sm:$0xf]
      %v7554 = vld [vmem:[%s546 + $0x24] sm:$0xf]
      %v7555 = vld [vmem:[%s546 + $0x28] sm:$0xf]
      %v7556 = vld [vmem:[%s546 + $0x2c] sm:$0xf]
      %v7557 = vld [vmem:[%s546 + $0x30] sm:$0xf]
      %v7558 = vld [vmem:[%s546 + $0x34] sm:$0xf]
      %v7559 = vld [vmem:[%s546 + $0x38] sm:$0xf]
      %v7560 = vld [vmem:[%s546 + $0x3c] sm:$0xf]
      %v7577 = vunpack.c.l.b16 %v7545
      %v7578 = vunpack.c.l.b16 %v7546
      %v7579 = vunpack.c.l.b16 %v7547
      %v7580 = vunpack.c.l.b16 %v7548
      %v7581 = vunpack.c.l.b16 %v7549
      %v7582 = vunpack.c.l.b16 %v7550
      %v7583 = vunpack.c.l.b16 %v7551
      %v7584 = vunpack.c.l.b16 %v7552
      %v7585 = vunpack.c.l.b16 %v7553
      %v7586 = vunpack.c.l.b16 %v7554
      %v7587 = vunpack.c.l.b16 %v7555
      %v7588 = vunpack.c.l.b16 %v7556
      %v7589 = vunpack.c.l.b16 %v7557
      %v7590 = vunpack.c.l.b16 %v7558
      %v7591 = vunpack.c.l.b16 %v7559
      %v7592 = vunpack.c.l.b16 %v7560
      %v7593 = vpack.c.b16 %v7578, %v7577
      %v7594 = vpack.c.b16 %v7580, %v7579
      %v7595 = vpack.c.b16 %v7582, %v7581
      %v7596 = vpack.c.b16 %v7584, %v7583
      %v7597 = vpack.c.b16 %v7586, %v7585
      %v7598 = vpack.c.b16 %v7588, %v7587
      %v7599 = vpack.c.b16 %v7590, %v7589
      %v7600 = vpack.c.b16 %v7592, %v7591
      %7609 = vmatprep.subr.bf16.mxu0 0
      %7610 = vmatpush1.bf16.msra.mxu0 %v7600
      %7611 = vmatprep.subr.bf16.mxu0 0
      %7612 = vmatpush1.bf16.msra.mxu0 %v7599
      %7613 = vmatprep.subr.bf16.mxu0 0
      %7614 = vmatpush1.bf16.msra.mxu0 %v7598
      %7615 = vmatprep.subr.bf16.mxu0 0
      %7616 = vmatpush1.bf16.msra.mxu0 %v7597
      %7617 = vmatprep.subr.bf16.mxu0 0
      %7618 = vmatpush1.bf16.msra.mxu0 %v7596
      %7619 = vmatprep.subr.bf16.mxu0 0
      %7620 = vmatpush1.bf16.msra.mxu0 %v7595
      %7621 = vmatprep.subr.bf16.mxu0 0
      %7622 = vmatpush1.bf16.msra.mxu0 %v7594
      %7623 = vmatprep.subr.bf16.mxu0 0
      %7624 = vmatpush1.bf16.msra.mxu0 %v7593
      %7625 = vmatprep.subr.bf16.mxu0 0
      %7626 = vmatpush2.bf16.msra.mxu0 0
      %7627 = vmatprep.subr.bf16.mxu0 0
      %7628 = vmatpush2.bf16.msra.mxu0 0
      %7629 = vmatprep.subr.bf16.mxu0 0
      %7630 = vmatpush2.bf16.msra.mxu0 0
      %7631 = vmatprep.subr.bf16.mxu0 0
      %7632 = vmatpush2.bf16.msra.mxu0 0
      %7633 = vmatprep.subr.bf16.mxu0 0
      %7634 = vmatpush2.bf16.msra.mxu0 0
      %7635 = vmatprep.subr.bf16.mxu0 0
      %7636 = vmatpush2.bf16.msra.mxu0 0
      %7637 = vmatprep.subr.bf16.mxu0 0
      %7638 = vmatpush2.bf16.msra.mxu0 0
      %7639 = vmatprep.subr.bf16.mxu0 0
      %7640 = vmatpush2.bf16.msra.mxu0 0
      %7641 = vmatprep.mubr.bf16.mxu0 0
      %7642 = vmatmul.mubr.bf16.gmra.mxu0 %v7544
      %v7643 = vpop.f32.mrf.mxu0
      %v7644 = vadd.f32 0.0, %v7643
      %v7645 = vpop.f32.mrf.mxu0
      %v7646 = vpop.f32.mrf.mxu0
      %v7647 = vpop.f32.mrf.mxu0
      %7648 = vdwg.mxu0
      %v7649 = vadd.f32 %v7542, %v7644
      %s7650 = scalar_lea.vmem %s204, 272
      %v7651 = vld [vmem:[%s7650] sm:$0xf]
      %v7652 = vld [vmem:[%s654] sm:$0xf]
      %v7653 = vld [vmem:[%s654 + $0x4] sm:$0xf]
      %v7654 = vld [vmem:[%s654 + $0x8] sm:$0xf]
      %v7655 = vld [vmem:[%s654 + $0xc] sm:$0xf]
      %v7656 = vld [vmem:[%s654 + $0x10] sm:$0xf]
      %v7657 = vld [vmem:[%s654 + $0x14] sm:$0xf]
      %v7658 = vld [vmem:[%s654 + $0x18] sm:$0xf]
      %v7659 = vld [vmem:[%s654 + $0x1c] sm:$0xf]
      %v7660 = vld [vmem:[%s654 + $0x20] sm:$0xf]
      %v7661 = vld [vmem:[%s654 + $0x24] sm:$0xf]
      %v7662 = vld [vmem:[%s654 + $0x28] sm:$0xf]
      %v7663 = vld [vmem:[%s654 + $0x2c] sm:$0xf]
      %v7664 = vld [vmem:[%s654 + $0x30] sm:$0xf]
      %v7665 = vld [vmem:[%s654 + $0x34] sm:$0xf]
      %v7666 = vld [vmem:[%s654 + $0x38] sm:$0xf]
      %v7667 = vld [vmem:[%s654 + $0x3c] sm:$0xf]
      %v7684 = vunpack.c.l.b16 %v7652
      %v7685 = vunpack.c.l.b16 %v7653
      %v7686 = vunpack.c.l.b16 %v7654
      %v7687 = vunpack.c.l.b16 %v7655
      %v7688 = vunpack.c.l.b16 %v7656
      %v7689 = vunpack.c.l.b16 %v7657
      %v7690 = vunpack.c.l.b16 %v7658
      %v7691 = vunpack.c.l.b16 %v7659
      %v7692 = vunpack.c.l.b16 %v7660
      %v7693 = vunpack.c.l.b16 %v7661
      %v7694 = vunpack.c.l.b16 %v7662
      %v7695 = vunpack.c.l.b16 %v7663
      %v7696 = vunpack.c.l.b16 %v7664
      %v7697 = vunpack.c.l.b16 %v7665
      %v7698 = vunpack.c.l.b16 %v7666
      %v7699 = vunpack.c.l.b16 %v7667
      %v7700 = vpack.c.b16 %v7685, %v7684
      %v7701 = vpack.c.b16 %v7687, %v7686
      %v7702 = vpack.c.b16 %v7689, %v7688
      %v7703 = vpack.c.b16 %v7691, %v7690
      %v7704 = vpack.c.b16 %v7693, %v7692
      %v7705 = vpack.c.b16 %v7695, %v7694
      %v7706 = vpack.c.b16 %v7697, %v7696
      %v7707 = vpack.c.b16 %v7699, %v7698
      %7716 = vmatprep.subr.bf16.mxu0 0
      %7717 = vmatpush1.bf16.msra.mxu0 %v7707
      %7718 = vmatprep.subr.bf16.mxu0 0
      %7719 = vmatpush1.bf16.msra.mxu0 %v7706
      %7720 = vmatprep.subr.bf16.mxu0 0
      %7721 = vmatpush1.bf16.msra.mxu0 %v7705
      %7722 = vmatprep.subr.bf16.mxu0 0
      %7723 = vmatpush1.bf16.msra.mxu0 %v7704
      %7724 = vmatprep.subr.bf16.mxu0 0
      %7725 = vmatpush1.bf16.msra.mxu0 %v7703
      %7726 = vmatprep.subr.bf16.mxu0 0
      %7727 = vmatpush1.bf16.msra.mxu0 %v7702
      %7728 = vmatprep.subr.bf16.mxu0 0
      %7729 = vmatpush1.bf16.msra.mxu0 %v7701
      %7730 = vmatprep.subr.bf16.mxu0 0
      %7731 = vmatpush1.bf16.msra.mxu0 %v7700
      %7732 = vmatprep.subr.bf16.mxu0 0
      %7733 = vmatpush2.bf16.msra.mxu0 0
      %7734 = vmatprep.subr.bf16.mxu0 0
      %7735 = vmatpush2.bf16.msra.mxu0 0
      %7736 = vmatprep.subr.bf16.mxu0 0
      %7737 = vmatpush2.bf16.msra.mxu0 0
      %7738 = vmatprep.subr.bf16.mxu0 0
      %7739 = vmatpush2.bf16.msra.mxu0 0
      %7740 = vmatprep.subr.bf16.mxu0 0
      %7741 = vmatpush2.bf16.msra.mxu0 0
      %7742 = vmatprep.subr.bf16.mxu0 0
      %7743 = vmatpush2.bf16.msra.mxu0 0
      %7744 = vmatprep.subr.bf16.mxu0 0
      %7745 = vmatpush2.bf16.msra.mxu0 0
      %7746 = vmatprep.subr.bf16.mxu0 0
      %7747 = vmatpush2.bf16.msra.mxu0 0
      %7748 = vmatprep.mubr.bf16.mxu0 0
      %7749 = vmatmul.mubr.bf16.gmra.mxu0 %v7651
      %v7750 = vpop.f32.mrf.mxu0
      %v7751 = vadd.f32 0.0, %v7750
      %v7752 = vpop.f32.mrf.mxu0
      %v7753 = vpop.f32.mrf.mxu0
      %v7754 = vpop.f32.mrf.mxu0
      %7755 = vdwg.mxu0
      %v7756 = vadd.f32 %v7649, %v7751
      %v7757 = vld [vmem:[%s7543] sm:$0xf]
      %v7758 = vld [vmem:[%s7543 + $0x4] sm:$0x1]
      %v7759 = vld [vmem:[%s762] sm:$0xf]
      %v7760 = vld [vmem:[%s762 + $0x4] sm:$0xf]
      %v7761 = vld [vmem:[%s762 + $0x8] sm:$0xf]
      %v7762 = vld [vmem:[%s762 + $0xc] sm:$0xf]
      %v7763 = vld [vmem:[%s762 + $0x10] sm:$0xf]
      %v7764 = vld [vmem:[%s762 + $0x14] sm:$0xf]
      %v7765 = vld [vmem:[%s762 + $0x18] sm:$0xf]
      %v7766 = vld [vmem:[%s762 + $0x1c] sm:$0xf]
      %v7767 = vld [vmem:[%s762 + $0x20] sm:$0xf]
      %v7768 = vld [vmem:[%s762 + $0x24] sm:$0xf]
      %v7769 = vld [vmem:[%s762 + $0x28] sm:$0xf]
      %v7770 = vld [vmem:[%s762 + $0x2c] sm:$0xf]
      %v7771 = vld [vmem:[%s762 + $0x30] sm:$0xf]
      %v7772 = vld [vmem:[%s762 + $0x34] sm:$0xf]
      %v7773 = vld [vmem:[%s762 + $0x38] sm:$0xf]
      %v7774 = vld [vmem:[%s762 + $0x3c] sm:$0xf]
      %v7777 = vunpack.c.l.b16 %v7757
      %v7778 = vunpack.c.l.b16 %v7758
      %v7779 = vpack.c.b16 %v7778, %v7777
      %v7781 = vshrl.u32 %v7779, 16
      %v7783 = vshll.u32 %v7779, 16
      %v7785 = vrot.slane %v7783, 1
      %v7786 = vor.u32 %v7781, %v7785
      %v7804 = vunpack.c.l.b16 %v7759
      %v7805 = vunpack.c.l.b16 %v7760
      %v7806 = vunpack.c.l.b16 %v7761
      %v7807 = vunpack.c.l.b16 %v7762
      %v7808 = vunpack.c.l.b16 %v7763
      %v7809 = vunpack.c.l.b16 %v7764
      %v7810 = vunpack.c.l.b16 %v7765
      %v7811 = vunpack.c.l.b16 %v7766
      %v7812 = vunpack.c.l.b16 %v7767
      %v7813 = vunpack.c.l.b16 %v7768
      %v7814 = vunpack.c.l.b16 %v7769
      %v7815 = vunpack.c.l.b16 %v7770
      %v7816 = vunpack.c.l.b16 %v7771
      %v7817 = vunpack.c.l.b16 %v7772
      %v7818 = vunpack.c.l.b16 %v7773
      %v7819 = vunpack.c.l.b16 %v7774
      %v7820 = vpack.c.b16 %v7805, %v7804
      %v7821 = vpack.c.b16 %v7807, %v7806
      %v7822 = vpack.c.b16 %v7809, %v7808
      %v7823 = vpack.c.b16 %v7811, %v7810
      %v7824 = vpack.c.b16 %v7813, %v7812
      %v7825 = vpack.c.b16 %v7815, %v7814
      %v7826 = vpack.c.b16 %v7817, %v7816
      %v7827 = vpack.c.b16 %v7819, %v7818
      %7836 = vmatprep.subr.bf16.mxu0 0
      %7837 = vmatpush1.bf16.msra.mxu0 %v7827
      %7838 = vmatprep.subr.bf16.mxu0 0
      %7839 = vmatpush1.bf16.msra.mxu0 %v7826
      %7840 = vmatprep.subr.bf16.mxu0 0
      %7841 = vmatpush1.bf16.msra.mxu0 %v7825
      %7842 = vmatprep.subr.bf16.mxu0 0
      %7843 = vmatpush1.bf16.msra.mxu0 %v7824
      %7844 = vmatprep.subr.bf16.mxu0 0
      %7845 = vmatpush1.bf16.msra.mxu0 %v7823
      %7846 = vmatprep.subr.bf16.mxu0 0
      %7847 = vmatpush1.bf16.msra.mxu0 %v7822
      %7848 = vmatprep.subr.bf16.mxu0 0
      %7849 = vmatpush1.bf16.msra.mxu0 %v7821
      %7850 = vmatprep.subr.bf16.mxu0 0
      %7851 = vmatpush1.bf16.msra.mxu0 %v7820
      %7852 = vmatprep.subr.bf16.mxu0 0
      %7853 = vmatpush2.bf16.msra.mxu0 0
      %7854 = vmatprep.subr.bf16.mxu0 0
      %7855 = vmatpush2.bf16.msra.mxu0 0
      %7856 = vmatprep.subr.bf16.mxu0 0
      %7857 = vmatpush2.bf16.msra.mxu0 0
      %7858 = vmatprep.subr.bf16.mxu0 0
      %7859 = vmatpush2.bf16.msra.mxu0 0
      %7860 = vmatprep.subr.bf16.mxu0 0
      %7861 = vmatpush2.bf16.msra.mxu0 0
      %7862 = vmatprep.subr.bf16.mxu0 0
      %7863 = vmatpush2.bf16.msra.mxu0 0
      %7864 = vmatprep.subr.bf16.mxu0 0
      %7865 = vmatpush2.bf16.msra.mxu0 0
      %7866 = vmatprep.subr.bf16.mxu0 0
      %7867 = vmatpush2.bf16.msra.mxu0 0
      %7868 = vmatprep.mubr.bf16.mxu0 0
      %7869 = vmatmul.mubr.bf16.gmra.mxu0 %v7786
      %v7870 = vpop.f32.mrf.mxu0
      %v7871 = vadd.f32 0.0, %v7870
      %v7872 = vpop.f32.mrf.mxu0
      %v7873 = vpop.f32.mrf.mxu0
      %v7874 = vpop.f32.mrf.mxu0
      %7875 = vdwg.mxu0
      %v7876 = vadd.f32 %v7756, %v7871
      %s7877 = scalar_lea.vmem %s204, 64
      %v7878 = vld [vmem:[%s7877] sm:$0xf]
      %v7879 = vld [vmem:[%s883] sm:$0xf]
      %v7880 = vld [vmem:[%s883 + $0x4] sm:$0xf]
      %v7881 = vld [vmem:[%s883 + $0x8] sm:$0xf]
      %v7882 = vld [vmem:[%s883 + $0xc] sm:$0xf]
      %v7883 = vld [vmem:[%s883 + $0x10] sm:$0xf]
      %v7884 = vld [vmem:[%s883 + $0x14] sm:$0xf]
      %v7885 = vld [vmem:[%s883 + $0x18] sm:$0xf]
      %v7886 = vld [vmem:[%s883 + $0x1c] sm:$0xf]
      %v7887 = vld [vmem:[%s883 + $0x20] sm:$0xf]
      %v7888 = vld [vmem:[%s883 + $0x24] sm:$0xf]
      %v7889 = vld [vmem:[%s883 + $0x28] sm:$0xf]
      %v7890 = vld [vmem:[%s883 + $0x2c] sm:$0xf]
      %v7891 = vld [vmem:[%s883 + $0x30] sm:$0xf]
      %v7892 = vld [vmem:[%s883 + $0x34] sm:$0xf]
      %v7893 = vld [vmem:[%s883 + $0x38] sm:$0xf]
      %v7894 = vld [vmem:[%s883 + $0x3c] sm:$0xf]
      %v7911 = vunpack.c.l.b16 %v7879
      %v7912 = vunpack.c.l.b16 %v7880
      %v7913 = vunpack.c.l.b16 %v7881
      %v7914 = vunpack.c.l.b16 %v7882
      %v7915 = vunpack.c.l.b16 %v7883
      %v7916 = vunpack.c.l.b16 %v7884
      %v7917 = vunpack.c.l.b16 %v7885
      %v7918 = vunpack.c.l.b16 %v7886
      %v7919 = vunpack.c.l.b16 %v7887
      %v7920 = vunpack.c.l.b16 %v7888
      %v7921 = vunpack.c.l.b16 %v7889
      %v7922 = vunpack.c.l.b16 %v7890
      %v7923 = vunpack.c.l.b16 %v7891
      %v7924 = vunpack.c.l.b16 %v7892
      %v7925 = vunpack.c.l.b16 %v7893
      %v7926 = vunpack.c.l.b16 %v7894
      %v7927 = vpack.c.b16 %v7912, %v7911
      %v7928 = vpack.c.b16 %v7914, %v7913
      %v7929 = vpack.c.b16 %v7916, %v7915
      %v7930 = vpack.c.b16 %v7918, %v7917
      %v7931 = vpack.c.b16 %v7920, %v7919
      %v7932 = vpack.c.b16 %v7922, %v7921
      %v7933 = vpack.c.b16 %v7924, %v7923
      %v7934 = vpack.c.b16 %v7926, %v7925
      %7943 = vmatprep.subr.bf16.mxu0 0
      %7944 = vmatpush1.bf16.msra.mxu0 %v7934
      %7945 = vmatprep.subr.bf16.mxu0 0
      %7946 = vmatpush1.bf16.msra.mxu0 %v7933
      %7947 = vmatprep.subr.bf16.mxu0 0
      %7948 = vmatpush1.bf16.msra.mxu0 %v7932
      %7949 = vmatprep.subr.bf16.mxu0 0
      %7950 = vmatpush1.bf16.msra.mxu0 %v7931
      %7951 = vmatprep.subr.bf16.mxu0 0
      %7952 = vmatpush1.bf16.msra.mxu0 %v7930
      %7953 = vmatprep.subr.bf16.mxu0 0
      %7954 = vmatpush1.bf16.msra.mxu0 %v7929
      %7955 = vmatprep.subr.bf16.mxu0 0
      %7956 = vmatpush1.bf16.msra.mxu0 %v7928
      %7957 = vmatprep.subr.bf16.mxu0 0
      %7958 = vmatpush1.bf16.msra.mxu0 %v7927
      %7959 = vmatprep.subr.bf16.mxu0 0
      %7960 = vmatpush2.bf16.msra.mxu0 0
      %7961 = vmatprep.subr.bf16.mxu0 0
      %7962 = vmatpush2.bf16.msra.mxu0 0
      %7963 = vmatprep.subr.bf16.mxu0 0
      %7964 = vmatpush2.bf16.msra.mxu0 0
      %7965 = vmatprep.subr.bf16.mxu0 0
      %7966 = vmatpush2.bf16.msra.mxu0 0
      %7967 = vmatprep.subr.bf16.mxu0 0
      %7968 = vmatpush2.bf16.msra.mxu0 0
      %7969 = vmatprep.subr.bf16.mxu0 0
      %7970 = vmatpush2.bf16.msra.mxu0 0
      %7971 = vmatprep.subr.bf16.mxu0 0
      %7972 = vmatpush2.bf16.msra.mxu0 0
      %7973 = vmatprep.subr.bf16.mxu0 0
      %7974 = vmatpush2.bf16.msra.mxu0 0
      %7975 = vmatprep.mubr.bf16.mxu0 0
      %7976 = vmatmul.mubr.bf16.gmra.mxu0 %v7878
      %v7977 = vpop.f32.mrf.mxu0
      %v7978 = vadd.f32 0.0, %v7977
      %v7979 = vpop.f32.mrf.mxu0
      %v7980 = vpop.f32.mrf.mxu0
      %v7981 = vpop.f32.mrf.mxu0
      %7982 = vdwg.mxu0
      %v7983 = vadd.f32 %v7876, %v7978
      %s7984 = scalar_lea.vmem %s204, 136
      %v7985 = vld [vmem:[%s7984] sm:$0xf]
      %v7986 = vld [vmem:[%s991] sm:$0xf]
      %v7987 = vld [vmem:[%s991 + $0x4] sm:$0xf]
      %v7988 = vld [vmem:[%s991 + $0x8] sm:$0xf]
      %v7989 = vld [vmem:[%s991 + $0xc] sm:$0xf]
      %v7990 = vld [vmem:[%s991 + $0x10] sm:$0xf]
      %v7991 = vld [vmem:[%s991 + $0x14] sm:$0xf]
      %v7992 = vld [vmem:[%s991 + $0x18] sm:$0xf]
      %v7993 = vld [vmem:[%s991 + $0x1c] sm:$0xf]
      %v7994 = vld [vmem:[%s991 + $0x20] sm:$0xf]
      %v7995 = vld [vmem:[%s991 + $0x24] sm:$0xf]
      %v7996 = vld [vmem:[%s991 + $0x28] sm:$0xf]
      %v7997 = vld [vmem:[%s991 + $0x2c] sm:$0xf]
      %v7998 = vld [vmem:[%s991 + $0x30] sm:$0xf]
      %v7999 = vld [vmem:[%s991 + $0x34] sm:$0xf]
      %v8000 = vld [vmem:[%s991 + $0x38] sm:$0xf]
      %v8001 = vld [vmem:[%s991 + $0x3c] sm:$0xf]
      %v8018 = vunpack.c.l.b16 %v7986
      %v8019 = vunpack.c.l.b16 %v7987
      %v8020 = vunpack.c.l.b16 %v7988
      %v8021 = vunpack.c.l.b16 %v7989
      %v8022 = vunpack.c.l.b16 %v7990
      %v8023 = vunpack.c.l.b16 %v7991
      %v8024 = vunpack.c.l.b16 %v7992
      %v8025 = vunpack.c.l.b16 %v7993
      %v8026 = vunpack.c.l.b16 %v7994
      %v8027 = vunpack.c.l.b16 %v7995
      %v8028 = vunpack.c.l.b16 %v7996
      %v8029 = vunpack.c.l.b16 %v7997
      %v8030 = vunpack.c.l.b16 %v7998
      %v8031 = vunpack.c.l.b16 %v7999
      %v8032 = vunpack.c.l.b16 %v8000
      %v8033 = vunpack.c.l.b16 %v8001
      %v8034 = vpack.c.b16 %v8019, %v8018
      %v8035 = vpack.c.b16 %v8021, %v8020
      %v8036 = vpack.c.b16 %v8023, %v8022
      %v8037 = vpack.c.b16 %v8025, %v8024
      %v8038 = vpack.c.b16 %v8027, %v8026
      %v8039 = vpack.c.b16 %v8029, %v8028
      %v8040 = vpack.c.b16 %v8031, %v8030
      %v8041 = vpack.c.b16 %v8033, %v8032
      %8050 = vmatprep.subr.bf16.mxu0 0
      %8051 = vmatpush1.bf16.msra.mxu0 %v8041
      %8052 = vmatprep.subr.bf16.mxu0 0
      %8053 = vmatpush1.bf16.msra.mxu0 %v8040
      %8054 = vmatprep.subr.bf16.mxu0 0
      %8055 = vmatpush1.bf16.msra.mxu0 %v8039
      %8056 = vmatprep.subr.bf16.mxu0 0
      %8057 = vmatpush1.bf16.msra.mxu0 %v8038
      %8058 = vmatprep.subr.bf16.mxu0 0
      %8059 = vmatpush1.bf16.msra.mxu0 %v8037
      %8060 = vmatprep.subr.bf16.mxu0 0
      %8061 = vmatpush1.bf16.msra.mxu0 %v8036
      %8062 = vmatprep.subr.bf16.mxu0 0
      %8063 = vmatpush1.bf16.msra.mxu0 %v8035
      %8064 = vmatprep.subr.bf16.mxu0 0
      %8065 = vmatpush1.bf16.msra.mxu0 %v8034
      %8066 = vmatprep.subr.bf16.mxu0 0
      %8067 = vmatpush2.bf16.msra.mxu0 0
      %8068 = vmatprep.subr.bf16.mxu0 0
      %8069 = vmatpush2.bf16.msra.mxu0 0
      %8070 = vmatprep.subr.bf16.mxu0 0
      %8071 = vmatpush2.bf16.msra.mxu0 0
      %8072 = vmatprep.subr.bf16.mxu0 0
      %8073 = vmatpush2.bf16.msra.mxu0 0
      %8074 = vmatprep.subr.bf16.mxu0 0
      %8075 = vmatpush2.bf16.msra.mxu0 0
      %8076 = vmatprep.subr.bf16.mxu0 0
      %8077 = vmatpush2.bf16.msra.mxu0 0
      %8078 = vmatprep.subr.bf16.mxu0 0
      %8079 = vmatpush2.bf16.msra.mxu0 0
      %8080 = vmatprep.subr.bf16.mxu0 0
      %8081 = vmatpush2.bf16.msra.mxu0 0
      %8082 = vmatprep.mubr.bf16.mxu0 0
      %8083 = vmatmul.mubr.bf16.gmra.mxu0 %v7985
      %v8084 = vpop.f32.mrf.mxu0
      %v8085 = vadd.f32 0.0, %v8084
      %v8086 = vpop.f32.mrf.mxu0
      %v8087 = vpop.f32.mrf.mxu0
      %v8088 = vpop.f32.mrf.mxu0
      %8089 = vdwg.mxu0
      %v8090 = vadd.f32 %v7983, %v8085
      %v8091 = vld [vmem:[%s7877] sm:$0xf]
      %v8092 = vld [vmem:[%s7877 + $0x4] sm:$0x1]
      %v8093 = vld [vmem:[%s1099] sm:$0xf]
      %v8094 = vld [vmem:[%s1099 + $0x4] sm:$0xf]
      %v8095 = vld [vmem:[%s1099 + $0x8] sm:$0xf]
      %v8096 = vld [vmem:[%s1099 + $0xc] sm:$0xf]
      %v8097 = vld [vmem:[%s1099 + $0x10] sm:$0xf]
      %v8098 = vld [vmem:[%s1099 + $0x14] sm:$0xf]
      %v8099 = vld [vmem:[%s1099 + $0x18] sm:$0xf]
      %v8100 = vld [vmem:[%s1099 + $0x1c] sm:$0xf]
      %v8101 = vld [vmem:[%s1099 + $0x20] sm:$0xf]
      %v8102 = vld [vmem:[%s1099 + $0x24] sm:$0xf]
      %v8103 = vld [vmem:[%s1099 + $0x28] sm:$0xf]
      %v8104 = vld [vmem:[%s1099 + $0x2c] sm:$0xf]
      %v8105 = vld [vmem:[%s1099 + $0x30] sm:$0xf]
      %v8106 = vld [vmem:[%s1099 + $0x34] sm:$0xf]
      %v8107 = vld [vmem:[%s1099 + $0x38] sm:$0xf]
      %v8108 = vld [vmem:[%s1099 + $0x3c] sm:$0xf]
      %v8111 = vunpack.c.l.b16 %v8091
      %v8112 = vunpack.c.l.b16 %v8092
      %v8113 = vpack.c.b16 %v8112, %v8111
      %v8115 = vshrl.u32 %v8113, 16
      %v8117 = vshll.u32 %v8113, 16
      %v8119 = vrot.slane %v8117, 1
      %v8120 = vor.u32 %v8115, %v8119
      %v8138 = vunpack.c.l.b16 %v8093
      %v8139 = vunpack.c.l.b16 %v8094
      %v8140 = vunpack.c.l.b16 %v8095
      %v8141 = vunpack.c.l.b16 %v8096
      %v8142 = vunpack.c.l.b16 %v8097
      %v8143 = vunpack.c.l.b16 %v8098
      %v8144 = vunpack.c.l.b16 %v8099
      %v8145 = vunpack.c.l.b16 %v8100
      %v8146 = vunpack.c.l.b16 %v8101
      %v8147 = vunpack.c.l.b16 %v8102
      %v8148 = vunpack.c.l.b16 %v8103
      %v8149 = vunpack.c.l.b16 %v8104
      %v8150 = vunpack.c.l.b16 %v8105
      %v8151 = vunpack.c.l.b16 %v8106
      %v8152 = vunpack.c.l.b16 %v8107
      %v8153 = vunpack.c.l.b16 %v8108
      %v8154 = vpack.c.b16 %v8139, %v8138
      %v8155 = vpack.c.b16 %v8141, %v8140
      %v8156 = vpack.c.b16 %v8143, %v8142
      %v8157 = vpack.c.b16 %v8145, %v8144
      %v8158 = vpack.c.b16 %v8147, %v8146
      %v8159 = vpack.c.b16 %v8149, %v8148
      %v8160 = vpack.c.b16 %v8151, %v8150
      %v8161 = vpack.c.b16 %v8153, %v8152
      %8170 = vmatprep.subr.bf16.mxu0 0
      %8171 = vmatpush1.bf16.msra.mxu0 %v8161
      %8172 = vmatprep.subr.bf16.mxu0 0
      %8173 = vmatpush1.bf16.msra.mxu0 %v8160
      %8174 = vmatprep.subr.bf16.mxu0 0
      %8175 = vmatpush1.bf16.msra.mxu0 %v8159
      %8176 = vmatprep.subr.bf16.mxu0 0
      %8177 = vmatpush1.bf16.msra.mxu0 %v8158
      %8178 = vmatprep.subr.bf16.mxu0 0
      %8179 = vmatpush1.bf16.msra.mxu0 %v8157
      %8180 = vmatprep.subr.bf16.mxu0 0
      %8181 = vmatpush1.bf16.msra.mxu0 %v8156
      %8182 = vmatprep.subr.bf16.mxu0 0
      %8183 = vmatpush1.bf16.msra.mxu0 %v8155
      %8184 = vmatprep.subr.bf16.mxu0 0
      %8185 = vmatpush1.bf16.msra.mxu0 %v8154
      %8186 = vmatprep.subr.bf16.mxu0 0
      %8187 = vmatpush2.bf16.msra.mxu0 0
      %8188 = vmatprep.subr.bf16.mxu0 0
      %8189 = vmatpush2.bf16.msra.mxu0 0
      %8190 = vmatprep.subr.bf16.mxu0 0
      %8191 = vmatpush2.bf16.msra.mxu0 0
      %8192 = vmatprep.subr.bf16.mxu0 0
      %8193 = vmatpush2.bf16.msra.mxu0 0
      %8194 = vmatprep.subr.bf16.mxu0 0
      %8195 = vmatpush2.bf16.msra.mxu0 0
      %8196 = vmatprep.subr.bf16.mxu0 0
      %8197 = vmatpush2.bf16.msra.mxu0 0
      %8198 = vmatprep.subr.bf16.mxu0 0
      %8199 = vmatpush2.bf16.msra.mxu0 0
      %8200 = vmatprep.subr.bf16.mxu0 0
      %8201 = vmatpush2.bf16.msra.mxu0 0
      %8202 = vmatprep.mubr.bf16.mxu0 0
      %8203 = vmatmul.mubr.bf16.gmra.mxu0 %v8120
      %v8204 = vpop.f32.mrf.mxu0
      %v8205 = vadd.f32 0.0, %v8204
      %v8206 = vpop.f32.mrf.mxu0
      %v8207 = vpop.f32.mrf.mxu0
      %v8208 = vpop.f32.mrf.mxu0
      %8209 = vdwg.mxu0
      %v8210 = vadd.f32 %v8090, %v8205
      %8211 = vst [vmem:[#allocation2 + $0x38] sm:$0xff] %v8210
      %v8212 = vld [vmem:[#allocation2] sm:$0xff]
      %v8213 = vld [vmem:[#allocation2 + $0x8] sm:$0xff]
      %v8214 = vld [vmem:[#allocation2 + $0x10] sm:$0xff]
      %v8215 = vld [vmem:[#allocation2 + $0x18] sm:$0xff]
      %v8216 = vld [vmem:[#allocation2 + $0x20] sm:$0xff]
      %v8217 = vld [vmem:[#allocation2 + $0x28] sm:$0xff]
      %v8218 = vld [vmem:[#allocation2 + $0x30] sm:$0xff]
      %v8219 = vld [vmem:[#allocation2 + $0x38] sm:$0xff]
      %p8220 = scmp.eq.s32.totalorder %s19, 0
      %p8221 = scmp.eq.s32.totalorder %s20, 0
      %p8222 = pnand %p8220, %p8221
      %p8223 = pneg %p8222
      // Predicated region
      $region37: #{bottleneck_forward.4} parent=35 // pred_check
        _
      $region38: #{bottleneck_forward.4} parent=35 // pred_check_branch
        %8225 = sbr.rel (%p8222) target = $region40
      $region39: #{bottleneck_forward.4} parent=35 // pred_region
        %8226 = vst [vmem:[#allocation3] sm:$0x1] 0.0
        %8227 = vst [vmem:[#allocation4] sm:$0x1] 0.0
      $region40: #{bottleneck_forward.4} parent=35 // pred_fallthru
        _
      // Predicated region
      $region41: #{bottleneck_forward.4} parent=35 // pred_check
        %p8228 = pneg %p8220
      $region42: #{bottleneck_forward.4} parent=35 // pred_check_branch
        %8230 = sbr.rel (%p8228) target = $region44
      $region43: #{bottleneck_forward.4} parent=35 // pred_region
        %v8231 = vld [vmem:[#allocation3] sm:$0x1]
        %v8232 = vadd.f32 %v8212, %v8213
        %v8233 = vadd.f32 %v8232, %v8214
        %v8234 = vadd.f32 %v8233, %v8215
        %v8235 = vadd.f32 %v8234, %v8216
        %v8236 = vadd.f32 %v8235, %v8217
        %v8237 = vadd.f32 %v8236, %v8218
        %v8238 = vadd.f32 %v8237, %v8219
        %v8239 = vrot.slane %v8238, 4
        %v8240 = vadd.f32 %v8238, %v8239
        %v8241 = vrot.slane %v8240, 2
        %v8242 = vadd.f32 %v8240, %v8241
        %v8243 = vrot.slane %v8242, 1
        %v8244 = vadd.f32 %v8242, %v8243
        %v8245 = vadd.f32 %v8231, %v8244
        %8246 = vst [vmem:[#allocation3] sm:$0x1] %v8245
        %v8247 = vld [vmem:[#allocation4] sm:$0x1]
        %v8248 = vmul.f32 %v8212, %v8212
        %v8249 = vmul.f32 %v8213, %v8213
        %v8250 = vmul.f32 %v8214, %v8214
        %v8251 = vmul.f32 %v8215, %v8215
        %v8252 = vmul.f32 %v8216, %v8216
        %v8253 = vmul.f32 %v8217, %v8217
        %v8254 = vmul.f32 %v8218, %v8218
        %v8255 = vmul.f32 %v8219, %v8219
        %v8256 = vadd.f32 %v8248, %v8249
        %v8257 = vadd.f32 %v8256, %v8250
        %v8258 = vadd.f32 %v8257, %v8251
        %v8259 = vadd.f32 %v8258, %v8252
        %v8260 = vadd.f32 %v8259, %v8253
        %v8261 = vadd.f32 %v8260, %v8254
        %v8262 = vadd.f32 %v8261, %v8255
        %v8263 = vrot.slane %v8262, 4
        %v8264 = vadd.f32 %v8262, %v8263
        %v8265 = vrot.slane %v8264, 2
        %v8266 = vadd.f32 %v8264, %v8265
        %v8267 = vrot.slane %v8266, 1
        %v8268 = vadd.f32 %v8266, %v8267
        %v8269 = vadd.f32 %v8247, %v8268
        %8270 = vst [vmem:[#allocation4] sm:$0x1] %v8269
      $region44: #{bottleneck_forward.4} parent=35 // pred_fallthru
        _
      %p8271 = scmp.eq.s32.totalorder %s19, 1
      %p8272 = pnand %p8271, %p8221
      %p8273 = pneg %p8272
      // Predicated region
      $region45: #{bottleneck_forward.4} parent=35 // pred_check
        _
      $region46: #{bottleneck_forward.4} parent=35 // pred_check_branch
        %8275 = sbr.rel (%p8272) target = $region48
      $region47: #{bottleneck_forward.4} parent=35 // pred_region
        %v8276 = vld [vmem:[#allocation3] sm:$0x1]
        %v8277 = vmul.f32 %v8276, 0.0078125
        %v8278 = vld [vmem:[#allocation4] sm:$0x1]
        %v8279 = vmul.f32 %v8278, 0.0078125
        %v8280 = vmul.f32 %v8277, %v8277
        %v8281 = vsub.f32 %v8279, %v8280
        %v8282 = vmax.f32 %v8281, 0.0
        %v8283 = vld [vmem:[%s2] sm:$0x1]
        %v8284 = vadd.f32 %v8282, 1e-05
        %v8285 = vrsqrt.pop %v8284
        %v8286 = vmul.f32 %v8283, %v8285
        %8287 = vst [vmem:[#allocation5] sm:$0x1] %v8286
        %v8288 = vld [vmem:[%s3] sm:$0x1]
        %v8289 = vmul.f32 %v8277, %v8286
        %v8290 = vsub.f32 %v8288, %v8289
        %8291 = vst [vmem:[#allocation6] sm:$0x1] %v8290
      $region48: #{bottleneck_forward.4} parent=35 // pred_fallthru
        _
      // Predicated region
      $region49: #{bottleneck_forward.4} parent=35 // pred_check
        %p8292 = pneg %p8271
      $region50: #{bottleneck_forward.4} parent=35 // pred_check_branch
        %8294 = sbr.rel (%p8292) target = $region52
      $region51: #{bottleneck_forward.4} parent=35 // pred_region
        %v8295 = vld [vmem:[#allocation5] sm:$0x1]
        %v8297 = vlaneseq
        %v8298 = vshrl.u32 %v8297, 7
        %v8299 = vsub.s32 0, %v8298
        %v8300 = vrot.slane %v8295, %v8299
        %v8302 = vmul.f32 %v8212, %v8300
        %v8303 = vmul.f32 %v8213, %v8300
        %v8304 = vmul.f32 %v8214, %v8300
        %v8305 = vmul.f32 %v8215, %v8300
        %v8306 = vmul.f32 %v8216, %v8300
        %v8307 = vmul.f32 %v8217, %v8300
        %v8308 = vmul.f32 %v8218, %v8300
        %v8309 = vmul.f32 %v8219, %v8300
        %v8310 = vld [vmem:[#allocation6] sm:$0x1]
        %v8312 = vlaneseq
        %v8313 = vshrl.u32 %v8312, 7
        %v8314 = vsub.s32 0, %v8313
        %v8315 = vrot.slane %v8310, %v8314
        %v8317 = vadd.f32 %v8302, %v8315
        %v8318 = vadd.f32 %v8303, %v8315
        %v8319 = vadd.f32 %v8304, %v8315
        %v8320 = vadd.f32 %v8305, %v8315
        %v8321 = vadd.f32 %v8306, %v8315
        %v8322 = vadd.f32 %v8307, %v8315
        %v8323 = vadd.f32 %v8308, %v8315
        %v8324 = vadd.f32 %v8309, %v8315
        %v8325 = vmax.f32 %v8317, 0.0
        %v8326 = vmax.f32 %v8318, 0.0
        %v8327 = vmax.f32 %v8319, 0.0
        %v8328 = vmax.f32 %v8320, 0.0
        %v8329 = vmax.f32 %v8321, 0.0
        %v8330 = vmax.f32 %v8322, 0.0
        %v8331 = vmax.f32 %v8323, 0.0
        %v8332 = vmax.f32 %v8324, 0.0
        %v8333 = vpack.c.bf16 %v8326, %v8325
        %v8334 = vpack.c.bf16 %v8328, %v8327
        %v8335 = vpack.c.bf16 %v8330, %v8329
        %v8336 = vpack.c.bf16 %v8332, %v8331
        %v8341 = vunpack.c.l.b16 %v8333
        %v8342 = vunpack.c.h.b16 %v8333
        %v8343 = vunpack.c.l.b16 %v8334
        %v8344 = vunpack.c.h.b16 %v8334
        %v8345 = vunpack.c.l.b16 %v8335
        %v8346 = vunpack.c.h.b16 %v8335
        %v8347 = vunpack.c.l.b16 %v8336
        %v8348 = vunpack.c.h.b16 %v8336
        %v8349 = vpack.c.b16 %v8341, %v8341
        %v8350 = vpack.c.b16 %v8342, %v8342
        %v8351 = vpack.c.b16 %v8343, %v8343
        %v8352 = vpack.c.b16 %v8344, %v8344
        %v8353 = vpack.c.b16 %v8345, %v8345
        %v8354 = vpack.c.b16 %v8346, %v8346
        %v8355 = vpack.c.b16 %v8347, %v8347
        %v8356 = vpack.c.b16 %v8348, %v8348
        %8365 = vst [vmem:[%s209] sm:$0xf] %v8349
        %8366 = vst [vmem:[%s209 + $0x4] sm:$0xf] %v8350
        %8367 = vst [vmem:[%s209 + $0x8] sm:$0xf] %v8351
        %8368 = vst [vmem:[%s209 + $0xc] sm:$0xf] %v8352
        %8369 = vst [vmem:[%s209 + $0x10] sm:$0xf] %v8353
        %8370 = vst [vmem:[%s209 + $0x14] sm:$0xf] %v8354
        %8371 = vst [vmem:[%s209 + $0x18] sm:$0xf] %v8355
        %8372 = vst [vmem:[%s209 + $0x1c] sm:$0xf] %v8356
      $region52: #{bottleneck_forward.4} parent=35 // pred_fallthru
        _
      %p8373 = scmp.lt.s32.totalorder %s20, 1
      %s8374 = scalar_select %p8373, %s20, 1
      %s8375 = smul.addr %s8374, 8
      %s8376 = smul.addr %s8375, 4
      %s8377 = scalar_lea.vmem %s4, %s8376
      // Predicated region
      $region53: #{bottleneck_forward.4} parent=35 // pred_check
        %p8378 = pneg %p134
      $region54: #{bottleneck_forward.4} parent=35 // pred_check_branch
        %8380 = sbr.rel (%p8378) target = $region56
      $region55: #{bottleneck_forward.4} parent=35 // pred_region
        _
      $region56: #{bottleneck_forward.4} parent=35 // pred_fallthru
        _
    $region36: #{bottleneck_forward.4} parent=5 // pred_fallthru
      _
    %p8381 = scmp.le.s32.totalorder 2, %s10
    // Predicated region
    $region57: #{bottleneck_forward.4} parent=5 // pred_check
      %p8382 = pneg %p8381
    $region58: #{bottleneck_forward.4} parent=5 // pred_check_branch
      %8384 = sbr.rel (%p8382) target = $region60
    $region59: #{bottleneck_forward.4} parent=5 // pred_region
      %s8385 = ssub.s32 %s10, 2
      // Predicated region
      $region61: #{bottleneck_forward.4} parent=59 // pred_check
        %p8386 = pneg %p140
      $region62: #{bottleneck_forward.4} parent=59 // pred_check_branch
        %8388 = sbr.rel (%p8386) target = $region64
      $region63: #{bottleneck_forward.4} parent=59 // pred_region
        %p8389 = scmp.lt.s32.totalorder %s22, 1
        %s8390 = scalar_select %p8389, %s22, 1
        %s8391 = smul.addr %s8390, 8
        %s8392 = smul.addr %s8391, 4
        %s8393 = scalar_lea.vmem %s4, %s8392
      $region64: #{bottleneck_forward.4} parent=59 // pred_fallthru
        _
    $region60: #{bottleneck_forward.4} parent=5 // pred_fallthru
      _
  $region6: #{bottleneck_forward.4} parent=0 // loop_footer
    %s14 = sadd.s32 1, %s10
  $region7: #{bottleneck_forward.4} parent=0 // loop_footer_branch
    %9 = sbr.rel target = $region3
  $region8: #{bottleneck_forward.4} parent=0 // loop_exit
    _

</llo_original>
